<compile_context>
chip_gen: v5e
topology: v5e:2x2
jax: 0.10.0
libtpu: 0.0.40
codegen_flags: <defaults>
</compile_context>

<pallas_src>
import numpy as np
import jax
import jax.numpy as jnp
from jax import lax
from jax.experimental import pallas as pl
from jax.experimental.pallas import tpu as pltpu


def _round_up(x, m):
    return (x + m - 1) // m * m


def _row_band(wrow, n_groups, group_stride, in_lanes, c_in, w_out, c_out):
    """Banded matrix for one conv kernel-row over the merged (W*C) lane axis.

    wrow: (k, c_in, c_out) conv weights at a fixed kernel-row (ki) index,
          wrow[kj, c, o] = conv_w[o, c, ki, kj].
    Returns B of shape (in_lanes, w_out*c_out) with
      B[group_stride*c_in*(w + kj) + c,  w*c_out + o] = wrow[kj, c, o]
    and zeros everywhere else (in particular at the "garbage" lane groups of
    a stride-2 (uncompacted) pooled input layout, so garbage * 0 == 0).
    """
    kk = wrow.shape[0]
    g = jnp.arange(n_groups)
    w = jnp.arange(w_out)
    kj = jnp.arange(kk)
    sel = (g[:, None, None] == (w[None, :, None] + kj[None, None, :])
           ).astype(wrow.dtype)                                    # (G, Wout, k)
    bg = jnp.einsum('gwk,kco->gcwo', sel, wrow)                    # (G, Cin, Wout, Cout)
    if group_stride == 1:
        full = bg.reshape(n_groups * c_in, w_out * c_out)
    else:
        z = jnp.zeros((n_groups, group_stride, c_in, w_out, c_out), wrow.dtype)
        full = z.at[:, 0].set(bg).reshape(
            n_groups * group_stride * c_in, w_out * c_out)
    return full[:in_lanes]


def _pair_bands(w_conv, n_groups, group_stride, in_lanes, w_out):
    """Banded weights that produce BOTH conv rows (2hp, 2hp+1) of a pool window.

    w_conv: torch-layout (c_out, c_in, k, k). Returns (k+1, in_lanes, 2*w_out*c_out):
    matrix r is contracted against input row 2*hp + r; column block 0 feeds
    conv output row 2hp, block 1 feeds row 2hp+1.
    """
    c_out, c_in, k, _ = w_conv.shape
    w_r = jnp.transpose(w_conv, (2, 3, 1, 0))                      # (ki, kj, c_in, c_out)
    zero = jnp.zeros_like(w_r[0])
    mats = []
    for r in range(k + 1):
        blk_a = _row_band(w_r[r] if r <= k - 1 else zero,
                          n_groups, group_stride, in_lanes, c_in, w_out, c_out)
        blk_b = _row_band(w_r[r - 1] if r >= 1 else zero,
                          n_groups, group_stride, in_lanes, c_in, w_out, c_out)
        mats.append(jnp.concatenate([blk_a, blk_b], axis=1))
    return jnp.stack(mats)


def _lin1_bands(wl1, c2, hp2, wp2, w2):
    """Per-pool2-row banded linear1 weights, folding the torch (C,H,W) flatten
    order and the uncompacted pool2 lane layout (data at lanes 2*wq*C2 + d)."""
    l1 = wl1.shape[0]
    in_lanes = (w2 - 1) * c2
    wl1_r = wl1.reshape(l1, c2, hp2, wp2)                          # [m, d, hq, wq]
    mats = []
    for hq in range(hp2):
        bg = jnp.transpose(wl1_r[:, :, hq, :], (2, 1, 0))          # (wq, d, m)
        z = jnp.zeros((wp2, 2, c2, l1), wl1.dtype)
        mats.append(z.at[:, 0].set(bg).reshape(wp2 * 2 * c2, l1)[:in_lanes])
    return jnp.stack(mats)


def testnet_forward(x_nchw, params, *, batch_block=64):
    """Pallas TPU implementation of testNet.forward. x_nchw: (N, Cin, H, W) f32."""
    N, Cin, H, W = x_nchw.shape
    w1_t, b1 = params["conv1_w"], params["conv1_b"]          # (C1, Cin, k, k)
    w2_t, b2 = params["conv2_w"], params["conv2_b"]          # (C2, C1,  k, k)
    wl1_t, bl1 = params["lin1_w"], params["lin1_b"]          # (L1, C2*k*k)
    wl2_t, bl2 = params["lin2_w"], params["lin2_b"]          # (L2, L1)
    wl3_t, bl3 = params["lin3_w"], params["lin3_b"]          # (F,  L2)

    C1, k = w1_t.shape[0], w1_t.shape[2]
    C2 = w2_t.shape[0]
    L1, L2, F = wl1_t.shape[0], wl2_t.shape[0], wl3_t.shape[0]

    H1, W1 = H - k + 1, W - k + 1                            # conv1 output
    Hp1, Wp1 = H1 // 2, W1 // 2                              # after pool1
    H2, W2 = Hp1 - k + 1, Wp1 - k + 1                        # conv2 output
    Hp2, Wp2 = H2 // 2, W2 // 2                              # after pool2

    # torch's x.view(-1, C2*k*k) is only consistent if final spatial == k x k
    assert Hp2 == k and Wp2 == k, "flatten requires final spatial dims == conv_size"
    assert W1 >= 2 and W2 >= 2 and Hp1 >= 1 and Hp2 >= 1

    WCin = W * Cin                     # merged input lane width
    P1L = (W1 - 1) * C1                # uncompacted pool1 lanes (data at 2*wp*C1)
    P2L = (W2 - 1) * C2                # uncompacted pool2 lanes (data at 2*wq*C2)
    N1 = 2 * W1 * C1                   # conv1 pair-output lanes
    N2 = 2 * W2 * C2                   # conv2 pair-output lanes
    Fp = _round_up(F, 128)             # lane-dense output width

    # >=2 grid steps whenever N >= 2 so v7x can shard across its 2 TensorCores.
    BB = 1 if N == 1 else min(batch_block, (N + 1) // 2)
    Np = _round_up(N, BB)
    n_steps = Np // BB

    # ---- glue: input to merged-lane layout, split into even / odd row planes
    xm = jnp.transpose(x_nchw, (0, 2, 3, 1)).astype(jnp.float32).reshape(N, H, WCin)
    xm = jnp.pad(xm, ((0, Np - N), (0, 0), (0, 0)))
    x_even = xm[:, 0::2, :]                                   # rows 0,2,4,...
    x_odd = xm[:, 1::2, :]                                    # rows 1,3,5,...
    He, Ho = x_even.shape[1], x_odd.shape[1]
    max_even = max(r // 2 for r in range(0, k + 1, 2))
    max_odd = max(r // 2 for r in range(1, k + 1, 2))
    assert Hp1 - 1 + max_even < He and Hp1 - 1 + max_odd < Ho

    # ---- banded weights (built once, outside the kernel) ---------------------
    f32 = jnp.float32
    w1pair = _pair_bands(w1_t.astype(f32), W, 1, WCin, W1)    # (k+1, WCin, N1)
    w2pair = _pair_bands(w2_t.astype(f32), Wp1, 2, P1L, W2)   # (k+1, P1L,  N2)
    wl1b = _lin1_bands(wl1_t.astype(f32), C2, Hp2, Wp2, W2)   # (Hp2, P2L, L1)
    b1p = jnp.tile(b1.astype(f32), 2 * W1).reshape(1, N1)
    b2p = jnp.tile(b2.astype(f32), 2 * W2).reshape(1, N2)
    bl1r = bl1.astype(f32).reshape(1, L1)
    wl2m = wl2_t.astype(f32).T                                # (L1, L2)
    bl2r = bl2.astype(f32).reshape(1, L2)
    wl3m = jnp.zeros((L2, Fp), f32).at[:, :F].set(wl3_t.astype(f32).T)
    bl3r = jnp.zeros((1, Fp), f32).at[0, :F].set(bl3.astype(f32))

    hi = lax.Precision.HIGHEST

    # TODO(synk): for configs where Hp1 % 8 != 0 and BB > 1 the leading-dim
    # merges below may trigger a (correct but slower) relayout.
    def kernel(xe_ref, xo_ref, w1_ref, b1_ref, w2_ref, b2_ref,
               wl1_ref, bl1_ref, wl2_ref, bl2_ref, wl3_ref, bl3_ref,
               out_ref, p1_ref):
        # ---- conv1 + ReLU + 2x2 max-pool, whole batch block in k+1 matmuls ---
        # matmul-output row (n, hp) carries the PAIR of conv rows (2hp, 2hp+1)
        # on the lane axis; input row 2hp + r comes from the even/odd plane.
        y1 = None
        for r in range(k + 1):
            src = xe_ref if r % 2 == 0 else xo_ref
            rows = src[:, r // 2:r // 2 + Hp1, :].reshape(BB * Hp1, WCin)
            d = jnp.dot(rows, w1_ref[r], preferred_element_type=jnp.float32,
                        precision=hi)
            y1 = d if y1 is None else y1 + d
        y1 = jnp.maximum(y1 + b1_ref[...], 0.0)                  # bias + ReLU
        t1 = jnp.maximum(y1[:, :W1 * C1], y1[:, W1 * C1:])       # pool over H (pair)
        p1 = jnp.maximum(t1[:, :P1L], t1[:, C1:])                # pool over W (lane shift)
        p1_ref[...] = p1.reshape(BB, Hp1, P1L)                   # data at lanes 2*wp*C1

        # ---- conv2 + ReLU + pool2 + torch-order flatten + linear1, per row ---
        h1 = None
        for hq in range(Hp2):
            y2 = None
            for r in range(k + 1):
                d = jnp.dot(p1_ref[:, 2 * hq + r, :], w2_ref[r],
                            preferred_element_type=jnp.float32, precision=hi)
                y2 = d if y2 is None else y2 + d
            y2 = jnp.maximum(y2 + b2_ref[...], 0.0)
            t2 = jnp.maximum(y2[:, :W2 * C2], y2[:, W2 * C2:])   # pool over H
            p2 = jnp.maximum(t2[:, :P2L], t2[:, C2:])            # pool over W
            d = jnp.dot(p2, wl1_ref[hq], preferred_element_type=jnp.float32,
                        precision=hi)
            h1 = d if h1 is None else h1 + d
        h1 = jnp.maximum(h1 + bl1_ref[...], 0.0)

        # ---- linear2 + ReLU, linear3; lane-dense (BB, Fp) output -------------
        h2 = jnp.maximum(jnp.dot(h1, wl2_ref[...],
                                 preferred_element_type=jnp.float32,
                                 precision=hi) + bl2_ref[...], 0.0)
        out_ref[0] = (jnp.dot(h2, wl3_ref[...],
                              preferred_element_type=jnp.float32,
                              precision=hi) + bl3_ref[...])

    def _full(a):
        zeros = (0,) * a.ndim
        return pl.BlockSpec(a.shape, lambda n, z=zeros: z)

    grid_spec = pltpu.PrefetchScalarGridSpec(
        num_scalar_prefetch=0,
        grid=(n_steps,),
        in_specs=[
            pl.BlockSpec((BB, He, WCin), lambda n: (n, 0, 0)),
            pl.BlockSpec((BB, Ho, WCin), lambda n: (n, 0, 0)),
            _full(w1pair), _full(b1p),
            _full(w2pair), _full(b2p),
            _full(wl1b), _full(bl1r),
            _full(wl2m), _full(bl2r),
            _full(wl3m), _full(bl3r),
        ],
        out_specs=pl.BlockSpec((1, BB, Fp), lambda n: (n, 0, 0)),
        scratch_shapes=[pltpu.VMEM((BB, Hp1, P1L), jnp.float32)],
    )

    out = pl.pallas_call(
        kernel,
        out_shape=jax.ShapeDtypeStruct((n_steps, BB, Fp), jnp.float32),
        grid_spec=grid_spec,
        compiler_params=pltpu.CompilerParams(
            dimension_semantics=("parallel",)),
    )(x_even, x_odd, w1pair, b1p, w2pair, b2p,
      wl1b, bl1r, wl2m, bl2r, wl3m, bl3r)

    return out.reshape(Np, Fp)[:N, :F]


def init_params(key, n_in, c1, c2, k, l1, l2, f):
    """Deterministic synthetic parameters in PyTorch layout conventions."""
    ks = jax.random.split(key, 10)

    def w(kk, shape, fan_in):
        return jax.random.normal(kk, shape, jnp.float32) / np.sqrt(fan_in)

    return {
        "conv1_w": w(ks[0], (c1, n_in, k, k), n_in * k * k),
        "conv1_b": w(ks[1], (c1,), n_in * k * k),
        "conv2_w": w(ks[2], (c2, c1, k, k), c1 * k * k),
        "conv2_b": w(ks[3], (c2,), c1 * k * k),
        "lin1_w": w(ks[4], (l1, c2 * k * k), c2 * k * k),
        "lin1_b": w(ks[5], (l1,), c2 * k * k),
        "lin2_w": w(ks[6], (l2, l1), l1),
        "lin2_b": w(ks[7], (l2,), l1),
        "lin3_w": w(ks[8], (f, l2), l2),
        "lin3_b": w(ks[9], (f,), l2),
    }


def reference_forward(x, p):
    """Pure-JAX replica of the PyTorch forward (NCHW), for verification."""
    hi = jax.lax.Precision.HIGHEST

    def conv(x, w, b):
        y = lax.conv_general_dilated(x, w, (1, 1), "VALID",
                                     dimension_numbers=("NCHW", "OIHW", "NCHW"),
                                     precision=hi)
        return y + b[None, :, None, None]

    def pool(x):
        return lax.reduce_window(x, -jnp.inf, lax.max,
                                 (1, 1, 2, 2), (1, 1, 2, 2), "VALID")

    x = pool(jax.nn.relu(conv(x, p["conv1_w"], p["conv1_b"])))
    x = pool(jax.nn.relu(conv(x, p["conv2_w"], p["conv2_b"])))
    x = x.reshape(x.shape[0], -1)
    x = jax.nn.relu(jnp.dot(x, p["lin1_w"].T, precision=hi) + p["lin1_b"])
    x = jax.nn.relu(jnp.dot(x, p["lin2_w"].T, precision=hi) + p["lin2_b"])
    return jnp.dot(x, p["lin3_w"].T, precision=hi) + p["lin3_b"]


if __name__ == "__main__":
    # testNet(n_in=4, layer1_conv_out=8, layer2_conv_out=8, conv_size=3,
    #         linear1_out=32, linear2_out=16, final_out=10)
    n_in, c1, c2, k = 4, 8, 8, 3
    l1, l2, f = 32, 16, 10
    # spatial 18: conv->16, pool->8, conv->6, pool->3 == conv_size (flatten fits)
    N, H, W = 2, 18, 18

    key = jax.random.PRNGKey(0)
    kx, kp = jax.random.split(key)
    x = jax.random.normal(kx, (N, n_in, H, W), jnp.float32)
    params = init_params(kp, n_in, c1, c2, k, l1, l2, f)

    out = jax.block_until_ready(testnet_forward(x, params))
    assert out.shape == (N, f)

    ref = reference_forward(x, params)
    # kernel dots use precision=HIGHEST, so this tolerance is generous slack
    np.testing.assert_allclose(np.asarray(out), np.asarray(ref),
                               rtol=2e-2, atol=2e-2)

    print("KERNEL_OK")
</pallas_src>

<mosaic_0001>
module attributes {stable_mosaic.version = 11 : i64} {
  func.func @kernel(%arg0: i32, %arg1: memref<1x9x72xf32, #tpu.memory_space<vmem>>, %arg2: memref<1x9x72xf32, #tpu.memory_space<vmem>>, %arg3: memref<4x72x256xf32, #tpu.memory_space<vmem>>, %arg4: memref<1x256xf32, #tpu.memory_space<vmem>>, %arg5: memref<4x120x96xf32, #tpu.memory_space<vmem>>, %arg6: memref<1x96xf32, #tpu.memory_space<vmem>>, %arg7: memref<3x40x32xf32, #tpu.memory_space<vmem>>, %arg8: memref<1x32xf32, #tpu.memory_space<vmem>>, %arg9: memref<32x16xf32, #tpu.memory_space<vmem>>, %arg10: memref<1x16xf32, #tpu.memory_space<vmem>>, %arg11: memref<16x128xf32, #tpu.memory_space<vmem>>, %arg12: memref<1x128xf32, #tpu.memory_space<vmem>>, %arg13: memref<1x1x128xf32, #tpu.memory_space<vmem>>, %arg14: memref<1x8x120xf32, #tpu.memory_space<vmem>>) attributes {dimension_semantics = [#tpu.dimension_semantics<parallel>], iteration_bounds = array<i64: 2>, scalar_prefetch = 0 : i64, scratch_operands = 1 : i64, tpu.core_type = #tpu.core_type<tc>, window_params = [{transform_indices = @transform_0, window_bounds = array<i64: 1, 9, 72>}, {transform_indices = @transform_1, window_bounds = array<i64: 1, 9, 72>}, {pipeline_mode = #tpu.pipeline_mode<synchronous>, transform_indices = @transform_2, window_bounds = array<i64: 4, 72, 256>}, {pipeline_mode = #tpu.pipeline_mode<synchronous>, transform_indices = @transform_3, window_bounds = array<i64: 1, 256>}, {pipeline_mode = #tpu.pipeline_mode<synchronous>, transform_indices = @transform_4, window_bounds = array<i64: 4, 120, 96>}, {pipeline_mode = #tpu.pipeline_mode<synchronous>, transform_indices = @transform_5, window_bounds = array<i64: 1, 96>}, {pipeline_mode = #tpu.pipeline_mode<synchronous>, transform_indices = @transform_6, window_bounds = array<i64: 3, 40, 32>}, {pipeline_mode = #tpu.pipeline_mode<synchronous>, transform_indices = @transform_7, window_bounds = array<i64: 1, 32>}, {pipeline_mode = #tpu.pipeline_mode<synchronous>, transform_indices = @transform_8, window_bounds = array<i64: 32, 16>}, {pipeline_mode = #tpu.pipeline_mode<synchronous>, transform_indices = @transform_9, window_bounds = array<i64: 1, 16>}, {pipeline_mode = #tpu.pipeline_mode<synchronous>, transform_indices = @transform_10, window_bounds = array<i64: 16, 128>}, {pipeline_mode = #tpu.pipeline_mode<synchronous>, transform_indices = @transform_11, window_bounds = array<i64: 1, 128>}, {transform_indices = @transform_12, window_bounds = array<i64: 1, 1, 128>}]} {
    %c0 = arith.constant 0 : index
    %c0_0 = arith.constant 0 : index
    %c0_1 = arith.constant 0 : index
    %0 = vector.load %arg1[%c0, %c0_0, %c0_1] : memref<1x9x72xf32, #tpu.memory_space<vmem>>, vector<1x8x72xf32>
    %1 = vector.shape_cast %0 : vector<1x8x72xf32> to vector<8x72xf32>
    %c0_2 = arith.constant 0 : index
    %c0_3 = arith.constant 0 : index
    %c0_4 = arith.constant 0 : index
    %2 = vector.load %arg3[%c0_2, %c0_3, %c0_4] : memref<4x72x256xf32, #tpu.memory_space<vmem>>, vector<1x72x256xf32>
    %3 = vector.shape_cast %2 : vector<1x72x256xf32> to vector<72x256xf32>
    %cst = arith.constant dense<0.000000e+00> : vector<8x256xf32>
    %4 = tpu.matmul %1, %3, %cst {dimension_numbers = #tpu.dot_dimension_numbers<[1], [0], [0], [1], [0, 0, 1, 1], [], []>, precision = #tpu.contract_precision<fp32>} : vector<8x72xf32>, vector<72x256xf32>, vector<8x256xf32> -> vector<8x256xf32>
    %c0_5 = arith.constant 0 : index
    %c0_6 = arith.constant 0 : index
    %c0_7 = arith.constant 0 : index
    %5 = vector.load %arg2[%c0_5, %c0_6, %c0_7] : memref<1x9x72xf32, #tpu.memory_space<vmem>>, vector<1x8x72xf32>
    %6 = vector.shape_cast %5 : vector<1x8x72xf32> to vector<8x72xf32>
    %c1 = arith.constant 1 : index
    %c0_8 = arith.constant 0 : index
    %c0_9 = arith.constant 0 : index
    %7 = vector.load %arg3[%c1, %c0_8, %c0_9] : memref<4x72x256xf32, #tpu.memory_space<vmem>>, vector<1x72x256xf32>
    %8 = vector.shape_cast %7 : vector<1x72x256xf32> to vector<72x256xf32>
    %cst_10 = arith.constant dense<0.000000e+00> : vector<8x256xf32>
    %9 = tpu.matmul %6, %8, %cst_10 {dimension_numbers = #tpu.dot_dimension_numbers<[1], [0], [0], [1], [0, 0, 1, 1], [], []>, precision = #tpu.contract_precision<fp32>} : vector<8x72xf32>, vector<72x256xf32>, vector<8x256xf32> -> vector<8x256xf32>
    %10 = arith.addf %4, %9 : vector<8x256xf32>
    %c0_11 = arith.constant 0 : index
    %c1_12 = arith.constant 1 : index
    %c0_13 = arith.constant 0 : index
    %11 = vector.load %arg1[%c0_11, %c1_12, %c0_13] : memref<1x9x72xf32, #tpu.memory_space<vmem>>, vector<1x8x72xf32>
    %12 = vector.shape_cast %11 : vector<1x8x72xf32> to vector<8x72xf32>
    %c2 = arith.constant 2 : index
    %c0_14 = arith.constant 0 : index
    %c0_15 = arith.constant 0 : index
    %13 = vector.load %arg3[%c2, %c0_14, %c0_15] : memref<4x72x256xf32, #tpu.memory_space<vmem>>, vector<1x72x256xf32>
    %14 = vector.shape_cast %13 : vector<1x72x256xf32> to vector<72x256xf32>
    %cst_16 = arith.constant dense<0.000000e+00> : vector<8x256xf32>
    %15 = tpu.matmul %12, %14, %cst_16 {dimension_numbers = #tpu.dot_dimension_numbers<[1], [0], [0], [1], [0, 0, 1, 1], [], []>, precision = #tpu.contract_precision<fp32>} : vector<8x72xf32>, vector<72x256xf32>, vector<8x256xf32> -> vector<8x256xf32>
    %16 = arith.addf %10, %15 : vector<8x256xf32>
    %c0_17 = arith.constant 0 : index
    %c1_18 = arith.constant 1 : index
    %c0_19 = arith.constant 0 : index
    %17 = vector.load %arg2[%c0_17, %c1_18, %c0_19] : memref<1x9x72xf32, #tpu.memory_space<vmem>>, vector<1x8x72xf32>
    %18 = vector.shape_cast %17 : vector<1x8x72xf32> to vector<8x72xf32>
    %c3 = arith.constant 3 : index
    %c0_20 = arith.constant 0 : index
    %c0_21 = arith.constant 0 : index
    %19 = vector.load %arg3[%c3, %c0_20, %c0_21] : memref<4x72x256xf32, #tpu.memory_space<vmem>>, vector<1x72x256xf32>
    %20 = vector.shape_cast %19 : vector<1x72x256xf32> to vector<72x256xf32>
    %cst_22 = arith.constant dense<0.000000e+00> : vector<8x256xf32>
    %21 = tpu.matmul %18, %20, %cst_22 {dimension_numbers = #tpu.dot_dimension_numbers<[1], [0], [0], [1], [0, 0, 1, 1], [], []>, precision = #tpu.contract_precision<fp32>} : vector<8x72xf32>, vector<72x256xf32>, vector<8x256xf32> -> vector<8x256xf32>
    %22 = arith.addf %16, %21 : vector<8x256xf32>
    %c0_23 = arith.constant 0 : index
    %c0_24 = arith.constant 0 : index
    %23 = vector.load %arg4[%c0_23, %c0_24] : memref<1x256xf32, #tpu.memory_space<vmem>>, vector<1x256xf32>
    %24 = vector.broadcast %23 : vector<1x256xf32> to vector<8x256xf32>
    %25 = arith.addf %22, %24 : vector<8x256xf32>
    %cst_25 = arith.constant 0.000000e+00 : f32
    %26 = vector.broadcast %cst_25 : f32 to vector<8x256xf32>
    %27 = arith.maximumf %25, %26 : vector<8x256xf32>
    %28 = vector.extract_strided_slice %27 {offsets = [0, 0], sizes = [8, 128], strides = [1, 1]} : vector<8x256xf32> to vector<8x128xf32>
    %29 = vector.extract_strided_slice %27 {offsets = [0, 128], sizes = [8, 128], strides = [1, 1]} : vector<8x256xf32> to vector<8x128xf32>
    %30 = arith.maximumf %28, %29 : vector<8x128xf32>
    %31 = vector.extract_strided_slice %30 {offsets = [0, 0], sizes = [8, 120], strides = [1, 1]} : vector<8x128xf32> to vector<8x120xf32>
    %32 = vector.extract_strided_slice %30 {offsets = [0, 8], sizes = [8, 120], strides = [1, 1]} : vector<8x128xf32> to vector<8x120xf32>
    %33 = arith.maximumf %31, %32 : vector<8x120xf32>
    %34 = vector.shape_cast %33 : vector<8x120xf32> to vector<1x8x120xf32>
    %c0_26 = arith.constant 0 : index
    %c0_27 = arith.constant 0 : index
    %c0_28 = arith.constant 0 : index
    %35 = vector.load %arg14[%c0_26, %c0_27, %c0_28] : memref<1x8x120xf32, #tpu.memory_space<vmem>>, vector<1x8x120xf32>
    tpu.vector_store %arg14[%c0_26, %c0_27, %c0_28], %34 {strides = array<i32>} : memref<1x8x120xf32, #tpu.memory_space<vmem>>, vector<1x8x120xf32>,
    %c0_29 = arith.constant 0 : index
    %c0_30 = arith.constant 0 : index
    %c0_31 = arith.constant 0 : index
    %36 = vector.load %arg14[%c0_29, %c0_30, %c0_31] : memref<1x8x120xf32, #tpu.memory_space<vmem>>, vector<1x1x120xf32>
    %37 = vector.shape_cast %36 : vector<1x1x120xf32> to vector<1x120xf32>
    %c0_32 = arith.constant 0 : index
    %c0_33 = arith.constant 0 : index
    %c0_34 = arith.constant 0 : index
    %38 = vector.load %arg5[%c0_32, %c0_33, %c0_34] : memref<4x120x96xf32, #tpu.memory_space<vmem>>, vector<1x120x96xf32>
    %39 = vector.shape_cast %38 : vector<1x120x96xf32> to vector<120x96xf32>
    %cst_35 = arith.constant dense<0.000000e+00> : vector<1x96xf32>
    %40 = tpu.matmul %37, %39, %cst_35 {dimension_numbers = #tpu.dot_dimension_numbers<[1], [0], [0], [1], [0, 0, 1, 1], [], []>, precision = #tpu.contract_precision<fp32>} : vector<1x120xf32>, vector<120x96xf32>, vector<1x96xf32> -> vector<1x96xf32>
    %c0_36 = arith.constant 0 : index
    %c1_37 = arith.constant 1 : index
    %c0_38 = arith.constant 0 : index
    %41 = vector.load %arg14[%c0_36, %c1_37, %c0_38] : memref<1x8x120xf32, #tpu.memory_space<vmem>>, vector<1x1x120xf32>
    %42 = vector.shape_cast %41 : vector<1x1x120xf32> to vector<1x120xf32>
    %c1_39 = arith.constant 1 : index
    %c0_40 = arith.constant 0 : index
    %c0_41 = arith.constant 0 : index
    %43 = vector.load %arg5[%c1_39, %c0_40, %c0_41] : memref<4x120x96xf32, #tpu.memory_space<vmem>>, vector<1x120x96xf32>
    %44 = vector.shape_cast %43 : vector<1x120x96xf32> to vector<120x96xf32>
    %cst_42 = arith.constant dense<0.000000e+00> : vector<1x96xf32>
    %45 = tpu.matmul %42, %44, %cst_42 {dimension_numbers = #tpu.dot_dimension_numbers<[1], [0], [0], [1], [0, 0, 1, 1], [], []>, precision = #tpu.contract_precision<fp32>} : vector<1x120xf32>, vector<120x96xf32>, vector<1x96xf32> -> vector<1x96xf32>
    %46 = arith.addf %40, %45 : vector<1x96xf32>
    %c0_43 = arith.constant 0 : index
    %c2_44 = arith.constant 2 : index
    %c0_45 = arith.constant 0 : index
    %47 = vector.load %arg14[%c0_43, %c2_44, %c0_45] : memref<1x8x120xf32, #tpu.memory_space<vmem>>, vector<1x1x120xf32>
    %48 = vector.shape_cast %47 : vector<1x1x120xf32> to vector<1x120xf32>
    %c2_46 = arith.constant 2 : index
    %c0_47 = arith.constant 0 : index
    %c0_48 = arith.constant 0 : index
    %49 = vector.load %arg5[%c2_46, %c0_47, %c0_48] : memref<4x120x96xf32, #tpu.memory_space<vmem>>, vector<1x120x96xf32>
    %50 = vector.shape_cast %49 : vector<1x120x96xf32> to vector<120x96xf32>
    %cst_49 = arith.constant dense<0.000000e+00> : vector<1x96xf32>
    %51 = tpu.matmul %48, %50, %cst_49 {dimension_numbers = #tpu.dot_dimension_numbers<[1], [0], [0], [1], [0, 0, 1, 1], [], []>, precision = #tpu.contract_precision<fp32>} : vector<1x120xf32>, vector<120x96xf32>, vector<1x96xf32> -> vector<1x96xf32>
    %52 = arith.addf %46, %51 : vector<1x96xf32>
    %c0_50 = arith.constant 0 : index
    %c3_51 = arith.constant 3 : index
    %c0_52 = arith.constant 0 : index
    %53 = vector.load %arg14[%c0_50, %c3_51, %c0_52] : memref<1x8x120xf32, #tpu.memory_space<vmem>>, vector<1x1x120xf32>
    %54 = vector.shape_cast %53 : vector<1x1x120xf32> to vector<1x120xf32>
    %c3_53 = arith.constant 3 : index
    %c0_54 = arith.constant 0 : index
    %c0_55 = arith.constant 0 : index
    %55 = vector.load %arg5[%c3_53, %c0_54, %c0_55] : memref<4x120x96xf32, #tpu.memory_space<vmem>>, vector<1x120x96xf32>
    %56 = vector.shape_cast %55 : vector<1x120x96xf32> to vector<120x96xf32>
    %cst_56 = arith.constant dense<0.000000e+00> : vector<1x96xf32>
    %57 = tpu.matmul %54, %56, %cst_56 {dimension_numbers = #tpu.dot_dimension_numbers<[1], [0], [0], [1], [0, 0, 1, 1], [], []>, precision = #tpu.contract_precision<fp32>} : vector<1x120xf32>, vector<120x96xf32>, vector<1x96xf32> -> vector<1x96xf32>
    %58 = arith.addf %52, %57 : vector<1x96xf32>
    %c0_57 = arith.constant 0 : index
    %c0_58 = arith.constant 0 : index
    %59 = vector.load %arg6[%c0_57, %c0_58] : memref<1x96xf32, #tpu.memory_space<vmem>>, vector<1x96xf32>
    %60 = arith.addf %58, %59 : vector<1x96xf32>
    %cst_59 = arith.constant 0.000000e+00 : f32
    %61 = vector.broadcast %cst_59 : f32 to vector<1x96xf32>
    %62 = arith.maximumf %60, %61 : vector<1x96xf32>
    %63 = vector.extract_strided_slice %62 {offsets = [0, 0], sizes = [1, 48], strides = [1, 1]} : vector<1x96xf32> to vector<1x48xf32>
    %64 = vector.extract_strided_slice %62 {offsets = [0, 48], sizes = [1, 48], strides = [1, 1]} : vector<1x96xf32> to vector<1x48xf32>
    %65 = arith.maximumf %63, %64 : vector<1x48xf32>
    %66 = vector.extract_strided_slice %65 {offsets = [0, 0], sizes = [1, 40], strides = [1, 1]} : vector<1x48xf32> to vector<1x40xf32>
    %67 = vector.extract_strided_slice %65 {offsets = [0, 8], sizes = [1, 40], strides = [1, 1]} : vector<1x48xf32> to vector<1x40xf32>
    %68 = arith.maximumf %66, %67 : vector<1x40xf32>
    %c0_60 = arith.constant 0 : index
    %c0_61 = arith.constant 0 : index
    %c0_62 = arith.constant 0 : index
    %69 = vector.load %arg7[%c0_60, %c0_61, %c0_62] : memref<3x40x32xf32, #tpu.memory_space<vmem>>, vector<1x40x32xf32>
    %70 = vector.shape_cast %69 : vector<1x40x32xf32> to vector<40x32xf32>
    %cst_63 = arith.constant dense<0.000000e+00> : vector<1x32xf32>
    %71 = tpu.matmul %68, %70, %cst_63 {dimension_numbers = #tpu.dot_dimension_numbers<[1], [0], [0], [1], [0, 0, 1, 1], [], []>, precision = #tpu.contract_precision<fp32>} : vector<1x40xf32>, vector<40x32xf32>, vector<1x32xf32> -> vector<1x32xf32>
    %c0_64 = arith.constant 0 : index
    %c2_65 = arith.constant 2 : index
    %c0_66 = arith.constant 0 : index
    %72 = vector.load %arg14[%c0_64, %c2_65, %c0_66] : memref<1x8x120xf32, #tpu.memory_space<vmem>>, vector<1x1x120xf32>
    %73 = vector.shape_cast %72 : vector<1x1x120xf32> to vector<1x120xf32>
    %c0_67 = arith.constant 0 : index
    %c0_68 = arith.constant 0 : index
    %c0_69 = arith.constant 0 : index
    %74 = vector.load %arg5[%c0_67, %c0_68, %c0_69] : memref<4x120x96xf32, #tpu.memory_space<vmem>>, vector<1x120x96xf32>
    %75 = vector.shape_cast %74 : vector<1x120x96xf32> to vector<120x96xf32>
    %cst_70 = arith.constant dense<0.000000e+00> : vector<1x96xf32>
    %76 = tpu.matmul %73, %75, %cst_70 {dimension_numbers = #tpu.dot_dimension_numbers<[1], [0], [0], [1], [0, 0, 1, 1], [], []>, precision = #tpu.contract_precision<fp32>} : vector<1x120xf32>, vector<120x96xf32>, vector<1x96xf32> -> vector<1x96xf32>
    %c0_71 = arith.constant 0 : index
    %c3_72 = arith.constant 3 : index
    %c0_73 = arith.constant 0 : index
    %77 = vector.load %arg14[%c0_71, %c3_72, %c0_73] : memref<1x8x120xf32, #tpu.memory_space<vmem>>, vector<1x1x120xf32>
    %78 = vector.shape_cast %77 : vector<1x1x120xf32> to vector<1x120xf32>
    %c1_74 = arith.constant 1 : index
    %c0_75 = arith.constant 0 : index
    %c0_76 = arith.constant 0 : index
    %79 = vector.load %arg5[%c1_74, %c0_75, %c0_76] : memref<4x120x96xf32, #tpu.memory_space<vmem>>, vector<1x120x96xf32>
    %80 = vector.shape_cast %79 : vector<1x120x96xf32> to vector<120x96xf32>
    %cst_77 = arith.constant dense<0.000000e+00> : vector<1x96xf32>
    %81 = tpu.matmul %78, %80, %cst_77 {dimension_numbers = #tpu.dot_dimension_numbers<[1], [0], [0], [1], [0, 0, 1, 1], [], []>, precision = #tpu.contract_precision<fp32>} : vector<1x120xf32>, vector<120x96xf32>, vector<1x96xf32> -> vector<1x96xf32>
    %82 = arith.addf %76, %81 : vector<1x96xf32>
    %c0_78 = arith.constant 0 : index
    %c4 = arith.constant 4 : index
    %c0_79 = arith.constant 0 : index
    %83 = vector.load %arg14[%c0_78, %c4, %c0_79] : memref<1x8x120xf32, #tpu.memory_space<vmem>>, vector<1x1x120xf32>
    %84 = vector.shape_cast %83 : vector<1x1x120xf32> to vector<1x120xf32>
    %c2_80 = arith.constant 2 : index
    %c0_81 = arith.constant 0 : index
    %c0_82 = arith.constant 0 : index
    %85 = vector.load %arg5[%c2_80, %c0_81, %c0_82] : memref<4x120x96xf32, #tpu.memory_space<vmem>>, vector<1x120x96xf32>
    %86 = vector.shape_cast %85 : vector<1x120x96xf32> to vector<120x96xf32>
    %cst_83 = arith.constant dense<0.000000e+00> : vector<1x96xf32>
    %87 = tpu.matmul %84, %86, %cst_83 {dimension_numbers = #tpu.dot_dimension_numbers<[1], [0], [0], [1], [0, 0, 1, 1], [], []>, precision = #tpu.contract_precision<fp32>} : vector<1x120xf32>, vector<120x96xf32>, vector<1x96xf32> -> vector<1x96xf32>
    %88 = arith.addf %82, %87 : vector<1x96xf32>
    %c0_84 = arith.constant 0 : index
    %c5 = arith.constant 5 : index
    %c0_85 = arith.constant 0 : index
    %89 = vector.load %arg14[%c0_84, %c5, %c0_85] : memref<1x8x120xf32, #tpu.memory_space<vmem>>, vector<1x1x120xf32>
    %90 = vector.shape_cast %89 : vector<1x1x120xf32> to vector<1x120xf32>
    %c3_86 = arith.constant 3 : index
    %c0_87 = arith.constant 0 : index
    %c0_88 = arith.constant 0 : index
    %91 = vector.load %arg5[%c3_86, %c0_87, %c0_88] : memref<4x120x96xf32, #tpu.memory_space<vmem>>, vector<1x120x96xf32>
    %92 = vector.shape_cast %91 : vector<1x120x96xf32> to vector<120x96xf32>
    %cst_89 = arith.constant dense<0.000000e+00> : vector<1x96xf32>
    %93 = tpu.matmul %90, %92, %cst_89 {dimension_numbers = #tpu.dot_dimension_numbers<[1], [0], [0], [1], [0, 0, 1, 1], [], []>, precision = #tpu.contract_precision<fp32>} : vector<1x120xf32>, vector<120x96xf32>, vector<1x96xf32> -> vector<1x96xf32>
    %94 = arith.addf %88, %93 : vector<1x96xf32>
    %c0_90 = arith.constant 0 : index
    %c0_91 = arith.constant 0 : index
    %95 = vector.load %arg6[%c0_90, %c0_91] : memref<1x96xf32, #tpu.memory_space<vmem>>, vector<1x96xf32>
    %96 = arith.addf %94, %95 : vector<1x96xf32>
    %cst_92 = arith.constant 0.000000e+00 : f32
    %97 = vector.broadcast %cst_92 : f32 to vector<1x96xf32>
    %98 = arith.maximumf %96, %97 : vector<1x96xf32>
    %99 = vector.extract_strided_slice %98 {offsets = [0, 0], sizes = [1, 48], strides = [1, 1]} : vector<1x96xf32> to vector<1x48xf32>
    %100 = vector.extract_strided_slice %98 {offsets = [0, 48], sizes = [1, 48], strides = [1, 1]} : vector<1x96xf32> to vector<1x48xf32>
    %101 = arith.maximumf %99, %100 : vector<1x48xf32>
    %102 = vector.extract_strided_slice %101 {offsets = [0, 0], sizes = [1, 40], strides = [1, 1]} : vector<1x48xf32> to vector<1x40xf32>
    %103 = vector.extract_strided_slice %101 {offsets = [0, 8], sizes = [1, 40], strides = [1, 1]} : vector<1x48xf32> to vector<1x40xf32>
    %104 = arith.maximumf %102, %103 : vector<1x40xf32>
    %c1_93 = arith.constant 1 : index
    %c0_94 = arith.constant 0 : index
    %c0_95 = arith.constant 0 : index
    %105 = vector.load %arg7[%c1_93, %c0_94, %c0_95] : memref<3x40x32xf32, #tpu.memory_space<vmem>>, vector<1x40x32xf32>
    %106 = vector.shape_cast %105 : vector<1x40x32xf32> to vector<40x32xf32>
    %cst_96 = arith.constant dense<0.000000e+00> : vector<1x32xf32>
    %107 = tpu.matmul %104, %106, %cst_96 {dimension_numbers = #tpu.dot_dimension_numbers<[1], [0], [0], [1], [0, 0, 1, 1], [], []>, precision = #tpu.contract_precision<fp32>} : vector<1x40xf32>, vector<40x32xf32>, vector<1x32xf32> -> vector<1x32xf32>
    %108 = arith.addf %71, %107 : vector<1x32xf32>
    %c0_97 = arith.constant 0 : index
    %c4_98 = arith.constant 4 : index
    %c0_99 = arith.constant 0 : index
    %109 = vector.load %arg14[%c0_97, %c4_98, %c0_99] : memref<1x8x120xf32, #tpu.memory_space<vmem>>, vector<1x1x120xf32>
    %110 = vector.shape_cast %109 : vector<1x1x120xf32> to vector<1x120xf32>
    %c0_100 = arith.constant 0 : index
    %c0_101 = arith.constant 0 : index
    %c0_102 = arith.constant 0 : index
    %111 = vector.load %arg5[%c0_100, %c0_101, %c0_102] : memref<4x120x96xf32, #tpu.memory_space<vmem>>, vector<1x120x96xf32>
    %112 = vector.shape_cast %111 : vector<1x120x96xf32> to vector<120x96xf32>
    %cst_103 = arith.constant dense<0.000000e+00> : vector<1x96xf32>
    %113 = tpu.matmul %110, %112, %cst_103 {dimension_numbers = #tpu.dot_dimension_numbers<[1], [0], [0], [1], [0, 0, 1, 1], [], []>, precision = #tpu.contract_precision<fp32>} : vector<1x120xf32>, vector<120x96xf32>, vector<1x96xf32> -> vector<1x96xf32>
    %c0_104 = arith.constant 0 : index
    %c5_105 = arith.constant 5 : index
    %c0_106 = arith.constant 0 : index
    %114 = vector.load %arg14[%c0_104, %c5_105, %c0_106] : memref<1x8x120xf32, #tpu.memory_space<vmem>>, vector<1x1x120xf32>
    %115 = vector.shape_cast %114 : vector<1x1x120xf32> to vector<1x120xf32>
    %c1_107 = arith.constant 1 : index
    %c0_108 = arith.constant 0 : index
    %c0_109 = arith.constant 0 : index
    %116 = vector.load %arg5[%c1_107, %c0_108, %c0_109] : memref<4x120x96xf32, #tpu.memory_space<vmem>>, vector<1x120x96xf32>
    %117 = vector.shape_cast %116 : vector<1x120x96xf32> to vector<120x96xf32>
    %cst_110 = arith.constant dense<0.000000e+00> : vector<1x96xf32>
    %118 = tpu.matmul %115, %117, %cst_110 {dimension_numbers = #tpu.dot_dimension_numbers<[1], [0], [0], [1], [0, 0, 1, 1], [], []>, precision = #tpu.contract_precision<fp32>} : vector<1x120xf32>, vector<120x96xf32>, vector<1x96xf32> -> vector<1x96xf32>
    %119 = arith.addf %113, %118 : vector<1x96xf32>
    %c0_111 = arith.constant 0 : index
    %c6 = arith.constant 6 : index
    %c0_112 = arith.constant 0 : index
    %120 = vector.load %arg14[%c0_111, %c6, %c0_112] : memref<1x8x120xf32, #tpu.memory_space<vmem>>, vector<1x1x120xf32>
    %121 = vector.shape_cast %120 : vector<1x1x120xf32> to vector<1x120xf32>
    %c2_113 = arith.constant 2 : index
    %c0_114 = arith.constant 0 : index
    %c0_115 = arith.constant 0 : index
    %122 = vector.load %arg5[%c2_113, %c0_114, %c0_115] : memref<4x120x96xf32, #tpu.memory_space<vmem>>, vector<1x120x96xf32>
    %123 = vector.shape_cast %122 : vector<1x120x96xf32> to vector<120x96xf32>
    %cst_116 = arith.constant dense<0.000000e+00> : vector<1x96xf32>
    %124 = tpu.matmul %121, %123, %cst_116 {dimension_numbers = #tpu.dot_dimension_numbers<[1], [0], [0], [1], [0, 0, 1, 1], [], []>, precision = #tpu.contract_precision<fp32>} : vector<1x120xf32>, vector<120x96xf32>, vector<1x96xf32> -> vector<1x96xf32>
    %125 = arith.addf %119, %124 : vector<1x96xf32>
    %c0_117 = arith.constant 0 : index
    %c7 = arith.constant 7 : index
    %c0_118 = arith.constant 0 : index
    %126 = vector.load %arg14[%c0_117, %c7, %c0_118] : memref<1x8x120xf32, #tpu.memory_space<vmem>>, vector<1x1x120xf32>
    %127 = vector.shape_cast %126 : vector<1x1x120xf32> to vector<1x120xf32>
    %c3_119 = arith.constant 3 : index
    %c0_120 = arith.constant 0 : index
    %c0_121 = arith.constant 0 : index
    %128 = vector.load %arg5[%c3_119, %c0_120, %c0_121] : memref<4x120x96xf32, #tpu.memory_space<vmem>>, vector<1x120x96xf32>
    %129 = vector.shape_cast %128 : vector<1x120x96xf32> to vector<120x96xf32>
    %cst_122 = arith.constant dense<0.000000e+00> : vector<1x96xf32>
    %130 = tpu.matmul %127, %129, %cst_122 {dimension_numbers = #tpu.dot_dimension_numbers<[1], [0], [0], [1], [0, 0, 1, 1], [], []>, precision = #tpu.contract_precision<fp32>} : vector<1x120xf32>, vector<120x96xf32>, vector<1x96xf32> -> vector<1x96xf32>
    %131 = arith.addf %125, %130 : vector<1x96xf32>
    %c0_123 = arith.constant 0 : index
    %c0_124 = arith.constant 0 : index
    %132 = vector.load %arg6[%c0_123, %c0_124] : memref<1x96xf32, #tpu.memory_space<vmem>>, vector<1x96xf32>
    %133 = arith.addf %131, %132 : vector<1x96xf32>
    %cst_125 = arith.constant 0.000000e+00 : f32
    %134 = vector.broadcast %cst_125 : f32 to vector<1x96xf32>
    %135 = arith.maximumf %133, %134 : vector<1x96xf32>
    %136 = vector.extract_strided_slice %135 {offsets = [0, 0], sizes = [1, 48], strides = [1, 1]} : vector<1x96xf32> to vector<1x48xf32>
    %137 = vector.extract_strided_slice %135 {offsets = [0, 48], sizes = [1, 48], strides = [1, 1]} : vector<1x96xf32> to vector<1x48xf32>
    %138 = arith.maximumf %136, %137 : vector<1x48xf32>
    %139 = vector.extract_strided_slice %138 {offsets = [0, 0], sizes = [1, 40], strides = [1, 1]} : vector<1x48xf32> to vector<1x40xf32>
    %140 = vector.extract_strided_slice %138 {offsets = [0, 8], sizes = [1, 40], strides = [1, 1]} : vector<1x48xf32> to vector<1x40xf32>
    %141 = arith.maximumf %139, %140 : vector<1x40xf32>
    %c2_126 = arith.constant 2 : index
    %c0_127 = arith.constant 0 : index
    %c0_128 = arith.constant 0 : index
    %142 = vector.load %arg7[%c2_126, %c0_127, %c0_128] : memref<3x40x32xf32, #tpu.memory_space<vmem>>, vector<1x40x32xf32>
    %143 = vector.shape_cast %142 : vector<1x40x32xf32> to vector<40x32xf32>
    %cst_129 = arith.constant dense<0.000000e+00> : vector<1x32xf32>
    %144 = tpu.matmul %141, %143, %cst_129 {dimension_numbers = #tpu.dot_dimension_numbers<[1], [0], [0], [1], [0, 0, 1, 1], [], []>, precision = #tpu.contract_precision<fp32>} : vector<1x40xf32>, vector<40x32xf32>, vector<1x32xf32> -> vector<1x32xf32>
    %145 = arith.addf %108, %144 : vector<1x32xf32>
    %c0_130 = arith.constant 0 : index
    %c0_131 = arith.constant 0 : index
    %146 = vector.load %arg8[%c0_130, %c0_131] : memref<1x32xf32, #tpu.memory_space<vmem>>, vector<1x32xf32>
    %147 = arith.addf %145, %146 : vector<1x32xf32>
    %cst_132 = arith.constant 0.000000e+00 : f32
    %148 = vector.broadcast %cst_132 : f32 to vector<1x32xf32>
    %149 = arith.maximumf %147, %148 : vector<1x32xf32>
    %c0_133 = arith.constant 0 : index
    %c0_134 = arith.constant 0 : index
    %150 = vector.load %arg9[%c0_133, %c0_134] : memref<32x16xf32, #tpu.memory_space<vmem>>, vector<32x16xf32>
    %cst_135 = arith.constant dense<0.000000e+00> : vector<1x16xf32>
    %151 = tpu.matmul %149, %150, %cst_135 {dimension_numbers = #tpu.dot_dimension_numbers<[1], [0], [0], [1], [0, 0, 1, 1], [], []>, precision = #tpu.contract_precision<fp32>} : vector<1x32xf32>, vector<32x16xf32>, vector<1x16xf32> -> vector<1x16xf32>
    %c0_136 = arith.constant 0 : index
    %c0_137 = arith.constant 0 : index
    %152 = vector.load %arg10[%c0_136, %c0_137] : memref<1x16xf32, #tpu.memory_space<vmem>>, vector<1x16xf32>
    %153 = arith.addf %151, %152 : vector<1x16xf32>
    %cst_138 = arith.constant 0.000000e+00 : f32
    %154 = vector.broadcast %cst_138 : f32 to vector<1x16xf32>
    %155 = arith.maximumf %153, %154 : vector<1x16xf32>
    %c0_139 = arith.constant 0 : index
    %c0_140 = arith.constant 0 : index
    %156 = vector.load %arg11[%c0_139, %c0_140] : memref<16x128xf32, #tpu.memory_space<vmem>>, vector<16x128xf32>
    %cst_141 = arith.constant dense<0.000000e+00> : vector<1x128xf32>
    %157 = tpu.matmul %155, %156, %cst_141 {dimension_numbers = #tpu.dot_dimension_numbers<[1], [0], [0], [1], [0, 0, 1, 1], [], []>, precision = #tpu.contract_precision<fp32>} : vector<1x16xf32>, vector<16x128xf32>, vector<1x128xf32> -> vector<1x128xf32>
    %c0_142 = arith.constant 0 : index
    %c0_143 = arith.constant 0 : index
    %158 = vector.load %arg12[%c0_142, %c0_143] : memref<1x128xf32, #tpu.memory_space<vmem>>, vector<1x128xf32>
    %159 = arith.addf %157, %158 : vector<1x128xf32>
    %c0_144 = arith.constant 0 : index
    %c0_145 = arith.constant 0 : index
    %c0_146 = arith.constant 0 : index
    %160 = vector.load %arg13[%c0_144, %c0_145, %c0_146] : memref<1x1x128xf32, #tpu.memory_space<vmem>>, vector<1x1x128xf32>
    %161 = vector.shape_cast %160 : vector<1x1x128xf32> to vector<1x128xf32>
    %162 = vector.shape_cast %159 : vector<1x128xf32> to vector<1x1x128xf32>
    tpu.vector_store %arg13[%c0_144, %c0_145, %c0_146], %162 {strides = array<i32>} : memref<1x1x128xf32, #tpu.memory_space<vmem>>, vector<1x1x128xf32>,
    return
  }
  func.func @transform_0(%arg0: i32) -> (i32, i32, i32) {
    %c0_i32 = arith.constant 0 : i32
    %c0_i32_0 = arith.constant 0 : i32
    %c0_i32_1 = arith.constant 0 : i32
    return %arg0, %c0_i32, %c0_i32_0 : i32, i32, i32
  }
  func.func @transform_1(%arg0: i32) -> (i32, i32, i32) {
    %c0_i32 = arith.constant 0 : i32
    %c0_i32_0 = arith.constant 0 : i32
    %c0_i32_1 = arith.constant 0 : i32
    return %arg0, %c0_i32, %c0_i32_0 : i32, i32, i32
  }
  func.func @transform_2(%arg0: i32) -> (i32, i32, i32) {
    %c0_i32 = arith.constant 0 : i32
    %c0_i32_0 = arith.constant 0 : i32
    %c0_i32_1 = arith.constant 0 : i32
    %c0_i32_2 = arith.constant 0 : i32
    return %c0_i32, %c0_i32_0, %c0_i32_1 : i32, i32, i32
  }
  func.func @transform_3(%arg0: i32) -> (i32, i32) {
    %c0_i32 = arith.constant 0 : i32
    %c0_i32_0 = arith.constant 0 : i32
    %c0_i32_1 = arith.constant 0 : i32
    return %c0_i32, %c0_i32_0 : i32, i32
  }
  func.func @transform_4(%arg0: i32) -> (i32, i32, i32) {
    %c0_i32 = arith.constant 0 : i32
    %c0_i32_0 = arith.constant 0 : i32
    %c0_i32_1 = arith.constant 0 : i32
    %c0_i32_2 = arith.constant 0 : i32
    return %c0_i32, %c0_i32_0, %c0_i32_1 : i32, i32, i32
  }
  func.func @transform_5(%arg0: i32) -> (i32, i32) {
    %c0_i32 = arith.constant 0 : i32
    %c0_i32_0 = arith.constant 0 : i32
    %c0_i32_1 = arith.constant 0 : i32
    return %c0_i32, %c0_i32_0 : i32, i32
  }
  func.func @transform_6(%arg0: i32) -> (i32, i32, i32) {
    %c0_i32 = arith.constant 0 : i32
    %c0_i32_0 = arith.constant 0 : i32
    %c0_i32_1 = arith.constant 0 : i32
    %c0_i32_2 = arith.constant 0 : i32
    return %c0_i32, %c0_i32_0, %c0_i32_1 : i32, i32, i32
  }
  func.func @transform_7(%arg0: i32) -> (i32, i32) {
    %c0_i32 = arith.constant 0 : i32
    %c0_i32_0 = arith.constant 0 : i32
    %c0_i32_1 = arith.constant 0 : i32
    return %c0_i32, %c0_i32_0 : i32, i32
  }
  func.func @transform_8(%arg0: i32) -> (i32, i32) {
    %c0_i32 = arith.constant 0 : i32
    %c0_i32_0 = arith.constant 0 : i32
    %c0_i32_1 = arith.constant 0 : i32
    return %c0_i32, %c0_i32_0 : i32, i32
  }
  func.func @transform_9(%arg0: i32) -> (i32, i32) {
    %c0_i32 = arith.constant 0 : i32
    %c0_i32_0 = arith.constant 0 : i32
    %c0_i32_1 = arith.constant 0 : i32
    return %c0_i32, %c0_i32_0 : i32, i32
  }
  func.func @transform_10(%arg0: i32) -> (i32, i32) {
    %c0_i32 = arith.constant 0 : i32
    %c0_i32_0 = arith.constant 0 : i32
    %c0_i32_1 = arith.constant 0 : i32
    return %c0_i32, %c0_i32_0 : i32, i32
  }
  func.func @transform_11(%arg0: i32) -> (i32, i32) {
    %c0_i32 = arith.constant 0 : i32
    %c0_i32_0 = arith.constant 0 : i32
    %c0_i32_1 = arith.constant 0 : i32
    return %c0_i32, %c0_i32_0 : i32, i32
  }
  func.func @transform_12(%arg0: i32) -> (i32, i32, i32) {
    %c0_i32 = arith.constant 0 : i32
    %c0_i32_0 = arith.constant 0 : i32
    %c0_i32_1 = arith.constant 0 : i32
    return %arg0, %c0_i32, %c0_i32_0 : i32, i32, i32
  }
}

</mosaic_0001>

<llo_original>
// kernel: tpu_custom_call.1
$region0: #{tpu_custom_call.1}
  #allocation0 [shape = 'u32[]', space=smem, size = 0x4, offset = 0x4, fixed_abs, tag = 'smem constant byte address 0x4 - core index']
  #allocation1 [shape = 'u32[72,128]{1,0:T(1,128)}', space=vmem, size = 0x9000, scoped, tag = 'internal scratch']
  #allocation2 [shape = 'f32[1,8,120]{2,1,0:T(8,128)}', space=vmem, size = 0x1000, scoped, tag = 'scratch operand']
  %s0 = inlined_call_operand.vmem [shape: f32[2,9,72], index: 0, kind: input, shape index: {}]
  %s1 = inlined_call_operand.vmem [shape: f32[2,9,72], index: 1, kind: input, shape index: {}]
  %s2 = inlined_call_operand.vmem [shape: f32[4,72,256], index: 2, kind: input, shape index: {}]
  %s3 = inlined_call_operand.vmem [shape: f32[1,256], index: 3, kind: input, shape index: {}]
  %s4 = inlined_call_operand.vmem [shape: f32[4,120,96], index: 4, kind: input, shape index: {}]
  %s5 = inlined_call_operand.vmem [shape: f32[1,96], index: 5, kind: input, shape index: {}]
  %s6 = inlined_call_operand.vmem [shape: f32[3,40,32], index: 6, kind: input, shape index: {}]
  %s7 = inlined_call_operand.vmem [shape: f32[1,32], index: 7, kind: input, shape index: {}]
  %s8 = inlined_call_operand.vmem [shape: f32[32,16], index: 8, kind: input, shape index: {}]
  %s9 = inlined_call_operand.vmem [shape: f32[1,16], index: 9, kind: input, shape index: {}]
  %s10 = inlined_call_operand.vmem [shape: f32[16,128], index: 10, kind: input, shape index: {}]
  %s11 = inlined_call_operand.vmem [shape: f32[1,128], index: 11, kind: input, shape index: {}]
  %s12 = inlined_call_operand.hbm [shape: f32[2,1,128], index: 12, kind: output, shape index: {}]
  %s13 = sld [smem:[#allocation0]]
  $region81: #{tpu_custom_call.1} parent=0
    _
  %s15 = ssub.s32 1, %s13
  %s16 = scalar_select 0, %s15, %s13
  $region1: #{tpu_custom_call.1} parent=0
    #allocation3 [shape = 'u8[1024]{0}', space=vmem, size = 0x400, scoped, tag = 'output window, operand 0']
    #allocation4 [shape = 's32[2]{0}', space=sflag, size = 0x8, scoped, tag = 'scoped memory for tpu_custom_call.1']
    %17 = vsyncpa [#allocation4], 0
    %s18 = scalar_lea.sflag [#allocation4], 1
    %19 = vsyncpa %s18, 0
    loop: start=0, step=1, limit=4
    $region2: #{tpu_custom_call.1} parent=1 // loop_pre_header
      _
    $region3: #{tpu_custom_call.1} parent=1 // loop_header
      %s21 = sphi 0, %s25
      %p22 = scmp.ge.s32.totalorder %s21, 4
      %s31 = sphi 0, %s33
      %s34 = sphi 0, %s31
      %s35 = sphi 0, %s34
      %s51 = sphi 0, %s35
      %s57 = sphi 0, %s59
      %s60 = sphi 0, %s57
      %s61 = sphi 0, %s60
      %s77 = sphi 0, %s61
      %s81 = sphi 0, %s81
      %s83 = sphi 0, %s81
      %s84 = sphi 0, %s83
      %s98 = sphi 0, %s84
      %s102 = sphi 0, %s102
      %s104 = sphi 0, %s102
      %s105 = sphi 0, %s104
      %s119 = sphi 0, %s105
      %s123 = sphi 0, %s123
      %s125 = sphi 0, %s123
      %s126 = sphi 0, %s125
      %s140 = sphi 0, %s126
      %s144 = sphi 0, %s144
      %s146 = sphi 0, %s144
      %s147 = sphi 0, %s146
      %s161 = sphi 0, %s147
      %s165 = sphi 0, %s165
      %s167 = sphi 0, %s165
      %s168 = sphi 0, %s167
      %s182 = sphi 0, %s168
      %s186 = sphi 0, %s186
      %s188 = sphi 0, %s186
      %s189 = sphi 0, %s188
      %s203 = sphi 0, %s189
      %s207 = sphi 0, %s207
      %s209 = sphi 0, %s207
      %s210 = sphi 0, %s209
      %s224 = sphi 0, %s210
      %s228 = sphi 0, %s228
      %s230 = sphi 0, %s228
      %s231 = sphi 0, %s230
      %s245 = sphi 0, %s231
      %s249 = sphi 0, %s249
      %s251 = sphi 0, %s249
      %s252 = sphi 0, %s251
      %s266 = sphi 0, %s252
      %s270 = sphi 0, %s270
      %s272 = sphi 0, %s270
      %s273 = sphi 0, %s272
      %s287 = sphi 0, %s273
      %s293 = sphi 0, %s295
      %s296 = sphi 0, %s293
      %s297 = sphi 0, %s296
      %s313 = sphi 0, %s297
    $region4: #{tpu_custom_call.1} parent=1 // loop_header_branch
      %24 = sbr.rel (%p22) target = $region8
    $region5: #{tpu_custom_call.1} parent=1 // loop_body
      %s26 = ssub.s32 %s21, 1
      %s27 = ssub.s32 %s21, 2
      %s28 = sadd.s32 %s21, 1
      %s29 = ssub.s32 %s21, %s28
      %p30 = scmp.eq.s32.totalorder %s29, 0
      %s32 = sadd.s32 %s31, 1
      %s33 = scalar_select %p30, %s31, %s32
      %p36 = pneg %p30
      %p37 = scmp.eq.s32.totalorder %s21, 1
      %p38 = por %p36, %p37
      %p39 = scmp.ne.s32.totalorder %s31, %s34
      %p40 = scmp.eq.s32.totalorder %s21, 0
      %p41 = por %p39, %p40
      %p42 = scmp.ne.s32.totalorder %s31, %s34
      %p43 = scmp.eq.s32.totalorder %s26, 1
      %p44 = por %p42, %p43
      %p45 = scmp.ne.s32.totalorder %s34, %s35
      %p46 = scmp.eq.s32.totalorder %s26, 0
      %p47 = por %p45, %p46
      %p48 = scmp.ne.s32.totalorder %s34, %s35
      %p49 = scmp.eq.s32.totalorder %s27, 1
      %p50 = por %p48, %p49
      %p52 = scmp.ne.s32.totalorder %s35, %s51
      %p53 = scmp.eq.s32.totalorder %s27, 0
      %p54 = por %p52, %p53
      %s55 = ssub.s32 %s21, %s28
      %p56 = scmp.eq.s32.totalorder %s55, 0
      %s58 = sadd.s32 %s57, 1
      %s59 = scalar_select %p56, %s57, %s58
      %p62 = pneg %p56
      %p63 = scmp.eq.s32.totalorder %s21, 1
      %p64 = por %p62, %p63
      %p65 = scmp.ne.s32.totalorder %s57, %s60
      %p66 = scmp.eq.s32.totalorder %s21, 0
      %p67 = por %p65, %p66
      %p68 = scmp.ne.s32.totalorder %s57, %s60
      %p69 = scmp.eq.s32.totalorder %s26, 1
      %p70 = por %p68, %p69
      %p71 = scmp.ne.s32.totalorder %s60, %s61
      %p72 = scmp.eq.s32.totalorder %s26, 0
      %p73 = por %p71, %p72
      %p74 = scmp.ne.s32.totalorder %s60, %s61
      %p75 = scmp.eq.s32.totalorder %s27, 1
      %p76 = por %p74, %p75
      %p78 = scmp.ne.s32.totalorder %s61, %s77
      %p79 = scmp.eq.s32.totalorder %s27, 0
      %p80 = por %p78, %p79
      %s82 = sadd.s32 %s81, 1
      %p85 = scmp.eq.s32.totalorder %s21, 1
      %p86 = scmp.ne.s32.totalorder %s81, %s83
      %p87 = scmp.eq.s32.totalorder %s21, 0
      %p88 = por %p86, %p87
      %p89 = scmp.ne.s32.totalorder %s81, %s83
      %p90 = scmp.eq.s32.totalorder %s26, 1
      %p91 = por %p89, %p90
      %p92 = scmp.ne.s32.totalorder %s83, %s84
      %p93 = scmp.eq.s32.totalorder %s26, 0
      %p94 = por %p92, %p93
      %p95 = scmp.ne.s32.totalorder %s83, %s84
      %p96 = scmp.eq.s32.totalorder %s27, 1
      %p97 = por %p95, %p96
      %p99 = scmp.ne.s32.totalorder %s84, %s98
      %p100 = scmp.eq.s32.totalorder %s27, 0
      %p101 = por %p99, %p100
      %s103 = sadd.s32 %s102, 1
      %p106 = scmp.eq.s32.totalorder %s21, 1
      %p107 = scmp.ne.s32.totalorder %s102, %s104
      %p108 = scmp.eq.s32.totalorder %s21, 0
      %p109 = por %p107, %p108
      %p110 = scmp.ne.s32.totalorder %s102, %s104
      %p111 = scmp.eq.s32.totalorder %s26, 1
      %p112 = por %p110, %p111
      %p113 = scmp.ne.s32.totalorder %s104, %s105
      %p114 = scmp.eq.s32.totalorder %s26, 0
      %p115 = por %p113, %p114
      %p116 = scmp.ne.s32.totalorder %s104, %s105
      %p117 = scmp.eq.s32.totalorder %s27, 1
      %p118 = por %p116, %p117
      %p120 = scmp.ne.s32.totalorder %s105, %s119
      %p121 = scmp.eq.s32.totalorder %s27, 0
      %p122 = por %p120, %p121
      %s124 = sadd.s32 %s123, 1
      %p127 = scmp.eq.s32.totalorder %s21, 1
      %p128 = scmp.ne.s32.totalorder %s123, %s125
      %p129 = scmp.eq.s32.totalorder %s21, 0
      %p130 = por %p128, %p129
      %p131 = scmp.ne.s32.totalorder %s123, %s125
      %p132 = scmp.eq.s32.totalorder %s26, 1
      %p133 = por %p131, %p132
      %p134 = scmp.ne.s32.totalorder %s125, %s126
      %p135 = scmp.eq.s32.totalorder %s26, 0
      %p136 = por %p134, %p135
      %p137 = scmp.ne.s32.totalorder %s125, %s126
      %p138 = scmp.eq.s32.totalorder %s27, 1
      %p139 = por %p137, %p138
      %p141 = scmp.ne.s32.totalorder %s126, %s140
      %p142 = scmp.eq.s32.totalorder %s27, 0
      %p143 = por %p141, %p142
      %s145 = sadd.s32 %s144, 1
      %p148 = scmp.eq.s32.totalorder %s21, 1
      %p149 = scmp.ne.s32.totalorder %s144, %s146
      %p150 = scmp.eq.s32.totalorder %s21, 0
      %p151 = por %p149, %p150
      %p152 = scmp.ne.s32.totalorder %s144, %s146
      %p153 = scmp.eq.s32.totalorder %s26, 1
      %p154 = por %p152, %p153
      %p155 = scmp.ne.s32.totalorder %s146, %s147
      %p156 = scmp.eq.s32.totalorder %s26, 0
      %p157 = por %p155, %p156
      %p158 = scmp.ne.s32.totalorder %s146, %s147
      %p159 = scmp.eq.s32.totalorder %s27, 1
      %p160 = por %p158, %p159
      %p162 = scmp.ne.s32.totalorder %s147, %s161
      %p163 = scmp.eq.s32.totalorder %s27, 0
      %p164 = por %p162, %p163
      %s166 = sadd.s32 %s165, 1
      %p169 = scmp.eq.s32.totalorder %s21, 1
      %p170 = scmp.ne.s32.totalorder %s165, %s167
      %p171 = scmp.eq.s32.totalorder %s21, 0
      %p172 = por %p170, %p171
      %p173 = scmp.ne.s32.totalorder %s165, %s167
      %p174 = scmp.eq.s32.totalorder %s26, 1
      %p175 = por %p173, %p174
      %p176 = scmp.ne.s32.totalorder %s167, %s168
      %p177 = scmp.eq.s32.totalorder %s26, 0
      %p178 = por %p176, %p177
      %p179 = scmp.ne.s32.totalorder %s167, %s168
      %p180 = scmp.eq.s32.totalorder %s27, 1
      %p181 = por %p179, %p180
      %p183 = scmp.ne.s32.totalorder %s168, %s182
      %p184 = scmp.eq.s32.totalorder %s27, 0
      %p185 = por %p183, %p184
      %s187 = sadd.s32 %s186, 1
      %p190 = scmp.eq.s32.totalorder %s21, 1
      %p191 = scmp.ne.s32.totalorder %s186, %s188
      %p192 = scmp.eq.s32.totalorder %s21, 0
      %p193 = por %p191, %p192
      %p194 = scmp.ne.s32.totalorder %s186, %s188
      %p195 = scmp.eq.s32.totalorder %s26, 1
      %p196 = por %p194, %p195
      %p197 = scmp.ne.s32.totalorder %s188, %s189
      %p198 = scmp.eq.s32.totalorder %s26, 0
      %p199 = por %p197, %p198
      %p200 = scmp.ne.s32.totalorder %s188, %s189
      %p201 = scmp.eq.s32.totalorder %s27, 1
      %p202 = por %p200, %p201
      %p204 = scmp.ne.s32.totalorder %s189, %s203
      %p205 = scmp.eq.s32.totalorder %s27, 0
      %p206 = por %p204, %p205
      %s208 = sadd.s32 %s207, 1
      %p211 = scmp.eq.s32.totalorder %s21, 1
      %p212 = scmp.ne.s32.totalorder %s207, %s209
      %p213 = scmp.eq.s32.totalorder %s21, 0
      %p214 = por %p212, %p213
      %p215 = scmp.ne.s32.totalorder %s207, %s209
      %p216 = scmp.eq.s32.totalorder %s26, 1
      %p217 = por %p215, %p216
      %p218 = scmp.ne.s32.totalorder %s209, %s210
      %p219 = scmp.eq.s32.totalorder %s26, 0
      %p220 = por %p218, %p219
      %p221 = scmp.ne.s32.totalorder %s209, %s210
      %p222 = scmp.eq.s32.totalorder %s27, 1
      %p223 = por %p221, %p222
      %p225 = scmp.ne.s32.totalorder %s210, %s224
      %p226 = scmp.eq.s32.totalorder %s27, 0
      %p227 = por %p225, %p226
      %s229 = sadd.s32 %s228, 1
      %p232 = scmp.eq.s32.totalorder %s21, 1
      %p233 = scmp.ne.s32.totalorder %s228, %s230
      %p234 = scmp.eq.s32.totalorder %s21, 0
      %p235 = por %p233, %p234
      %p236 = scmp.ne.s32.totalorder %s228, %s230
      %p237 = scmp.eq.s32.totalorder %s26, 1
      %p238 = por %p236, %p237
      %p239 = scmp.ne.s32.totalorder %s230, %s231
      %p240 = scmp.eq.s32.totalorder %s26, 0
      %p241 = por %p239, %p240
      %p242 = scmp.ne.s32.totalorder %s230, %s231
      %p243 = scmp.eq.s32.totalorder %s27, 1
      %p244 = por %p242, %p243
      %p246 = scmp.ne.s32.totalorder %s231, %s245
      %p247 = scmp.eq.s32.totalorder %s27, 0
      %p248 = por %p246, %p247
      %s250 = sadd.s32 %s249, 1
      %p253 = scmp.eq.s32.totalorder %s21, 1
      %p254 = scmp.ne.s32.totalorder %s249, %s251
      %p255 = scmp.eq.s32.totalorder %s21, 0
      %p256 = por %p254, %p255
      %p257 = scmp.ne.s32.totalorder %s249, %s251
      %p258 = scmp.eq.s32.totalorder %s26, 1
      %p259 = por %p257, %p258
      %p260 = scmp.ne.s32.totalorder %s251, %s252
      %p261 = scmp.eq.s32.totalorder %s26, 0
      %p262 = por %p260, %p261
      %p263 = scmp.ne.s32.totalorder %s251, %s252
      %p264 = scmp.eq.s32.totalorder %s27, 1
      %p265 = por %p263, %p264
      %p267 = scmp.ne.s32.totalorder %s252, %s266
      %p268 = scmp.eq.s32.totalorder %s27, 0
      %p269 = por %p267, %p268
      %s271 = sadd.s32 %s270, 1
      %p274 = scmp.eq.s32.totalorder %s21, 1
      %p275 = scmp.ne.s32.totalorder %s270, %s272
      %p276 = scmp.eq.s32.totalorder %s21, 0
      %p277 = por %p275, %p276
      %p278 = scmp.ne.s32.totalorder %s270, %s272
      %p279 = scmp.eq.s32.totalorder %s26, 1
      %p280 = por %p278, %p279
      %p281 = scmp.ne.s32.totalorder %s272, %s273
      %p282 = scmp.eq.s32.totalorder %s26, 0
      %p283 = por %p281, %p282
      %p284 = scmp.ne.s32.totalorder %s272, %s273
      %p285 = scmp.eq.s32.totalorder %s27, 1
      %p286 = por %p284, %p285
      %p288 = scmp.ne.s32.totalorder %s273, %s287
      %p289 = scmp.eq.s32.totalorder %s27, 0
      %p290 = por %p288, %p289
      %s291 = ssub.s32 %s21, %s28
      %p292 = scmp.eq.s32.totalorder %s291, 0
      %s294 = sadd.s32 %s293, 1
      %s295 = scalar_select %p292, %s293, %s294
      %p298 = pneg %p292
      %p299 = scmp.eq.s32.totalorder %s21, 1
      %p300 = por %p298, %p299
      %p301 = scmp.ne.s32.totalorder %s293, %s296
      %p302 = scmp.eq.s32.totalorder %s21, 0
      %p303 = por %p301, %p302
      %p304 = scmp.ne.s32.totalorder %s293, %s296
      %p305 = scmp.eq.s32.totalorder %s26, 1
      %p306 = por %p304, %p305
      %p307 = scmp.ne.s32.totalorder %s296, %s297
      %p308 = scmp.eq.s32.totalorder %s26, 0
      %p309 = por %p307, %p308
      %p310 = scmp.ne.s32.totalorder %s296, %s297
      %p311 = scmp.eq.s32.totalorder %s27, 1
      %p312 = por %p310, %p311
      %p314 = scmp.ne.s32.totalorder %s297, %s313
      %p315 = scmp.eq.s32.totalorder %s27, 0
      %p316 = por %p314, %p315
      %p317 = scmp.le.s32.totalorder 1, %s21
      %p318 = scmp.lt.s32.totalorder %s21, 3
      %p319 = pnand %p317, %p318
      %p320 = pneg %p319
      // Predicated region
      $region9: #{tpu_custom_call.1} parent=5 // pred_check
        _
      $region10: #{tpu_custom_call.1} parent=5 // pred_check_branch
        %322 = sbr.rel (%p319) target = $region12
      $region11: #{tpu_custom_call.1} parent=5 // pred_region
        %s323 = ssub.s32 %s21, 1
        // Predicated region
        $region13: #{tpu_custom_call.1} parent=11 // pred_check
          %p324 = pneg %p94
        $region14: #{tpu_custom_call.1} parent=11 // pred_check_branch
          %326 = sbr.rel (%p324) target = $region16
        $region15: #{tpu_custom_call.1} parent=11 // pred_region
          _
        $region16: #{tpu_custom_call.1} parent=11 // pred_fallthru
          _
        // Predicated region
        $region17: #{tpu_custom_call.1} parent=11 // pred_check
          %p327 = pneg %p115
        $region18: #{tpu_custom_call.1} parent=11 // pred_check_branch
          %329 = sbr.rel (%p327) target = $region20
        $region19: #{tpu_custom_call.1} parent=11 // pred_region
          _
        $region20: #{tpu_custom_call.1} parent=11 // pred_fallthru
          _
        // Predicated region
        $region21: #{tpu_custom_call.1} parent=11 // pred_check
          %p330 = pneg %p136
        $region22: #{tpu_custom_call.1} parent=11 // pred_check_branch
          %332 = sbr.rel (%p330) target = $region24
        $region23: #{tpu_custom_call.1} parent=11 // pred_region
          _
        $region24: #{tpu_custom_call.1} parent=11 // pred_fallthru
          _
        // Predicated region
        $region25: #{tpu_custom_call.1} parent=11 // pred_check
          %p333 = pneg %p157
        $region26: #{tpu_custom_call.1} parent=11 // pred_check_branch
          %335 = sbr.rel (%p333) target = $region28
        $region27: #{tpu_custom_call.1} parent=11 // pred_region
          _
        $region28: #{tpu_custom_call.1} parent=11 // pred_fallthru
          _
        // Predicated region
        $region29: #{tpu_custom_call.1} parent=11 // pred_check
          %p336 = pneg %p178
        $region30: #{tpu_custom_call.1} parent=11 // pred_check_branch
          %338 = sbr.rel (%p336) target = $region32
        $region31: #{tpu_custom_call.1} parent=11 // pred_region
          _
        $region32: #{tpu_custom_call.1} parent=11 // pred_fallthru
          _
        // Predicated region
        $region33: #{tpu_custom_call.1} parent=11 // pred_check
          %p339 = pneg %p199
        $region34: #{tpu_custom_call.1} parent=11 // pred_check_branch
          %341 = sbr.rel (%p339) target = $region36
        $region35: #{tpu_custom_call.1} parent=11 // pred_region
          _
        $region36: #{tpu_custom_call.1} parent=11 // pred_fallthru
          _
        // Predicated region
        $region37: #{tpu_custom_call.1} parent=11 // pred_check
          %p342 = pneg %p220
        $region38: #{tpu_custom_call.1} parent=11 // pred_check_branch
          %344 = sbr.rel (%p342) target = $region40
        $region39: #{tpu_custom_call.1} parent=11 // pred_region
          _
        $region40: #{tpu_custom_call.1} parent=11 // pred_fallthru
          _
        // Predicated region
        $region41: #{tpu_custom_call.1} parent=11 // pred_check
          %p345 = pneg %p241
        $region42: #{tpu_custom_call.1} parent=11 // pred_check_branch
          %347 = sbr.rel (%p345) target = $region44
        $region43: #{tpu_custom_call.1} parent=11 // pred_region
          _
        $region44: #{tpu_custom_call.1} parent=11 // pred_fallthru
          _
        // Predicated region
        $region45: #{tpu_custom_call.1} parent=11 // pred_check
          %p348 = pneg %p262
        $region46: #{tpu_custom_call.1} parent=11 // pred_check_branch
          %350 = sbr.rel (%p348) target = $region48
        $region47: #{tpu_custom_call.1} parent=11 // pred_region
          _
        $region48: #{tpu_custom_call.1} parent=11 // pred_fallthru
          _
        // Predicated region
        $region49: #{tpu_custom_call.1} parent=11 // pred_check
          %p351 = pneg %p283
        $region50: #{tpu_custom_call.1} parent=11 // pred_check_branch
          %353 = sbr.rel (%p351) target = $region52
        $region51: #{tpu_custom_call.1} parent=11 // pred_region
          _
        $region52: #{tpu_custom_call.1} parent=11 // pred_fallthru
          _
      $region12: #{tpu_custom_call.1} parent=5 // pred_fallthru
        _
      %p354 = scmp.lt.s32.totalorder %s21, 2
      // Predicated region
      $region53: #{tpu_custom_call.1} parent=5 // pred_check
        %p355 = pneg %p354
      $region54: #{tpu_custom_call.1} parent=5 // pred_check_branch
        %357 = sbr.rel (%p355) target = $region56
      $region55: #{tpu_custom_call.1} parent=5 // pred_region
        // Predicated region
        $region57: #{tpu_custom_call.1} parent=55 // pred_check
          %p358 = pneg %p41
        $region58: #{tpu_custom_call.1} parent=55 // pred_check_branch
          %360 = sbr.rel (%p358) target = $region60
        $region59: #{tpu_custom_call.1} parent=55 // pred_region
          %p361 = scmp.lt.s32.totalorder %s21, 1
          %s362 = scalar_select %p361, %s21, 1
          %s363 = smul.addr %s362, 2
          %s364 = smul.addr %s363, 8
          %s365 = scalar_lea.vmem %s0, %s364
        $region60: #{tpu_custom_call.1} parent=55 // pred_fallthru
          _
        // Predicated region
        $region61: #{tpu_custom_call.1} parent=55 // pred_check
          %p366 = pneg %p67
        $region62: #{tpu_custom_call.1} parent=55 // pred_check_branch
          %368 = sbr.rel (%p366) target = $region64
        $region63: #{tpu_custom_call.1} parent=55 // pred_region
          %p369 = scmp.lt.s32.totalorder %s21, 1
          %s370 = scalar_select %p369, %s21, 1
          %s371 = smul.addr %s370, 2
          %s372 = smul.addr %s371, 8
          %s373 = scalar_lea.vmem %s1, %s372
        $region64: #{tpu_custom_call.1} parent=55 // pred_fallthru
          _
      $region56: #{tpu_custom_call.1} parent=5 // pred_fallthru
        _
      %p374 = scmp.le.s32.totalorder 1, %s21
      %p375 = scmp.lt.s32.totalorder %s21, 3
      %p376 = pnand %p374, %p375
      %p377 = pneg %p376
      // Predicated region
      $region65: #{tpu_custom_call.1} parent=5 // pred_check
        _
      $region66: #{tpu_custom_call.1} parent=5 // pred_check_branch
        %379 = sbr.rel (%p376) target = $region68
      $region67: #{tpu_custom_call.1} parent=5 // pred_region
        %s380 = ssub.s32 %s21, 1
        %p381 = scmp.lt.s32.totalorder %s26, 1
        %s382 = scalar_select %p381, %s26, 1
        %s383 = smul.addr %s382, 2
        %s384 = smul.addr %s383, 8
        %s385 = scalar_lea.vmem %s0, %s384
        %p386 = pneg %p47
        %p387 = pneg %p44
        %p388 = scmp.lt.s32.totalorder %s26, 1
        %s389 = scalar_select %p388, %s26, 1
        %s390 = smul.addr %s389, 2
        %s391 = smul.addr %s390, 8
        %s392 = scalar_lea.vmem %s1, %s391
        %p393 = pneg %p73
        %p394 = pneg %p70
        %p395 = pneg %p94
        %p396 = pneg %p91
        %p397 = pneg %p115
        %p398 = pneg %p112
        %p399 = pneg %p136
        %p400 = pneg %p133
        %p401 = pneg %p157
        %p402 = pneg %p154
        %p403 = pneg %p178
        %p404 = pneg %p175
        %p405 = pneg %p199
        %p406 = pneg %p196
        %p407 = pneg %p220
        %p408 = pneg %p217
        %p409 = pneg %p241
        %p410 = pneg %p238
        %p411 = pneg %p262
        %p412 = pneg %p259
        %p413 = pneg %p283
        %p414 = pneg %p280
        %p415 = pneg %p309
        %p416 = pneg %p306
        %s417 = sand.u32 %s296, 1
        %s418 = scalar_lea.sflag [#allocation4], %s417
        %s419 = sand.u32 %s296, 1
        %s420 = scalar_lea.vmem [#allocation3], %s419
        %p421 = scmp.lt.s32.totalorder %s26, 1
        %s422 = scalar_select %p421, %s26, 1
        %s423 = smul.addr %s422, 2
        %s424 = smul.addr %s423, 8
        %s425 = scalar_lea.vmem %s0, %s424
        %p426 = scmp.lt.s32.totalorder %s26, 1
        %s427 = scalar_select %p426, %s26, 1
        %s428 = smul.addr %s427, 2
        %s429 = smul.addr %s428, 8
        %s430 = scalar_lea.vmem %s1, %s429
        %v431 = vld [vmem:[%s425] sm:$0xff]
        %v432 = vld [vmem:[%s2] sm:$0xff]
        %v433 = vld [vmem:[%s2 + $0x8] sm:$0xff]
        %v434 = vld [vmem:[%s2 + $0x10] sm:$0xff]
        %v435 = vld [vmem:[%s2 + $0x18] sm:$0xff]
        %v436 = vld [vmem:[%s2 + $0x20] sm:$0xff]
        %v437 = vld [vmem:[%s2 + $0x28] sm:$0xff]
        %v438 = vld [vmem:[%s2 + $0x30] sm:$0xff]
        %v439 = vld [vmem:[%s2 + $0x38] sm:$0xff]
        %v440 = vld [vmem:[%s2 + $0x40] sm:$0xff]
        %v441 = vld [vmem:[%s2 + $0x48] sm:$0xff]
        %v442 = vld [vmem:[%s2 + $0x50] sm:$0xff]
        %v443 = vld [vmem:[%s2 + $0x58] sm:$0xff]
        %v444 = vld [vmem:[%s2 + $0x60] sm:$0xff]
        %v445 = vld [vmem:[%s2 + $0x68] sm:$0xff]
        %v446 = vld [vmem:[%s2 + $0x70] sm:$0xff]
        %v447 = vld [vmem:[%s2 + $0x78] sm:$0xff]
        %v448 = vld [vmem:[%s2 + $0x80] sm:$0xff]
        %v449 = vld [vmem:[%s2 + $0x88] sm:$0xff]
        %v450 = vld [vmem:[%s430] sm:$0xff]
        %s451 = scalar_lea.vmem %s2, 144
        %v452 = vld [vmem:[%s451] sm:$0xff]
        %v453 = vld [vmem:[%s451 + $0x8] sm:$0xff]
        %v454 = vld [vmem:[%s451 + $0x10] sm:$0xff]
        %v455 = vld [vmem:[%s451 + $0x18] sm:$0xff]
        %v456 = vld [vmem:[%s451 + $0x20] sm:$0xff]
        %v457 = vld [vmem:[%s451 + $0x28] sm:$0xff]
        %v458 = vld [vmem:[%s451 + $0x30] sm:$0xff]
        %v459 = vld [vmem:[%s451 + $0x38] sm:$0xff]
        %v460 = vld [vmem:[%s451 + $0x40] sm:$0xff]
        %v461 = vld [vmem:[%s451 + $0x48] sm:$0xff]
        %v462 = vld [vmem:[%s451 + $0x50] sm:$0xff]
        %v463 = vld [vmem:[%s451 + $0x58] sm:$0xff]
        %v464 = vld [vmem:[%s451 + $0x60] sm:$0xff]
        %v465 = vld [vmem:[%s451 + $0x68] sm:$0xff]
        %v466 = vld [vmem:[%s451 + $0x70] sm:$0xff]
        %v467 = vld [vmem:[%s451 + $0x78] sm:$0xff]
        %v468 = vld [vmem:[%s451 + $0x80] sm:$0xff]
        %v469 = vld [vmem:[%s451 + $0x88] sm:$0xff]
        %vm470 = vcmask 588800
        %v472 = vsel %vm470, %v450, 0
        %474 = vmatpush.msra.mxu0 0.0
        %475 = vmatpush.msra.mxu0 0.0
        %476 = vmatpush.msra.mxu0 0.0
        %477 = vmatpush.msra.mxu0 0.0
        %478 = vmatpush.msra.mxu0 0.0
        %479 = vmatpush.msra.mxu0 0.0
        %480 = vmatpush.msra.mxu0 0.0
        %v481 = vand.u32 %v468, 4294901760
        %482 = vmatpush.msra.mxu0 %v481
        %v483 = vand.u32 %v466, 4294901760
        %484 = vmatpush.msra.mxu0 %v483
        %v485 = vand.u32 %v464, 4294901760
        %486 = vmatpush.msra.mxu0 %v485
        %v487 = vand.u32 %v462, 4294901760
        %488 = vmatpush.msra.mxu0 %v487
        %v489 = vand.u32 %v460, 4294901760
        %490 = vmatpush.msra.mxu0 %v489
        %v491 = vand.u32 %v458, 4294901760
        %492 = vmatpush.msra.mxu0 %v491
        %v493 = vand.u32 %v456, 4294901760
        %494 = vmatpush.msra.mxu0 %v493
        %v495 = vand.u32 %v454, 4294901760
        %496 = vmatpush.msra.mxu0 %v495
        %v497 = vand.u32 %v452, 4294901760
        %498 = vmatpush.msra.mxu0 %v497
        %v499 = vand.u32 %v472, 4294901760
        %v500 = vsub.f32 %v472, %v499
        %v501 = vand.u32 %v500, 4294901760
        %v502 = vsub.f32 %v500, %v501
        %v503 = vand.u32 %v502, 4294901760
        %504 = vmatmul.f32.gmra.mxu0 %v503
        %v505 = vpop.f32.mrf.mxu0
        %v506 = vadd.f32 0.0, %v505
        %507 = vdwg.mxu0
        %508 = vmatpush.msra.mxu0 0.0
        %509 = vmatpush.msra.mxu0 0.0
        %510 = vmatpush.msra.mxu0 0.0
        %511 = vmatpush.msra.mxu0 0.0
        %512 = vmatpush.msra.mxu0 0.0
        %513 = vmatpush.msra.mxu0 0.0
        %514 = vmatpush.msra.mxu0 0.0
        %v515 = vand.u32 %v468, 4294901760
        %v516 = vsub.f32 %v468, %v515
        %v517 = vand.u32 %v516, 4294901760
        %v518 = vsub.f32 %v516, %v517
        %v519 = vand.u32 %v518, 4294901760
        %520 = vmatpush.msra.mxu0 %v519
        %v521 = vand.u32 %v466, 4294901760
        %v522 = vsub.f32 %v466, %v521
        %v523 = vand.u32 %v522, 4294901760
        %v524 = vsub.f32 %v522, %v523
        %v525 = vand.u32 %v524, 4294901760
        %526 = vmatpush.msra.mxu0 %v525
        %v527 = vand.u32 %v464, 4294901760
        %v528 = vsub.f32 %v464, %v527
        %v529 = vand.u32 %v528, 4294901760
        %v530 = vsub.f32 %v528, %v529
        %v531 = vand.u32 %v530, 4294901760
        %532 = vmatpush.msra.mxu0 %v531
        %v533 = vand.u32 %v462, 4294901760
        %v534 = vsub.f32 %v462, %v533
        %v535 = vand.u32 %v534, 4294901760
        %v536 = vsub.f32 %v534, %v535
        %v537 = vand.u32 %v536, 4294901760
        %538 = vmatpush.msra.mxu0 %v537
        %v539 = vand.u32 %v460, 4294901760
        %v540 = vsub.f32 %v460, %v539
        %v541 = vand.u32 %v540, 4294901760
        %v542 = vsub.f32 %v540, %v541
        %v543 = vand.u32 %v542, 4294901760
        %544 = vmatpush.msra.mxu0 %v543
        %v545 = vand.u32 %v458, 4294901760
        %v546 = vsub.f32 %v458, %v545
        %v547 = vand.u32 %v546, 4294901760
        %v548 = vsub.f32 %v546, %v547
        %v549 = vand.u32 %v548, 4294901760
        %550 = vmatpush.msra.mxu0 %v549
        %v551 = vand.u32 %v456, 4294901760
        %v552 = vsub.f32 %v456, %v551
        %v553 = vand.u32 %v552, 4294901760
        %v554 = vsub.f32 %v552, %v553
        %v555 = vand.u32 %v554, 4294901760
        %556 = vmatpush.msra.mxu0 %v555
        %v557 = vand.u32 %v454, 4294901760
        %v558 = vsub.f32 %v454, %v557
        %v559 = vand.u32 %v558, 4294901760
        %v560 = vsub.f32 %v558, %v559
        %v561 = vand.u32 %v560, 4294901760
        %562 = vmatpush.msra.mxu0 %v561
        %v563 = vand.u32 %v452, 4294901760
        %v564 = vsub.f32 %v452, %v563
        %v565 = vand.u32 %v564, 4294901760
        %v566 = vsub.f32 %v564, %v565
        %v567 = vand.u32 %v566, 4294901760
        %568 = vmatpush.msra.mxu0 %v567
        %v569 = vand.u32 %v472, 4294901760
        %570 = vmatmul.f32.gmra.mxu0 %v569
        %v571 = vpop.f32.mrf.mxu0
        %v572 = vadd.f32 %v506, %v571
        %573 = vdwg.mxu0
        %574 = vmatpush.msra.mxu0 0.0
        %575 = vmatpush.msra.mxu0 0.0
        %576 = vmatpush.msra.mxu0 0.0
        %577 = vmatpush.msra.mxu0 0.0
        %578 = vmatpush.msra.mxu0 0.0
        %579 = vmatpush.msra.mxu0 0.0
        %580 = vmatpush.msra.mxu0 0.0
        %v581 = vand.u32 %v468, 4294901760
        %v582 = vsub.f32 %v468, %v581
        %583 = vmatpush.msra.mxu0 %v582
        %v584 = vand.u32 %v466, 4294901760
        %v585 = vsub.f32 %v466, %v584
        %586 = vmatpush.msra.mxu0 %v585
        %v587 = vand.u32 %v464, 4294901760
        %v588 = vsub.f32 %v464, %v587
        %589 = vmatpush.msra.mxu0 %v588
        %v590 = vand.u32 %v462, 4294901760
        %v591 = vsub.f32 %v462, %v590
        %592 = vmatpush.msra.mxu0 %v591
        %v593 = vand.u32 %v460, 4294901760
        %v594 = vsub.f32 %v460, %v593
        %595 = vmatpush.msra.mxu0 %v594
        %v596 = vand.u32 %v458, 4294901760
        %v597 = vsub.f32 %v458, %v596
        %598 = vmatpush.msra.mxu0 %v597
        %v599 = vand.u32 %v456, 4294901760
        %v600 = vsub.f32 %v456, %v599
        %601 = vmatpush.msra.mxu0 %v600
        %v602 = vand.u32 %v454, 4294901760
        %v603 = vsub.f32 %v454, %v602
        %604 = vmatpush.msra.mxu0 %v603
        %v605 = vand.u32 %v452, 4294901760
        %v606 = vsub.f32 %v452, %v605
        %607 = vmatpush.msra.mxu0 %v606
        %v608 = vand.u32 %v472, 4294901760
        %v609 = vsub.f32 %v472, %v608
        %610 = vmatmul.f32.gmra.mxu0 %v609
        %v611 = vpop.f32.mrf.mxu0
        %v612 = vadd.f32 %v572, %v611
        %613 = vdwg.mxu0
        %614 = vmatpush.msra.mxu0 0.0
        %615 = vmatpush.msra.mxu0 0.0
        %616 = vmatpush.msra.mxu0 0.0
        %617 = vmatpush.msra.mxu0 0.0
        %618 = vmatpush.msra.mxu0 0.0
        %619 = vmatpush.msra.mxu0 0.0
        %620 = vmatpush.msra.mxu0 0.0
        %v621 = vand.u32 %v468, 4294901760
        %622 = vmatpush.msra.mxu0 %v621
        %v623 = vand.u32 %v466, 4294901760
        %624 = vmatpush.msra.mxu0 %v623
        %v625 = vand.u32 %v464, 4294901760
        %626 = vmatpush.msra.mxu0 %v625
        %v627 = vand.u32 %v462, 4294901760
        %628 = vmatpush.msra.mxu0 %v627
        %v629 = vand.u32 %v460, 4294901760
        %630 = vmatpush.msra.mxu0 %v629
        %v631 = vand.u32 %v458, 4294901760
        %632 = vmatpush.msra.mxu0 %v631
        %v633 = vand.u32 %v456, 4294901760
        %634 = vmatpush.msra.mxu0 %v633
        %v635 = vand.u32 %v454, 4294901760
        %636 = vmatpush.msra.mxu0 %v635
        %v637 = vand.u32 %v452, 4294901760
        %638 = vmatpush.msra.mxu0 %v637
        %v639 = vand.u32 %v472, 4294901760
        %v640 = vsub.f32 %v472, %v639
        %v641 = vand.u32 %v640, 4294901760
        %642 = vmatmul.f32.gmra.mxu0 %v641
        %v643 = vpop.f32.mrf.mxu0
        %v644 = vadd.f32 %v612, %v643
        %645 = vdwg.mxu0
        %646 = vmatpush.msra.mxu0 0.0
        %647 = vmatpush.msra.mxu0 0.0
        %648 = vmatpush.msra.mxu0 0.0
        %649 = vmatpush.msra.mxu0 0.0
        %650 = vmatpush.msra.mxu0 0.0
        %651 = vmatpush.msra.mxu0 0.0
        %652 = vmatpush.msra.mxu0 0.0
        %v653 = vand.u32 %v468, 4294901760
        %v654 = vsub.f32 %v468, %v653
        %v655 = vand.u32 %v654, 4294901760
        %656 = vmatpush.msra.mxu0 %v655
        %v657 = vand.u32 %v466, 4294901760
        %v658 = vsub.f32 %v466, %v657
        %v659 = vand.u32 %v658, 4294901760
        %660 = vmatpush.msra.mxu0 %v659
        %v661 = vand.u32 %v464, 4294901760
        %v662 = vsub.f32 %v464, %v661
        %v663 = vand.u32 %v662, 4294901760
        %664 = vmatpush.msra.mxu0 %v663
        %v665 = vand.u32 %v462, 4294901760
        %v666 = vsub.f32 %v462, %v665
        %v667 = vand.u32 %v666, 4294901760
        %668 = vmatpush.msra.mxu0 %v667
        %v669 = vand.u32 %v460, 4294901760
        %v670 = vsub.f32 %v460, %v669
        %v671 = vand.u32 %v670, 4294901760
        %672 = vmatpush.msra.mxu0 %v671
        %v673 = vand.u32 %v458, 4294901760
        %v674 = vsub.f32 %v458, %v673
        %v675 = vand.u32 %v674, 4294901760
        %676 = vmatpush.msra.mxu0 %v675
        %v677 = vand.u32 %v456, 4294901760
        %v678 = vsub.f32 %v456, %v677
        %v679 = vand.u32 %v678, 4294901760
        %680 = vmatpush.msra.mxu0 %v679
        %v681 = vand.u32 %v454, 4294901760
        %v682 = vsub.f32 %v454, %v681
        %v683 = vand.u32 %v682, 4294901760
        %684 = vmatpush.msra.mxu0 %v683
        %v685 = vand.u32 %v452, 4294901760
        %v686 = vsub.f32 %v452, %v685
        %v687 = vand.u32 %v686, 4294901760
        %688 = vmatpush.msra.mxu0 %v687
        %v689 = vand.u32 %v472, 4294901760
        %690 = vmatmul.f32.gmra.mxu0 %v689
        %v691 = vpop.f32.mrf.mxu0
        %v692 = vadd.f32 %v644, %v691
        %693 = vdwg.mxu0
        %694 = vmatpush.msra.mxu0 0.0
        %695 = vmatpush.msra.mxu0 0.0
        %696 = vmatpush.msra.mxu0 0.0
        %697 = vmatpush.msra.mxu0 0.0
        %698 = vmatpush.msra.mxu0 0.0
        %699 = vmatpush.msra.mxu0 0.0
        %700 = vmatpush.msra.mxu0 0.0
        %v701 = vand.u32 %v468, 4294901760
        %702 = vmatpush.msra.mxu0 %v701
        %v703 = vand.u32 %v466, 4294901760
        %704 = vmatpush.msra.mxu0 %v703
        %v705 = vand.u32 %v464, 4294901760
        %706 = vmatpush.msra.mxu0 %v705
        %v707 = vand.u32 %v462, 4294901760
        %708 = vmatpush.msra.mxu0 %v707
        %v709 = vand.u32 %v460, 4294901760
        %710 = vmatpush.msra.mxu0 %v709
        %v711 = vand.u32 %v458, 4294901760
        %712 = vmatpush.msra.mxu0 %v711
        %v713 = vand.u32 %v456, 4294901760
        %714 = vmatpush.msra.mxu0 %v713
        %v715 = vand.u32 %v454, 4294901760
        %716 = vmatpush.msra.mxu0 %v715
        %v717 = vand.u32 %v452, 4294901760
        %718 = vmatpush.msra.mxu0 %v717
        %v719 = vand.u32 %v472, 4294901760
        %720 = vmatmul.f32.gmra.mxu0 %v719
        %v721 = vpop.f32.mrf.mxu0
        %v722 = vadd.f32 %v692, %v721
        %723 = vdwg.mxu0
        %724 = vmatpush.msra.mxu0 0.0
        %725 = vmatpush.msra.mxu0 0.0
        %726 = vmatpush.msra.mxu0 0.0
        %727 = vmatpush.msra.mxu0 0.0
        %728 = vmatpush.msra.mxu0 0.0
        %729 = vmatpush.msra.mxu0 0.0
        %730 = vmatpush.msra.mxu0 0.0
        %v731 = vand.u32 %v469, 4294901760
        %732 = vmatpush.msra.mxu0 %v731
        %v733 = vand.u32 %v467, 4294901760
        %734 = vmatpush.msra.mxu0 %v733
        %v735 = vand.u32 %v465, 4294901760
        %736 = vmatpush.msra.mxu0 %v735
        %v737 = vand.u32 %v463, 4294901760
        %738 = vmatpush.msra.mxu0 %v737
        %v739 = vand.u32 %v461, 4294901760
        %740 = vmatpush.msra.mxu0 %v739
        %v741 = vand.u32 %v459, 4294901760
        %742 = vmatpush.msra.mxu0 %v741
        %v743 = vand.u32 %v457, 4294901760
        %744 = vmatpush.msra.mxu0 %v743
        %v745 = vand.u32 %v455, 4294901760
        %746 = vmatpush.msra.mxu0 %v745
        %v747 = vand.u32 %v453, 4294901760
        %748 = vmatpush.msra.mxu0 %v747
        %v749 = vand.u32 %v472, 4294901760
        %v750 = vsub.f32 %v472, %v749
        %v751 = vand.u32 %v750, 4294901760
        %v752 = vsub.f32 %v750, %v751
        %v753 = vand.u32 %v752, 4294901760
        %754 = vmatmul.f32.gmra.mxu0 %v753
        %v755 = vpop.f32.mrf.mxu0
        %v756 = vadd.f32 0.0, %v755
        %757 = vdwg.mxu0
        %758 = vmatpush.msra.mxu0 0.0
        %759 = vmatpush.msra.mxu0 0.0
        %760 = vmatpush.msra.mxu0 0.0
        %761 = vmatpush.msra.mxu0 0.0
        %762 = vmatpush.msra.mxu0 0.0
        %763 = vmatpush.msra.mxu0 0.0
        %764 = vmatpush.msra.mxu0 0.0
        %v765 = vand.u32 %v469, 4294901760
        %v766 = vsub.f32 %v469, %v765
        %v767 = vand.u32 %v766, 4294901760
        %v768 = vsub.f32 %v766, %v767
        %v769 = vand.u32 %v768, 4294901760
        %770 = vmatpush.msra.mxu0 %v769
        %v771 = vand.u32 %v467, 4294901760
        %v772 = vsub.f32 %v467, %v771
        %v773 = vand.u32 %v772, 4294901760
        %v774 = vsub.f32 %v772, %v773
        %v775 = vand.u32 %v774, 4294901760
        %776 = vmatpush.msra.mxu0 %v775
        %v777 = vand.u32 %v465, 4294901760
        %v778 = vsub.f32 %v465, %v777
        %v779 = vand.u32 %v778, 4294901760
        %v780 = vsub.f32 %v778, %v779
        %v781 = vand.u32 %v780, 4294901760
        %782 = vmatpush.msra.mxu0 %v781
        %v783 = vand.u32 %v463, 4294901760
        %v784 = vsub.f32 %v463, %v783
        %v785 = vand.u32 %v784, 4294901760
        %v786 = vsub.f32 %v784, %v785
        %v787 = vand.u32 %v786, 4294901760
        %788 = vmatpush.msra.mxu0 %v787
        %v789 = vand.u32 %v461, 4294901760
        %v790 = vsub.f32 %v461, %v789
        %v791 = vand.u32 %v790, 4294901760
        %v792 = vsub.f32 %v790, %v791
        %v793 = vand.u32 %v792, 4294901760
        %794 = vmatpush.msra.mxu0 %v793
        %v795 = vand.u32 %v459, 4294901760
        %v796 = vsub.f32 %v459, %v795
        %v797 = vand.u32 %v796, 4294901760
        %v798 = vsub.f32 %v796, %v797
        %v799 = vand.u32 %v798, 4294901760
        %800 = vmatpush.msra.mxu0 %v799
        %v801 = vand.u32 %v457, 4294901760
        %v802 = vsub.f32 %v457, %v801
        %v803 = vand.u32 %v802, 4294901760
        %v804 = vsub.f32 %v802, %v803
        %v805 = vand.u32 %v804, 4294901760
        %806 = vmatpush.msra.mxu0 %v805
        %v807 = vand.u32 %v455, 4294901760
        %v808 = vsub.f32 %v455, %v807
        %v809 = vand.u32 %v808, 4294901760
        %v810 = vsub.f32 %v808, %v809
        %v811 = vand.u32 %v810, 4294901760
        %812 = vmatpush.msra.mxu0 %v811
        %v813 = vand.u32 %v453, 4294901760
        %v814 = vsub.f32 %v453, %v813
        %v815 = vand.u32 %v814, 4294901760
        %v816 = vsub.f32 %v814, %v815
        %v817 = vand.u32 %v816, 4294901760
        %818 = vmatpush.msra.mxu0 %v817
        %v819 = vand.u32 %v472, 4294901760
        %820 = vmatmul.f32.gmra.mxu0 %v819
        %v821 = vpop.f32.mrf.mxu0
        %v822 = vadd.f32 %v756, %v821
        %823 = vdwg.mxu0
        %824 = vmatpush.msra.mxu0 0.0
        %825 = vmatpush.msra.mxu0 0.0
        %826 = vmatpush.msra.mxu0 0.0
        %827 = vmatpush.msra.mxu0 0.0
        %828 = vmatpush.msra.mxu0 0.0
        %829 = vmatpush.msra.mxu0 0.0
        %830 = vmatpush.msra.mxu0 0.0
        %v831 = vand.u32 %v469, 4294901760
        %v832 = vsub.f32 %v469, %v831
        %833 = vmatpush.msra.mxu0 %v832
        %v834 = vand.u32 %v467, 4294901760
        %v835 = vsub.f32 %v467, %v834
        %836 = vmatpush.msra.mxu0 %v835
        %v837 = vand.u32 %v465, 4294901760
        %v838 = vsub.f32 %v465, %v837
        %839 = vmatpush.msra.mxu0 %v838
        %v840 = vand.u32 %v463, 4294901760
        %v841 = vsub.f32 %v463, %v840
        %842 = vmatpush.msra.mxu0 %v841
        %v843 = vand.u32 %v461, 4294901760
        %v844 = vsub.f32 %v461, %v843
        %845 = vmatpush.msra.mxu0 %v844
        %v846 = vand.u32 %v459, 4294901760
        %v847 = vsub.f32 %v459, %v846
        %848 = vmatpush.msra.mxu0 %v847
        %v849 = vand.u32 %v457, 4294901760
        %v850 = vsub.f32 %v457, %v849
        %851 = vmatpush.msra.mxu0 %v850
        %v852 = vand.u32 %v455, 4294901760
        %v853 = vsub.f32 %v455, %v852
        %854 = vmatpush.msra.mxu0 %v853
        %v855 = vand.u32 %v453, 4294901760
        %v856 = vsub.f32 %v453, %v855
        %857 = vmatpush.msra.mxu0 %v856
        %v858 = vand.u32 %v472, 4294901760
        %v859 = vsub.f32 %v472, %v858
        %860 = vmatmul.f32.gmra.mxu0 %v859
        %v861 = vpop.f32.mrf.mxu0
        %v862 = vadd.f32 %v822, %v861
        %863 = vdwg.mxu0
        %864 = vmatpush.msra.mxu0 0.0
        %865 = vmatpush.msra.mxu0 0.0
        %866 = vmatpush.msra.mxu0 0.0
        %867 = vmatpush.msra.mxu0 0.0
        %868 = vmatpush.msra.mxu0 0.0
        %869 = vmatpush.msra.mxu0 0.0
        %870 = vmatpush.msra.mxu0 0.0
        %v871 = vand.u32 %v469, 4294901760
        %872 = vmatpush.msra.mxu0 %v871
        %v873 = vand.u32 %v467, 4294901760
        %874 = vmatpush.msra.mxu0 %v873
        %v875 = vand.u32 %v465, 4294901760
        %876 = vmatpush.msra.mxu0 %v875
        %v877 = vand.u32 %v463, 4294901760
        %878 = vmatpush.msra.mxu0 %v877
        %v879 = vand.u32 %v461, 4294901760
        %880 = vmatpush.msra.mxu0 %v879
        %v881 = vand.u32 %v459, 4294901760
        %882 = vmatpush.msra.mxu0 %v881
        %v883 = vand.u32 %v457, 4294901760
        %884 = vmatpush.msra.mxu0 %v883
        %v885 = vand.u32 %v455, 4294901760
        %886 = vmatpush.msra.mxu0 %v885
        %v887 = vand.u32 %v453, 4294901760
        %888 = vmatpush.msra.mxu0 %v887
        %v889 = vand.u32 %v472, 4294901760
        %v890 = vsub.f32 %v472, %v889
        %v891 = vand.u32 %v890, 4294901760
        %892 = vmatmul.f32.gmra.mxu0 %v891
        %v893 = vpop.f32.mrf.mxu0
        %v894 = vadd.f32 %v862, %v893
        %895 = vdwg.mxu0
        %896 = vmatpush.msra.mxu0 0.0
        %897 = vmatpush.msra.mxu0 0.0
        %898 = vmatpush.msra.mxu0 0.0
        %899 = vmatpush.msra.mxu0 0.0
        %900 = vmatpush.msra.mxu0 0.0
        %901 = vmatpush.msra.mxu0 0.0
        %902 = vmatpush.msra.mxu0 0.0
        %v903 = vand.u32 %v469, 4294901760
        %v904 = vsub.f32 %v469, %v903
        %v905 = vand.u32 %v904, 4294901760
        %906 = vmatpush.msra.mxu0 %v905
        %v907 = vand.u32 %v467, 4294901760
        %v908 = vsub.f32 %v467, %v907
        %v909 = vand.u32 %v908, 4294901760
        %910 = vmatpush.msra.mxu0 %v909
        %v911 = vand.u32 %v465, 4294901760
        %v912 = vsub.f32 %v465, %v911
        %v913 = vand.u32 %v912, 4294901760
        %914 = vmatpush.msra.mxu0 %v913
        %v915 = vand.u32 %v463, 4294901760
        %v916 = vsub.f32 %v463, %v915
        %v917 = vand.u32 %v916, 4294901760
        %918 = vmatpush.msra.mxu0 %v917
        %v919 = vand.u32 %v461, 4294901760
        %v920 = vsub.f32 %v461, %v919
        %v921 = vand.u32 %v920, 4294901760
        %922 = vmatpush.msra.mxu0 %v921
        %v923 = vand.u32 %v459, 4294901760
        %v924 = vsub.f32 %v459, %v923
        %v925 = vand.u32 %v924, 4294901760
        %926 = vmatpush.msra.mxu0 %v925
        %v927 = vand.u32 %v457, 4294901760
        %v928 = vsub.f32 %v457, %v927
        %v929 = vand.u32 %v928, 4294901760
        %930 = vmatpush.msra.mxu0 %v929
        %v931 = vand.u32 %v455, 4294901760
        %v932 = vsub.f32 %v455, %v931
        %v933 = vand.u32 %v932, 4294901760
        %934 = vmatpush.msra.mxu0 %v933
        %v935 = vand.u32 %v453, 4294901760
        %v936 = vsub.f32 %v453, %v935
        %v937 = vand.u32 %v936, 4294901760
        %938 = vmatpush.msra.mxu0 %v937
        %v939 = vand.u32 %v472, 4294901760
        %940 = vmatmul.f32.gmra.mxu0 %v939
        %v941 = vpop.f32.mrf.mxu0
        %v942 = vadd.f32 %v894, %v941
        %943 = vdwg.mxu0
        %944 = vmatpush.msra.mxu0 0.0
        %945 = vmatpush.msra.mxu0 0.0
        %946 = vmatpush.msra.mxu0 0.0
        %947 = vmatpush.msra.mxu0 0.0
        %948 = vmatpush.msra.mxu0 0.0
        %949 = vmatpush.msra.mxu0 0.0
        %950 = vmatpush.msra.mxu0 0.0
        %v951 = vand.u32 %v469, 4294901760
        %952 = vmatpush.msra.mxu0 %v951
        %v953 = vand.u32 %v467, 4294901760
        %954 = vmatpush.msra.mxu0 %v953
        %v955 = vand.u32 %v465, 4294901760
        %956 = vmatpush.msra.mxu0 %v955
        %v957 = vand.u32 %v463, 4294901760
        %958 = vmatpush.msra.mxu0 %v957
        %v959 = vand.u32 %v461, 4294901760
        %960 = vmatpush.msra.mxu0 %v959
        %v961 = vand.u32 %v459, 4294901760
        %962 = vmatpush.msra.mxu0 %v961
        %v963 = vand.u32 %v457, 4294901760
        %964 = vmatpush.msra.mxu0 %v963
        %v965 = vand.u32 %v455, 4294901760
        %966 = vmatpush.msra.mxu0 %v965
        %v967 = vand.u32 %v453, 4294901760
        %968 = vmatpush.msra.mxu0 %v967
        %v969 = vand.u32 %v472, 4294901760
        %970 = vmatmul.f32.gmra.mxu0 %v969
        %v971 = vpop.f32.mrf.mxu0
        %v972 = vadd.f32 %v942, %v971
        %973 = vdwg.mxu0
        %v975 = vsel %vm470, %v431, 0
        %977 = vmatpush.msra.mxu0 0.0
        %978 = vmatpush.msra.mxu0 0.0
        %979 = vmatpush.msra.mxu0 0.0
        %980 = vmatpush.msra.mxu0 0.0
        %981 = vmatpush.msra.mxu0 0.0
        %982 = vmatpush.msra.mxu0 0.0
        %983 = vmatpush.msra.mxu0 0.0
        %v984 = vand.u32 %v448, 4294901760
        %985 = vmatpush.msra.mxu0 %v984
        %v986 = vand.u32 %v446, 4294901760
        %987 = vmatpush.msra.mxu0 %v986
        %v988 = vand.u32 %v444, 4294901760
        %989 = vmatpush.msra.mxu0 %v988
        %v990 = vand.u32 %v442, 4294901760
        %991 = vmatpush.msra.mxu0 %v990
        %v992 = vand.u32 %v440, 4294901760
        %993 = vmatpush.msra.mxu0 %v992
        %v994 = vand.u32 %v438, 4294901760
        %995 = vmatpush.msra.mxu0 %v994
        %v996 = vand.u32 %v436, 4294901760
        %997 = vmatpush.msra.mxu0 %v996
        %v998 = vand.u32 %v434, 4294901760
        %999 = vmatpush.msra.mxu0 %v998
        %v1000 = vand.u32 %v432, 4294901760
        %1001 = vmatpush.msra.mxu0 %v1000
        %v1002 = vand.u32 %v975, 4294901760
        %v1003 = vsub.f32 %v975, %v1002
        %v1004 = vand.u32 %v1003, 4294901760
        %v1005 = vsub.f32 %v1003, %v1004
        %v1006 = vand.u32 %v1005, 4294901760
        %1007 = vmatmul.f32.gmra.mxu0 %v1006
        %v1008 = vpop.f32.mrf.mxu0
        %v1009 = vadd.f32 %v722, %v1008
        %1010 = vdwg.mxu0
        %1011 = vmatpush.msra.mxu0 0.0
        %1012 = vmatpush.msra.mxu0 0.0
        %1013 = vmatpush.msra.mxu0 0.0
        %1014 = vmatpush.msra.mxu0 0.0
        %1015 = vmatpush.msra.mxu0 0.0
        %1016 = vmatpush.msra.mxu0 0.0
        %1017 = vmatpush.msra.mxu0 0.0
        %v1018 = vand.u32 %v448, 4294901760
        %v1019 = vsub.f32 %v448, %v1018
        %v1020 = vand.u32 %v1019, 4294901760
        %v1021 = vsub.f32 %v1019, %v1020
        %v1022 = vand.u32 %v1021, 4294901760
        %1023 = vmatpush.msra.mxu0 %v1022
        %v1024 = vand.u32 %v446, 4294901760
        %v1025 = vsub.f32 %v446, %v1024
        %v1026 = vand.u32 %v1025, 4294901760
        %v1027 = vsub.f32 %v1025, %v1026
        %v1028 = vand.u32 %v1027, 4294901760
        %1029 = vmatpush.msra.mxu0 %v1028
        %v1030 = vand.u32 %v444, 4294901760
        %v1031 = vsub.f32 %v444, %v1030
        %v1032 = vand.u32 %v1031, 4294901760
        %v1033 = vsub.f32 %v1031, %v1032
        %v1034 = vand.u32 %v1033, 4294901760
        %1035 = vmatpush.msra.mxu0 %v1034
        %v1036 = vand.u32 %v442, 4294901760
        %v1037 = vsub.f32 %v442, %v1036
        %v1038 = vand.u32 %v1037, 4294901760
        %v1039 = vsub.f32 %v1037, %v1038
        %v1040 = vand.u32 %v1039, 4294901760
        %1041 = vmatpush.msra.mxu0 %v1040
        %v1042 = vand.u32 %v440, 4294901760
        %v1043 = vsub.f32 %v440, %v1042
        %v1044 = vand.u32 %v1043, 4294901760
        %v1045 = vsub.f32 %v1043, %v1044
        %v1046 = vand.u32 %v1045, 4294901760
        %1047 = vmatpush.msra.mxu0 %v1046
        %v1048 = vand.u32 %v438, 4294901760
        %v1049 = vsub.f32 %v438, %v1048
        %v1050 = vand.u32 %v1049, 4294901760
        %v1051 = vsub.f32 %v1049, %v1050
        %v1052 = vand.u32 %v1051, 4294901760
        %1053 = vmatpush.msra.mxu0 %v1052
        %v1054 = vand.u32 %v436, 4294901760
        %v1055 = vsub.f32 %v436, %v1054
        %v1056 = vand.u32 %v1055, 4294901760
        %v1057 = vsub.f32 %v1055, %v1056
        %v1058 = vand.u32 %v1057, 4294901760
        %1059 = vmatpush.msra.mxu0 %v1058
        %v1060 = vand.u32 %v434, 4294901760
        %v1061 = vsub.f32 %v434, %v1060
        %v1062 = vand.u32 %v1061, 4294901760
        %v1063 = vsub.f32 %v1061, %v1062
        %v1064 = vand.u32 %v1063, 4294901760
        %1065 = vmatpush.msra.mxu0 %v1064
        %v1066 = vand.u32 %v432, 4294901760
        %v1067 = vsub.f32 %v432, %v1066
        %v1068 = vand.u32 %v1067, 4294901760
        %v1069 = vsub.f32 %v1067, %v1068
        %v1070 = vand.u32 %v1069, 4294901760
        %1071 = vmatpush.msra.mxu0 %v1070
        %v1072 = vand.u32 %v975, 4294901760
        %1073 = vmatmul.f32.gmra.mxu0 %v1072
        %v1074 = vpop.f32.mrf.mxu0
        %v1075 = vadd.f32 %v1009, %v1074
        %1076 = vdwg.mxu0
        %1077 = vmatpush.msra.mxu0 0.0
        %1078 = vmatpush.msra.mxu0 0.0
        %1079 = vmatpush.msra.mxu0 0.0
        %1080 = vmatpush.msra.mxu0 0.0
        %1081 = vmatpush.msra.mxu0 0.0
        %1082 = vmatpush.msra.mxu0 0.0
        %1083 = vmatpush.msra.mxu0 0.0
        %v1084 = vand.u32 %v448, 4294901760
        %v1085 = vsub.f32 %v448, %v1084
        %1086 = vmatpush.msra.mxu0 %v1085
        %v1087 = vand.u32 %v446, 4294901760
        %v1088 = vsub.f32 %v446, %v1087
        %1089 = vmatpush.msra.mxu0 %v1088
        %v1090 = vand.u32 %v444, 4294901760
        %v1091 = vsub.f32 %v444, %v1090
        %1092 = vmatpush.msra.mxu0 %v1091
        %v1093 = vand.u32 %v442, 4294901760
        %v1094 = vsub.f32 %v442, %v1093
        %1095 = vmatpush.msra.mxu0 %v1094
        %v1096 = vand.u32 %v440, 4294901760
        %v1097 = vsub.f32 %v440, %v1096
        %1098 = vmatpush.msra.mxu0 %v1097
        %v1099 = vand.u32 %v438, 4294901760
        %v1100 = vsub.f32 %v438, %v1099
        %1101 = vmatpush.msra.mxu0 %v1100
        %v1102 = vand.u32 %v436, 4294901760
        %v1103 = vsub.f32 %v436, %v1102
        %1104 = vmatpush.msra.mxu0 %v1103
        %v1105 = vand.u32 %v434, 4294901760
        %v1106 = vsub.f32 %v434, %v1105
        %1107 = vmatpush.msra.mxu0 %v1106
        %v1108 = vand.u32 %v432, 4294901760
        %v1109 = vsub.f32 %v432, %v1108
        %1110 = vmatpush.msra.mxu0 %v1109
        %v1111 = vand.u32 %v975, 4294901760
        %v1112 = vsub.f32 %v975, %v1111
        %1113 = vmatmul.f32.gmra.mxu0 %v1112
        %v1114 = vpop.f32.mrf.mxu0
        %v1115 = vadd.f32 %v1075, %v1114
        %1116 = vdwg.mxu0
        %1117 = vmatpush.msra.mxu0 0.0
        %1118 = vmatpush.msra.mxu0 0.0
        %1119 = vmatpush.msra.mxu0 0.0
        %1120 = vmatpush.msra.mxu0 0.0
        %1121 = vmatpush.msra.mxu0 0.0
        %1122 = vmatpush.msra.mxu0 0.0
        %1123 = vmatpush.msra.mxu0 0.0
        %v1124 = vand.u32 %v448, 4294901760
        %1125 = vmatpush.msra.mxu0 %v1124
        %v1126 = vand.u32 %v446, 4294901760
        %1127 = vmatpush.msra.mxu0 %v1126
        %v1128 = vand.u32 %v444, 4294901760
        %1129 = vmatpush.msra.mxu0 %v1128
        %v1130 = vand.u32 %v442, 4294901760
        %1131 = vmatpush.msra.mxu0 %v1130
        %v1132 = vand.u32 %v440, 4294901760
        %1133 = vmatpush.msra.mxu0 %v1132
        %v1134 = vand.u32 %v438, 4294901760
        %1135 = vmatpush.msra.mxu0 %v1134
        %v1136 = vand.u32 %v436, 4294901760
        %1137 = vmatpush.msra.mxu0 %v1136
        %v1138 = vand.u32 %v434, 4294901760
        %1139 = vmatpush.msra.mxu0 %v1138
        %v1140 = vand.u32 %v432, 4294901760
        %1141 = vmatpush.msra.mxu0 %v1140
        %v1142 = vand.u32 %v975, 4294901760
        %v1143 = vsub.f32 %v975, %v1142
        %v1144 = vand.u32 %v1143, 4294901760
        %1145 = vmatmul.f32.gmra.mxu0 %v1144
        %v1146 = vpop.f32.mrf.mxu0
        %v1147 = vadd.f32 %v1115, %v1146
        %1148 = vdwg.mxu0
        %1149 = vmatpush.msra.mxu0 0.0
        %1150 = vmatpush.msra.mxu0 0.0
        %1151 = vmatpush.msra.mxu0 0.0
        %1152 = vmatpush.msra.mxu0 0.0
        %1153 = vmatpush.msra.mxu0 0.0
        %1154 = vmatpush.msra.mxu0 0.0
        %1155 = vmatpush.msra.mxu0 0.0
        %v1156 = vand.u32 %v448, 4294901760
        %v1157 = vsub.f32 %v448, %v1156
        %v1158 = vand.u32 %v1157, 4294901760
        %1159 = vmatpush.msra.mxu0 %v1158
        %v1160 = vand.u32 %v446, 4294901760
        %v1161 = vsub.f32 %v446, %v1160
        %v1162 = vand.u32 %v1161, 4294901760
        %1163 = vmatpush.msra.mxu0 %v1162
        %v1164 = vand.u32 %v444, 4294901760
        %v1165 = vsub.f32 %v444, %v1164
        %v1166 = vand.u32 %v1165, 4294901760
        %1167 = vmatpush.msra.mxu0 %v1166
        %v1168 = vand.u32 %v442, 4294901760
        %v1169 = vsub.f32 %v442, %v1168
        %v1170 = vand.u32 %v1169, 4294901760
        %1171 = vmatpush.msra.mxu0 %v1170
        %v1172 = vand.u32 %v440, 4294901760
        %v1173 = vsub.f32 %v440, %v1172
        %v1174 = vand.u32 %v1173, 4294901760
        %1175 = vmatpush.msra.mxu0 %v1174
        %v1176 = vand.u32 %v438, 4294901760
        %v1177 = vsub.f32 %v438, %v1176
        %v1178 = vand.u32 %v1177, 4294901760
        %1179 = vmatpush.msra.mxu0 %v1178
        %v1180 = vand.u32 %v436, 4294901760
        %v1181 = vsub.f32 %v436, %v1180
        %v1182 = vand.u32 %v1181, 4294901760
        %1183 = vmatpush.msra.mxu0 %v1182
        %v1184 = vand.u32 %v434, 4294901760
        %v1185 = vsub.f32 %v434, %v1184
        %v1186 = vand.u32 %v1185, 4294901760
        %1187 = vmatpush.msra.mxu0 %v1186
        %v1188 = vand.u32 %v432, 4294901760
        %v1189 = vsub.f32 %v432, %v1188
        %v1190 = vand.u32 %v1189, 4294901760
        %1191 = vmatpush.msra.mxu0 %v1190
        %v1192 = vand.u32 %v975, 4294901760
        %1193 = vmatmul.f32.gmra.mxu0 %v1192
        %v1194 = vpop.f32.mrf.mxu0
        %v1195 = vadd.f32 %v1147, %v1194
        %1196 = vdwg.mxu0
        %1197 = vmatpush.msra.mxu0 0.0
        %1198 = vmatpush.msra.mxu0 0.0
        %1199 = vmatpush.msra.mxu0 0.0
        %1200 = vmatpush.msra.mxu0 0.0
        %1201 = vmatpush.msra.mxu0 0.0
        %1202 = vmatpush.msra.mxu0 0.0
        %1203 = vmatpush.msra.mxu0 0.0
        %v1204 = vand.u32 %v448, 4294901760
        %1205 = vmatpush.msra.mxu0 %v1204
        %v1206 = vand.u32 %v446, 4294901760
        %1207 = vmatpush.msra.mxu0 %v1206
        %v1208 = vand.u32 %v444, 4294901760
        %1209 = vmatpush.msra.mxu0 %v1208
        %v1210 = vand.u32 %v442, 4294901760
        %1211 = vmatpush.msra.mxu0 %v1210
        %v1212 = vand.u32 %v440, 4294901760
        %1213 = vmatpush.msra.mxu0 %v1212
        %v1214 = vand.u32 %v438, 4294901760
        %1215 = vmatpush.msra.mxu0 %v1214
        %v1216 = vand.u32 %v436, 4294901760
        %1217 = vmatpush.msra.mxu0 %v1216
        %v1218 = vand.u32 %v434, 4294901760
        %1219 = vmatpush.msra.mxu0 %v1218
        %v1220 = vand.u32 %v432, 4294901760
        %1221 = vmatpush.msra.mxu0 %v1220
        %v1222 = vand.u32 %v975, 4294901760
        %1223 = vmatmul.f32.gmra.mxu0 %v1222
        %v1224 = vpop.f32.mrf.mxu0
        %v1225 = vadd.f32 %v1195, %v1224
        %1226 = vdwg.mxu0
        %1227 = vmatpush.msra.mxu0 0.0
        %1228 = vmatpush.msra.mxu0 0.0
        %1229 = vmatpush.msra.mxu0 0.0
        %1230 = vmatpush.msra.mxu0 0.0
        %1231 = vmatpush.msra.mxu0 0.0
        %1232 = vmatpush.msra.mxu0 0.0
        %1233 = vmatpush.msra.mxu0 0.0
        %v1234 = vand.u32 %v449, 4294901760
        %1235 = vmatpush.msra.mxu0 %v1234
        %v1236 = vand.u32 %v447, 4294901760
        %1237 = vmatpush.msra.mxu0 %v1236
        %v1238 = vand.u32 %v445, 4294901760
        %1239 = vmatpush.msra.mxu0 %v1238
        %v1240 = vand.u32 %v443, 4294901760
        %1241 = vmatpush.msra.mxu0 %v1240
        %v1242 = vand.u32 %v441, 4294901760
        %1243 = vmatpush.msra.mxu0 %v1242
        %v1244 = vand.u32 %v439, 4294901760
        %1245 = vmatpush.msra.mxu0 %v1244
        %v1246 = vand.u32 %v437, 4294901760
        %1247 = vmatpush.msra.mxu0 %v1246
        %v1248 = vand.u32 %v435, 4294901760
        %1249 = vmatpush.msra.mxu0 %v1248
        %v1250 = vand.u32 %v433, 4294901760
        %1251 = vmatpush.msra.mxu0 %v1250
        %v1252 = vand.u32 %v975, 4294901760
        %v1253 = vsub.f32 %v975, %v1252
        %v1254 = vand.u32 %v1253, 4294901760
        %v1255 = vsub.f32 %v1253, %v1254
        %v1256 = vand.u32 %v1255, 4294901760
        %1257 = vmatmul.f32.gmra.mxu0 %v1256
        %v1258 = vpop.f32.mrf.mxu0
        %v1259 = vadd.f32 %v972, %v1258
        %1260 = vdwg.mxu0
        %1261 = vmatpush.msra.mxu0 0.0
        %1262 = vmatpush.msra.mxu0 0.0
        %1263 = vmatpush.msra.mxu0 0.0
        %1264 = vmatpush.msra.mxu0 0.0
        %1265 = vmatpush.msra.mxu0 0.0
        %1266 = vmatpush.msra.mxu0 0.0
        %1267 = vmatpush.msra.mxu0 0.0
        %v1268 = vand.u32 %v449, 4294901760
        %v1269 = vsub.f32 %v449, %v1268
        %v1270 = vand.u32 %v1269, 4294901760
        %v1271 = vsub.f32 %v1269, %v1270
        %v1272 = vand.u32 %v1271, 4294901760
        %1273 = vmatpush.msra.mxu0 %v1272
        %v1274 = vand.u32 %v447, 4294901760
        %v1275 = vsub.f32 %v447, %v1274
        %v1276 = vand.u32 %v1275, 4294901760
        %v1277 = vsub.f32 %v1275, %v1276
        %v1278 = vand.u32 %v1277, 4294901760
        %1279 = vmatpush.msra.mxu0 %v1278
        %v1280 = vand.u32 %v445, 4294901760
        %v1281 = vsub.f32 %v445, %v1280
        %v1282 = vand.u32 %v1281, 4294901760
        %v1283 = vsub.f32 %v1281, %v1282
        %v1284 = vand.u32 %v1283, 4294901760
        %1285 = vmatpush.msra.mxu0 %v1284
        %v1286 = vand.u32 %v443, 4294901760
        %v1287 = vsub.f32 %v443, %v1286
        %v1288 = vand.u32 %v1287, 4294901760
        %v1289 = vsub.f32 %v1287, %v1288
        %v1290 = vand.u32 %v1289, 4294901760
        %1291 = vmatpush.msra.mxu0 %v1290
        %v1292 = vand.u32 %v441, 4294901760
        %v1293 = vsub.f32 %v441, %v1292
        %v1294 = vand.u32 %v1293, 4294901760
        %v1295 = vsub.f32 %v1293, %v1294
        %v1296 = vand.u32 %v1295, 4294901760
        %1297 = vmatpush.msra.mxu0 %v1296
        %v1298 = vand.u32 %v439, 4294901760
        %v1299 = vsub.f32 %v439, %v1298
        %v1300 = vand.u32 %v1299, 4294901760
        %v1301 = vsub.f32 %v1299, %v1300
        %v1302 = vand.u32 %v1301, 4294901760
        %1303 = vmatpush.msra.mxu0 %v1302
        %v1304 = vand.u32 %v437, 4294901760
        %v1305 = vsub.f32 %v437, %v1304
        %v1306 = vand.u32 %v1305, 4294901760
        %v1307 = vsub.f32 %v1305, %v1306
        %v1308 = vand.u32 %v1307, 4294901760
        %1309 = vmatpush.msra.mxu0 %v1308
        %v1310 = vand.u32 %v435, 4294901760
        %v1311 = vsub.f32 %v435, %v1310
        %v1312 = vand.u32 %v1311, 4294901760
        %v1313 = vsub.f32 %v1311, %v1312
        %v1314 = vand.u32 %v1313, 4294901760
        %1315 = vmatpush.msra.mxu0 %v1314
        %v1316 = vand.u32 %v433, 4294901760
        %v1317 = vsub.f32 %v433, %v1316
        %v1318 = vand.u32 %v1317, 4294901760
        %v1319 = vsub.f32 %v1317, %v1318
        %v1320 = vand.u32 %v1319, 4294901760
        %1321 = vmatpush.msra.mxu0 %v1320
        %v1322 = vand.u32 %v975, 4294901760
        %1323 = vmatmul.f32.gmra.mxu0 %v1322
        %v1324 = vpop.f32.mrf.mxu0
        %v1325 = vadd.f32 %v1259, %v1324
        %1326 = vdwg.mxu0
        %1327 = vmatpush.msra.mxu0 0.0
        %1328 = vmatpush.msra.mxu0 0.0
        %1329 = vmatpush.msra.mxu0 0.0
        %1330 = vmatpush.msra.mxu0 0.0
        %1331 = vmatpush.msra.mxu0 0.0
        %1332 = vmatpush.msra.mxu0 0.0
        %1333 = vmatpush.msra.mxu0 0.0
        %v1334 = vand.u32 %v449, 4294901760
        %v1335 = vsub.f32 %v449, %v1334
        %1336 = vmatpush.msra.mxu0 %v1335
        %v1337 = vand.u32 %v447, 4294901760
        %v1338 = vsub.f32 %v447, %v1337
        %1339 = vmatpush.msra.mxu0 %v1338
        %v1340 = vand.u32 %v445, 4294901760
        %v1341 = vsub.f32 %v445, %v1340
        %1342 = vmatpush.msra.mxu0 %v1341
        %v1343 = vand.u32 %v443, 4294901760
        %v1344 = vsub.f32 %v443, %v1343
        %1345 = vmatpush.msra.mxu0 %v1344
        %v1346 = vand.u32 %v441, 4294901760
        %v1347 = vsub.f32 %v441, %v1346
        %1348 = vmatpush.msra.mxu0 %v1347
        %v1349 = vand.u32 %v439, 4294901760
        %v1350 = vsub.f32 %v439, %v1349
        %1351 = vmatpush.msra.mxu0 %v1350
        %v1352 = vand.u32 %v437, 4294901760
        %v1353 = vsub.f32 %v437, %v1352
        %1354 = vmatpush.msra.mxu0 %v1353
        %v1355 = vand.u32 %v435, 4294901760
        %v1356 = vsub.f32 %v435, %v1355
        %1357 = vmatpush.msra.mxu0 %v1356
        %v1358 = vand.u32 %v433, 4294901760
        %v1359 = vsub.f32 %v433, %v1358
        %1360 = vmatpush.msra.mxu0 %v1359
        %v1361 = vand.u32 %v975, 4294901760
        %v1362 = vsub.f32 %v975, %v1361
        %1363 = vmatmul.f32.gmra.mxu0 %v1362
        %v1364 = vpop.f32.mrf.mxu0
        %v1365 = vadd.f32 %v1325, %v1364
        %1366 = vdwg.mxu0
        %1367 = vmatpush.msra.mxu0 0.0
        %1368 = vmatpush.msra.mxu0 0.0
        %1369 = vmatpush.msra.mxu0 0.0
        %1370 = vmatpush.msra.mxu0 0.0
        %1371 = vmatpush.msra.mxu0 0.0
        %1372 = vmatpush.msra.mxu0 0.0
        %1373 = vmatpush.msra.mxu0 0.0
        %v1374 = vand.u32 %v449, 4294901760
        %1375 = vmatpush.msra.mxu0 %v1374
        %v1376 = vand.u32 %v447, 4294901760
        %1377 = vmatpush.msra.mxu0 %v1376
        %v1378 = vand.u32 %v445, 4294901760
        %1379 = vmatpush.msra.mxu0 %v1378
        %v1380 = vand.u32 %v443, 4294901760
        %1381 = vmatpush.msra.mxu0 %v1380
        %v1382 = vand.u32 %v441, 4294901760
        %1383 = vmatpush.msra.mxu0 %v1382
        %v1384 = vand.u32 %v439, 4294901760
        %1385 = vmatpush.msra.mxu0 %v1384
        %v1386 = vand.u32 %v437, 4294901760
        %1387 = vmatpush.msra.mxu0 %v1386
        %v1388 = vand.u32 %v435, 4294901760
        %1389 = vmatpush.msra.mxu0 %v1388
        %v1390 = vand.u32 %v433, 4294901760
        %1391 = vmatpush.msra.mxu0 %v1390
        %v1392 = vand.u32 %v975, 4294901760
        %v1393 = vsub.f32 %v975, %v1392
        %v1394 = vand.u32 %v1393, 4294901760
        %1395 = vmatmul.f32.gmra.mxu0 %v1394
        %v1396 = vpop.f32.mrf.mxu0
        %v1397 = vadd.f32 %v1365, %v1396
        %1398 = vdwg.mxu0
        %1399 = vmatpush.msra.mxu0 0.0
        %1400 = vmatpush.msra.mxu0 0.0
        %1401 = vmatpush.msra.mxu0 0.0
        %1402 = vmatpush.msra.mxu0 0.0
        %1403 = vmatpush.msra.mxu0 0.0
        %1404 = vmatpush.msra.mxu0 0.0
        %1405 = vmatpush.msra.mxu0 0.0
        %v1406 = vand.u32 %v449, 4294901760
        %v1407 = vsub.f32 %v449, %v1406
        %v1408 = vand.u32 %v1407, 4294901760
        %1409 = vmatpush.msra.mxu0 %v1408
        %v1410 = vand.u32 %v447, 4294901760
        %v1411 = vsub.f32 %v447, %v1410
        %v1412 = vand.u32 %v1411, 4294901760
        %1413 = vmatpush.msra.mxu0 %v1412
        %v1414 = vand.u32 %v445, 4294901760
        %v1415 = vsub.f32 %v445, %v1414
        %v1416 = vand.u32 %v1415, 4294901760
        %1417 = vmatpush.msra.mxu0 %v1416
        %v1418 = vand.u32 %v443, 4294901760
        %v1419 = vsub.f32 %v443, %v1418
        %v1420 = vand.u32 %v1419, 4294901760
        %1421 = vmatpush.msra.mxu0 %v1420
        %v1422 = vand.u32 %v441, 4294901760
        %v1423 = vsub.f32 %v441, %v1422
        %v1424 = vand.u32 %v1423, 4294901760
        %1425 = vmatpush.msra.mxu0 %v1424
        %v1426 = vand.u32 %v439, 4294901760
        %v1427 = vsub.f32 %v439, %v1426
        %v1428 = vand.u32 %v1427, 4294901760
        %1429 = vmatpush.msra.mxu0 %v1428
        %v1430 = vand.u32 %v437, 4294901760
        %v1431 = vsub.f32 %v437, %v1430
        %v1432 = vand.u32 %v1431, 4294901760
        %1433 = vmatpush.msra.mxu0 %v1432
        %v1434 = vand.u32 %v435, 4294901760
        %v1435 = vsub.f32 %v435, %v1434
        %v1436 = vand.u32 %v1435, 4294901760
        %1437 = vmatpush.msra.mxu0 %v1436
        %v1438 = vand.u32 %v433, 4294901760
        %v1439 = vsub.f32 %v433, %v1438
        %v1440 = vand.u32 %v1439, 4294901760
        %1441 = vmatpush.msra.mxu0 %v1440
        %v1442 = vand.u32 %v975, 4294901760
        %1443 = vmatmul.f32.gmra.mxu0 %v1442
        %v1444 = vpop.f32.mrf.mxu0
        %v1445 = vadd.f32 %v1397, %v1444
        %1446 = vdwg.mxu0
        %1447 = vmatpush.msra.mxu0 0.0
        %1448 = vmatpush.msra.mxu0 0.0
        %1449 = vmatpush.msra.mxu0 0.0
        %1450 = vmatpush.msra.mxu0 0.0
        %1451 = vmatpush.msra.mxu0 0.0
        %1452 = vmatpush.msra.mxu0 0.0
        %1453 = vmatpush.msra.mxu0 0.0
        %v1454 = vand.u32 %v449, 4294901760
        %1455 = vmatpush.msra.mxu0 %v1454
        %v1456 = vand.u32 %v447, 4294901760
        %1457 = vmatpush.msra.mxu0 %v1456
        %v1458 = vand.u32 %v445, 4294901760
        %1459 = vmatpush.msra.mxu0 %v1458
        %v1460 = vand.u32 %v443, 4294901760
        %1461 = vmatpush.msra.mxu0 %v1460
        %v1462 = vand.u32 %v441, 4294901760
        %1463 = vmatpush.msra.mxu0 %v1462
        %v1464 = vand.u32 %v439, 4294901760
        %1465 = vmatpush.msra.mxu0 %v1464
        %v1466 = vand.u32 %v437, 4294901760
        %1467 = vmatpush.msra.mxu0 %v1466
        %v1468 = vand.u32 %v435, 4294901760
        %1469 = vmatpush.msra.mxu0 %v1468
        %v1470 = vand.u32 %v433, 4294901760
        %1471 = vmatpush.msra.mxu0 %v1470
        %v1472 = vand.u32 %v975, 4294901760
        %1473 = vmatmul.f32.gmra.mxu0 %v1472
        %v1474 = vpop.f32.mrf.mxu0
        %v1475 = vadd.f32 %v1445, %v1474
        %1476 = vdwg.mxu0
        %v1477 = vld [vmem:[%s425 + $0x1] sm:$0xff]
        %s1478 = scalar_lea.vmem %s2, 288
        %v1479 = vld [vmem:[%s1478] sm:$0xff]
        %v1480 = vld [vmem:[%s1478 + $0x8] sm:$0xff]
        %v1481 = vld [vmem:[%s1478 + $0x10] sm:$0xff]
        %v1482 = vld [vmem:[%s1478 + $0x18] sm:$0xff]
        %v1483 = vld [vmem:[%s1478 + $0x20] sm:$0xff]
        %v1484 = vld [vmem:[%s1478 + $0x28] sm:$0xff]
        %v1485 = vld [vmem:[%s1478 + $0x30] sm:$0xff]
        %v1486 = vld [vmem:[%s1478 + $0x38] sm:$0xff]
        %v1487 = vld [vmem:[%s1478 + $0x40] sm:$0xff]
        %v1488 = vld [vmem:[%s1478 + $0x48] sm:$0xff]
        %v1489 = vld [vmem:[%s1478 + $0x50] sm:$0xff]
        %v1490 = vld [vmem:[%s1478 + $0x58] sm:$0xff]
        %v1491 = vld [vmem:[%s1478 + $0x60] sm:$0xff]
        %v1492 = vld [vmem:[%s1478 + $0x68] sm:$0xff]
        %v1493 = vld [vmem:[%s1478 + $0x70] sm:$0xff]
        %v1494 = vld [vmem:[%s1478 + $0x78] sm:$0xff]
        %v1495 = vld [vmem:[%s1478 + $0x80] sm:$0xff]
        %v1496 = vld [vmem:[%s1478 + $0x88] sm:$0xff]
        %v1498 = vsel %vm470, %v1477, 0
        %1500 = vmatpush.msra.mxu0 0.0
        %1501 = vmatpush.msra.mxu0 0.0
        %1502 = vmatpush.msra.mxu0 0.0
        %1503 = vmatpush.msra.mxu0 0.0
        %1504 = vmatpush.msra.mxu0 0.0
        %1505 = vmatpush.msra.mxu0 0.0
        %1506 = vmatpush.msra.mxu0 0.0
        %v1507 = vand.u32 %v1495, 4294901760
        %1508 = vmatpush.msra.mxu0 %v1507
        %v1509 = vand.u32 %v1493, 4294901760
        %1510 = vmatpush.msra.mxu0 %v1509
        %v1511 = vand.u32 %v1491, 4294901760
        %1512 = vmatpush.msra.mxu0 %v1511
        %v1513 = vand.u32 %v1489, 4294901760
        %1514 = vmatpush.msra.mxu0 %v1513
        %v1515 = vand.u32 %v1487, 4294901760
        %1516 = vmatpush.msra.mxu0 %v1515
        %v1517 = vand.u32 %v1485, 4294901760
        %1518 = vmatpush.msra.mxu0 %v1517
        %v1519 = vand.u32 %v1483, 4294901760
        %1520 = vmatpush.msra.mxu0 %v1519
        %v1521 = vand.u32 %v1481, 4294901760
        %1522 = vmatpush.msra.mxu0 %v1521
        %v1523 = vand.u32 %v1479, 4294901760
        %1524 = vmatpush.msra.mxu0 %v1523
        %v1525 = vand.u32 %v1498, 4294901760
        %v1526 = vsub.f32 %v1498, %v1525
        %v1527 = vand.u32 %v1526, 4294901760
        %v1528 = vsub.f32 %v1526, %v1527
        %v1529 = vand.u32 %v1528, 4294901760
        %1530 = vmatmul.f32.gmra.mxu0 %v1529
        %v1531 = vpop.f32.mrf.mxu0
        %v1532 = vadd.f32 0.0, %v1531
        %1533 = vdwg.mxu0
        %1534 = vmatpush.msra.mxu0 0.0
        %1535 = vmatpush.msra.mxu0 0.0
        %1536 = vmatpush.msra.mxu0 0.0
        %1537 = vmatpush.msra.mxu0 0.0
        %1538 = vmatpush.msra.mxu0 0.0
        %1539 = vmatpush.msra.mxu0 0.0
        %1540 = vmatpush.msra.mxu0 0.0
        %v1541 = vand.u32 %v1495, 4294901760
        %v1542 = vsub.f32 %v1495, %v1541
        %v1543 = vand.u32 %v1542, 4294901760
        %v1544 = vsub.f32 %v1542, %v1543
        %v1545 = vand.u32 %v1544, 4294901760
        %1546 = vmatpush.msra.mxu0 %v1545
        %v1547 = vand.u32 %v1493, 4294901760
        %v1548 = vsub.f32 %v1493, %v1547
        %v1549 = vand.u32 %v1548, 4294901760
        %v1550 = vsub.f32 %v1548, %v1549
        %v1551 = vand.u32 %v1550, 4294901760
        %1552 = vmatpush.msra.mxu0 %v1551
        %v1553 = vand.u32 %v1491, 4294901760
        %v1554 = vsub.f32 %v1491, %v1553
        %v1555 = vand.u32 %v1554, 4294901760
        %v1556 = vsub.f32 %v1554, %v1555
        %v1557 = vand.u32 %v1556, 4294901760
        %1558 = vmatpush.msra.mxu0 %v1557
        %v1559 = vand.u32 %v1489, 4294901760
        %v1560 = vsub.f32 %v1489, %v1559
        %v1561 = vand.u32 %v1560, 4294901760
        %v1562 = vsub.f32 %v1560, %v1561
        %v1563 = vand.u32 %v1562, 4294901760
        %1564 = vmatpush.msra.mxu0 %v1563
        %v1565 = vand.u32 %v1487, 4294901760
        %v1566 = vsub.f32 %v1487, %v1565
        %v1567 = vand.u32 %v1566, 4294901760
        %v1568 = vsub.f32 %v1566, %v1567
        %v1569 = vand.u32 %v1568, 4294901760
        %1570 = vmatpush.msra.mxu0 %v1569
        %v1571 = vand.u32 %v1485, 4294901760
        %v1572 = vsub.f32 %v1485, %v1571
        %v1573 = vand.u32 %v1572, 4294901760
        %v1574 = vsub.f32 %v1572, %v1573
        %v1575 = vand.u32 %v1574, 4294901760
        %1576 = vmatpush.msra.mxu0 %v1575
        %v1577 = vand.u32 %v1483, 4294901760
        %v1578 = vsub.f32 %v1483, %v1577
        %v1579 = vand.u32 %v1578, 4294901760
        %v1580 = vsub.f32 %v1578, %v1579
        %v1581 = vand.u32 %v1580, 4294901760
        %1582 = vmatpush.msra.mxu0 %v1581
        %v1583 = vand.u32 %v1481, 4294901760
        %v1584 = vsub.f32 %v1481, %v1583
        %v1585 = vand.u32 %v1584, 4294901760
        %v1586 = vsub.f32 %v1584, %v1585
        %v1587 = vand.u32 %v1586, 4294901760
        %1588 = vmatpush.msra.mxu0 %v1587
        %v1589 = vand.u32 %v1479, 4294901760
        %v1590 = vsub.f32 %v1479, %v1589
        %v1591 = vand.u32 %v1590, 4294901760
        %v1592 = vsub.f32 %v1590, %v1591
        %v1593 = vand.u32 %v1592, 4294901760
        %1594 = vmatpush.msra.mxu0 %v1593
        %v1595 = vand.u32 %v1498, 4294901760
        %1596 = vmatmul.f32.gmra.mxu0 %v1595
        %v1597 = vpop.f32.mrf.mxu0
        %v1598 = vadd.f32 %v1532, %v1597
        %1599 = vdwg.mxu0
        %1600 = vmatpush.msra.mxu0 0.0
        %1601 = vmatpush.msra.mxu0 0.0
        %1602 = vmatpush.msra.mxu0 0.0
        %1603 = vmatpush.msra.mxu0 0.0
        %1604 = vmatpush.msra.mxu0 0.0
        %1605 = vmatpush.msra.mxu0 0.0
        %1606 = vmatpush.msra.mxu0 0.0
        %v1607 = vand.u32 %v1495, 4294901760
        %v1608 = vsub.f32 %v1495, %v1607
        %1609 = vmatpush.msra.mxu0 %v1608
        %v1610 = vand.u32 %v1493, 4294901760
        %v1611 = vsub.f32 %v1493, %v1610
        %1612 = vmatpush.msra.mxu0 %v1611
        %v1613 = vand.u32 %v1491, 4294901760
        %v1614 = vsub.f32 %v1491, %v1613
        %1615 = vmatpush.msra.mxu0 %v1614
        %v1616 = vand.u32 %v1489, 4294901760
        %v1617 = vsub.f32 %v1489, %v1616
        %1618 = vmatpush.msra.mxu0 %v1617
        %v1619 = vand.u32 %v1487, 4294901760
        %v1620 = vsub.f32 %v1487, %v1619
        %1621 = vmatpush.msra.mxu0 %v1620
        %v1622 = vand.u32 %v1485, 4294901760
        %v1623 = vsub.f32 %v1485, %v1622
        %1624 = vmatpush.msra.mxu0 %v1623
        %v1625 = vand.u32 %v1483, 4294901760
        %v1626 = vsub.f32 %v1483, %v1625
        %1627 = vmatpush.msra.mxu0 %v1626
        %v1628 = vand.u32 %v1481, 4294901760
        %v1629 = vsub.f32 %v1481, %v1628
        %1630 = vmatpush.msra.mxu0 %v1629
        %v1631 = vand.u32 %v1479, 4294901760
        %v1632 = vsub.f32 %v1479, %v1631
        %1633 = vmatpush.msra.mxu0 %v1632
        %v1634 = vand.u32 %v1498, 4294901760
        %v1635 = vsub.f32 %v1498, %v1634
        %1636 = vmatmul.f32.gmra.mxu0 %v1635
        %v1637 = vpop.f32.mrf.mxu0
        %v1638 = vadd.f32 %v1598, %v1637
        %1639 = vdwg.mxu0
        %1640 = vmatpush.msra.mxu0 0.0
        %1641 = vmatpush.msra.mxu0 0.0
        %1642 = vmatpush.msra.mxu0 0.0
        %1643 = vmatpush.msra.mxu0 0.0
        %1644 = vmatpush.msra.mxu0 0.0
        %1645 = vmatpush.msra.mxu0 0.0
        %1646 = vmatpush.msra.mxu0 0.0
        %v1647 = vand.u32 %v1495, 4294901760
        %1648 = vmatpush.msra.mxu0 %v1647
        %v1649 = vand.u32 %v1493, 4294901760
        %1650 = vmatpush.msra.mxu0 %v1649
        %v1651 = vand.u32 %v1491, 4294901760
        %1652 = vmatpush.msra.mxu0 %v1651
        %v1653 = vand.u32 %v1489, 4294901760
        %1654 = vmatpush.msra.mxu0 %v1653
        %v1655 = vand.u32 %v1487, 4294901760
        %1656 = vmatpush.msra.mxu0 %v1655
        %v1657 = vand.u32 %v1485, 4294901760
        %1658 = vmatpush.msra.mxu0 %v1657
        %v1659 = vand.u32 %v1483, 4294901760
        %1660 = vmatpush.msra.mxu0 %v1659
        %v1661 = vand.u32 %v1481, 4294901760
        %1662 = vmatpush.msra.mxu0 %v1661
        %v1663 = vand.u32 %v1479, 4294901760
        %1664 = vmatpush.msra.mxu0 %v1663
        %v1665 = vand.u32 %v1498, 4294901760
        %v1666 = vsub.f32 %v1498, %v1665
        %v1667 = vand.u32 %v1666, 4294901760
        %1668 = vmatmul.f32.gmra.mxu0 %v1667
        %v1669 = vpop.f32.mrf.mxu0
        %v1670 = vadd.f32 %v1638, %v1669
        %1671 = vdwg.mxu0
        %1672 = vmatpush.msra.mxu0 0.0
        %1673 = vmatpush.msra.mxu0 0.0
        %1674 = vmatpush.msra.mxu0 0.0
        %1675 = vmatpush.msra.mxu0 0.0
        %1676 = vmatpush.msra.mxu0 0.0
        %1677 = vmatpush.msra.mxu0 0.0
        %1678 = vmatpush.msra.mxu0 0.0
        %v1679 = vand.u32 %v1495, 4294901760
        %v1680 = vsub.f32 %v1495, %v1679
        %v1681 = vand.u32 %v1680, 4294901760
        %1682 = vmatpush.msra.mxu0 %v1681
        %v1683 = vand.u32 %v1493, 4294901760
        %v1684 = vsub.f32 %v1493, %v1683
        %v1685 = vand.u32 %v1684, 4294901760
        %1686 = vmatpush.msra.mxu0 %v1685
        %v1687 = vand.u32 %v1491, 4294901760
        %v1688 = vsub.f32 %v1491, %v1687
        %v1689 = vand.u32 %v1688, 4294901760
        %1690 = vmatpush.msra.mxu0 %v1689
        %v1691 = vand.u32 %v1489, 4294901760
        %v1692 = vsub.f32 %v1489, %v1691
        %v1693 = vand.u32 %v1692, 4294901760
        %1694 = vmatpush.msra.mxu0 %v1693
        %v1695 = vand.u32 %v1487, 4294901760
        %v1696 = vsub.f32 %v1487, %v1695
        %v1697 = vand.u32 %v1696, 4294901760
        %1698 = vmatpush.msra.mxu0 %v1697
        %v1699 = vand.u32 %v1485, 4294901760
        %v1700 = vsub.f32 %v1485, %v1699
        %v1701 = vand.u32 %v1700, 4294901760
        %1702 = vmatpush.msra.mxu0 %v1701
        %v1703 = vand.u32 %v1483, 4294901760
        %v1704 = vsub.f32 %v1483, %v1703
        %v1705 = vand.u32 %v1704, 4294901760
        %1706 = vmatpush.msra.mxu0 %v1705
        %v1707 = vand.u32 %v1481, 4294901760
        %v1708 = vsub.f32 %v1481, %v1707
        %v1709 = vand.u32 %v1708, 4294901760
        %1710 = vmatpush.msra.mxu0 %v1709
        %v1711 = vand.u32 %v1479, 4294901760
        %v1712 = vsub.f32 %v1479, %v1711
        %v1713 = vand.u32 %v1712, 4294901760
        %1714 = vmatpush.msra.mxu0 %v1713
        %v1715 = vand.u32 %v1498, 4294901760
        %1716 = vmatmul.f32.gmra.mxu0 %v1715
        %v1717 = vpop.f32.mrf.mxu0
        %v1718 = vadd.f32 %v1670, %v1717
        %1719 = vdwg.mxu0
        %1720 = vmatpush.msra.mxu0 0.0
        %1721 = vmatpush.msra.mxu0 0.0
        %1722 = vmatpush.msra.mxu0 0.0
        %1723 = vmatpush.msra.mxu0 0.0
        %1724 = vmatpush.msra.mxu0 0.0
        %1725 = vmatpush.msra.mxu0 0.0
        %1726 = vmatpush.msra.mxu0 0.0
        %v1727 = vand.u32 %v1495, 4294901760
        %1728 = vmatpush.msra.mxu0 %v1727
        %v1729 = vand.u32 %v1493, 4294901760
        %1730 = vmatpush.msra.mxu0 %v1729
        %v1731 = vand.u32 %v1491, 4294901760
        %1732 = vmatpush.msra.mxu0 %v1731
        %v1733 = vand.u32 %v1489, 4294901760
        %1734 = vmatpush.msra.mxu0 %v1733
        %v1735 = vand.u32 %v1487, 4294901760
        %1736 = vmatpush.msra.mxu0 %v1735
        %v1737 = vand.u32 %v1485, 4294901760
        %1738 = vmatpush.msra.mxu0 %v1737
        %v1739 = vand.u32 %v1483, 4294901760
        %1740 = vmatpush.msra.mxu0 %v1739
        %v1741 = vand.u32 %v1481, 4294901760
        %1742 = vmatpush.msra.mxu0 %v1741
        %v1743 = vand.u32 %v1479, 4294901760
        %1744 = vmatpush.msra.mxu0 %v1743
        %v1745 = vand.u32 %v1498, 4294901760
        %1746 = vmatmul.f32.gmra.mxu0 %v1745
        %v1747 = vpop.f32.mrf.mxu0
        %v1748 = vadd.f32 %v1718, %v1747
        %1749 = vdwg.mxu0
        %1750 = vmatpush.msra.mxu0 0.0
        %1751 = vmatpush.msra.mxu0 0.0
        %1752 = vmatpush.msra.mxu0 0.0
        %1753 = vmatpush.msra.mxu0 0.0
        %1754 = vmatpush.msra.mxu0 0.0
        %1755 = vmatpush.msra.mxu0 0.0
        %1756 = vmatpush.msra.mxu0 0.0
        %v1757 = vand.u32 %v1496, 4294901760
        %1758 = vmatpush.msra.mxu0 %v1757
        %v1759 = vand.u32 %v1494, 4294901760
        %1760 = vmatpush.msra.mxu0 %v1759
        %v1761 = vand.u32 %v1492, 4294901760
        %1762 = vmatpush.msra.mxu0 %v1761
        %v1763 = vand.u32 %v1490, 4294901760
        %1764 = vmatpush.msra.mxu0 %v1763
        %v1765 = vand.u32 %v1488, 4294901760
        %1766 = vmatpush.msra.mxu0 %v1765
        %v1767 = vand.u32 %v1486, 4294901760
        %1768 = vmatpush.msra.mxu0 %v1767
        %v1769 = vand.u32 %v1484, 4294901760
        %1770 = vmatpush.msra.mxu0 %v1769
        %v1771 = vand.u32 %v1482, 4294901760
        %1772 = vmatpush.msra.mxu0 %v1771
        %v1773 = vand.u32 %v1480, 4294901760
        %1774 = vmatpush.msra.mxu0 %v1773
        %v1775 = vand.u32 %v1498, 4294901760
        %v1776 = vsub.f32 %v1498, %v1775
        %v1777 = vand.u32 %v1776, 4294901760
        %v1778 = vsub.f32 %v1776, %v1777
        %v1779 = vand.u32 %v1778, 4294901760
        %1780 = vmatmul.f32.gmra.mxu0 %v1779
        %v1781 = vpop.f32.mrf.mxu0
        %v1782 = vadd.f32 0.0, %v1781
        %1783 = vdwg.mxu0
        %1784 = vmatpush.msra.mxu0 0.0
        %1785 = vmatpush.msra.mxu0 0.0
        %1786 = vmatpush.msra.mxu0 0.0
        %1787 = vmatpush.msra.mxu0 0.0
        %1788 = vmatpush.msra.mxu0 0.0
        %1789 = vmatpush.msra.mxu0 0.0
        %1790 = vmatpush.msra.mxu0 0.0
        %v1791 = vand.u32 %v1496, 4294901760
        %v1792 = vsub.f32 %v1496, %v1791
        %v1793 = vand.u32 %v1792, 4294901760
        %v1794 = vsub.f32 %v1792, %v1793
        %v1795 = vand.u32 %v1794, 4294901760
        %1796 = vmatpush.msra.mxu0 %v1795
        %v1797 = vand.u32 %v1494, 4294901760
        %v1798 = vsub.f32 %v1494, %v1797
        %v1799 = vand.u32 %v1798, 4294901760
        %v1800 = vsub.f32 %v1798, %v1799
        %v1801 = vand.u32 %v1800, 4294901760
        %1802 = vmatpush.msra.mxu0 %v1801
        %v1803 = vand.u32 %v1492, 4294901760
        %v1804 = vsub.f32 %v1492, %v1803
        %v1805 = vand.u32 %v1804, 4294901760
        %v1806 = vsub.f32 %v1804, %v1805
        %v1807 = vand.u32 %v1806, 4294901760
        %1808 = vmatpush.msra.mxu0 %v1807
        %v1809 = vand.u32 %v1490, 4294901760
        %v1810 = vsub.f32 %v1490, %v1809
        %v1811 = vand.u32 %v1810, 4294901760
        %v1812 = vsub.f32 %v1810, %v1811
        %v1813 = vand.u32 %v1812, 4294901760
        %1814 = vmatpush.msra.mxu0 %v1813
        %v1815 = vand.u32 %v1488, 4294901760
        %v1816 = vsub.f32 %v1488, %v1815
        %v1817 = vand.u32 %v1816, 4294901760
        %v1818 = vsub.f32 %v1816, %v1817
        %v1819 = vand.u32 %v1818, 4294901760
        %1820 = vmatpush.msra.mxu0 %v1819
        %v1821 = vand.u32 %v1486, 4294901760
        %v1822 = vsub.f32 %v1486, %v1821
        %v1823 = vand.u32 %v1822, 4294901760
        %v1824 = vsub.f32 %v1822, %v1823
        %v1825 = vand.u32 %v1824, 4294901760
        %1826 = vmatpush.msra.mxu0 %v1825
        %v1827 = vand.u32 %v1484, 4294901760
        %v1828 = vsub.f32 %v1484, %v1827
        %v1829 = vand.u32 %v1828, 4294901760
        %v1830 = vsub.f32 %v1828, %v1829
        %v1831 = vand.u32 %v1830, 4294901760
        %1832 = vmatpush.msra.mxu0 %v1831
        %v1833 = vand.u32 %v1482, 4294901760
        %v1834 = vsub.f32 %v1482, %v1833
        %v1835 = vand.u32 %v1834, 4294901760
        %v1836 = vsub.f32 %v1834, %v1835
        %v1837 = vand.u32 %v1836, 4294901760
        %1838 = vmatpush.msra.mxu0 %v1837
        %v1839 = vand.u32 %v1480, 4294901760
        %v1840 = vsub.f32 %v1480, %v1839
        %v1841 = vand.u32 %v1840, 4294901760
        %v1842 = vsub.f32 %v1840, %v1841
        %v1843 = vand.u32 %v1842, 4294901760
        %1844 = vmatpush.msra.mxu0 %v1843
        %v1845 = vand.u32 %v1498, 4294901760
        %1846 = vmatmul.f32.gmra.mxu0 %v1845
        %v1847 = vpop.f32.mrf.mxu0
        %v1848 = vadd.f32 %v1782, %v1847
        %1849 = vdwg.mxu0
        %1850 = vmatpush.msra.mxu0 0.0
        %1851 = vmatpush.msra.mxu0 0.0
        %1852 = vmatpush.msra.mxu0 0.0
        %1853 = vmatpush.msra.mxu0 0.0
        %1854 = vmatpush.msra.mxu0 0.0
        %1855 = vmatpush.msra.mxu0 0.0
        %1856 = vmatpush.msra.mxu0 0.0
        %v1857 = vand.u32 %v1496, 4294901760
        %v1858 = vsub.f32 %v1496, %v1857
        %1859 = vmatpush.msra.mxu0 %v1858
        %v1860 = vand.u32 %v1494, 4294901760
        %v1861 = vsub.f32 %v1494, %v1860
        %1862 = vmatpush.msra.mxu0 %v1861
        %v1863 = vand.u32 %v1492, 4294901760
        %v1864 = vsub.f32 %v1492, %v1863
        %1865 = vmatpush.msra.mxu0 %v1864
        %v1866 = vand.u32 %v1490, 4294901760
        %v1867 = vsub.f32 %v1490, %v1866
        %1868 = vmatpush.msra.mxu0 %v1867
        %v1869 = vand.u32 %v1488, 4294901760
        %v1870 = vsub.f32 %v1488, %v1869
        %1871 = vmatpush.msra.mxu0 %v1870
        %v1872 = vand.u32 %v1486, 4294901760
        %v1873 = vsub.f32 %v1486, %v1872
        %1874 = vmatpush.msra.mxu0 %v1873
        %v1875 = vand.u32 %v1484, 4294901760
        %v1876 = vsub.f32 %v1484, %v1875
        %1877 = vmatpush.msra.mxu0 %v1876
        %v1878 = vand.u32 %v1482, 4294901760
        %v1879 = vsub.f32 %v1482, %v1878
        %1880 = vmatpush.msra.mxu0 %v1879
        %v1881 = vand.u32 %v1480, 4294901760
        %v1882 = vsub.f32 %v1480, %v1881
        %1883 = vmatpush.msra.mxu0 %v1882
        %v1884 = vand.u32 %v1498, 4294901760
        %v1885 = vsub.f32 %v1498, %v1884
        %1886 = vmatmul.f32.gmra.mxu0 %v1885
        %v1887 = vpop.f32.mrf.mxu0
        %v1888 = vadd.f32 %v1848, %v1887
        %1889 = vdwg.mxu0
        %1890 = vmatpush.msra.mxu0 0.0
        %1891 = vmatpush.msra.mxu0 0.0
        %1892 = vmatpush.msra.mxu0 0.0
        %1893 = vmatpush.msra.mxu0 0.0
        %1894 = vmatpush.msra.mxu0 0.0
        %1895 = vmatpush.msra.mxu0 0.0
        %1896 = vmatpush.msra.mxu0 0.0
        %v1897 = vand.u32 %v1496, 4294901760
        %1898 = vmatpush.msra.mxu0 %v1897
        %v1899 = vand.u32 %v1494, 4294901760
        %1900 = vmatpush.msra.mxu0 %v1899
        %v1901 = vand.u32 %v1492, 4294901760
        %1902 = vmatpush.msra.mxu0 %v1901
        %v1903 = vand.u32 %v1490, 4294901760
        %1904 = vmatpush.msra.mxu0 %v1903
        %v1905 = vand.u32 %v1488, 4294901760
        %1906 = vmatpush.msra.mxu0 %v1905
        %v1907 = vand.u32 %v1486, 4294901760
        %1908 = vmatpush.msra.mxu0 %v1907
        %v1909 = vand.u32 %v1484, 4294901760
        %1910 = vmatpush.msra.mxu0 %v1909
        %v1911 = vand.u32 %v1482, 4294901760
        %1912 = vmatpush.msra.mxu0 %v1911
        %v1913 = vand.u32 %v1480, 4294901760
        %1914 = vmatpush.msra.mxu0 %v1913
        %v1915 = vand.u32 %v1498, 4294901760
        %v1916 = vsub.f32 %v1498, %v1915
        %v1917 = vand.u32 %v1916, 4294901760
        %1918 = vmatmul.f32.gmra.mxu0 %v1917
        %v1919 = vpop.f32.mrf.mxu0
        %v1920 = vadd.f32 %v1888, %v1919
        %1921 = vdwg.mxu0
        %1922 = vmatpush.msra.mxu0 0.0
        %1923 = vmatpush.msra.mxu0 0.0
        %1924 = vmatpush.msra.mxu0 0.0
        %1925 = vmatpush.msra.mxu0 0.0
        %1926 = vmatpush.msra.mxu0 0.0
        %1927 = vmatpush.msra.mxu0 0.0
        %1928 = vmatpush.msra.mxu0 0.0
        %v1929 = vand.u32 %v1496, 4294901760
        %v1930 = vsub.f32 %v1496, %v1929
        %v1931 = vand.u32 %v1930, 4294901760
        %1932 = vmatpush.msra.mxu0 %v1931
        %v1933 = vand.u32 %v1494, 4294901760
        %v1934 = vsub.f32 %v1494, %v1933
        %v1935 = vand.u32 %v1934, 4294901760
        %1936 = vmatpush.msra.mxu0 %v1935
        %v1937 = vand.u32 %v1492, 4294901760
        %v1938 = vsub.f32 %v1492, %v1937
        %v1939 = vand.u32 %v1938, 4294901760
        %1940 = vmatpush.msra.mxu0 %v1939
        %v1941 = vand.u32 %v1490, 4294901760
        %v1942 = vsub.f32 %v1490, %v1941
        %v1943 = vand.u32 %v1942, 4294901760
        %1944 = vmatpush.msra.mxu0 %v1943
        %v1945 = vand.u32 %v1488, 4294901760
        %v1946 = vsub.f32 %v1488, %v1945
        %v1947 = vand.u32 %v1946, 4294901760
        %1948 = vmatpush.msra.mxu0 %v1947
        %v1949 = vand.u32 %v1486, 4294901760
        %v1950 = vsub.f32 %v1486, %v1949
        %v1951 = vand.u32 %v1950, 4294901760
        %1952 = vmatpush.msra.mxu0 %v1951
        %v1953 = vand.u32 %v1484, 4294901760
        %v1954 = vsub.f32 %v1484, %v1953
        %v1955 = vand.u32 %v1954, 4294901760
        %1956 = vmatpush.msra.mxu0 %v1955
        %v1957 = vand.u32 %v1482, 4294901760
        %v1958 = vsub.f32 %v1482, %v1957
        %v1959 = vand.u32 %v1958, 4294901760
        %1960 = vmatpush.msra.mxu0 %v1959
        %v1961 = vand.u32 %v1480, 4294901760
        %v1962 = vsub.f32 %v1480, %v1961
        %v1963 = vand.u32 %v1962, 4294901760
        %1964 = vmatpush.msra.mxu0 %v1963
        %v1965 = vand.u32 %v1498, 4294901760
        %1966 = vmatmul.f32.gmra.mxu0 %v1965
        %v1967 = vpop.f32.mrf.mxu0
        %v1968 = vadd.f32 %v1920, %v1967
        %1969 = vdwg.mxu0
        %1970 = vmatpush.msra.mxu0 0.0
        %1971 = vmatpush.msra.mxu0 0.0
        %1972 = vmatpush.msra.mxu0 0.0
        %1973 = vmatpush.msra.mxu0 0.0
        %1974 = vmatpush.msra.mxu0 0.0
        %1975 = vmatpush.msra.mxu0 0.0
        %1976 = vmatpush.msra.mxu0 0.0
        %v1977 = vand.u32 %v1496, 4294901760
        %1978 = vmatpush.msra.mxu0 %v1977
        %v1979 = vand.u32 %v1494, 4294901760
        %1980 = vmatpush.msra.mxu0 %v1979
        %v1981 = vand.u32 %v1492, 4294901760
        %1982 = vmatpush.msra.mxu0 %v1981
        %v1983 = vand.u32 %v1490, 4294901760
        %1984 = vmatpush.msra.mxu0 %v1983
        %v1985 = vand.u32 %v1488, 4294901760
        %1986 = vmatpush.msra.mxu0 %v1985
        %v1987 = vand.u32 %v1486, 4294901760
        %1988 = vmatpush.msra.mxu0 %v1987
        %v1989 = vand.u32 %v1484, 4294901760
        %1990 = vmatpush.msra.mxu0 %v1989
        %v1991 = vand.u32 %v1482, 4294901760
        %1992 = vmatpush.msra.mxu0 %v1991
        %v1993 = vand.u32 %v1480, 4294901760
        %1994 = vmatpush.msra.mxu0 %v1993
        %v1995 = vand.u32 %v1498, 4294901760
        %1996 = vmatmul.f32.gmra.mxu0 %v1995
        %v1997 = vpop.f32.mrf.mxu0
        %v1998 = vadd.f32 %v1968, %v1997
        %1999 = vdwg.mxu0
        %v2000 = vadd.f32 %v1225, %v1748
        %v2001 = vadd.f32 %v1475, %v1998
        %v2002 = vld [vmem:[%s430 + $0x1] sm:$0xff]
        %s2003 = scalar_lea.vmem %s2, 432
        %v2004 = vld [vmem:[%s2003] sm:$0xff]
        %v2005 = vld [vmem:[%s2003 + $0x8] sm:$0xff]
        %v2006 = vld [vmem:[%s2003 + $0x10] sm:$0xff]
        %v2007 = vld [vmem:[%s2003 + $0x18] sm:$0xff]
        %v2008 = vld [vmem:[%s2003 + $0x20] sm:$0xff]
        %v2009 = vld [vmem:[%s2003 + $0x28] sm:$0xff]
        %v2010 = vld [vmem:[%s2003 + $0x30] sm:$0xff]
        %v2011 = vld [vmem:[%s2003 + $0x38] sm:$0xff]
        %v2012 = vld [vmem:[%s2003 + $0x40] sm:$0xff]
        %v2013 = vld [vmem:[%s2003 + $0x48] sm:$0xff]
        %v2014 = vld [vmem:[%s2003 + $0x50] sm:$0xff]
        %v2015 = vld [vmem:[%s2003 + $0x58] sm:$0xff]
        %v2016 = vld [vmem:[%s2003 + $0x60] sm:$0xff]
        %v2017 = vld [vmem:[%s2003 + $0x68] sm:$0xff]
        %v2018 = vld [vmem:[%s2003 + $0x70] sm:$0xff]
        %v2019 = vld [vmem:[%s2003 + $0x78] sm:$0xff]
        %v2020 = vld [vmem:[%s2003 + $0x80] sm:$0xff]
        %v2021 = vld [vmem:[%s2003 + $0x88] sm:$0xff]
        %v2023 = vsel %vm470, %v2002, 0
        %2025 = vmatpush.msra.mxu0 0.0
        %2026 = vmatpush.msra.mxu0 0.0
        %2027 = vmatpush.msra.mxu0 0.0
        %2028 = vmatpush.msra.mxu0 0.0
        %2029 = vmatpush.msra.mxu0 0.0
        %2030 = vmatpush.msra.mxu0 0.0
        %2031 = vmatpush.msra.mxu0 0.0
        %v2032 = vand.u32 %v2020, 4294901760
        %2033 = vmatpush.msra.mxu0 %v2032
        %v2034 = vand.u32 %v2018, 4294901760
        %2035 = vmatpush.msra.mxu0 %v2034
        %v2036 = vand.u32 %v2016, 4294901760
        %2037 = vmatpush.msra.mxu0 %v2036
        %v2038 = vand.u32 %v2014, 4294901760
        %2039 = vmatpush.msra.mxu0 %v2038
        %v2040 = vand.u32 %v2012, 4294901760
        %2041 = vmatpush.msra.mxu0 %v2040
        %v2042 = vand.u32 %v2010, 4294901760
        %2043 = vmatpush.msra.mxu0 %v2042
        %v2044 = vand.u32 %v2008, 4294901760
        %2045 = vmatpush.msra.mxu0 %v2044
        %v2046 = vand.u32 %v2006, 4294901760
        %2047 = vmatpush.msra.mxu0 %v2046
        %v2048 = vand.u32 %v2004, 4294901760
        %2049 = vmatpush.msra.mxu0 %v2048
        %v2050 = vand.u32 %v2023, 4294901760
        %v2051 = vsub.f32 %v2023, %v2050
        %v2052 = vand.u32 %v2051, 4294901760
        %v2053 = vsub.f32 %v2051, %v2052
        %v2054 = vand.u32 %v2053, 4294901760
        %2055 = vmatmul.f32.gmra.mxu0 %v2054
        %v2056 = vpop.f32.mrf.mxu0
        %v2057 = vadd.f32 0.0, %v2056
        %2058 = vdwg.mxu0
        %2059 = vmatpush.msra.mxu0 0.0
        %2060 = vmatpush.msra.mxu0 0.0
        %2061 = vmatpush.msra.mxu0 0.0
        %2062 = vmatpush.msra.mxu0 0.0
        %2063 = vmatpush.msra.mxu0 0.0
        %2064 = vmatpush.msra.mxu0 0.0
        %2065 = vmatpush.msra.mxu0 0.0
        %v2066 = vand.u32 %v2020, 4294901760
        %v2067 = vsub.f32 %v2020, %v2066
        %v2068 = vand.u32 %v2067, 4294901760
        %v2069 = vsub.f32 %v2067, %v2068
        %v2070 = vand.u32 %v2069, 4294901760
        %2071 = vmatpush.msra.mxu0 %v2070
        %v2072 = vand.u32 %v2018, 4294901760
        %v2073 = vsub.f32 %v2018, %v2072
        %v2074 = vand.u32 %v2073, 4294901760
        %v2075 = vsub.f32 %v2073, %v2074
        %v2076 = vand.u32 %v2075, 4294901760
        %2077 = vmatpush.msra.mxu0 %v2076
        %v2078 = vand.u32 %v2016, 4294901760
        %v2079 = vsub.f32 %v2016, %v2078
        %v2080 = vand.u32 %v2079, 4294901760
        %v2081 = vsub.f32 %v2079, %v2080
        %v2082 = vand.u32 %v2081, 4294901760
        %2083 = vmatpush.msra.mxu0 %v2082
        %v2084 = vand.u32 %v2014, 4294901760
        %v2085 = vsub.f32 %v2014, %v2084
        %v2086 = vand.u32 %v2085, 4294901760
        %v2087 = vsub.f32 %v2085, %v2086
        %v2088 = vand.u32 %v2087, 4294901760
        %2089 = vmatpush.msra.mxu0 %v2088
        %v2090 = vand.u32 %v2012, 4294901760
        %v2091 = vsub.f32 %v2012, %v2090
        %v2092 = vand.u32 %v2091, 4294901760
        %v2093 = vsub.f32 %v2091, %v2092
        %v2094 = vand.u32 %v2093, 4294901760
        %2095 = vmatpush.msra.mxu0 %v2094
        %v2096 = vand.u32 %v2010, 4294901760
        %v2097 = vsub.f32 %v2010, %v2096
        %v2098 = vand.u32 %v2097, 4294901760
        %v2099 = vsub.f32 %v2097, %v2098
        %v2100 = vand.u32 %v2099, 4294901760
        %2101 = vmatpush.msra.mxu0 %v2100
        %v2102 = vand.u32 %v2008, 4294901760
        %v2103 = vsub.f32 %v2008, %v2102
        %v2104 = vand.u32 %v2103, 4294901760
        %v2105 = vsub.f32 %v2103, %v2104
        %v2106 = vand.u32 %v2105, 4294901760
        %2107 = vmatpush.msra.mxu0 %v2106
        %v2108 = vand.u32 %v2006, 4294901760
        %v2109 = vsub.f32 %v2006, %v2108
        %v2110 = vand.u32 %v2109, 4294901760
        %v2111 = vsub.f32 %v2109, %v2110
        %v2112 = vand.u32 %v2111, 4294901760
        %2113 = vmatpush.msra.mxu0 %v2112
        %v2114 = vand.u32 %v2004, 4294901760
        %v2115 = vsub.f32 %v2004, %v2114
        %v2116 = vand.u32 %v2115, 4294901760
        %v2117 = vsub.f32 %v2115, %v2116
        %v2118 = vand.u32 %v2117, 4294901760
        %2119 = vmatpush.msra.mxu0 %v2118
        %v2120 = vand.u32 %v2023, 4294901760
        %2121 = vmatmul.f32.gmra.mxu0 %v2120
        %v2122 = vpop.f32.mrf.mxu0
        %v2123 = vadd.f32 %v2057, %v2122
        %2124 = vdwg.mxu0
        %2125 = vmatpush.msra.mxu0 0.0
        %2126 = vmatpush.msra.mxu0 0.0
        %2127 = vmatpush.msra.mxu0 0.0
        %2128 = vmatpush.msra.mxu0 0.0
        %2129 = vmatpush.msra.mxu0 0.0
        %2130 = vmatpush.msra.mxu0 0.0
        %2131 = vmatpush.msra.mxu0 0.0
        %v2132 = vand.u32 %v2020, 4294901760
        %v2133 = vsub.f32 %v2020, %v2132
        %2134 = vmatpush.msra.mxu0 %v2133
        %v2135 = vand.u32 %v2018, 4294901760
        %v2136 = vsub.f32 %v2018, %v2135
        %2137 = vmatpush.msra.mxu0 %v2136
        %v2138 = vand.u32 %v2016, 4294901760
        %v2139 = vsub.f32 %v2016, %v2138
        %2140 = vmatpush.msra.mxu0 %v2139
        %v2141 = vand.u32 %v2014, 4294901760
        %v2142 = vsub.f32 %v2014, %v2141
        %2143 = vmatpush.msra.mxu0 %v2142
        %v2144 = vand.u32 %v2012, 4294901760
        %v2145 = vsub.f32 %v2012, %v2144
        %2146 = vmatpush.msra.mxu0 %v2145
        %v2147 = vand.u32 %v2010, 4294901760
        %v2148 = vsub.f32 %v2010, %v2147
        %2149 = vmatpush.msra.mxu0 %v2148
        %v2150 = vand.u32 %v2008, 4294901760
        %v2151 = vsub.f32 %v2008, %v2150
        %2152 = vmatpush.msra.mxu0 %v2151
        %v2153 = vand.u32 %v2006, 4294901760
        %v2154 = vsub.f32 %v2006, %v2153
        %2155 = vmatpush.msra.mxu0 %v2154
        %v2156 = vand.u32 %v2004, 4294901760
        %v2157 = vsub.f32 %v2004, %v2156
        %2158 = vmatpush.msra.mxu0 %v2157
        %v2159 = vand.u32 %v2023, 4294901760
        %v2160 = vsub.f32 %v2023, %v2159
        %2161 = vmatmul.f32.gmra.mxu0 %v2160
        %v2162 = vpop.f32.mrf.mxu0
        %v2163 = vadd.f32 %v2123, %v2162
        %2164 = vdwg.mxu0
        %2165 = vmatpush.msra.mxu0 0.0
        %2166 = vmatpush.msra.mxu0 0.0
        %2167 = vmatpush.msra.mxu0 0.0
        %2168 = vmatpush.msra.mxu0 0.0
        %2169 = vmatpush.msra.mxu0 0.0
        %2170 = vmatpush.msra.mxu0 0.0
        %2171 = vmatpush.msra.mxu0 0.0
        %v2172 = vand.u32 %v2020, 4294901760
        %2173 = vmatpush.msra.mxu0 %v2172
        %v2174 = vand.u32 %v2018, 4294901760
        %2175 = vmatpush.msra.mxu0 %v2174
        %v2176 = vand.u32 %v2016, 4294901760
        %2177 = vmatpush.msra.mxu0 %v2176
        %v2178 = vand.u32 %v2014, 4294901760
        %2179 = vmatpush.msra.mxu0 %v2178
        %v2180 = vand.u32 %v2012, 4294901760
        %2181 = vmatpush.msra.mxu0 %v2180
        %v2182 = vand.u32 %v2010, 4294901760
        %2183 = vmatpush.msra.mxu0 %v2182
        %v2184 = vand.u32 %v2008, 4294901760
        %2185 = vmatpush.msra.mxu0 %v2184
        %v2186 = vand.u32 %v2006, 4294901760
        %2187 = vmatpush.msra.mxu0 %v2186
        %v2188 = vand.u32 %v2004, 4294901760
        %2189 = vmatpush.msra.mxu0 %v2188
        %v2190 = vand.u32 %v2023, 4294901760
        %v2191 = vsub.f32 %v2023, %v2190
        %v2192 = vand.u32 %v2191, 4294901760
        %2193 = vmatmul.f32.gmra.mxu0 %v2192
        %v2194 = vpop.f32.mrf.mxu0
        %v2195 = vadd.f32 %v2163, %v2194
        %2196 = vdwg.mxu0
        %2197 = vmatpush.msra.mxu0 0.0
        %2198 = vmatpush.msra.mxu0 0.0
        %2199 = vmatpush.msra.mxu0 0.0
        %2200 = vmatpush.msra.mxu0 0.0
        %2201 = vmatpush.msra.mxu0 0.0
        %2202 = vmatpush.msra.mxu0 0.0
        %2203 = vmatpush.msra.mxu0 0.0
        %v2204 = vand.u32 %v2020, 4294901760
        %v2205 = vsub.f32 %v2020, %v2204
        %v2206 = vand.u32 %v2205, 4294901760
        %2207 = vmatpush.msra.mxu0 %v2206
        %v2208 = vand.u32 %v2018, 4294901760
        %v2209 = vsub.f32 %v2018, %v2208
        %v2210 = vand.u32 %v2209, 4294901760
        %2211 = vmatpush.msra.mxu0 %v2210
        %v2212 = vand.u32 %v2016, 4294901760
        %v2213 = vsub.f32 %v2016, %v2212
        %v2214 = vand.u32 %v2213, 4294901760
        %2215 = vmatpush.msra.mxu0 %v2214
        %v2216 = vand.u32 %v2014, 4294901760
        %v2217 = vsub.f32 %v2014, %v2216
        %v2218 = vand.u32 %v2217, 4294901760
        %2219 = vmatpush.msra.mxu0 %v2218
        %v2220 = vand.u32 %v2012, 4294901760
        %v2221 = vsub.f32 %v2012, %v2220
        %v2222 = vand.u32 %v2221, 4294901760
        %2223 = vmatpush.msra.mxu0 %v2222
        %v2224 = vand.u32 %v2010, 4294901760
        %v2225 = vsub.f32 %v2010, %v2224
        %v2226 = vand.u32 %v2225, 4294901760
        %2227 = vmatpush.msra.mxu0 %v2226
        %v2228 = vand.u32 %v2008, 4294901760
        %v2229 = vsub.f32 %v2008, %v2228
        %v2230 = vand.u32 %v2229, 4294901760
        %2231 = vmatpush.msra.mxu0 %v2230
        %v2232 = vand.u32 %v2006, 4294901760
        %v2233 = vsub.f32 %v2006, %v2232
        %v2234 = vand.u32 %v2233, 4294901760
        %2235 = vmatpush.msra.mxu0 %v2234
        %v2236 = vand.u32 %v2004, 4294901760
        %v2237 = vsub.f32 %v2004, %v2236
        %v2238 = vand.u32 %v2237, 4294901760
        %2239 = vmatpush.msra.mxu0 %v2238
        %v2240 = vand.u32 %v2023, 4294901760
        %2241 = vmatmul.f32.gmra.mxu0 %v2240
        %v2242 = vpop.f32.mrf.mxu0
        %v2243 = vadd.f32 %v2195, %v2242
        %2244 = vdwg.mxu0
        %2245 = vmatpush.msra.mxu0 0.0
        %2246 = vmatpush.msra.mxu0 0.0
        %2247 = vmatpush.msra.mxu0 0.0
        %2248 = vmatpush.msra.mxu0 0.0
        %2249 = vmatpush.msra.mxu0 0.0
        %2250 = vmatpush.msra.mxu0 0.0
        %2251 = vmatpush.msra.mxu0 0.0
        %v2252 = vand.u32 %v2020, 4294901760
        %2253 = vmatpush.msra.mxu0 %v2252
        %v2254 = vand.u32 %v2018, 4294901760
        %2255 = vmatpush.msra.mxu0 %v2254
        %v2256 = vand.u32 %v2016, 4294901760
        %2257 = vmatpush.msra.mxu0 %v2256
        %v2258 = vand.u32 %v2014, 4294901760
        %2259 = vmatpush.msra.mxu0 %v2258
        %v2260 = vand.u32 %v2012, 4294901760
        %2261 = vmatpush.msra.mxu0 %v2260
        %v2262 = vand.u32 %v2010, 4294901760
        %2263 = vmatpush.msra.mxu0 %v2262
        %v2264 = vand.u32 %v2008, 4294901760
        %2265 = vmatpush.msra.mxu0 %v2264
        %v2266 = vand.u32 %v2006, 4294901760
        %2267 = vmatpush.msra.mxu0 %v2266
        %v2268 = vand.u32 %v2004, 4294901760
        %2269 = vmatpush.msra.mxu0 %v2268
        %v2270 = vand.u32 %v2023, 4294901760
        %2271 = vmatmul.f32.gmra.mxu0 %v2270
        %v2272 = vpop.f32.mrf.mxu0
        %v2273 = vadd.f32 %v2243, %v2272
        %2274 = vdwg.mxu0
        %2275 = vmatpush.msra.mxu0 0.0
        %2276 = vmatpush.msra.mxu0 0.0
        %2277 = vmatpush.msra.mxu0 0.0
        %2278 = vmatpush.msra.mxu0 0.0
        %2279 = vmatpush.msra.mxu0 0.0
        %2280 = vmatpush.msra.mxu0 0.0
        %2281 = vmatpush.msra.mxu0 0.0
        %v2282 = vand.u32 %v2021, 4294901760
        %2283 = vmatpush.msra.mxu0 %v2282
        %v2284 = vand.u32 %v2019, 4294901760
        %2285 = vmatpush.msra.mxu0 %v2284
        %v2286 = vand.u32 %v2017, 4294901760
        %2287 = vmatpush.msra.mxu0 %v2286
        %v2288 = vand.u32 %v2015, 4294901760
        %2289 = vmatpush.msra.mxu0 %v2288
        %v2290 = vand.u32 %v2013, 4294901760
        %2291 = vmatpush.msra.mxu0 %v2290
        %v2292 = vand.u32 %v2011, 4294901760
        %2293 = vmatpush.msra.mxu0 %v2292
        %v2294 = vand.u32 %v2009, 4294901760
        %2295 = vmatpush.msra.mxu0 %v2294
        %v2296 = vand.u32 %v2007, 4294901760
        %2297 = vmatpush.msra.mxu0 %v2296
        %v2298 = vand.u32 %v2005, 4294901760
        %2299 = vmatpush.msra.mxu0 %v2298
        %v2300 = vand.u32 %v2023, 4294901760
        %v2301 = vsub.f32 %v2023, %v2300
        %v2302 = vand.u32 %v2301, 4294901760
        %v2303 = vsub.f32 %v2301, %v2302
        %v2304 = vand.u32 %v2303, 4294901760
        %2305 = vmatmul.f32.gmra.mxu0 %v2304
        %v2306 = vpop.f32.mrf.mxu0
        %v2307 = vadd.f32 0.0, %v2306
        %2308 = vdwg.mxu0
        %2309 = vmatpush.msra.mxu0 0.0
        %2310 = vmatpush.msra.mxu0 0.0
        %2311 = vmatpush.msra.mxu0 0.0
        %2312 = vmatpush.msra.mxu0 0.0
        %2313 = vmatpush.msra.mxu0 0.0
        %2314 = vmatpush.msra.mxu0 0.0
        %2315 = vmatpush.msra.mxu0 0.0
        %v2316 = vand.u32 %v2021, 4294901760
        %v2317 = vsub.f32 %v2021, %v2316
        %v2318 = vand.u32 %v2317, 4294901760
        %v2319 = vsub.f32 %v2317, %v2318
        %v2320 = vand.u32 %v2319, 4294901760
        %2321 = vmatpush.msra.mxu0 %v2320
        %v2322 = vand.u32 %v2019, 4294901760
        %v2323 = vsub.f32 %v2019, %v2322
        %v2324 = vand.u32 %v2323, 4294901760
        %v2325 = vsub.f32 %v2323, %v2324
        %v2326 = vand.u32 %v2325, 4294901760
        %2327 = vmatpush.msra.mxu0 %v2326
        %v2328 = vand.u32 %v2017, 4294901760
        %v2329 = vsub.f32 %v2017, %v2328
        %v2330 = vand.u32 %v2329, 4294901760
        %v2331 = vsub.f32 %v2329, %v2330
        %v2332 = vand.u32 %v2331, 4294901760
        %2333 = vmatpush.msra.mxu0 %v2332
        %v2334 = vand.u32 %v2015, 4294901760
        %v2335 = vsub.f32 %v2015, %v2334
        %v2336 = vand.u32 %v2335, 4294901760
        %v2337 = vsub.f32 %v2335, %v2336
        %v2338 = vand.u32 %v2337, 4294901760
        %2339 = vmatpush.msra.mxu0 %v2338
        %v2340 = vand.u32 %v2013, 4294901760
        %v2341 = vsub.f32 %v2013, %v2340
        %v2342 = vand.u32 %v2341, 4294901760
        %v2343 = vsub.f32 %v2341, %v2342
        %v2344 = vand.u32 %v2343, 4294901760
        %2345 = vmatpush.msra.mxu0 %v2344
        %v2346 = vand.u32 %v2011, 4294901760
        %v2347 = vsub.f32 %v2011, %v2346
        %v2348 = vand.u32 %v2347, 4294901760
        %v2349 = vsub.f32 %v2347, %v2348
        %v2350 = vand.u32 %v2349, 4294901760
        %2351 = vmatpush.msra.mxu0 %v2350
        %v2352 = vand.u32 %v2009, 4294901760
        %v2353 = vsub.f32 %v2009, %v2352
        %v2354 = vand.u32 %v2353, 4294901760
        %v2355 = vsub.f32 %v2353, %v2354
        %v2356 = vand.u32 %v2355, 4294901760
        %2357 = vmatpush.msra.mxu0 %v2356
        %v2358 = vand.u32 %v2007, 4294901760
        %v2359 = vsub.f32 %v2007, %v2358
        %v2360 = vand.u32 %v2359, 4294901760
        %v2361 = vsub.f32 %v2359, %v2360
        %v2362 = vand.u32 %v2361, 4294901760
        %2363 = vmatpush.msra.mxu0 %v2362
        %v2364 = vand.u32 %v2005, 4294901760
        %v2365 = vsub.f32 %v2005, %v2364
        %v2366 = vand.u32 %v2365, 4294901760
        %v2367 = vsub.f32 %v2365, %v2366
        %v2368 = vand.u32 %v2367, 4294901760
        %2369 = vmatpush.msra.mxu0 %v2368
        %v2370 = vand.u32 %v2023, 4294901760
        %2371 = vmatmul.f32.gmra.mxu0 %v2370
        %v2372 = vpop.f32.mrf.mxu0
        %v2373 = vadd.f32 %v2307, %v2372
        %2374 = vdwg.mxu0
        %2375 = vmatpush.msra.mxu0 0.0
        %2376 = vmatpush.msra.mxu0 0.0
        %2377 = vmatpush.msra.mxu0 0.0
        %2378 = vmatpush.msra.mxu0 0.0
        %2379 = vmatpush.msra.mxu0 0.0
        %2380 = vmatpush.msra.mxu0 0.0
        %2381 = vmatpush.msra.mxu0 0.0
        %v2382 = vand.u32 %v2021, 4294901760
        %v2383 = vsub.f32 %v2021, %v2382
        %2384 = vmatpush.msra.mxu0 %v2383
        %v2385 = vand.u32 %v2019, 4294901760
        %v2386 = vsub.f32 %v2019, %v2385
        %2387 = vmatpush.msra.mxu0 %v2386
        %v2388 = vand.u32 %v2017, 4294901760
        %v2389 = vsub.f32 %v2017, %v2388
        %2390 = vmatpush.msra.mxu0 %v2389
        %v2391 = vand.u32 %v2015, 4294901760
        %v2392 = vsub.f32 %v2015, %v2391
        %2393 = vmatpush.msra.mxu0 %v2392
        %v2394 = vand.u32 %v2013, 4294901760
        %v2395 = vsub.f32 %v2013, %v2394
        %2396 = vmatpush.msra.mxu0 %v2395
        %v2397 = vand.u32 %v2011, 4294901760
        %v2398 = vsub.f32 %v2011, %v2397
        %2399 = vmatpush.msra.mxu0 %v2398
        %v2400 = vand.u32 %v2009, 4294901760
        %v2401 = vsub.f32 %v2009, %v2400
        %2402 = vmatpush.msra.mxu0 %v2401
        %v2403 = vand.u32 %v2007, 4294901760
        %v2404 = vsub.f32 %v2007, %v2403
        %2405 = vmatpush.msra.mxu0 %v2404
        %v2406 = vand.u32 %v2005, 4294901760
        %v2407 = vsub.f32 %v2005, %v2406
        %2408 = vmatpush.msra.mxu0 %v2407
        %v2409 = vand.u32 %v2023, 4294901760
        %v2410 = vsub.f32 %v2023, %v2409
        %2411 = vmatmul.f32.gmra.mxu0 %v2410
        %v2412 = vpop.f32.mrf.mxu0
        %v2413 = vadd.f32 %v2373, %v2412
        %2414 = vdwg.mxu0
        %2415 = vmatpush.msra.mxu0 0.0
        %2416 = vmatpush.msra.mxu0 0.0
        %2417 = vmatpush.msra.mxu0 0.0
        %2418 = vmatpush.msra.mxu0 0.0
        %2419 = vmatpush.msra.mxu0 0.0
        %2420 = vmatpush.msra.mxu0 0.0
        %2421 = vmatpush.msra.mxu0 0.0
        %v2422 = vand.u32 %v2021, 4294901760
        %2423 = vmatpush.msra.mxu0 %v2422
        %v2424 = vand.u32 %v2019, 4294901760
        %2425 = vmatpush.msra.mxu0 %v2424
        %v2426 = vand.u32 %v2017, 4294901760
        %2427 = vmatpush.msra.mxu0 %v2426
        %v2428 = vand.u32 %v2015, 4294901760
        %2429 = vmatpush.msra.mxu0 %v2428
        %v2430 = vand.u32 %v2013, 4294901760
        %2431 = vmatpush.msra.mxu0 %v2430
        %v2432 = vand.u32 %v2011, 4294901760
        %2433 = vmatpush.msra.mxu0 %v2432
        %v2434 = vand.u32 %v2009, 4294901760
        %2435 = vmatpush.msra.mxu0 %v2434
        %v2436 = vand.u32 %v2007, 4294901760
        %2437 = vmatpush.msra.mxu0 %v2436
        %v2438 = vand.u32 %v2005, 4294901760
        %2439 = vmatpush.msra.mxu0 %v2438
        %v2440 = vand.u32 %v2023, 4294901760
        %v2441 = vsub.f32 %v2023, %v2440
        %v2442 = vand.u32 %v2441, 4294901760
        %2443 = vmatmul.f32.gmra.mxu0 %v2442
        %v2444 = vpop.f32.mrf.mxu0
        %v2445 = vadd.f32 %v2413, %v2444
        %2446 = vdwg.mxu0
        %2447 = vmatpush.msra.mxu0 0.0
        %2448 = vmatpush.msra.mxu0 0.0
        %2449 = vmatpush.msra.mxu0 0.0
        %2450 = vmatpush.msra.mxu0 0.0
        %2451 = vmatpush.msra.mxu0 0.0
        %2452 = vmatpush.msra.mxu0 0.0
        %2453 = vmatpush.msra.mxu0 0.0
        %v2454 = vand.u32 %v2021, 4294901760
        %v2455 = vsub.f32 %v2021, %v2454
        %v2456 = vand.u32 %v2455, 4294901760
        %2457 = vmatpush.msra.mxu0 %v2456
        %v2458 = vand.u32 %v2019, 4294901760
        %v2459 = vsub.f32 %v2019, %v2458
        %v2460 = vand.u32 %v2459, 4294901760
        %2461 = vmatpush.msra.mxu0 %v2460
        %v2462 = vand.u32 %v2017, 4294901760
        %v2463 = vsub.f32 %v2017, %v2462
        %v2464 = vand.u32 %v2463, 4294901760
        %2465 = vmatpush.msra.mxu0 %v2464
        %v2466 = vand.u32 %v2015, 4294901760
        %v2467 = vsub.f32 %v2015, %v2466
        %v2468 = vand.u32 %v2467, 4294901760
        %2469 = vmatpush.msra.mxu0 %v2468
        %v2470 = vand.u32 %v2013, 4294901760
        %v2471 = vsub.f32 %v2013, %v2470
        %v2472 = vand.u32 %v2471, 4294901760
        %2473 = vmatpush.msra.mxu0 %v2472
        %v2474 = vand.u32 %v2011, 4294901760
        %v2475 = vsub.f32 %v2011, %v2474
        %v2476 = vand.u32 %v2475, 4294901760
        %2477 = vmatpush.msra.mxu0 %v2476
        %v2478 = vand.u32 %v2009, 4294901760
        %v2479 = vsub.f32 %v2009, %v2478
        %v2480 = vand.u32 %v2479, 4294901760
        %2481 = vmatpush.msra.mxu0 %v2480
        %v2482 = vand.u32 %v2007, 4294901760
        %v2483 = vsub.f32 %v2007, %v2482
        %v2484 = vand.u32 %v2483, 4294901760
        %2485 = vmatpush.msra.mxu0 %v2484
        %v2486 = vand.u32 %v2005, 4294901760
        %v2487 = vsub.f32 %v2005, %v2486
        %v2488 = vand.u32 %v2487, 4294901760
        %2489 = vmatpush.msra.mxu0 %v2488
        %v2490 = vand.u32 %v2023, 4294901760
        %2491 = vmatmul.f32.gmra.mxu0 %v2490
        %v2492 = vpop.f32.mrf.mxu0
        %v2493 = vadd.f32 %v2445, %v2492
        %2494 = vdwg.mxu0
        %2495 = vmatpush.msra.mxu0 0.0
        %2496 = vmatpush.msra.mxu0 0.0
        %2497 = vmatpush.msra.mxu0 0.0
        %2498 = vmatpush.msra.mxu0 0.0
        %2499 = vmatpush.msra.mxu0 0.0
        %2500 = vmatpush.msra.mxu0 0.0
        %2501 = vmatpush.msra.mxu0 0.0
        %v2502 = vand.u32 %v2021, 4294901760
        %2503 = vmatpush.msra.mxu0 %v2502
        %v2504 = vand.u32 %v2019, 4294901760
        %2505 = vmatpush.msra.mxu0 %v2504
        %v2506 = vand.u32 %v2017, 4294901760
        %2507 = vmatpush.msra.mxu0 %v2506
        %v2508 = vand.u32 %v2015, 4294901760
        %2509 = vmatpush.msra.mxu0 %v2508
        %v2510 = vand.u32 %v2013, 4294901760
        %2511 = vmatpush.msra.mxu0 %v2510
        %v2512 = vand.u32 %v2011, 4294901760
        %2513 = vmatpush.msra.mxu0 %v2512
        %v2514 = vand.u32 %v2009, 4294901760
        %2515 = vmatpush.msra.mxu0 %v2514
        %v2516 = vand.u32 %v2007, 4294901760
        %2517 = vmatpush.msra.mxu0 %v2516
        %v2518 = vand.u32 %v2005, 4294901760
        %2519 = vmatpush.msra.mxu0 %v2518
        %v2520 = vand.u32 %v2023, 4294901760
        %2521 = vmatmul.f32.gmra.mxu0 %v2520
        %v2522 = vpop.f32.mrf.mxu0
        %v2523 = vadd.f32 %v2493, %v2522
        %2524 = vdwg.mxu0
        %v2525 = vadd.f32 %v2000, %v2273
        %v2526 = vadd.f32 %v2001, %v2523
        %v2527 = vld [vmem:[%s3] sm:$0x3]
        %v2529 = vperm.slane %v2527, 0
        %v2530 = vperm.slane %v2527, 1
        %v2533 = vadd.f32 %v2525, %v2529
        %v2534 = vadd.f32 %v2526, %v2530
        %v2535 = vmax.f32 %v2533, 0.0
        %v2536 = vmax.f32 %v2534, 0.0
        %v2537 = vmax.f32 %v2535, %v2536
        %2539 = vrot.lane.b32.xlu0 %v2537, 120
        %v2540 = vpop.permute.xlu0 %2539
        %v2542 = vmax.f32 %v2537, %v2540
        %vm2543 = vcmask 982016
        %2544 = vst.msk [vmem:[#allocation2] sm:$0xff] %vm2543, %v2542
        %v2545 = vld [vmem:[#allocation2] sm:$0x1]
        %v2546 = vld [vmem:[%s4] sm:$0xff]
        %v2547 = vld [vmem:[%s4 + $0x8] sm:$0xff]
        %v2548 = vld [vmem:[%s4 + $0x10] sm:$0xff]
        %v2549 = vld [vmem:[%s4 + $0x18] sm:$0xff]
        %v2550 = vld [vmem:[%s4 + $0x20] sm:$0xff]
        %v2551 = vld [vmem:[%s4 + $0x28] sm:$0xff]
        %v2552 = vld [vmem:[%s4 + $0x30] sm:$0xff]
        %v2553 = vld [vmem:[%s4 + $0x38] sm:$0xff]
        %v2554 = vld [vmem:[%s4 + $0x40] sm:$0xff]
        %v2555 = vld [vmem:[%s4 + $0x48] sm:$0xff]
        %v2556 = vld [vmem:[%s4 + $0x50] sm:$0xff]
        %v2557 = vld [vmem:[%s4 + $0x58] sm:$0xff]
        %v2558 = vld [vmem:[%s4 + $0x60] sm:$0xff]
        %v2559 = vld [vmem:[%s4 + $0x68] sm:$0xff]
        %v2560 = vld [vmem:[%s4 + $0x70] sm:$0xff]
        %v2561 = vld [vmem:[#allocation2 + $0x1] sm:$0x1]
        %s2562 = scalar_lea.vmem %s4, 120
        %v2563 = vld [vmem:[%s2562] sm:$0xff]
        %v2564 = vld [vmem:[%s2562 + $0x8] sm:$0xff]
        %v2565 = vld [vmem:[%s2562 + $0x10] sm:$0xff]
        %v2566 = vld [vmem:[%s2562 + $0x18] sm:$0xff]
        %v2567 = vld [vmem:[%s2562 + $0x20] sm:$0xff]
        %v2568 = vld [vmem:[%s2562 + $0x28] sm:$0xff]
        %v2569 = vld [vmem:[%s2562 + $0x30] sm:$0xff]
        %v2570 = vld [vmem:[%s2562 + $0x38] sm:$0xff]
        %v2571 = vld [vmem:[%s2562 + $0x40] sm:$0xff]
        %v2572 = vld [vmem:[%s2562 + $0x48] sm:$0xff]
        %v2573 = vld [vmem:[%s2562 + $0x50] sm:$0xff]
        %v2574 = vld [vmem:[%s2562 + $0x58] sm:$0xff]
        %v2575 = vld [vmem:[%s2562 + $0x60] sm:$0xff]
        %v2576 = vld [vmem:[%s2562 + $0x68] sm:$0xff]
        %v2577 = vld [vmem:[%s2562 + $0x70] sm:$0xff]
        %v2579 = vsel %vm2543, %v2561, 0
        %2581 = vmatpush.msra.mxu0 0.0
        %v2582 = vand.u32 %v2577, 4294901760
        %2583 = vmatpush.msra.mxu0 %v2582
        %v2584 = vand.u32 %v2576, 4294901760
        %2585 = vmatpush.msra.mxu0 %v2584
        %v2586 = vand.u32 %v2575, 4294901760
        %2587 = vmatpush.msra.mxu0 %v2586
        %v2588 = vand.u32 %v2574, 4294901760
        %2589 = vmatpush.msra.mxu0 %v2588
        %v2590 = vand.u32 %v2573, 4294901760
        %2591 = vmatpush.msra.mxu0 %v2590
        %v2592 = vand.u32 %v2572, 4294901760
        %2593 = vmatpush.msra.mxu0 %v2592
        %v2594 = vand.u32 %v2571, 4294901760
        %2595 = vmatpush.msra.mxu0 %v2594
        %v2596 = vand.u32 %v2570, 4294901760
        %2597 = vmatpush.msra.mxu0 %v2596
        %v2598 = vand.u32 %v2569, 4294901760
        %2599 = vmatpush.msra.mxu0 %v2598
        %v2600 = vand.u32 %v2568, 4294901760
        %2601 = vmatpush.msra.mxu0 %v2600
        %v2602 = vand.u32 %v2567, 4294901760
        %2603 = vmatpush.msra.mxu0 %v2602
        %v2604 = vand.u32 %v2566, 4294901760
        %2605 = vmatpush.msra.mxu0 %v2604
        %v2606 = vand.u32 %v2565, 4294901760
        %2607 = vmatpush.msra.mxu0 %v2606
        %v2608 = vand.u32 %v2564, 4294901760
        %2609 = vmatpush.msra.mxu0 %v2608
        %v2610 = vand.u32 %v2563, 4294901760
        %2611 = vmatpush.msra.mxu0 %v2610
        %v2612 = vand.u32 %v2579, 4294901760
        %v2613 = vsub.f32 %v2579, %v2612
        %v2614 = vand.u32 %v2613, 4294901760
        %v2615 = vsub.f32 %v2613, %v2614
        %v2616 = vand.u32 %v2615, 4294901760
        %2617 = vmatmul.f32.gmra.mxu0 %v2616
        %v2618 = vpop.f32.mrf.mxu0
        %v2619 = vadd.f32 0.0, %v2618
        %2620 = vdwg.mxu0
        %2621 = vmatpush.msra.mxu0 0.0
        %v2622 = vand.u32 %v2577, 4294901760
        %v2623 = vsub.f32 %v2577, %v2622
        %v2624 = vand.u32 %v2623, 4294901760
        %v2625 = vsub.f32 %v2623, %v2624
        %v2626 = vand.u32 %v2625, 4294901760
        %2627 = vmatpush.msra.mxu0 %v2626
        %v2628 = vand.u32 %v2576, 4294901760
        %v2629 = vsub.f32 %v2576, %v2628
        %v2630 = vand.u32 %v2629, 4294901760
        %v2631 = vsub.f32 %v2629, %v2630
        %v2632 = vand.u32 %v2631, 4294901760
        %2633 = vmatpush.msra.mxu0 %v2632
        %v2634 = vand.u32 %v2575, 4294901760
        %v2635 = vsub.f32 %v2575, %v2634
        %v2636 = vand.u32 %v2635, 4294901760
        %v2637 = vsub.f32 %v2635, %v2636
        %v2638 = vand.u32 %v2637, 4294901760
        %2639 = vmatpush.msra.mxu0 %v2638
        %v2640 = vand.u32 %v2574, 4294901760
        %v2641 = vsub.f32 %v2574, %v2640
        %v2642 = vand.u32 %v2641, 4294901760
        %v2643 = vsub.f32 %v2641, %v2642
        %v2644 = vand.u32 %v2643, 4294901760
        %2645 = vmatpush.msra.mxu0 %v2644
        %v2646 = vand.u32 %v2573, 4294901760
        %v2647 = vsub.f32 %v2573, %v2646
        %v2648 = vand.u32 %v2647, 4294901760
        %v2649 = vsub.f32 %v2647, %v2648
        %v2650 = vand.u32 %v2649, 4294901760
        %2651 = vmatpush.msra.mxu0 %v2650
        %v2652 = vand.u32 %v2572, 4294901760
        %v2653 = vsub.f32 %v2572, %v2652
        %v2654 = vand.u32 %v2653, 4294901760
        %v2655 = vsub.f32 %v2653, %v2654
        %v2656 = vand.u32 %v2655, 4294901760
        %2657 = vmatpush.msra.mxu0 %v2656
        %v2658 = vand.u32 %v2571, 4294901760
        %v2659 = vsub.f32 %v2571, %v2658
        %v2660 = vand.u32 %v2659, 4294901760
        %v2661 = vsub.f32 %v2659, %v2660
        %v2662 = vand.u32 %v2661, 4294901760
        %2663 = vmatpush.msra.mxu0 %v2662
        %v2664 = vand.u32 %v2570, 4294901760
        %v2665 = vsub.f32 %v2570, %v2664
        %v2666 = vand.u32 %v2665, 4294901760
        %v2667 = vsub.f32 %v2665, %v2666
        %v2668 = vand.u32 %v2667, 4294901760
        %2669 = vmatpush.msra.mxu0 %v2668
        %v2670 = vand.u32 %v2569, 4294901760
        %v2671 = vsub.f32 %v2569, %v2670
        %v2672 = vand.u32 %v2671, 4294901760
        %v2673 = vsub.f32 %v2671, %v2672
        %v2674 = vand.u32 %v2673, 4294901760
        %2675 = vmatpush.msra.mxu0 %v2674
        %v2676 = vand.u32 %v2568, 4294901760
        %v2677 = vsub.f32 %v2568, %v2676
        %v2678 = vand.u32 %v2677, 4294901760
        %v2679 = vsub.f32 %v2677, %v2678
        %v2680 = vand.u32 %v2679, 4294901760
        %2681 = vmatpush.msra.mxu0 %v2680
        %v2682 = vand.u32 %v2567, 4294901760
        %v2683 = vsub.f32 %v2567, %v2682
        %v2684 = vand.u32 %v2683, 4294901760
        %v2685 = vsub.f32 %v2683, %v2684
        %v2686 = vand.u32 %v2685, 4294901760
        %2687 = vmatpush.msra.mxu0 %v2686
        %v2688 = vand.u32 %v2566, 4294901760
        %v2689 = vsub.f32 %v2566, %v2688
        %v2690 = vand.u32 %v2689, 4294901760
        %v2691 = vsub.f32 %v2689, %v2690
        %v2692 = vand.u32 %v2691, 4294901760
        %2693 = vmatpush.msra.mxu0 %v2692
        %v2694 = vand.u32 %v2565, 4294901760
        %v2695 = vsub.f32 %v2565, %v2694
        %v2696 = vand.u32 %v2695, 4294901760
        %v2697 = vsub.f32 %v2695, %v2696
        %v2698 = vand.u32 %v2697, 4294901760
        %2699 = vmatpush.msra.mxu0 %v2698
        %v2700 = vand.u32 %v2564, 4294901760
        %v2701 = vsub.f32 %v2564, %v2700
        %v2702 = vand.u32 %v2701, 4294901760
        %v2703 = vsub.f32 %v2701, %v2702
        %v2704 = vand.u32 %v2703, 4294901760
        %2705 = vmatpush.msra.mxu0 %v2704
        %v2706 = vand.u32 %v2563, 4294901760
        %v2707 = vsub.f32 %v2563, %v2706
        %v2708 = vand.u32 %v2707, 4294901760
        %v2709 = vsub.f32 %v2707, %v2708
        %v2710 = vand.u32 %v2709, 4294901760
        %2711 = vmatpush.msra.mxu0 %v2710
        %v2712 = vand.u32 %v2579, 4294901760
        %2713 = vmatmul.f32.gmra.mxu0 %v2712
        %v2714 = vpop.f32.mrf.mxu0
        %v2715 = vadd.f32 %v2619, %v2714
        %2716 = vdwg.mxu0
        %2717 = vmatpush.msra.mxu0 0.0
        %v2718 = vand.u32 %v2577, 4294901760
        %v2719 = vsub.f32 %v2577, %v2718
        %2720 = vmatpush.msra.mxu0 %v2719
        %v2721 = vand.u32 %v2576, 4294901760
        %v2722 = vsub.f32 %v2576, %v2721
        %2723 = vmatpush.msra.mxu0 %v2722
        %v2724 = vand.u32 %v2575, 4294901760
        %v2725 = vsub.f32 %v2575, %v2724
        %2726 = vmatpush.msra.mxu0 %v2725
        %v2727 = vand.u32 %v2574, 4294901760
        %v2728 = vsub.f32 %v2574, %v2727
        %2729 = vmatpush.msra.mxu0 %v2728
        %v2730 = vand.u32 %v2573, 4294901760
        %v2731 = vsub.f32 %v2573, %v2730
        %2732 = vmatpush.msra.mxu0 %v2731
        %v2733 = vand.u32 %v2572, 4294901760
        %v2734 = vsub.f32 %v2572, %v2733
        %2735 = vmatpush.msra.mxu0 %v2734
        %v2736 = vand.u32 %v2571, 4294901760
        %v2737 = vsub.f32 %v2571, %v2736
        %2738 = vmatpush.msra.mxu0 %v2737
        %v2739 = vand.u32 %v2570, 4294901760
        %v2740 = vsub.f32 %v2570, %v2739
        %2741 = vmatpush.msra.mxu0 %v2740
        %v2742 = vand.u32 %v2569, 4294901760
        %v2743 = vsub.f32 %v2569, %v2742
        %2744 = vmatpush.msra.mxu0 %v2743
        %v2745 = vand.u32 %v2568, 4294901760
        %v2746 = vsub.f32 %v2568, %v2745
        %2747 = vmatpush.msra.mxu0 %v2746
        %v2748 = vand.u32 %v2567, 4294901760
        %v2749 = vsub.f32 %v2567, %v2748
        %2750 = vmatpush.msra.mxu0 %v2749
        %v2751 = vand.u32 %v2566, 4294901760
        %v2752 = vsub.f32 %v2566, %v2751
        %2753 = vmatpush.msra.mxu0 %v2752
        %v2754 = vand.u32 %v2565, 4294901760
        %v2755 = vsub.f32 %v2565, %v2754
        %2756 = vmatpush.msra.mxu0 %v2755
        %v2757 = vand.u32 %v2564, 4294901760
        %v2758 = vsub.f32 %v2564, %v2757
        %2759 = vmatpush.msra.mxu0 %v2758
        %v2760 = vand.u32 %v2563, 4294901760
        %v2761 = vsub.f32 %v2563, %v2760
        %2762 = vmatpush.msra.mxu0 %v2761
        %v2763 = vand.u32 %v2579, 4294901760
        %v2764 = vsub.f32 %v2579, %v2763
        %2765 = vmatmul.f32.gmra.mxu0 %v2764
        %v2766 = vpop.f32.mrf.mxu0
        %v2767 = vadd.f32 %v2715, %v2766
        %2768 = vdwg.mxu0
        %2769 = vmatpush.msra.mxu0 0.0
        %v2770 = vand.u32 %v2577, 4294901760
        %2771 = vmatpush.msra.mxu0 %v2770
        %v2772 = vand.u32 %v2576, 4294901760
        %2773 = vmatpush.msra.mxu0 %v2772
        %v2774 = vand.u32 %v2575, 4294901760
        %2775 = vmatpush.msra.mxu0 %v2774
        %v2776 = vand.u32 %v2574, 4294901760
        %2777 = vmatpush.msra.mxu0 %v2776
        %v2778 = vand.u32 %v2573, 4294901760
        %2779 = vmatpush.msra.mxu0 %v2778
        %v2780 = vand.u32 %v2572, 4294901760
        %2781 = vmatpush.msra.mxu0 %v2780
        %v2782 = vand.u32 %v2571, 4294901760
        %2783 = vmatpush.msra.mxu0 %v2782
        %v2784 = vand.u32 %v2570, 4294901760
        %2785 = vmatpush.msra.mxu0 %v2784
        %v2786 = vand.u32 %v2569, 4294901760
        %2787 = vmatpush.msra.mxu0 %v2786
        %v2788 = vand.u32 %v2568, 4294901760
        %2789 = vmatpush.msra.mxu0 %v2788
        %v2790 = vand.u32 %v2567, 4294901760
        %2791 = vmatpush.msra.mxu0 %v2790
        %v2792 = vand.u32 %v2566, 4294901760
        %2793 = vmatpush.msra.mxu0 %v2792
        %v2794 = vand.u32 %v2565, 4294901760
        %2795 = vmatpush.msra.mxu0 %v2794
        %v2796 = vand.u32 %v2564, 4294901760
        %2797 = vmatpush.msra.mxu0 %v2796
        %v2798 = vand.u32 %v2563, 4294901760
        %2799 = vmatpush.msra.mxu0 %v2798
        %v2800 = vand.u32 %v2579, 4294901760
        %v2801 = vsub.f32 %v2579, %v2800
        %v2802 = vand.u32 %v2801, 4294901760
        %2803 = vmatmul.f32.gmra.mxu0 %v2802
        %v2804 = vpop.f32.mrf.mxu0
        %v2805 = vadd.f32 %v2767, %v2804
        %2806 = vdwg.mxu0
        %2807 = vmatpush.msra.mxu0 0.0
        %v2808 = vand.u32 %v2577, 4294901760
        %v2809 = vsub.f32 %v2577, %v2808
        %v2810 = vand.u32 %v2809, 4294901760
        %2811 = vmatpush.msra.mxu0 %v2810
        %v2812 = vand.u32 %v2576, 4294901760
        %v2813 = vsub.f32 %v2576, %v2812
        %v2814 = vand.u32 %v2813, 4294901760
        %2815 = vmatpush.msra.mxu0 %v2814
        %v2816 = vand.u32 %v2575, 4294901760
        %v2817 = vsub.f32 %v2575, %v2816
        %v2818 = vand.u32 %v2817, 4294901760
        %2819 = vmatpush.msra.mxu0 %v2818
        %v2820 = vand.u32 %v2574, 4294901760
        %v2821 = vsub.f32 %v2574, %v2820
        %v2822 = vand.u32 %v2821, 4294901760
        %2823 = vmatpush.msra.mxu0 %v2822
        %v2824 = vand.u32 %v2573, 4294901760
        %v2825 = vsub.f32 %v2573, %v2824
        %v2826 = vand.u32 %v2825, 4294901760
        %2827 = vmatpush.msra.mxu0 %v2826
        %v2828 = vand.u32 %v2572, 4294901760
        %v2829 = vsub.f32 %v2572, %v2828
        %v2830 = vand.u32 %v2829, 4294901760
        %2831 = vmatpush.msra.mxu0 %v2830
        %v2832 = vand.u32 %v2571, 4294901760
        %v2833 = vsub.f32 %v2571, %v2832
        %v2834 = vand.u32 %v2833, 4294901760
        %2835 = vmatpush.msra.mxu0 %v2834
        %v2836 = vand.u32 %v2570, 4294901760
        %v2837 = vsub.f32 %v2570, %v2836
        %v2838 = vand.u32 %v2837, 4294901760
        %2839 = vmatpush.msra.mxu0 %v2838
        %v2840 = vand.u32 %v2569, 4294901760
        %v2841 = vsub.f32 %v2569, %v2840
        %v2842 = vand.u32 %v2841, 4294901760
        %2843 = vmatpush.msra.mxu0 %v2842
        %v2844 = vand.u32 %v2568, 4294901760
        %v2845 = vsub.f32 %v2568, %v2844
        %v2846 = vand.u32 %v2845, 4294901760
        %2847 = vmatpush.msra.mxu0 %v2846
        %v2848 = vand.u32 %v2567, 4294901760
        %v2849 = vsub.f32 %v2567, %v2848
        %v2850 = vand.u32 %v2849, 4294901760
        %2851 = vmatpush.msra.mxu0 %v2850
        %v2852 = vand.u32 %v2566, 4294901760
        %v2853 = vsub.f32 %v2566, %v2852
        %v2854 = vand.u32 %v2853, 4294901760
        %2855 = vmatpush.msra.mxu0 %v2854
        %v2856 = vand.u32 %v2565, 4294901760
        %v2857 = vsub.f32 %v2565, %v2856
        %v2858 = vand.u32 %v2857, 4294901760
        %2859 = vmatpush.msra.mxu0 %v2858
        %v2860 = vand.u32 %v2564, 4294901760
        %v2861 = vsub.f32 %v2564, %v2860
        %v2862 = vand.u32 %v2861, 4294901760
        %2863 = vmatpush.msra.mxu0 %v2862
        %v2864 = vand.u32 %v2563, 4294901760
        %v2865 = vsub.f32 %v2563, %v2864
        %v2866 = vand.u32 %v2865, 4294901760
        %2867 = vmatpush.msra.mxu0 %v2866
        %v2868 = vand.u32 %v2579, 4294901760
        %2869 = vmatmul.f32.gmra.mxu0 %v2868
        %v2870 = vpop.f32.mrf.mxu0
        %v2871 = vadd.f32 %v2805, %v2870
        %2872 = vdwg.mxu0
        %2873 = vmatpush.msra.mxu0 0.0
        %v2874 = vand.u32 %v2577, 4294901760
        %2875 = vmatpush.msra.mxu0 %v2874
        %v2876 = vand.u32 %v2576, 4294901760
        %2877 = vmatpush.msra.mxu0 %v2876
        %v2878 = vand.u32 %v2575, 4294901760
        %2879 = vmatpush.msra.mxu0 %v2878
        %v2880 = vand.u32 %v2574, 4294901760
        %2881 = vmatpush.msra.mxu0 %v2880
        %v2882 = vand.u32 %v2573, 4294901760
        %2883 = vmatpush.msra.mxu0 %v2882
        %v2884 = vand.u32 %v2572, 4294901760
        %2885 = vmatpush.msra.mxu0 %v2884
        %v2886 = vand.u32 %v2571, 4294901760
        %2887 = vmatpush.msra.mxu0 %v2886
        %v2888 = vand.u32 %v2570, 4294901760
        %2889 = vmatpush.msra.mxu0 %v2888
        %v2890 = vand.u32 %v2569, 4294901760
        %2891 = vmatpush.msra.mxu0 %v2890
        %v2892 = vand.u32 %v2568, 4294901760
        %2893 = vmatpush.msra.mxu0 %v2892
        %v2894 = vand.u32 %v2567, 4294901760
        %2895 = vmatpush.msra.mxu0 %v2894
        %v2896 = vand.u32 %v2566, 4294901760
        %2897 = vmatpush.msra.mxu0 %v2896
        %v2898 = vand.u32 %v2565, 4294901760
        %2899 = vmatpush.msra.mxu0 %v2898
        %v2900 = vand.u32 %v2564, 4294901760
        %2901 = vmatpush.msra.mxu0 %v2900
        %v2902 = vand.u32 %v2563, 4294901760
        %2903 = vmatpush.msra.mxu0 %v2902
        %v2904 = vand.u32 %v2579, 4294901760
        %2905 = vmatmul.f32.gmra.mxu0 %v2904
        %v2906 = vpop.f32.mrf.mxu0
        %v2907 = vadd.f32 %v2871, %v2906
        %2908 = vdwg.mxu0
        %v2910 = vsel %vm2543, %v2545, 0
        %2912 = vmatpush.msra.mxu0 0.0
        %v2913 = vand.u32 %v2560, 4294901760
        %2914 = vmatpush.msra.mxu0 %v2913
        %v2915 = vand.u32 %v2559, 4294901760
        %2916 = vmatpush.msra.mxu0 %v2915
        %v2917 = vand.u32 %v2558, 4294901760
        %2918 = vmatpush.msra.mxu0 %v2917
        %v2919 = vand.u32 %v2557, 4294901760
        %2920 = vmatpush.msra.mxu0 %v2919
        %v2921 = vand.u32 %v2556, 4294901760
        %2922 = vmatpush.msra.mxu0 %v2921
        %v2923 = vand.u32 %v2555, 4294901760
        %2924 = vmatpush.msra.mxu0 %v2923
        %v2925 = vand.u32 %v2554, 4294901760
        %2926 = vmatpush.msra.mxu0 %v2925
        %v2927 = vand.u32 %v2553, 4294901760
        %2928 = vmatpush.msra.mxu0 %v2927
        %v2929 = vand.u32 %v2552, 4294901760
        %2930 = vmatpush.msra.mxu0 %v2929
        %v2931 = vand.u32 %v2551, 4294901760
        %2932 = vmatpush.msra.mxu0 %v2931
        %v2933 = vand.u32 %v2550, 4294901760
        %2934 = vmatpush.msra.mxu0 %v2933
        %v2935 = vand.u32 %v2549, 4294901760
        %2936 = vmatpush.msra.mxu0 %v2935
        %v2937 = vand.u32 %v2548, 4294901760
        %2938 = vmatpush.msra.mxu0 %v2937
        %v2939 = vand.u32 %v2547, 4294901760
        %2940 = vmatpush.msra.mxu0 %v2939
        %v2941 = vand.u32 %v2546, 4294901760
        %2942 = vmatpush.msra.mxu0 %v2941
        %v2943 = vand.u32 %v2910, 4294901760
        %v2944 = vsub.f32 %v2910, %v2943
        %v2945 = vand.u32 %v2944, 4294901760
        %v2946 = vsub.f32 %v2944, %v2945
        %v2947 = vand.u32 %v2946, 4294901760
        %2948 = vmatmul.f32.gmra.mxu0 %v2947
        %v2949 = vpop.f32.mrf.mxu0
        %v2950 = vadd.f32 %v2907, %v2949
        %2951 = vdwg.mxu0
        %2952 = vmatpush.msra.mxu0 0.0
        %v2953 = vand.u32 %v2560, 4294901760
        %v2954 = vsub.f32 %v2560, %v2953
        %v2955 = vand.u32 %v2954, 4294901760
        %v2956 = vsub.f32 %v2954, %v2955
        %v2957 = vand.u32 %v2956, 4294901760
        %2958 = vmatpush.msra.mxu0 %v2957
        %v2959 = vand.u32 %v2559, 4294901760
        %v2960 = vsub.f32 %v2559, %v2959
        %v2961 = vand.u32 %v2960, 4294901760
        %v2962 = vsub.f32 %v2960, %v2961
        %v2963 = vand.u32 %v2962, 4294901760
        %2964 = vmatpush.msra.mxu0 %v2963
        %v2965 = vand.u32 %v2558, 4294901760
        %v2966 = vsub.f32 %v2558, %v2965
        %v2967 = vand.u32 %v2966, 4294901760
        %v2968 = vsub.f32 %v2966, %v2967
        %v2969 = vand.u32 %v2968, 4294901760
        %2970 = vmatpush.msra.mxu0 %v2969
        %v2971 = vand.u32 %v2557, 4294901760
        %v2972 = vsub.f32 %v2557, %v2971
        %v2973 = vand.u32 %v2972, 4294901760
        %v2974 = vsub.f32 %v2972, %v2973
        %v2975 = vand.u32 %v2974, 4294901760
        %2976 = vmatpush.msra.mxu0 %v2975
        %v2977 = vand.u32 %v2556, 4294901760
        %v2978 = vsub.f32 %v2556, %v2977
        %v2979 = vand.u32 %v2978, 4294901760
        %v2980 = vsub.f32 %v2978, %v2979
        %v2981 = vand.u32 %v2980, 4294901760
        %2982 = vmatpush.msra.mxu0 %v2981
        %v2983 = vand.u32 %v2555, 4294901760
        %v2984 = vsub.f32 %v2555, %v2983
        %v2985 = vand.u32 %v2984, 4294901760
        %v2986 = vsub.f32 %v2984, %v2985
        %v2987 = vand.u32 %v2986, 4294901760
        %2988 = vmatpush.msra.mxu0 %v2987
        %v2989 = vand.u32 %v2554, 4294901760
        %v2990 = vsub.f32 %v2554, %v2989
        %v2991 = vand.u32 %v2990, 4294901760
        %v2992 = vsub.f32 %v2990, %v2991
        %v2993 = vand.u32 %v2992, 4294901760
        %2994 = vmatpush.msra.mxu0 %v2993
        %v2995 = vand.u32 %v2553, 4294901760
        %v2996 = vsub.f32 %v2553, %v2995
        %v2997 = vand.u32 %v2996, 4294901760
        %v2998 = vsub.f32 %v2996, %v2997
        %v2999 = vand.u32 %v2998, 4294901760
        %3000 = vmatpush.msra.mxu0 %v2999
        %v3001 = vand.u32 %v2552, 4294901760
        %v3002 = vsub.f32 %v2552, %v3001
        %v3003 = vand.u32 %v3002, 4294901760
        %v3004 = vsub.f32 %v3002, %v3003
        %v3005 = vand.u32 %v3004, 4294901760
        %3006 = vmatpush.msra.mxu0 %v3005
        %v3007 = vand.u32 %v2551, 4294901760
        %v3008 = vsub.f32 %v2551, %v3007
        %v3009 = vand.u32 %v3008, 4294901760
        %v3010 = vsub.f32 %v3008, %v3009
        %v3011 = vand.u32 %v3010, 4294901760
        %3012 = vmatpush.msra.mxu0 %v3011
        %v3013 = vand.u32 %v2550, 4294901760
        %v3014 = vsub.f32 %v2550, %v3013
        %v3015 = vand.u32 %v3014, 4294901760
        %v3016 = vsub.f32 %v3014, %v3015
        %v3017 = vand.u32 %v3016, 4294901760
        %3018 = vmatpush.msra.mxu0 %v3017
        %v3019 = vand.u32 %v2549, 4294901760
        %v3020 = vsub.f32 %v2549, %v3019
        %v3021 = vand.u32 %v3020, 4294901760
        %v3022 = vsub.f32 %v3020, %v3021
        %v3023 = vand.u32 %v3022, 4294901760
        %3024 = vmatpush.msra.mxu0 %v3023
        %v3025 = vand.u32 %v2548, 4294901760
        %v3026 = vsub.f32 %v2548, %v3025
        %v3027 = vand.u32 %v3026, 4294901760
        %v3028 = vsub.f32 %v3026, %v3027
        %v3029 = vand.u32 %v3028, 4294901760
        %3030 = vmatpush.msra.mxu0 %v3029
        %v3031 = vand.u32 %v2547, 4294901760
        %v3032 = vsub.f32 %v2547, %v3031
        %v3033 = vand.u32 %v3032, 4294901760
        %v3034 = vsub.f32 %v3032, %v3033
        %v3035 = vand.u32 %v3034, 4294901760
        %3036 = vmatpush.msra.mxu0 %v3035
        %v3037 = vand.u32 %v2546, 4294901760
        %v3038 = vsub.f32 %v2546, %v3037
        %v3039 = vand.u32 %v3038, 4294901760
        %v3040 = vsub.f32 %v3038, %v3039
        %v3041 = vand.u32 %v3040, 4294901760
        %3042 = vmatpush.msra.mxu0 %v3041
        %v3043 = vand.u32 %v2910, 4294901760
        %3044 = vmatmul.f32.gmra.mxu0 %v3043
        %v3045 = vpop.f32.mrf.mxu0
        %v3046 = vadd.f32 %v2950, %v3045
        %3047 = vdwg.mxu0
        %3048 = vmatpush.msra.mxu0 0.0
        %v3049 = vand.u32 %v2560, 4294901760
        %v3050 = vsub.f32 %v2560, %v3049
        %3051 = vmatpush.msra.mxu0 %v3050
        %v3052 = vand.u32 %v2559, 4294901760
        %v3053 = vsub.f32 %v2559, %v3052
        %3054 = vmatpush.msra.mxu0 %v3053
        %v3055 = vand.u32 %v2558, 4294901760
        %v3056 = vsub.f32 %v2558, %v3055
        %3057 = vmatpush.msra.mxu0 %v3056
        %v3058 = vand.u32 %v2557, 4294901760
        %v3059 = vsub.f32 %v2557, %v3058
        %3060 = vmatpush.msra.mxu0 %v3059
        %v3061 = vand.u32 %v2556, 4294901760
        %v3062 = vsub.f32 %v2556, %v3061
        %3063 = vmatpush.msra.mxu0 %v3062
        %v3064 = vand.u32 %v2555, 4294901760
        %v3065 = vsub.f32 %v2555, %v3064
        %3066 = vmatpush.msra.mxu0 %v3065
        %v3067 = vand.u32 %v2554, 4294901760
        %v3068 = vsub.f32 %v2554, %v3067
        %3069 = vmatpush.msra.mxu0 %v3068
        %v3070 = vand.u32 %v2553, 4294901760
        %v3071 = vsub.f32 %v2553, %v3070
        %3072 = vmatpush.msra.mxu0 %v3071
        %v3073 = vand.u32 %v2552, 4294901760
        %v3074 = vsub.f32 %v2552, %v3073
        %3075 = vmatpush.msra.mxu0 %v3074
        %v3076 = vand.u32 %v2551, 4294901760
        %v3077 = vsub.f32 %v2551, %v3076
        %3078 = vmatpush.msra.mxu0 %v3077
        %v3079 = vand.u32 %v2550, 4294901760
        %v3080 = vsub.f32 %v2550, %v3079
        %3081 = vmatpush.msra.mxu0 %v3080
        %v3082 = vand.u32 %v2549, 4294901760
        %v3083 = vsub.f32 %v2549, %v3082
        %3084 = vmatpush.msra.mxu0 %v3083
        %v3085 = vand.u32 %v2548, 4294901760
        %v3086 = vsub.f32 %v2548, %v3085
        %3087 = vmatpush.msra.mxu0 %v3086
        %v3088 = vand.u32 %v2547, 4294901760
        %v3089 = vsub.f32 %v2547, %v3088
        %3090 = vmatpush.msra.mxu0 %v3089
        %v3091 = vand.u32 %v2546, 4294901760
        %v3092 = vsub.f32 %v2546, %v3091
        %3093 = vmatpush.msra.mxu0 %v3092
        %v3094 = vand.u32 %v2910, 4294901760
        %v3095 = vsub.f32 %v2910, %v3094
        %3096 = vmatmul.f32.gmra.mxu0 %v3095
        %v3097 = vpop.f32.mrf.mxu0
        %v3098 = vadd.f32 %v3046, %v3097
        %3099 = vdwg.mxu0
        %3100 = vmatpush.msra.mxu0 0.0
        %v3101 = vand.u32 %v2560, 4294901760
        %3102 = vmatpush.msra.mxu0 %v3101
        %v3103 = vand.u32 %v2559, 4294901760
        %3104 = vmatpush.msra.mxu0 %v3103
        %v3105 = vand.u32 %v2558, 4294901760
        %3106 = vmatpush.msra.mxu0 %v3105
        %v3107 = vand.u32 %v2557, 4294901760
        %3108 = vmatpush.msra.mxu0 %v3107
        %v3109 = vand.u32 %v2556, 4294901760
        %3110 = vmatpush.msra.mxu0 %v3109
        %v3111 = vand.u32 %v2555, 4294901760
        %3112 = vmatpush.msra.mxu0 %v3111
        %v3113 = vand.u32 %v2554, 4294901760
        %3114 = vmatpush.msra.mxu0 %v3113
        %v3115 = vand.u32 %v2553, 4294901760
        %3116 = vmatpush.msra.mxu0 %v3115
        %v3117 = vand.u32 %v2552, 4294901760
        %3118 = vmatpush.msra.mxu0 %v3117
        %v3119 = vand.u32 %v2551, 4294901760
        %3120 = vmatpush.msra.mxu0 %v3119
        %v3121 = vand.u32 %v2550, 4294901760
        %3122 = vmatpush.msra.mxu0 %v3121
        %v3123 = vand.u32 %v2549, 4294901760
        %3124 = vmatpush.msra.mxu0 %v3123
        %v3125 = vand.u32 %v2548, 4294901760
        %3126 = vmatpush.msra.mxu0 %v3125
        %v3127 = vand.u32 %v2547, 4294901760
        %3128 = vmatpush.msra.mxu0 %v3127
        %v3129 = vand.u32 %v2546, 4294901760
        %3130 = vmatpush.msra.mxu0 %v3129
        %v3131 = vand.u32 %v2910, 4294901760
        %v3132 = vsub.f32 %v2910, %v3131
        %v3133 = vand.u32 %v3132, 4294901760
        %3134 = vmatmul.f32.gmra.mxu0 %v3133
        %v3135 = vpop.f32.mrf.mxu0
        %v3136 = vadd.f32 %v3098, %v3135
        %3137 = vdwg.mxu0
        %3138 = vmatpush.msra.mxu0 0.0
        %v3139 = vand.u32 %v2560, 4294901760
        %v3140 = vsub.f32 %v2560, %v3139
        %v3141 = vand.u32 %v3140, 4294901760
        %3142 = vmatpush.msra.mxu0 %v3141
        %v3143 = vand.u32 %v2559, 4294901760
        %v3144 = vsub.f32 %v2559, %v3143
        %v3145 = vand.u32 %v3144, 4294901760
        %3146 = vmatpush.msra.mxu0 %v3145
        %v3147 = vand.u32 %v2558, 4294901760
        %v3148 = vsub.f32 %v2558, %v3147
        %v3149 = vand.u32 %v3148, 4294901760
        %3150 = vmatpush.msra.mxu0 %v3149
        %v3151 = vand.u32 %v2557, 4294901760
        %v3152 = vsub.f32 %v2557, %v3151
        %v3153 = vand.u32 %v3152, 4294901760
        %3154 = vmatpush.msra.mxu0 %v3153
        %v3155 = vand.u32 %v2556, 4294901760
        %v3156 = vsub.f32 %v2556, %v3155
        %v3157 = vand.u32 %v3156, 4294901760
        %3158 = vmatpush.msra.mxu0 %v3157
        %v3159 = vand.u32 %v2555, 4294901760
        %v3160 = vsub.f32 %v2555, %v3159
        %v3161 = vand.u32 %v3160, 4294901760
        %3162 = vmatpush.msra.mxu0 %v3161
        %v3163 = vand.u32 %v2554, 4294901760
        %v3164 = vsub.f32 %v2554, %v3163
        %v3165 = vand.u32 %v3164, 4294901760
        %3166 = vmatpush.msra.mxu0 %v3165
        %v3167 = vand.u32 %v2553, 4294901760
        %v3168 = vsub.f32 %v2553, %v3167
        %v3169 = vand.u32 %v3168, 4294901760
        %3170 = vmatpush.msra.mxu0 %v3169
        %v3171 = vand.u32 %v2552, 4294901760
        %v3172 = vsub.f32 %v2552, %v3171
        %v3173 = vand.u32 %v3172, 4294901760
        %3174 = vmatpush.msra.mxu0 %v3173
        %v3175 = vand.u32 %v2551, 4294901760
        %v3176 = vsub.f32 %v2551, %v3175
        %v3177 = vand.u32 %v3176, 4294901760
        %3178 = vmatpush.msra.mxu0 %v3177
        %v3179 = vand.u32 %v2550, 4294901760
        %v3180 = vsub.f32 %v2550, %v3179
        %v3181 = vand.u32 %v3180, 4294901760
        %3182 = vmatpush.msra.mxu0 %v3181
        %v3183 = vand.u32 %v2549, 4294901760
        %v3184 = vsub.f32 %v2549, %v3183
        %v3185 = vand.u32 %v3184, 4294901760
        %3186 = vmatpush.msra.mxu0 %v3185
        %v3187 = vand.u32 %v2548, 4294901760
        %v3188 = vsub.f32 %v2548, %v3187
        %v3189 = vand.u32 %v3188, 4294901760
        %3190 = vmatpush.msra.mxu0 %v3189
        %v3191 = vand.u32 %v2547, 4294901760
        %v3192 = vsub.f32 %v2547, %v3191
        %v3193 = vand.u32 %v3192, 4294901760
        %3194 = vmatpush.msra.mxu0 %v3193
        %v3195 = vand.u32 %v2546, 4294901760
        %v3196 = vsub.f32 %v2546, %v3195
        %v3197 = vand.u32 %v3196, 4294901760
        %3198 = vmatpush.msra.mxu0 %v3197
        %v3199 = vand.u32 %v2910, 4294901760
        %3200 = vmatmul.f32.gmra.mxu0 %v3199
        %v3201 = vpop.f32.mrf.mxu0
        %v3202 = vadd.f32 %v3136, %v3201
        %3203 = vdwg.mxu0
        %3204 = vmatpush.msra.mxu0 0.0
        %v3205 = vand.u32 %v2560, 4294901760
        %3206 = vmatpush.msra.mxu0 %v3205
        %v3207 = vand.u32 %v2559, 4294901760
        %3208 = vmatpush.msra.mxu0 %v3207
        %v3209 = vand.u32 %v2558, 4294901760
        %3210 = vmatpush.msra.mxu0 %v3209
        %v3211 = vand.u32 %v2557, 4294901760
        %3212 = vmatpush.msra.mxu0 %v3211
        %v3213 = vand.u32 %v2556, 4294901760
        %3214 = vmatpush.msra.mxu0 %v3213
        %v3215 = vand.u32 %v2555, 4294901760
        %3216 = vmatpush.msra.mxu0 %v3215
        %v3217 = vand.u32 %v2554, 4294901760
        %3218 = vmatpush.msra.mxu0 %v3217
        %v3219 = vand.u32 %v2553, 4294901760
        %3220 = vmatpush.msra.mxu0 %v3219
        %v3221 = vand.u32 %v2552, 4294901760
        %3222 = vmatpush.msra.mxu0 %v3221
        %v3223 = vand.u32 %v2551, 4294901760
        %3224 = vmatpush.msra.mxu0 %v3223
        %v3225 = vand.u32 %v2550, 4294901760
        %3226 = vmatpush.msra.mxu0 %v3225
        %v3227 = vand.u32 %v2549, 4294901760
        %3228 = vmatpush.msra.mxu0 %v3227
        %v3229 = vand.u32 %v2548, 4294901760
        %3230 = vmatpush.msra.mxu0 %v3229
        %v3231 = vand.u32 %v2547, 4294901760
        %3232 = vmatpush.msra.mxu0 %v3231
        %v3233 = vand.u32 %v2546, 4294901760
        %3234 = vmatpush.msra.mxu0 %v3233
        %v3235 = vand.u32 %v2910, 4294901760
        %3236 = vmatmul.f32.gmra.mxu0 %v3235
        %v3237 = vpop.f32.mrf.mxu0
        %v3238 = vadd.f32 %v3202, %v3237
        %3239 = vdwg.mxu0
        %v3240 = vld [vmem:[#allocation2 + $0x2] sm:$0x1]
        %s3241 = scalar_lea.vmem %s4, 240
        %v3242 = vld [vmem:[%s3241] sm:$0xff]
        %v3243 = vld [vmem:[%s3241 + $0x8] sm:$0xff]
        %v3244 = vld [vmem:[%s3241 + $0x10] sm:$0xff]
        %v3245 = vld [vmem:[%s3241 + $0x18] sm:$0xff]
        %v3246 = vld [vmem:[%s3241 + $0x20] sm:$0xff]
        %v3247 = vld [vmem:[%s3241 + $0x28] sm:$0xff]
        %v3248 = vld [vmem:[%s3241 + $0x30] sm:$0xff]
        %v3249 = vld [vmem:[%s3241 + $0x38] sm:$0xff]
        %v3250 = vld [vmem:[%s3241 + $0x40] sm:$0xff]
        %v3251 = vld [vmem:[%s3241 + $0x48] sm:$0xff]
        %v3252 = vld [vmem:[%s3241 + $0x50] sm:$0xff]
        %v3253 = vld [vmem:[%s3241 + $0x58] sm:$0xff]
        %v3254 = vld [vmem:[%s3241 + $0x60] sm:$0xff]
        %v3255 = vld [vmem:[%s3241 + $0x68] sm:$0xff]
        %v3256 = vld [vmem:[%s3241 + $0x70] sm:$0xff]
        %v3258 = vsel %vm2543, %v3240, 0
        %3260 = vmatpush.msra.mxu0 0.0
        %v3261 = vand.u32 %v3256, 4294901760
        %3262 = vmatpush.msra.mxu0 %v3261
        %v3263 = vand.u32 %v3255, 4294901760
        %3264 = vmatpush.msra.mxu0 %v3263
        %v3265 = vand.u32 %v3254, 4294901760
        %3266 = vmatpush.msra.mxu0 %v3265
        %v3267 = vand.u32 %v3253, 4294901760
        %3268 = vmatpush.msra.mxu0 %v3267
        %v3269 = vand.u32 %v3252, 4294901760
        %3270 = vmatpush.msra.mxu0 %v3269
        %v3271 = vand.u32 %v3251, 4294901760
        %3272 = vmatpush.msra.mxu0 %v3271
        %v3273 = vand.u32 %v3250, 4294901760
        %3274 = vmatpush.msra.mxu0 %v3273
        %v3275 = vand.u32 %v3249, 4294901760
        %3276 = vmatpush.msra.mxu0 %v3275
        %v3277 = vand.u32 %v3248, 4294901760
        %3278 = vmatpush.msra.mxu0 %v3277
        %v3279 = vand.u32 %v3247, 4294901760
        %3280 = vmatpush.msra.mxu0 %v3279
        %v3281 = vand.u32 %v3246, 4294901760
        %3282 = vmatpush.msra.mxu0 %v3281
        %v3283 = vand.u32 %v3245, 4294901760
        %3284 = vmatpush.msra.mxu0 %v3283
        %v3285 = vand.u32 %v3244, 4294901760
        %3286 = vmatpush.msra.mxu0 %v3285
        %v3287 = vand.u32 %v3243, 4294901760
        %3288 = vmatpush.msra.mxu0 %v3287
        %v3289 = vand.u32 %v3242, 4294901760
        %3290 = vmatpush.msra.mxu0 %v3289
        %v3291 = vand.u32 %v3258, 4294901760
        %v3292 = vsub.f32 %v3258, %v3291
        %v3293 = vand.u32 %v3292, 4294901760
        %v3294 = vsub.f32 %v3292, %v3293
        %v3295 = vand.u32 %v3294, 4294901760
        %3296 = vmatmul.f32.gmra.mxu0 %v3295
        %v3297 = vpop.f32.mrf.mxu0
        %v3298 = vadd.f32 0.0, %v3297
        %3299 = vdwg.mxu0
        %3300 = vmatpush.msra.mxu0 0.0
        %v3301 = vand.u32 %v3256, 4294901760
        %v3302 = vsub.f32 %v3256, %v3301
        %v3303 = vand.u32 %v3302, 4294901760
        %v3304 = vsub.f32 %v3302, %v3303
        %v3305 = vand.u32 %v3304, 4294901760
        %3306 = vmatpush.msra.mxu0 %v3305
        %v3307 = vand.u32 %v3255, 4294901760
        %v3308 = vsub.f32 %v3255, %v3307
        %v3309 = vand.u32 %v3308, 4294901760
        %v3310 = vsub.f32 %v3308, %v3309
        %v3311 = vand.u32 %v3310, 4294901760
        %3312 = vmatpush.msra.mxu0 %v3311
        %v3313 = vand.u32 %v3254, 4294901760
        %v3314 = vsub.f32 %v3254, %v3313
        %v3315 = vand.u32 %v3314, 4294901760
        %v3316 = vsub.f32 %v3314, %v3315
        %v3317 = vand.u32 %v3316, 4294901760
        %3318 = vmatpush.msra.mxu0 %v3317
        %v3319 = vand.u32 %v3253, 4294901760
        %v3320 = vsub.f32 %v3253, %v3319
        %v3321 = vand.u32 %v3320, 4294901760
        %v3322 = vsub.f32 %v3320, %v3321
        %v3323 = vand.u32 %v3322, 4294901760
        %3324 = vmatpush.msra.mxu0 %v3323
        %v3325 = vand.u32 %v3252, 4294901760
        %v3326 = vsub.f32 %v3252, %v3325
        %v3327 = vand.u32 %v3326, 4294901760
        %v3328 = vsub.f32 %v3326, %v3327
        %v3329 = vand.u32 %v3328, 4294901760
        %3330 = vmatpush.msra.mxu0 %v3329
        %v3331 = vand.u32 %v3251, 4294901760
        %v3332 = vsub.f32 %v3251, %v3331
        %v3333 = vand.u32 %v3332, 4294901760
        %v3334 = vsub.f32 %v3332, %v3333
        %v3335 = vand.u32 %v3334, 4294901760
        %3336 = vmatpush.msra.mxu0 %v3335
        %v3337 = vand.u32 %v3250, 4294901760
        %v3338 = vsub.f32 %v3250, %v3337
        %v3339 = vand.u32 %v3338, 4294901760
        %v3340 = vsub.f32 %v3338, %v3339
        %v3341 = vand.u32 %v3340, 4294901760
        %3342 = vmatpush.msra.mxu0 %v3341
        %v3343 = vand.u32 %v3249, 4294901760
        %v3344 = vsub.f32 %v3249, %v3343
        %v3345 = vand.u32 %v3344, 4294901760
        %v3346 = vsub.f32 %v3344, %v3345
        %v3347 = vand.u32 %v3346, 4294901760
        %3348 = vmatpush.msra.mxu0 %v3347
        %v3349 = vand.u32 %v3248, 4294901760
        %v3350 = vsub.f32 %v3248, %v3349
        %v3351 = vand.u32 %v3350, 4294901760
        %v3352 = vsub.f32 %v3350, %v3351
        %v3353 = vand.u32 %v3352, 4294901760
        %3354 = vmatpush.msra.mxu0 %v3353
        %v3355 = vand.u32 %v3247, 4294901760
        %v3356 = vsub.f32 %v3247, %v3355
        %v3357 = vand.u32 %v3356, 4294901760
        %v3358 = vsub.f32 %v3356, %v3357
        %v3359 = vand.u32 %v3358, 4294901760
        %3360 = vmatpush.msra.mxu0 %v3359
        %v3361 = vand.u32 %v3246, 4294901760
        %v3362 = vsub.f32 %v3246, %v3361
        %v3363 = vand.u32 %v3362, 4294901760
        %v3364 = vsub.f32 %v3362, %v3363
        %v3365 = vand.u32 %v3364, 4294901760
        %3366 = vmatpush.msra.mxu0 %v3365
        %v3367 = vand.u32 %v3245, 4294901760
        %v3368 = vsub.f32 %v3245, %v3367
        %v3369 = vand.u32 %v3368, 4294901760
        %v3370 = vsub.f32 %v3368, %v3369
        %v3371 = vand.u32 %v3370, 4294901760
        %3372 = vmatpush.msra.mxu0 %v3371
        %v3373 = vand.u32 %v3244, 4294901760
        %v3374 = vsub.f32 %v3244, %v3373
        %v3375 = vand.u32 %v3374, 4294901760
        %v3376 = vsub.f32 %v3374, %v3375
        %v3377 = vand.u32 %v3376, 4294901760
        %3378 = vmatpush.msra.mxu0 %v3377
        %v3379 = vand.u32 %v3243, 4294901760
        %v3380 = vsub.f32 %v3243, %v3379
        %v3381 = vand.u32 %v3380, 4294901760
        %v3382 = vsub.f32 %v3380, %v3381
        %v3383 = vand.u32 %v3382, 4294901760
        %3384 = vmatpush.msra.mxu0 %v3383
        %v3385 = vand.u32 %v3242, 4294901760
        %v3386 = vsub.f32 %v3242, %v3385
        %v3387 = vand.u32 %v3386, 4294901760
        %v3388 = vsub.f32 %v3386, %v3387
        %v3389 = vand.u32 %v3388, 4294901760
        %3390 = vmatpush.msra.mxu0 %v3389
        %v3391 = vand.u32 %v3258, 4294901760
        %3392 = vmatmul.f32.gmra.mxu0 %v3391
        %v3393 = vpop.f32.mrf.mxu0
        %v3394 = vadd.f32 %v3298, %v3393
        %3395 = vdwg.mxu0
        %3396 = vmatpush.msra.mxu0 0.0
        %v3397 = vand.u32 %v3256, 4294901760
        %v3398 = vsub.f32 %v3256, %v3397
        %3399 = vmatpush.msra.mxu0 %v3398
        %v3400 = vand.u32 %v3255, 4294901760
        %v3401 = vsub.f32 %v3255, %v3400
        %3402 = vmatpush.msra.mxu0 %v3401
        %v3403 = vand.u32 %v3254, 4294901760
        %v3404 = vsub.f32 %v3254, %v3403
        %3405 = vmatpush.msra.mxu0 %v3404
        %v3406 = vand.u32 %v3253, 4294901760
        %v3407 = vsub.f32 %v3253, %v3406
        %3408 = vmatpush.msra.mxu0 %v3407
        %v3409 = vand.u32 %v3252, 4294901760
        %v3410 = vsub.f32 %v3252, %v3409
        %3411 = vmatpush.msra.mxu0 %v3410
        %v3412 = vand.u32 %v3251, 4294901760
        %v3413 = vsub.f32 %v3251, %v3412
        %3414 = vmatpush.msra.mxu0 %v3413
        %v3415 = vand.u32 %v3250, 4294901760
        %v3416 = vsub.f32 %v3250, %v3415
        %3417 = vmatpush.msra.mxu0 %v3416
        %v3418 = vand.u32 %v3249, 4294901760
        %v3419 = vsub.f32 %v3249, %v3418
        %3420 = vmatpush.msra.mxu0 %v3419
        %v3421 = vand.u32 %v3248, 4294901760
        %v3422 = vsub.f32 %v3248, %v3421
        %3423 = vmatpush.msra.mxu0 %v3422
        %v3424 = vand.u32 %v3247, 4294901760
        %v3425 = vsub.f32 %v3247, %v3424
        %3426 = vmatpush.msra.mxu0 %v3425
        %v3427 = vand.u32 %v3246, 4294901760
        %v3428 = vsub.f32 %v3246, %v3427
        %3429 = vmatpush.msra.mxu0 %v3428
        %v3430 = vand.u32 %v3245, 4294901760
        %v3431 = vsub.f32 %v3245, %v3430
        %3432 = vmatpush.msra.mxu0 %v3431
        %v3433 = vand.u32 %v3244, 4294901760
        %v3434 = vsub.f32 %v3244, %v3433
        %3435 = vmatpush.msra.mxu0 %v3434
        %v3436 = vand.u32 %v3243, 4294901760
        %v3437 = vsub.f32 %v3243, %v3436
        %3438 = vmatpush.msra.mxu0 %v3437
        %v3439 = vand.u32 %v3242, 4294901760
        %v3440 = vsub.f32 %v3242, %v3439
        %3441 = vmatpush.msra.mxu0 %v3440
        %v3442 = vand.u32 %v3258, 4294901760
        %v3443 = vsub.f32 %v3258, %v3442
        %3444 = vmatmul.f32.gmra.mxu0 %v3443
        %v3445 = vpop.f32.mrf.mxu0
        %v3446 = vadd.f32 %v3394, %v3445
        %3447 = vdwg.mxu0
        %3448 = vmatpush.msra.mxu0 0.0
        %v3449 = vand.u32 %v3256, 4294901760
        %3450 = vmatpush.msra.mxu0 %v3449
        %v3451 = vand.u32 %v3255, 4294901760
        %3452 = vmatpush.msra.mxu0 %v3451
        %v3453 = vand.u32 %v3254, 4294901760
        %3454 = vmatpush.msra.mxu0 %v3453
        %v3455 = vand.u32 %v3253, 4294901760
        %3456 = vmatpush.msra.mxu0 %v3455
        %v3457 = vand.u32 %v3252, 4294901760
        %3458 = vmatpush.msra.mxu0 %v3457
        %v3459 = vand.u32 %v3251, 4294901760
        %3460 = vmatpush.msra.mxu0 %v3459
        %v3461 = vand.u32 %v3250, 4294901760
        %3462 = vmatpush.msra.mxu0 %v3461
        %v3463 = vand.u32 %v3249, 4294901760
        %3464 = vmatpush.msra.mxu0 %v3463
        %v3465 = vand.u32 %v3248, 4294901760
        %3466 = vmatpush.msra.mxu0 %v3465
        %v3467 = vand.u32 %v3247, 4294901760
        %3468 = vmatpush.msra.mxu0 %v3467
        %v3469 = vand.u32 %v3246, 4294901760
        %3470 = vmatpush.msra.mxu0 %v3469
        %v3471 = vand.u32 %v3245, 4294901760
        %3472 = vmatpush.msra.mxu0 %v3471
        %v3473 = vand.u32 %v3244, 4294901760
        %3474 = vmatpush.msra.mxu0 %v3473
        %v3475 = vand.u32 %v3243, 4294901760
        %3476 = vmatpush.msra.mxu0 %v3475
        %v3477 = vand.u32 %v3242, 4294901760
        %3478 = vmatpush.msra.mxu0 %v3477
        %v3479 = vand.u32 %v3258, 4294901760
        %v3480 = vsub.f32 %v3258, %v3479
        %v3481 = vand.u32 %v3480, 4294901760
        %3482 = vmatmul.f32.gmra.mxu0 %v3481
        %v3483 = vpop.f32.mrf.mxu0
        %v3484 = vadd.f32 %v3446, %v3483
        %3485 = vdwg.mxu0
        %3486 = vmatpush.msra.mxu0 0.0
        %v3487 = vand.u32 %v3256, 4294901760
        %v3488 = vsub.f32 %v3256, %v3487
        %v3489 = vand.u32 %v3488, 4294901760
        %3490 = vmatpush.msra.mxu0 %v3489
        %v3491 = vand.u32 %v3255, 4294901760
        %v3492 = vsub.f32 %v3255, %v3491
        %v3493 = vand.u32 %v3492, 4294901760
        %3494 = vmatpush.msra.mxu0 %v3493
        %v3495 = vand.u32 %v3254, 4294901760
        %v3496 = vsub.f32 %v3254, %v3495
        %v3497 = vand.u32 %v3496, 4294901760
        %3498 = vmatpush.msra.mxu0 %v3497
        %v3499 = vand.u32 %v3253, 4294901760
        %v3500 = vsub.f32 %v3253, %v3499
        %v3501 = vand.u32 %v3500, 4294901760
        %3502 = vmatpush.msra.mxu0 %v3501
        %v3503 = vand.u32 %v3252, 4294901760
        %v3504 = vsub.f32 %v3252, %v3503
        %v3505 = vand.u32 %v3504, 4294901760
        %3506 = vmatpush.msra.mxu0 %v3505
        %v3507 = vand.u32 %v3251, 4294901760
        %v3508 = vsub.f32 %v3251, %v3507
        %v3509 = vand.u32 %v3508, 4294901760
        %3510 = vmatpush.msra.mxu0 %v3509
        %v3511 = vand.u32 %v3250, 4294901760
        %v3512 = vsub.f32 %v3250, %v3511
        %v3513 = vand.u32 %v3512, 4294901760
        %3514 = vmatpush.msra.mxu0 %v3513
        %v3515 = vand.u32 %v3249, 4294901760
        %v3516 = vsub.f32 %v3249, %v3515
        %v3517 = vand.u32 %v3516, 4294901760
        %3518 = vmatpush.msra.mxu0 %v3517
        %v3519 = vand.u32 %v3248, 4294901760
        %v3520 = vsub.f32 %v3248, %v3519
        %v3521 = vand.u32 %v3520, 4294901760
        %3522 = vmatpush.msra.mxu0 %v3521
        %v3523 = vand.u32 %v3247, 4294901760
        %v3524 = vsub.f32 %v3247, %v3523
        %v3525 = vand.u32 %v3524, 4294901760
        %3526 = vmatpush.msra.mxu0 %v3525
        %v3527 = vand.u32 %v3246, 4294901760
        %v3528 = vsub.f32 %v3246, %v3527
        %v3529 = vand.u32 %v3528, 4294901760
        %3530 = vmatpush.msra.mxu0 %v3529
        %v3531 = vand.u32 %v3245, 4294901760
        %v3532 = vsub.f32 %v3245, %v3531
        %v3533 = vand.u32 %v3532, 4294901760
        %3534 = vmatpush.msra.mxu0 %v3533
        %v3535 = vand.u32 %v3244, 4294901760
        %v3536 = vsub.f32 %v3244, %v3535
        %v3537 = vand.u32 %v3536, 4294901760
        %3538 = vmatpush.msra.mxu0 %v3537
        %v3539 = vand.u32 %v3243, 4294901760
        %v3540 = vsub.f32 %v3243, %v3539
        %v3541 = vand.u32 %v3540, 4294901760
        %3542 = vmatpush.msra.mxu0 %v3541
        %v3543 = vand.u32 %v3242, 4294901760
        %v3544 = vsub.f32 %v3242, %v3543
        %v3545 = vand.u32 %v3544, 4294901760
        %3546 = vmatpush.msra.mxu0 %v3545
        %v3547 = vand.u32 %v3258, 4294901760
        %3548 = vmatmul.f32.gmra.mxu0 %v3547
        %v3549 = vpop.f32.mrf.mxu0
        %v3550 = vadd.f32 %v3484, %v3549
        %3551 = vdwg.mxu0
        %3552 = vmatpush.msra.mxu0 0.0
        %v3553 = vand.u32 %v3256, 4294901760
        %3554 = vmatpush.msra.mxu0 %v3553
        %v3555 = vand.u32 %v3255, 4294901760
        %3556 = vmatpush.msra.mxu0 %v3555
        %v3557 = vand.u32 %v3254, 4294901760
        %3558 = vmatpush.msra.mxu0 %v3557
        %v3559 = vand.u32 %v3253, 4294901760
        %3560 = vmatpush.msra.mxu0 %v3559
        %v3561 = vand.u32 %v3252, 4294901760
        %3562 = vmatpush.msra.mxu0 %v3561
        %v3563 = vand.u32 %v3251, 4294901760
        %3564 = vmatpush.msra.mxu0 %v3563
        %v3565 = vand.u32 %v3250, 4294901760
        %3566 = vmatpush.msra.mxu0 %v3565
        %v3567 = vand.u32 %v3249, 4294901760
        %3568 = vmatpush.msra.mxu0 %v3567
        %v3569 = vand.u32 %v3248, 4294901760
        %3570 = vmatpush.msra.mxu0 %v3569
        %v3571 = vand.u32 %v3247, 4294901760
        %3572 = vmatpush.msra.mxu0 %v3571
        %v3573 = vand.u32 %v3246, 4294901760
        %3574 = vmatpush.msra.mxu0 %v3573
        %v3575 = vand.u32 %v3245, 4294901760
        %3576 = vmatpush.msra.mxu0 %v3575
        %v3577 = vand.u32 %v3244, 4294901760
        %3578 = vmatpush.msra.mxu0 %v3577
        %v3579 = vand.u32 %v3243, 4294901760
        %3580 = vmatpush.msra.mxu0 %v3579
        %v3581 = vand.u32 %v3242, 4294901760
        %3582 = vmatpush.msra.mxu0 %v3581
        %v3583 = vand.u32 %v3258, 4294901760
        %3584 = vmatmul.f32.gmra.mxu0 %v3583
        %v3585 = vpop.f32.mrf.mxu0
        %v3586 = vadd.f32 %v3550, %v3585
        %3587 = vdwg.mxu0
        %v3588 = vadd.f32 %v3238, %v3586
        %v3589 = vld [vmem:[#allocation2 + $0x3] sm:$0x1]
        %s3590 = scalar_lea.vmem %s4, 360
        %v3591 = vld [vmem:[%s3590] sm:$0xff]
        %v3592 = vld [vmem:[%s3590 + $0x8] sm:$0xff]
        %v3593 = vld [vmem:[%s3590 + $0x10] sm:$0xff]
        %v3594 = vld [vmem:[%s3590 + $0x18] sm:$0xff]
        %v3595 = vld [vmem:[%s3590 + $0x20] sm:$0xff]
        %v3596 = vld [vmem:[%s3590 + $0x28] sm:$0xff]
        %v3597 = vld [vmem:[%s3590 + $0x30] sm:$0xff]
        %v3598 = vld [vmem:[%s3590 + $0x38] sm:$0xff]
        %v3599 = vld [vmem:[%s3590 + $0x40] sm:$0xff]
        %v3600 = vld [vmem:[%s3590 + $0x48] sm:$0xff]
        %v3601 = vld [vmem:[%s3590 + $0x50] sm:$0xff]
        %v3602 = vld [vmem:[%s3590 + $0x58] sm:$0xff]
        %v3603 = vld [vmem:[%s3590 + $0x60] sm:$0xff]
        %v3604 = vld [vmem:[%s3590 + $0x68] sm:$0xff]
        %v3605 = vld [vmem:[%s3590 + $0x70] sm:$0xff]
        %v3607 = vsel %vm2543, %v3589, 0
        %3609 = vmatpush.msra.mxu0 0.0
        %v3610 = vand.u32 %v3605, 4294901760
        %3611 = vmatpush.msra.mxu0 %v3610
        %v3612 = vand.u32 %v3604, 4294901760
        %3613 = vmatpush.msra.mxu0 %v3612
        %v3614 = vand.u32 %v3603, 4294901760
        %3615 = vmatpush.msra.mxu0 %v3614
        %v3616 = vand.u32 %v3602, 4294901760
        %3617 = vmatpush.msra.mxu0 %v3616
        %v3618 = vand.u32 %v3601, 4294901760
        %3619 = vmatpush.msra.mxu0 %v3618
        %v3620 = vand.u32 %v3600, 4294901760
        %3621 = vmatpush.msra.mxu0 %v3620
        %v3622 = vand.u32 %v3599, 4294901760
        %3623 = vmatpush.msra.mxu0 %v3622
        %v3624 = vand.u32 %v3598, 4294901760
        %3625 = vmatpush.msra.mxu0 %v3624
        %v3626 = vand.u32 %v3597, 4294901760
        %3627 = vmatpush.msra.mxu0 %v3626
        %v3628 = vand.u32 %v3596, 4294901760
        %3629 = vmatpush.msra.mxu0 %v3628
        %v3630 = vand.u32 %v3595, 4294901760
        %3631 = vmatpush.msra.mxu0 %v3630
        %v3632 = vand.u32 %v3594, 4294901760
        %3633 = vmatpush.msra.mxu0 %v3632
        %v3634 = vand.u32 %v3593, 4294901760
        %3635 = vmatpush.msra.mxu0 %v3634
        %v3636 = vand.u32 %v3592, 4294901760
        %3637 = vmatpush.msra.mxu0 %v3636
        %v3638 = vand.u32 %v3591, 4294901760
        %3639 = vmatpush.msra.mxu0 %v3638
        %v3640 = vand.u32 %v3607, 4294901760
        %v3641 = vsub.f32 %v3607, %v3640
        %v3642 = vand.u32 %v3641, 4294901760
        %v3643 = vsub.f32 %v3641, %v3642
        %v3644 = vand.u32 %v3643, 4294901760
        %3645 = vmatmul.f32.gmra.mxu0 %v3644
        %v3646 = vpop.f32.mrf.mxu0
        %v3647 = vadd.f32 0.0, %v3646
        %3648 = vdwg.mxu0
        %3649 = vmatpush.msra.mxu0 0.0
        %v3650 = vand.u32 %v3605, 4294901760
        %v3651 = vsub.f32 %v3605, %v3650
        %v3652 = vand.u32 %v3651, 4294901760
        %v3653 = vsub.f32 %v3651, %v3652
        %v3654 = vand.u32 %v3653, 4294901760
        %3655 = vmatpush.msra.mxu0 %v3654
        %v3656 = vand.u32 %v3604, 4294901760
        %v3657 = vsub.f32 %v3604, %v3656
        %v3658 = vand.u32 %v3657, 4294901760
        %v3659 = vsub.f32 %v3657, %v3658
        %v3660 = vand.u32 %v3659, 4294901760
        %3661 = vmatpush.msra.mxu0 %v3660
        %v3662 = vand.u32 %v3603, 4294901760
        %v3663 = vsub.f32 %v3603, %v3662
        %v3664 = vand.u32 %v3663, 4294901760
        %v3665 = vsub.f32 %v3663, %v3664
        %v3666 = vand.u32 %v3665, 4294901760
        %3667 = vmatpush.msra.mxu0 %v3666
        %v3668 = vand.u32 %v3602, 4294901760
        %v3669 = vsub.f32 %v3602, %v3668
        %v3670 = vand.u32 %v3669, 4294901760
        %v3671 = vsub.f32 %v3669, %v3670
        %v3672 = vand.u32 %v3671, 4294901760
        %3673 = vmatpush.msra.mxu0 %v3672
        %v3674 = vand.u32 %v3601, 4294901760
        %v3675 = vsub.f32 %v3601, %v3674
        %v3676 = vand.u32 %v3675, 4294901760
        %v3677 = vsub.f32 %v3675, %v3676
        %v3678 = vand.u32 %v3677, 4294901760
        %3679 = vmatpush.msra.mxu0 %v3678
        %v3680 = vand.u32 %v3600, 4294901760
        %v3681 = vsub.f32 %v3600, %v3680
        %v3682 = vand.u32 %v3681, 4294901760
        %v3683 = vsub.f32 %v3681, %v3682
        %v3684 = vand.u32 %v3683, 4294901760
        %3685 = vmatpush.msra.mxu0 %v3684
        %v3686 = vand.u32 %v3599, 4294901760
        %v3687 = vsub.f32 %v3599, %v3686
        %v3688 = vand.u32 %v3687, 4294901760
        %v3689 = vsub.f32 %v3687, %v3688
        %v3690 = vand.u32 %v3689, 4294901760
        %3691 = vmatpush.msra.mxu0 %v3690
        %v3692 = vand.u32 %v3598, 4294901760
        %v3693 = vsub.f32 %v3598, %v3692
        %v3694 = vand.u32 %v3693, 4294901760
        %v3695 = vsub.f32 %v3693, %v3694
        %v3696 = vand.u32 %v3695, 4294901760
        %3697 = vmatpush.msra.mxu0 %v3696
        %v3698 = vand.u32 %v3597, 4294901760
        %v3699 = vsub.f32 %v3597, %v3698
        %v3700 = vand.u32 %v3699, 4294901760
        %v3701 = vsub.f32 %v3699, %v3700
        %v3702 = vand.u32 %v3701, 4294901760
        %3703 = vmatpush.msra.mxu0 %v3702
        %v3704 = vand.u32 %v3596, 4294901760
        %v3705 = vsub.f32 %v3596, %v3704
        %v3706 = vand.u32 %v3705, 4294901760
        %v3707 = vsub.f32 %v3705, %v3706
        %v3708 = vand.u32 %v3707, 4294901760
        %3709 = vmatpush.msra.mxu0 %v3708
        %v3710 = vand.u32 %v3595, 4294901760
        %v3711 = vsub.f32 %v3595, %v3710
        %v3712 = vand.u32 %v3711, 4294901760
        %v3713 = vsub.f32 %v3711, %v3712
        %v3714 = vand.u32 %v3713, 4294901760
        %3715 = vmatpush.msra.mxu0 %v3714
        %v3716 = vand.u32 %v3594, 4294901760
        %v3717 = vsub.f32 %v3594, %v3716
        %v3718 = vand.u32 %v3717, 4294901760
        %v3719 = vsub.f32 %v3717, %v3718
        %v3720 = vand.u32 %v3719, 4294901760
        %3721 = vmatpush.msra.mxu0 %v3720
        %v3722 = vand.u32 %v3593, 4294901760
        %v3723 = vsub.f32 %v3593, %v3722
        %v3724 = vand.u32 %v3723, 4294901760
        %v3725 = vsub.f32 %v3723, %v3724
        %v3726 = vand.u32 %v3725, 4294901760
        %3727 = vmatpush.msra.mxu0 %v3726
        %v3728 = vand.u32 %v3592, 4294901760
        %v3729 = vsub.f32 %v3592, %v3728
        %v3730 = vand.u32 %v3729, 4294901760
        %v3731 = vsub.f32 %v3729, %v3730
        %v3732 = vand.u32 %v3731, 4294901760
        %3733 = vmatpush.msra.mxu0 %v3732
        %v3734 = vand.u32 %v3591, 4294901760
        %v3735 = vsub.f32 %v3591, %v3734
        %v3736 = vand.u32 %v3735, 4294901760
        %v3737 = vsub.f32 %v3735, %v3736
        %v3738 = vand.u32 %v3737, 4294901760
        %3739 = vmatpush.msra.mxu0 %v3738
        %v3740 = vand.u32 %v3607, 4294901760
        %3741 = vmatmul.f32.gmra.mxu0 %v3740
        %v3742 = vpop.f32.mrf.mxu0
        %v3743 = vadd.f32 %v3647, %v3742
        %3744 = vdwg.mxu0
        %3745 = vmatpush.msra.mxu0 0.0
        %v3746 = vand.u32 %v3605, 4294901760
        %v3747 = vsub.f32 %v3605, %v3746
        %3748 = vmatpush.msra.mxu0 %v3747
        %v3749 = vand.u32 %v3604, 4294901760
        %v3750 = vsub.f32 %v3604, %v3749
        %3751 = vmatpush.msra.mxu0 %v3750
        %v3752 = vand.u32 %v3603, 4294901760
        %v3753 = vsub.f32 %v3603, %v3752
        %3754 = vmatpush.msra.mxu0 %v3753
        %v3755 = vand.u32 %v3602, 4294901760
        %v3756 = vsub.f32 %v3602, %v3755
        %3757 = vmatpush.msra.mxu0 %v3756
        %v3758 = vand.u32 %v3601, 4294901760
        %v3759 = vsub.f32 %v3601, %v3758
        %3760 = vmatpush.msra.mxu0 %v3759
        %v3761 = vand.u32 %v3600, 4294901760
        %v3762 = vsub.f32 %v3600, %v3761
        %3763 = vmatpush.msra.mxu0 %v3762
        %v3764 = vand.u32 %v3599, 4294901760
        %v3765 = vsub.f32 %v3599, %v3764
        %3766 = vmatpush.msra.mxu0 %v3765
        %v3767 = vand.u32 %v3598, 4294901760
        %v3768 = vsub.f32 %v3598, %v3767
        %3769 = vmatpush.msra.mxu0 %v3768
        %v3770 = vand.u32 %v3597, 4294901760
        %v3771 = vsub.f32 %v3597, %v3770
        %3772 = vmatpush.msra.mxu0 %v3771
        %v3773 = vand.u32 %v3596, 4294901760
        %v3774 = vsub.f32 %v3596, %v3773
        %3775 = vmatpush.msra.mxu0 %v3774
        %v3776 = vand.u32 %v3595, 4294901760
        %v3777 = vsub.f32 %v3595, %v3776
        %3778 = vmatpush.msra.mxu0 %v3777
        %v3779 = vand.u32 %v3594, 4294901760
        %v3780 = vsub.f32 %v3594, %v3779
        %3781 = vmatpush.msra.mxu0 %v3780
        %v3782 = vand.u32 %v3593, 4294901760
        %v3783 = vsub.f32 %v3593, %v3782
        %3784 = vmatpush.msra.mxu0 %v3783
        %v3785 = vand.u32 %v3592, 4294901760
        %v3786 = vsub.f32 %v3592, %v3785
        %3787 = vmatpush.msra.mxu0 %v3786
        %v3788 = vand.u32 %v3591, 4294901760
        %v3789 = vsub.f32 %v3591, %v3788
        %3790 = vmatpush.msra.mxu0 %v3789
        %v3791 = vand.u32 %v3607, 4294901760
        %v3792 = vsub.f32 %v3607, %v3791
        %3793 = vmatmul.f32.gmra.mxu0 %v3792
        %v3794 = vpop.f32.mrf.mxu0
        %v3795 = vadd.f32 %v3743, %v3794
        %3796 = vdwg.mxu0
        %3797 = vmatpush.msra.mxu0 0.0
        %v3798 = vand.u32 %v3605, 4294901760
        %3799 = vmatpush.msra.mxu0 %v3798
        %v3800 = vand.u32 %v3604, 4294901760
        %3801 = vmatpush.msra.mxu0 %v3800
        %v3802 = vand.u32 %v3603, 4294901760
        %3803 = vmatpush.msra.mxu0 %v3802
        %v3804 = vand.u32 %v3602, 4294901760
        %3805 = vmatpush.msra.mxu0 %v3804
        %v3806 = vand.u32 %v3601, 4294901760
        %3807 = vmatpush.msra.mxu0 %v3806
        %v3808 = vand.u32 %v3600, 4294901760
        %3809 = vmatpush.msra.mxu0 %v3808
        %v3810 = vand.u32 %v3599, 4294901760
        %3811 = vmatpush.msra.mxu0 %v3810
        %v3812 = vand.u32 %v3598, 4294901760
        %3813 = vmatpush.msra.mxu0 %v3812
        %v3814 = vand.u32 %v3597, 4294901760
        %3815 = vmatpush.msra.mxu0 %v3814
        %v3816 = vand.u32 %v3596, 4294901760
        %3817 = vmatpush.msra.mxu0 %v3816
        %v3818 = vand.u32 %v3595, 4294901760
        %3819 = vmatpush.msra.mxu0 %v3818
        %v3820 = vand.u32 %v3594, 4294901760
        %3821 = vmatpush.msra.mxu0 %v3820
        %v3822 = vand.u32 %v3593, 4294901760
        %3823 = vmatpush.msra.mxu0 %v3822
        %v3824 = vand.u32 %v3592, 4294901760
        %3825 = vmatpush.msra.mxu0 %v3824
        %v3826 = vand.u32 %v3591, 4294901760
        %3827 = vmatpush.msra.mxu0 %v3826
        %v3828 = vand.u32 %v3607, 4294901760
        %v3829 = vsub.f32 %v3607, %v3828
        %v3830 = vand.u32 %v3829, 4294901760
        %3831 = vmatmul.f32.gmra.mxu0 %v3830
        %v3832 = vpop.f32.mrf.mxu0
        %v3833 = vadd.f32 %v3795, %v3832
        %3834 = vdwg.mxu0
        %3835 = vmatpush.msra.mxu0 0.0
        %v3836 = vand.u32 %v3605, 4294901760
        %v3837 = vsub.f32 %v3605, %v3836
        %v3838 = vand.u32 %v3837, 4294901760
        %3839 = vmatpush.msra.mxu0 %v3838
        %v3840 = vand.u32 %v3604, 4294901760
        %v3841 = vsub.f32 %v3604, %v3840
        %v3842 = vand.u32 %v3841, 4294901760
        %3843 = vmatpush.msra.mxu0 %v3842
        %v3844 = vand.u32 %v3603, 4294901760
        %v3845 = vsub.f32 %v3603, %v3844
        %v3846 = vand.u32 %v3845, 4294901760
        %3847 = vmatpush.msra.mxu0 %v3846
        %v3848 = vand.u32 %v3602, 4294901760
        %v3849 = vsub.f32 %v3602, %v3848
        %v3850 = vand.u32 %v3849, 4294901760
        %3851 = vmatpush.msra.mxu0 %v3850
        %v3852 = vand.u32 %v3601, 4294901760
        %v3853 = vsub.f32 %v3601, %v3852
        %v3854 = vand.u32 %v3853, 4294901760
        %3855 = vmatpush.msra.mxu0 %v3854
        %v3856 = vand.u32 %v3600, 4294901760
        %v3857 = vsub.f32 %v3600, %v3856
        %v3858 = vand.u32 %v3857, 4294901760
        %3859 = vmatpush.msra.mxu0 %v3858
        %v3860 = vand.u32 %v3599, 4294901760
        %v3861 = vsub.f32 %v3599, %v3860
        %v3862 = vand.u32 %v3861, 4294901760
        %3863 = vmatpush.msra.mxu0 %v3862
        %v3864 = vand.u32 %v3598, 4294901760
        %v3865 = vsub.f32 %v3598, %v3864
        %v3866 = vand.u32 %v3865, 4294901760
        %3867 = vmatpush.msra.mxu0 %v3866
        %v3868 = vand.u32 %v3597, 4294901760
        %v3869 = vsub.f32 %v3597, %v3868
        %v3870 = vand.u32 %v3869, 4294901760
        %3871 = vmatpush.msra.mxu0 %v3870
        %v3872 = vand.u32 %v3596, 4294901760
        %v3873 = vsub.f32 %v3596, %v3872
        %v3874 = vand.u32 %v3873, 4294901760
        %3875 = vmatpush.msra.mxu0 %v3874
        %v3876 = vand.u32 %v3595, 4294901760
        %v3877 = vsub.f32 %v3595, %v3876
        %v3878 = vand.u32 %v3877, 4294901760
        %3879 = vmatpush.msra.mxu0 %v3878
        %v3880 = vand.u32 %v3594, 4294901760
        %v3881 = vsub.f32 %v3594, %v3880
        %v3882 = vand.u32 %v3881, 4294901760
        %3883 = vmatpush.msra.mxu0 %v3882
        %v3884 = vand.u32 %v3593, 4294901760
        %v3885 = vsub.f32 %v3593, %v3884
        %v3886 = vand.u32 %v3885, 4294901760
        %3887 = vmatpush.msra.mxu0 %v3886
        %v3888 = vand.u32 %v3592, 4294901760
        %v3889 = vsub.f32 %v3592, %v3888
        %v3890 = vand.u32 %v3889, 4294901760
        %3891 = vmatpush.msra.mxu0 %v3890
        %v3892 = vand.u32 %v3591, 4294901760
        %v3893 = vsub.f32 %v3591, %v3892
        %v3894 = vand.u32 %v3893, 4294901760
        %3895 = vmatpush.msra.mxu0 %v3894
        %v3896 = vand.u32 %v3607, 4294901760
        %3897 = vmatmul.f32.gmra.mxu0 %v3896
        %v3898 = vpop.f32.mrf.mxu0
        %v3899 = vadd.f32 %v3833, %v3898
        %3900 = vdwg.mxu0
        %3901 = vmatpush.msra.mxu0 0.0
        %v3902 = vand.u32 %v3605, 4294901760
        %3903 = vmatpush.msra.mxu0 %v3902
        %v3904 = vand.u32 %v3604, 4294901760
        %3905 = vmatpush.msra.mxu0 %v3904
        %v3906 = vand.u32 %v3603, 4294901760
        %3907 = vmatpush.msra.mxu0 %v3906
        %v3908 = vand.u32 %v3602, 4294901760
        %3909 = vmatpush.msra.mxu0 %v3908
        %v3910 = vand.u32 %v3601, 4294901760
        %3911 = vmatpush.msra.mxu0 %v3910
        %v3912 = vand.u32 %v3600, 4294901760
        %3913 = vmatpush.msra.mxu0 %v3912
        %v3914 = vand.u32 %v3599, 4294901760
        %3915 = vmatpush.msra.mxu0 %v3914
        %v3916 = vand.u32 %v3598, 4294901760
        %3917 = vmatpush.msra.mxu0 %v3916
        %v3918 = vand.u32 %v3597, 4294901760
        %3919 = vmatpush.msra.mxu0 %v3918
        %v3920 = vand.u32 %v3596, 4294901760
        %3921 = vmatpush.msra.mxu0 %v3920
        %v3922 = vand.u32 %v3595, 4294901760
        %3923 = vmatpush.msra.mxu0 %v3922
        %v3924 = vand.u32 %v3594, 4294901760
        %3925 = vmatpush.msra.mxu0 %v3924
        %v3926 = vand.u32 %v3593, 4294901760
        %3927 = vmatpush.msra.mxu0 %v3926
        %v3928 = vand.u32 %v3592, 4294901760
        %3929 = vmatpush.msra.mxu0 %v3928
        %v3930 = vand.u32 %v3591, 4294901760
        %3931 = vmatpush.msra.mxu0 %v3930
        %v3932 = vand.u32 %v3607, 4294901760
        %3933 = vmatmul.f32.gmra.mxu0 %v3932
        %v3934 = vpop.f32.mrf.mxu0
        %v3935 = vadd.f32 %v3899, %v3934
        %3936 = vdwg.mxu0
        %v3937 = vadd.f32 %v3588, %v3935
        %v3938 = vld [vmem:[%s5] sm:$0x1]
        %v3939 = vadd.f32 %v3937, %v3938
        %v3940 = vmax.f32 %v3939, 0.0
        %3942 = vrot.lane.b32.xlu0 %v3940, 80
        %v3943 = vpop.permute.xlu0 %3942
        %v3945 = vmax.f32 %v3940, %v3943
        %3947 = vrot.lane.b32.xlu0 %v3945, 120
        %v3948 = vpop.permute.xlu0 %3947
        %v3950 = vmax.f32 %v3945, %v3948
        %v3951 = vld [vmem:[%s6] sm:$0xff]
        %v3952 = vld [vmem:[%s6 + $0x8] sm:$0xff]
        %v3953 = vld [vmem:[%s6 + $0x10] sm:$0xff]
        %v3954 = vld [vmem:[%s6 + $0x18] sm:$0xff]
        %v3955 = vld [vmem:[%s6 + $0x20] sm:$0xff]
        %3956 = vmatpush.msra.mxu0 0.0
        %v3957 = vand.u32 %v2577, 4294901760
        %3958 = vmatpush.msra.mxu0 %v3957
        %v3959 = vand.u32 %v2576, 4294901760
        %3960 = vmatpush.msra.mxu0 %v3959
        %v3961 = vand.u32 %v2575, 4294901760
        %3962 = vmatpush.msra.mxu0 %v3961
        %v3963 = vand.u32 %v2574, 4294901760
        %3964 = vmatpush.msra.mxu0 %v3963
        %v3965 = vand.u32 %v2573, 4294901760
        %3966 = vmatpush.msra.mxu0 %v3965
        %v3967 = vand.u32 %v2572, 4294901760
        %3968 = vmatpush.msra.mxu0 %v3967
        %v3969 = vand.u32 %v2571, 4294901760
        %3970 = vmatpush.msra.mxu0 %v3969
        %v3971 = vand.u32 %v2570, 4294901760
        %3972 = vmatpush.msra.mxu0 %v3971
        %v3973 = vand.u32 %v2569, 4294901760
        %3974 = vmatpush.msra.mxu0 %v3973
        %v3975 = vand.u32 %v2568, 4294901760
        %3976 = vmatpush.msra.mxu0 %v3975
        %v3977 = vand.u32 %v2567, 4294901760
        %3978 = vmatpush.msra.mxu0 %v3977
        %v3979 = vand.u32 %v2566, 4294901760
        %3980 = vmatpush.msra.mxu0 %v3979
        %v3981 = vand.u32 %v2565, 4294901760
        %3982 = vmatpush.msra.mxu0 %v3981
        %v3983 = vand.u32 %v2564, 4294901760
        %3984 = vmatpush.msra.mxu0 %v3983
        %v3985 = vand.u32 %v2563, 4294901760
        %3986 = vmatpush.msra.mxu0 %v3985
        %v3987 = vand.u32 %v3607, 4294901760
        %v3988 = vsub.f32 %v3607, %v3987
        %v3989 = vand.u32 %v3988, 4294901760
        %v3990 = vsub.f32 %v3988, %v3989
        %v3991 = vand.u32 %v3990, 4294901760
        %3992 = vmatmul.f32.gmra.mxu0 %v3991
        %v3993 = vpop.f32.mrf.mxu0
        %v3994 = vadd.f32 0.0, %v3993
        %3995 = vdwg.mxu0
        %3996 = vmatpush.msra.mxu0 0.0
        %v3997 = vand.u32 %v2577, 4294901760
        %v3998 = vsub.f32 %v2577, %v3997
        %v3999 = vand.u32 %v3998, 4294901760
        %v4000 = vsub.f32 %v3998, %v3999
        %v4001 = vand.u32 %v4000, 4294901760
        %4002 = vmatpush.msra.mxu0 %v4001
        %v4003 = vand.u32 %v2576, 4294901760
        %v4004 = vsub.f32 %v2576, %v4003
        %v4005 = vand.u32 %v4004, 4294901760
        %v4006 = vsub.f32 %v4004, %v4005
        %v4007 = vand.u32 %v4006, 4294901760
        %4008 = vmatpush.msra.mxu0 %v4007
        %v4009 = vand.u32 %v2575, 4294901760
        %v4010 = vsub.f32 %v2575, %v4009
        %v4011 = vand.u32 %v4010, 4294901760
        %v4012 = vsub.f32 %v4010, %v4011
        %v4013 = vand.u32 %v4012, 4294901760
        %4014 = vmatpush.msra.mxu0 %v4013
        %v4015 = vand.u32 %v2574, 4294901760
        %v4016 = vsub.f32 %v2574, %v4015
        %v4017 = vand.u32 %v4016, 4294901760
        %v4018 = vsub.f32 %v4016, %v4017
        %v4019 = vand.u32 %v4018, 4294901760
        %4020 = vmatpush.msra.mxu0 %v4019
        %v4021 = vand.u32 %v2573, 4294901760
        %v4022 = vsub.f32 %v2573, %v4021
        %v4023 = vand.u32 %v4022, 4294901760
        %v4024 = vsub.f32 %v4022, %v4023
        %v4025 = vand.u32 %v4024, 4294901760
        %4026 = vmatpush.msra.mxu0 %v4025
        %v4027 = vand.u32 %v2572, 4294901760
        %v4028 = vsub.f32 %v2572, %v4027
        %v4029 = vand.u32 %v4028, 4294901760
        %v4030 = vsub.f32 %v4028, %v4029
        %v4031 = vand.u32 %v4030, 4294901760
        %4032 = vmatpush.msra.mxu0 %v4031
        %v4033 = vand.u32 %v2571, 4294901760
        %v4034 = vsub.f32 %v2571, %v4033
        %v4035 = vand.u32 %v4034, 4294901760
        %v4036 = vsub.f32 %v4034, %v4035
        %v4037 = vand.u32 %v4036, 4294901760
        %4038 = vmatpush.msra.mxu0 %v4037
        %v4039 = vand.u32 %v2570, 4294901760
        %v4040 = vsub.f32 %v2570, %v4039
        %v4041 = vand.u32 %v4040, 4294901760
        %v4042 = vsub.f32 %v4040, %v4041
        %v4043 = vand.u32 %v4042, 4294901760
        %4044 = vmatpush.msra.mxu0 %v4043
        %v4045 = vand.u32 %v2569, 4294901760
        %v4046 = vsub.f32 %v2569, %v4045
        %v4047 = vand.u32 %v4046, 4294901760
        %v4048 = vsub.f32 %v4046, %v4047
        %v4049 = vand.u32 %v4048, 4294901760
        %4050 = vmatpush.msra.mxu0 %v4049
        %v4051 = vand.u32 %v2568, 4294901760
        %v4052 = vsub.f32 %v2568, %v4051
        %v4053 = vand.u32 %v4052, 4294901760
        %v4054 = vsub.f32 %v4052, %v4053
        %v4055 = vand.u32 %v4054, 4294901760
        %4056 = vmatpush.msra.mxu0 %v4055
        %v4057 = vand.u32 %v2567, 4294901760
        %v4058 = vsub.f32 %v2567, %v4057
        %v4059 = vand.u32 %v4058, 4294901760
        %v4060 = vsub.f32 %v4058, %v4059
        %v4061 = vand.u32 %v4060, 4294901760
        %4062 = vmatpush.msra.mxu0 %v4061
        %v4063 = vand.u32 %v2566, 4294901760
        %v4064 = vsub.f32 %v2566, %v4063
        %v4065 = vand.u32 %v4064, 4294901760
        %v4066 = vsub.f32 %v4064, %v4065
        %v4067 = vand.u32 %v4066, 4294901760
        %4068 = vmatpush.msra.mxu0 %v4067
        %v4069 = vand.u32 %v2565, 4294901760
        %v4070 = vsub.f32 %v2565, %v4069
        %v4071 = vand.u32 %v4070, 4294901760
        %v4072 = vsub.f32 %v4070, %v4071
        %v4073 = vand.u32 %v4072, 4294901760
        %4074 = vmatpush.msra.mxu0 %v4073
        %v4075 = vand.u32 %v2564, 4294901760
        %v4076 = vsub.f32 %v2564, %v4075
        %v4077 = vand.u32 %v4076, 4294901760
        %v4078 = vsub.f32 %v4076, %v4077
        %v4079 = vand.u32 %v4078, 4294901760
        %4080 = vmatpush.msra.mxu0 %v4079
        %v4081 = vand.u32 %v2563, 4294901760
        %v4082 = vsub.f32 %v2563, %v4081
        %v4083 = vand.u32 %v4082, 4294901760
        %v4084 = vsub.f32 %v4082, %v4083
        %v4085 = vand.u32 %v4084, 4294901760
        %4086 = vmatpush.msra.mxu0 %v4085
        %v4087 = vand.u32 %v3607, 4294901760
        %4088 = vmatmul.f32.gmra.mxu0 %v4087
        %v4089 = vpop.f32.mrf.mxu0
        %v4090 = vadd.f32 %v3994, %v4089
        %4091 = vdwg.mxu0
        %4092 = vmatpush.msra.mxu0 0.0
        %v4093 = vand.u32 %v2577, 4294901760
        %v4094 = vsub.f32 %v2577, %v4093
        %4095 = vmatpush.msra.mxu0 %v4094
        %v4096 = vand.u32 %v2576, 4294901760
        %v4097 = vsub.f32 %v2576, %v4096
        %4098 = vmatpush.msra.mxu0 %v4097
        %v4099 = vand.u32 %v2575, 4294901760
        %v4100 = vsub.f32 %v2575, %v4099
        %4101 = vmatpush.msra.mxu0 %v4100
        %v4102 = vand.u32 %v2574, 4294901760
        %v4103 = vsub.f32 %v2574, %v4102
        %4104 = vmatpush.msra.mxu0 %v4103
        %v4105 = vand.u32 %v2573, 4294901760
        %v4106 = vsub.f32 %v2573, %v4105
        %4107 = vmatpush.msra.mxu0 %v4106
        %v4108 = vand.u32 %v2572, 4294901760
        %v4109 = vsub.f32 %v2572, %v4108
        %4110 = vmatpush.msra.mxu0 %v4109
        %v4111 = vand.u32 %v2571, 4294901760
        %v4112 = vsub.f32 %v2571, %v4111
        %4113 = vmatpush.msra.mxu0 %v4112
        %v4114 = vand.u32 %v2570, 4294901760
        %v4115 = vsub.f32 %v2570, %v4114
        %4116 = vmatpush.msra.mxu0 %v4115
        %v4117 = vand.u32 %v2569, 4294901760
        %v4118 = vsub.f32 %v2569, %v4117
        %4119 = vmatpush.msra.mxu0 %v4118
        %v4120 = vand.u32 %v2568, 4294901760
        %v4121 = vsub.f32 %v2568, %v4120
        %4122 = vmatpush.msra.mxu0 %v4121
        %v4123 = vand.u32 %v2567, 4294901760
        %v4124 = vsub.f32 %v2567, %v4123
        %4125 = vmatpush.msra.mxu0 %v4124
        %v4126 = vand.u32 %v2566, 4294901760
        %v4127 = vsub.f32 %v2566, %v4126
        %4128 = vmatpush.msra.mxu0 %v4127
        %v4129 = vand.u32 %v2565, 4294901760
        %v4130 = vsub.f32 %v2565, %v4129
        %4131 = vmatpush.msra.mxu0 %v4130
        %v4132 = vand.u32 %v2564, 4294901760
        %v4133 = vsub.f32 %v2564, %v4132
        %4134 = vmatpush.msra.mxu0 %v4133
        %v4135 = vand.u32 %v2563, 4294901760
        %v4136 = vsub.f32 %v2563, %v4135
        %4137 = vmatpush.msra.mxu0 %v4136
        %v4138 = vand.u32 %v3607, 4294901760
        %v4139 = vsub.f32 %v3607, %v4138
        %4140 = vmatmul.f32.gmra.mxu0 %v4139
        %v4141 = vpop.f32.mrf.mxu0
        %v4142 = vadd.f32 %v4090, %v4141
        %4143 = vdwg.mxu0
        %4144 = vmatpush.msra.mxu0 0.0
        %v4145 = vand.u32 %v2577, 4294901760
        %4146 = vmatpush.msra.mxu0 %v4145
        %v4147 = vand.u32 %v2576, 4294901760
        %4148 = vmatpush.msra.mxu0 %v4147
        %v4149 = vand.u32 %v2575, 4294901760
        %4150 = vmatpush.msra.mxu0 %v4149
        %v4151 = vand.u32 %v2574, 4294901760
        %4152 = vmatpush.msra.mxu0 %v4151
        %v4153 = vand.u32 %v2573, 4294901760
        %4154 = vmatpush.msra.mxu0 %v4153
        %v4155 = vand.u32 %v2572, 4294901760
        %4156 = vmatpush.msra.mxu0 %v4155
        %v4157 = vand.u32 %v2571, 4294901760
        %4158 = vmatpush.msra.mxu0 %v4157
        %v4159 = vand.u32 %v2570, 4294901760
        %4160 = vmatpush.msra.mxu0 %v4159
        %v4161 = vand.u32 %v2569, 4294901760
        %4162 = vmatpush.msra.mxu0 %v4161
        %v4163 = vand.u32 %v2568, 4294901760
        %4164 = vmatpush.msra.mxu0 %v4163
        %v4165 = vand.u32 %v2567, 4294901760
        %4166 = vmatpush.msra.mxu0 %v4165
        %v4167 = vand.u32 %v2566, 4294901760
        %4168 = vmatpush.msra.mxu0 %v4167
        %v4169 = vand.u32 %v2565, 4294901760
        %4170 = vmatpush.msra.mxu0 %v4169
        %v4171 = vand.u32 %v2564, 4294901760
        %4172 = vmatpush.msra.mxu0 %v4171
        %v4173 = vand.u32 %v2563, 4294901760
        %4174 = vmatpush.msra.mxu0 %v4173
        %v4175 = vand.u32 %v3607, 4294901760
        %v4176 = vsub.f32 %v3607, %v4175
        %v4177 = vand.u32 %v4176, 4294901760
        %4178 = vmatmul.f32.gmra.mxu0 %v4177
        %v4179 = vpop.f32.mrf.mxu0
        %v4180 = vadd.f32 %v4142, %v4179
        %4181 = vdwg.mxu0
        %4182 = vmatpush.msra.mxu0 0.0
        %v4183 = vand.u32 %v2577, 4294901760
        %v4184 = vsub.f32 %v2577, %v4183
        %v4185 = vand.u32 %v4184, 4294901760
        %4186 = vmatpush.msra.mxu0 %v4185
        %v4187 = vand.u32 %v2576, 4294901760
        %v4188 = vsub.f32 %v2576, %v4187
        %v4189 = vand.u32 %v4188, 4294901760
        %4190 = vmatpush.msra.mxu0 %v4189
        %v4191 = vand.u32 %v2575, 4294901760
        %v4192 = vsub.f32 %v2575, %v4191
        %v4193 = vand.u32 %v4192, 4294901760
        %4194 = vmatpush.msra.mxu0 %v4193
        %v4195 = vand.u32 %v2574, 4294901760
        %v4196 = vsub.f32 %v2574, %v4195
        %v4197 = vand.u32 %v4196, 4294901760
        %4198 = vmatpush.msra.mxu0 %v4197
        %v4199 = vand.u32 %v2573, 4294901760
        %v4200 = vsub.f32 %v2573, %v4199
        %v4201 = vand.u32 %v4200, 4294901760
        %4202 = vmatpush.msra.mxu0 %v4201
        %v4203 = vand.u32 %v2572, 4294901760
        %v4204 = vsub.f32 %v2572, %v4203
        %v4205 = vand.u32 %v4204, 4294901760
        %4206 = vmatpush.msra.mxu0 %v4205
        %v4207 = vand.u32 %v2571, 4294901760
        %v4208 = vsub.f32 %v2571, %v4207
        %v4209 = vand.u32 %v4208, 4294901760
        %4210 = vmatpush.msra.mxu0 %v4209
        %v4211 = vand.u32 %v2570, 4294901760
        %v4212 = vsub.f32 %v2570, %v4211
        %v4213 = vand.u32 %v4212, 4294901760
        %4214 = vmatpush.msra.mxu0 %v4213
        %v4215 = vand.u32 %v2569, 4294901760
        %v4216 = vsub.f32 %v2569, %v4215
        %v4217 = vand.u32 %v4216, 4294901760
        %4218 = vmatpush.msra.mxu0 %v4217
        %v4219 = vand.u32 %v2568, 4294901760
        %v4220 = vsub.f32 %v2568, %v4219
        %v4221 = vand.u32 %v4220, 4294901760
        %4222 = vmatpush.msra.mxu0 %v4221
        %v4223 = vand.u32 %v2567, 4294901760
        %v4224 = vsub.f32 %v2567, %v4223
        %v4225 = vand.u32 %v4224, 4294901760
        %4226 = vmatpush.msra.mxu0 %v4225
        %v4227 = vand.u32 %v2566, 4294901760
        %v4228 = vsub.f32 %v2566, %v4227
        %v4229 = vand.u32 %v4228, 4294901760
        %4230 = vmatpush.msra.mxu0 %v4229
        %v4231 = vand.u32 %v2565, 4294901760
        %v4232 = vsub.f32 %v2565, %v4231
        %v4233 = vand.u32 %v4232, 4294901760
        %4234 = vmatpush.msra.mxu0 %v4233
        %v4235 = vand.u32 %v2564, 4294901760
        %v4236 = vsub.f32 %v2564, %v4235
        %v4237 = vand.u32 %v4236, 4294901760
        %4238 = vmatpush.msra.mxu0 %v4237
        %v4239 = vand.u32 %v2563, 4294901760
        %v4240 = vsub.f32 %v2563, %v4239
        %v4241 = vand.u32 %v4240, 4294901760
        %4242 = vmatpush.msra.mxu0 %v4241
        %v4243 = vand.u32 %v3607, 4294901760
        %4244 = vmatmul.f32.gmra.mxu0 %v4243
        %v4245 = vpop.f32.mrf.mxu0
        %v4246 = vadd.f32 %v4180, %v4245
        %4247 = vdwg.mxu0
        %4248 = vmatpush.msra.mxu0 0.0
        %v4249 = vand.u32 %v2577, 4294901760
        %4250 = vmatpush.msra.mxu0 %v4249
        %v4251 = vand.u32 %v2576, 4294901760
        %4252 = vmatpush.msra.mxu0 %v4251
        %v4253 = vand.u32 %v2575, 4294901760
        %4254 = vmatpush.msra.mxu0 %v4253
        %v4255 = vand.u32 %v2574, 4294901760
        %4256 = vmatpush.msra.mxu0 %v4255
        %v4257 = vand.u32 %v2573, 4294901760
        %4258 = vmatpush.msra.mxu0 %v4257
        %v4259 = vand.u32 %v2572, 4294901760
        %4260 = vmatpush.msra.mxu0 %v4259
        %v4261 = vand.u32 %v2571, 4294901760
        %4262 = vmatpush.msra.mxu0 %v4261
        %v4263 = vand.u32 %v2570, 4294901760
        %4264 = vmatpush.msra.mxu0 %v4263
        %v4265 = vand.u32 %v2569, 4294901760
        %4266 = vmatpush.msra.mxu0 %v4265
        %v4267 = vand.u32 %v2568, 4294901760
        %4268 = vmatpush.msra.mxu0 %v4267
        %v4269 = vand.u32 %v2567, 4294901760
        %4270 = vmatpush.msra.mxu0 %v4269
        %v4271 = vand.u32 %v2566, 4294901760
        %4272 = vmatpush.msra.mxu0 %v4271
        %v4273 = vand.u32 %v2565, 4294901760
        %4274 = vmatpush.msra.mxu0 %v4273
        %v4275 = vand.u32 %v2564, 4294901760
        %4276 = vmatpush.msra.mxu0 %v4275
        %v4277 = vand.u32 %v2563, 4294901760
        %4278 = vmatpush.msra.mxu0 %v4277
        %v4279 = vand.u32 %v3607, 4294901760
        %4280 = vmatmul.f32.gmra.mxu0 %v4279
        %v4281 = vpop.f32.mrf.mxu0
        %v4282 = vadd.f32 %v4246, %v4281
        %4283 = vdwg.mxu0
        %4284 = vmatpush.msra.mxu0 0.0
        %v4285 = vand.u32 %v2560, 4294901760
        %4286 = vmatpush.msra.mxu0 %v4285
        %v4287 = vand.u32 %v2559, 4294901760
        %4288 = vmatpush.msra.mxu0 %v4287
        %v4289 = vand.u32 %v2558, 4294901760
        %4290 = vmatpush.msra.mxu0 %v4289
        %v4291 = vand.u32 %v2557, 4294901760
        %4292 = vmatpush.msra.mxu0 %v4291
        %v4293 = vand.u32 %v2556, 4294901760
        %4294 = vmatpush.msra.mxu0 %v4293
        %v4295 = vand.u32 %v2555, 4294901760
        %4296 = vmatpush.msra.mxu0 %v4295
        %v4297 = vand.u32 %v2554, 4294901760
        %4298 = vmatpush.msra.mxu0 %v4297
        %v4299 = vand.u32 %v2553, 4294901760
        %4300 = vmatpush.msra.mxu0 %v4299
        %v4301 = vand.u32 %v2552, 4294901760
        %4302 = vmatpush.msra.mxu0 %v4301
        %v4303 = vand.u32 %v2551, 4294901760
        %4304 = vmatpush.msra.mxu0 %v4303
        %v4305 = vand.u32 %v2550, 4294901760
        %4306 = vmatpush.msra.mxu0 %v4305
        %v4307 = vand.u32 %v2549, 4294901760
        %4308 = vmatpush.msra.mxu0 %v4307
        %v4309 = vand.u32 %v2548, 4294901760
        %4310 = vmatpush.msra.mxu0 %v4309
        %v4311 = vand.u32 %v2547, 4294901760
        %4312 = vmatpush.msra.mxu0 %v4311
        %v4313 = vand.u32 %v2546, 4294901760
        %4314 = vmatpush.msra.mxu0 %v4313
        %v4315 = vand.u32 %v3258, 4294901760
        %v4316 = vsub.f32 %v3258, %v4315
        %v4317 = vand.u32 %v4316, 4294901760
        %v4318 = vsub.f32 %v4316, %v4317
        %v4319 = vand.u32 %v4318, 4294901760
        %4320 = vmatmul.f32.gmra.mxu0 %v4319
        %v4321 = vpop.f32.mrf.mxu0
        %v4322 = vadd.f32 %v4282, %v4321
        %4323 = vdwg.mxu0
        %4324 = vmatpush.msra.mxu0 0.0
        %v4325 = vand.u32 %v2560, 4294901760
        %v4326 = vsub.f32 %v2560, %v4325
        %v4327 = vand.u32 %v4326, 4294901760
        %v4328 = vsub.f32 %v4326, %v4327
        %v4329 = vand.u32 %v4328, 4294901760
        %4330 = vmatpush.msra.mxu0 %v4329
        %v4331 = vand.u32 %v2559, 4294901760
        %v4332 = vsub.f32 %v2559, %v4331
        %v4333 = vand.u32 %v4332, 4294901760
        %v4334 = vsub.f32 %v4332, %v4333
        %v4335 = vand.u32 %v4334, 4294901760
        %4336 = vmatpush.msra.mxu0 %v4335
        %v4337 = vand.u32 %v2558, 4294901760
        %v4338 = vsub.f32 %v2558, %v4337
        %v4339 = vand.u32 %v4338, 4294901760
        %v4340 = vsub.f32 %v4338, %v4339
        %v4341 = vand.u32 %v4340, 4294901760
        %4342 = vmatpush.msra.mxu0 %v4341
        %v4343 = vand.u32 %v2557, 4294901760
        %v4344 = vsub.f32 %v2557, %v4343
        %v4345 = vand.u32 %v4344, 4294901760
        %v4346 = vsub.f32 %v4344, %v4345
        %v4347 = vand.u32 %v4346, 4294901760
        %4348 = vmatpush.msra.mxu0 %v4347
        %v4349 = vand.u32 %v2556, 4294901760
        %v4350 = vsub.f32 %v2556, %v4349
        %v4351 = vand.u32 %v4350, 4294901760
        %v4352 = vsub.f32 %v4350, %v4351
        %v4353 = vand.u32 %v4352, 4294901760
        %4354 = vmatpush.msra.mxu0 %v4353
        %v4355 = vand.u32 %v2555, 4294901760
        %v4356 = vsub.f32 %v2555, %v4355
        %v4357 = vand.u32 %v4356, 4294901760
        %v4358 = vsub.f32 %v4356, %v4357
        %v4359 = vand.u32 %v4358, 4294901760
        %4360 = vmatpush.msra.mxu0 %v4359
        %v4361 = vand.u32 %v2554, 4294901760
        %v4362 = vsub.f32 %v2554, %v4361
        %v4363 = vand.u32 %v4362, 4294901760
        %v4364 = vsub.f32 %v4362, %v4363
        %v4365 = vand.u32 %v4364, 4294901760
        %4366 = vmatpush.msra.mxu0 %v4365
        %v4367 = vand.u32 %v2553, 4294901760
        %v4368 = vsub.f32 %v2553, %v4367
        %v4369 = vand.u32 %v4368, 4294901760
        %v4370 = vsub.f32 %v4368, %v4369
        %v4371 = vand.u32 %v4370, 4294901760
        %4372 = vmatpush.msra.mxu0 %v4371
        %v4373 = vand.u32 %v2552, 4294901760
        %v4374 = vsub.f32 %v2552, %v4373
        %v4375 = vand.u32 %v4374, 4294901760
        %v4376 = vsub.f32 %v4374, %v4375
        %v4377 = vand.u32 %v4376, 4294901760
        %4378 = vmatpush.msra.mxu0 %v4377
        %v4379 = vand.u32 %v2551, 4294901760
        %v4380 = vsub.f32 %v2551, %v4379
        %v4381 = vand.u32 %v4380, 4294901760
        %v4382 = vsub.f32 %v4380, %v4381
        %v4383 = vand.u32 %v4382, 4294901760
        %4384 = vmatpush.msra.mxu0 %v4383
        %v4385 = vand.u32 %v2550, 4294901760
        %v4386 = vsub.f32 %v2550, %v4385
        %v4387 = vand.u32 %v4386, 4294901760
        %v4388 = vsub.f32 %v4386, %v4387
        %v4389 = vand.u32 %v4388, 4294901760
        %4390 = vmatpush.msra.mxu0 %v4389
        %v4391 = vand.u32 %v2549, 4294901760
        %v4392 = vsub.f32 %v2549, %v4391
        %v4393 = vand.u32 %v4392, 4294901760
        %v4394 = vsub.f32 %v4392, %v4393
        %v4395 = vand.u32 %v4394, 4294901760
        %4396 = vmatpush.msra.mxu0 %v4395
        %v4397 = vand.u32 %v2548, 4294901760
        %v4398 = vsub.f32 %v2548, %v4397
        %v4399 = vand.u32 %v4398, 4294901760
        %v4400 = vsub.f32 %v4398, %v4399
        %v4401 = vand.u32 %v4400, 4294901760
        %4402 = vmatpush.msra.mxu0 %v4401
        %v4403 = vand.u32 %v2547, 4294901760
        %v4404 = vsub.f32 %v2547, %v4403
        %v4405 = vand.u32 %v4404, 4294901760
        %v4406 = vsub.f32 %v4404, %v4405
        %v4407 = vand.u32 %v4406, 4294901760
        %4408 = vmatpush.msra.mxu0 %v4407
        %v4409 = vand.u32 %v2546, 4294901760
        %v4410 = vsub.f32 %v2546, %v4409
        %v4411 = vand.u32 %v4410, 4294901760
        %v4412 = vsub.f32 %v4410, %v4411
        %v4413 = vand.u32 %v4412, 4294901760
        %4414 = vmatpush.msra.mxu0 %v4413
        %v4415 = vand.u32 %v3258, 4294901760
        %4416 = vmatmul.f32.gmra.mxu0 %v4415
        %v4417 = vpop.f32.mrf.mxu0
        %v4418 = vadd.f32 %v4322, %v4417
        %4419 = vdwg.mxu0
        %4420 = vmatpush.msra.mxu0 0.0
        %v4421 = vand.u32 %v2560, 4294901760
        %v4422 = vsub.f32 %v2560, %v4421
        %4423 = vmatpush.msra.mxu0 %v4422
        %v4424 = vand.u32 %v2559, 4294901760
        %v4425 = vsub.f32 %v2559, %v4424
        %4426 = vmatpush.msra.mxu0 %v4425
        %v4427 = vand.u32 %v2558, 4294901760
        %v4428 = vsub.f32 %v2558, %v4427
        %4429 = vmatpush.msra.mxu0 %v4428
        %v4430 = vand.u32 %v2557, 4294901760
        %v4431 = vsub.f32 %v2557, %v4430
        %4432 = vmatpush.msra.mxu0 %v4431
        %v4433 = vand.u32 %v2556, 4294901760
        %v4434 = vsub.f32 %v2556, %v4433
        %4435 = vmatpush.msra.mxu0 %v4434
        %v4436 = vand.u32 %v2555, 4294901760
        %v4437 = vsub.f32 %v2555, %v4436
        %4438 = vmatpush.msra.mxu0 %v4437
        %v4439 = vand.u32 %v2554, 4294901760
        %v4440 = vsub.f32 %v2554, %v4439
        %4441 = vmatpush.msra.mxu0 %v4440
        %v4442 = vand.u32 %v2553, 4294901760
        %v4443 = vsub.f32 %v2553, %v4442
        %4444 = vmatpush.msra.mxu0 %v4443
        %v4445 = vand.u32 %v2552, 4294901760
        %v4446 = vsub.f32 %v2552, %v4445
        %4447 = vmatpush.msra.mxu0 %v4446
        %v4448 = vand.u32 %v2551, 4294901760
        %v4449 = vsub.f32 %v2551, %v4448
        %4450 = vmatpush.msra.mxu0 %v4449
        %v4451 = vand.u32 %v2550, 4294901760
        %v4452 = vsub.f32 %v2550, %v4451
        %4453 = vmatpush.msra.mxu0 %v4452
        %v4454 = vand.u32 %v2549, 4294901760
        %v4455 = vsub.f32 %v2549, %v4454
        %4456 = vmatpush.msra.mxu0 %v4455
        %v4457 = vand.u32 %v2548, 4294901760
        %v4458 = vsub.f32 %v2548, %v4457
        %4459 = vmatpush.msra.mxu0 %v4458
        %v4460 = vand.u32 %v2547, 4294901760
        %v4461 = vsub.f32 %v2547, %v4460
        %4462 = vmatpush.msra.mxu0 %v4461
        %v4463 = vand.u32 %v2546, 4294901760
        %v4464 = vsub.f32 %v2546, %v4463
        %4465 = vmatpush.msra.mxu0 %v4464
        %v4466 = vand.u32 %v3258, 4294901760
        %v4467 = vsub.f32 %v3258, %v4466
        %4468 = vmatmul.f32.gmra.mxu0 %v4467
        %v4469 = vpop.f32.mrf.mxu0
        %v4470 = vadd.f32 %v4418, %v4469
        %4471 = vdwg.mxu0
        %4472 = vmatpush.msra.mxu0 0.0
        %v4473 = vand.u32 %v2560, 4294901760
        %4474 = vmatpush.msra.mxu0 %v4473
        %v4475 = vand.u32 %v2559, 4294901760
        %4476 = vmatpush.msra.mxu0 %v4475
        %v4477 = vand.u32 %v2558, 4294901760
        %4478 = vmatpush.msra.mxu0 %v4477
        %v4479 = vand.u32 %v2557, 4294901760
        %4480 = vmatpush.msra.mxu0 %v4479
        %v4481 = vand.u32 %v2556, 4294901760
        %4482 = vmatpush.msra.mxu0 %v4481
        %v4483 = vand.u32 %v2555, 4294901760
        %4484 = vmatpush.msra.mxu0 %v4483
        %v4485 = vand.u32 %v2554, 4294901760
        %4486 = vmatpush.msra.mxu0 %v4485
        %v4487 = vand.u32 %v2553, 4294901760
        %4488 = vmatpush.msra.mxu0 %v4487
        %v4489 = vand.u32 %v2552, 4294901760
        %4490 = vmatpush.msra.mxu0 %v4489
        %v4491 = vand.u32 %v2551, 4294901760
        %4492 = vmatpush.msra.mxu0 %v4491
        %v4493 = vand.u32 %v2550, 4294901760
        %4494 = vmatpush.msra.mxu0 %v4493
        %v4495 = vand.u32 %v2549, 4294901760
        %4496 = vmatpush.msra.mxu0 %v4495
        %v4497 = vand.u32 %v2548, 4294901760
        %4498 = vmatpush.msra.mxu0 %v4497
        %v4499 = vand.u32 %v2547, 4294901760
        %4500 = vmatpush.msra.mxu0 %v4499
        %v4501 = vand.u32 %v2546, 4294901760
        %4502 = vmatpush.msra.mxu0 %v4501
        %v4503 = vand.u32 %v3258, 4294901760
        %v4504 = vsub.f32 %v3258, %v4503
        %v4505 = vand.u32 %v4504, 4294901760
        %4506 = vmatmul.f32.gmra.mxu0 %v4505
        %v4507 = vpop.f32.mrf.mxu0
        %v4508 = vadd.f32 %v4470, %v4507
        %4509 = vdwg.mxu0
        %4510 = vmatpush.msra.mxu0 0.0
        %v4511 = vand.u32 %v2560, 4294901760
        %v4512 = vsub.f32 %v2560, %v4511
        %v4513 = vand.u32 %v4512, 4294901760
        %4514 = vmatpush.msra.mxu0 %v4513
        %v4515 = vand.u32 %v2559, 4294901760
        %v4516 = vsub.f32 %v2559, %v4515
        %v4517 = vand.u32 %v4516, 4294901760
        %4518 = vmatpush.msra.mxu0 %v4517
        %v4519 = vand.u32 %v2558, 4294901760
        %v4520 = vsub.f32 %v2558, %v4519
        %v4521 = vand.u32 %v4520, 4294901760
        %4522 = vmatpush.msra.mxu0 %v4521
        %v4523 = vand.u32 %v2557, 4294901760
        %v4524 = vsub.f32 %v2557, %v4523
        %v4525 = vand.u32 %v4524, 4294901760
        %4526 = vmatpush.msra.mxu0 %v4525
        %v4527 = vand.u32 %v2556, 4294901760
        %v4528 = vsub.f32 %v2556, %v4527
        %v4529 = vand.u32 %v4528, 4294901760
        %4530 = vmatpush.msra.mxu0 %v4529
        %v4531 = vand.u32 %v2555, 4294901760
        %v4532 = vsub.f32 %v2555, %v4531
        %v4533 = vand.u32 %v4532, 4294901760
        %4534 = vmatpush.msra.mxu0 %v4533
        %v4535 = vand.u32 %v2554, 4294901760
        %v4536 = vsub.f32 %v2554, %v4535
        %v4537 = vand.u32 %v4536, 4294901760
        %4538 = vmatpush.msra.mxu0 %v4537
        %v4539 = vand.u32 %v2553, 4294901760
        %v4540 = vsub.f32 %v2553, %v4539
        %v4541 = vand.u32 %v4540, 4294901760
        %4542 = vmatpush.msra.mxu0 %v4541
        %v4543 = vand.u32 %v2552, 4294901760
        %v4544 = vsub.f32 %v2552, %v4543
        %v4545 = vand.u32 %v4544, 4294901760
        %4546 = vmatpush.msra.mxu0 %v4545
        %v4547 = vand.u32 %v2551, 4294901760
        %v4548 = vsub.f32 %v2551, %v4547
        %v4549 = vand.u32 %v4548, 4294901760
        %4550 = vmatpush.msra.mxu0 %v4549
        %v4551 = vand.u32 %v2550, 4294901760
        %v4552 = vsub.f32 %v2550, %v4551
        %v4553 = vand.u32 %v4552, 4294901760
        %4554 = vmatpush.msra.mxu0 %v4553
        %v4555 = vand.u32 %v2549, 4294901760
        %v4556 = vsub.f32 %v2549, %v4555
        %v4557 = vand.u32 %v4556, 4294901760
        %4558 = vmatpush.msra.mxu0 %v4557
        %v4559 = vand.u32 %v2548, 4294901760
        %v4560 = vsub.f32 %v2548, %v4559
        %v4561 = vand.u32 %v4560, 4294901760
        %4562 = vmatpush.msra.mxu0 %v4561
        %v4563 = vand.u32 %v2547, 4294901760
        %v4564 = vsub.f32 %v2547, %v4563
        %v4565 = vand.u32 %v4564, 4294901760
        %4566 = vmatpush.msra.mxu0 %v4565
        %v4567 = vand.u32 %v2546, 4294901760
        %v4568 = vsub.f32 %v2546, %v4567
        %v4569 = vand.u32 %v4568, 4294901760
        %4570 = vmatpush.msra.mxu0 %v4569
        %v4571 = vand.u32 %v3258, 4294901760
        %4572 = vmatmul.f32.gmra.mxu0 %v4571
        %v4573 = vpop.f32.mrf.mxu0
        %v4574 = vadd.f32 %v4508, %v4573
        %4575 = vdwg.mxu0
        %4576 = vmatpush.msra.mxu0 0.0
        %v4577 = vand.u32 %v2560, 4294901760
        %4578 = vmatpush.msra.mxu0 %v4577
        %v4579 = vand.u32 %v2559, 4294901760
        %4580 = vmatpush.msra.mxu0 %v4579
        %v4581 = vand.u32 %v2558, 4294901760
        %4582 = vmatpush.msra.mxu0 %v4581
        %v4583 = vand.u32 %v2557, 4294901760
        %4584 = vmatpush.msra.mxu0 %v4583
        %v4585 = vand.u32 %v2556, 4294901760
        %4586 = vmatpush.msra.mxu0 %v4585
        %v4587 = vand.u32 %v2555, 4294901760
        %4588 = vmatpush.msra.mxu0 %v4587
        %v4589 = vand.u32 %v2554, 4294901760
        %4590 = vmatpush.msra.mxu0 %v4589
        %v4591 = vand.u32 %v2553, 4294901760
        %4592 = vmatpush.msra.mxu0 %v4591
        %v4593 = vand.u32 %v2552, 4294901760
        %4594 = vmatpush.msra.mxu0 %v4593
        %v4595 = vand.u32 %v2551, 4294901760
        %4596 = vmatpush.msra.mxu0 %v4595
        %v4597 = vand.u32 %v2550, 4294901760
        %4598 = vmatpush.msra.mxu0 %v4597
        %v4599 = vand.u32 %v2549, 4294901760
        %4600 = vmatpush.msra.mxu0 %v4599
        %v4601 = vand.u32 %v2548, 4294901760
        %4602 = vmatpush.msra.mxu0 %v4601
        %v4603 = vand.u32 %v2547, 4294901760
        %4604 = vmatpush.msra.mxu0 %v4603
        %v4605 = vand.u32 %v2546, 4294901760
        %4606 = vmatpush.msra.mxu0 %v4605
        %v4607 = vand.u32 %v3258, 4294901760
        %4608 = vmatmul.f32.gmra.mxu0 %v4607
        %v4609 = vpop.f32.mrf.mxu0
        %v4610 = vadd.f32 %v4574, %v4609
        %4611 = vdwg.mxu0
        %v4612 = vld [vmem:[#allocation2 + $0x4] sm:$0x1]
        %v4614 = vsel %vm2543, %v4612, 0
        %4616 = vmatpush.msra.mxu0 0.0
        %v4617 = vand.u32 %v3256, 4294901760
        %4618 = vmatpush.msra.mxu0 %v4617
        %v4619 = vand.u32 %v3255, 4294901760
        %4620 = vmatpush.msra.mxu0 %v4619
        %v4621 = vand.u32 %v3254, 4294901760
        %4622 = vmatpush.msra.mxu0 %v4621
        %v4623 = vand.u32 %v3253, 4294901760
        %4624 = vmatpush.msra.mxu0 %v4623
        %v4625 = vand.u32 %v3252, 4294901760
        %4626 = vmatpush.msra.mxu0 %v4625
        %v4627 = vand.u32 %v3251, 4294901760
        %4628 = vmatpush.msra.mxu0 %v4627
        %v4629 = vand.u32 %v3250, 4294901760
        %4630 = vmatpush.msra.mxu0 %v4629
        %v4631 = vand.u32 %v3249, 4294901760
        %4632 = vmatpush.msra.mxu0 %v4631
        %v4633 = vand.u32 %v3248, 4294901760
        %4634 = vmatpush.msra.mxu0 %v4633
        %v4635 = vand.u32 %v3247, 4294901760
        %4636 = vmatpush.msra.mxu0 %v4635
        %v4637 = vand.u32 %v3246, 4294901760
        %4638 = vmatpush.msra.mxu0 %v4637
        %v4639 = vand.u32 %v3245, 4294901760
        %4640 = vmatpush.msra.mxu0 %v4639
        %v4641 = vand.u32 %v3244, 4294901760
        %4642 = vmatpush.msra.mxu0 %v4641
        %v4643 = vand.u32 %v3243, 4294901760
        %4644 = vmatpush.msra.mxu0 %v4643
        %v4645 = vand.u32 %v3242, 4294901760
        %4646 = vmatpush.msra.mxu0 %v4645
        %v4647 = vand.u32 %v4614, 4294901760
        %v4648 = vsub.f32 %v4614, %v4647
        %v4649 = vand.u32 %v4648, 4294901760
        %v4650 = vsub.f32 %v4648, %v4649
        %v4651 = vand.u32 %v4650, 4294901760
        %4652 = vmatmul.f32.gmra.mxu0 %v4651
        %v4653 = vpop.f32.mrf.mxu0
        %v4654 = vadd.f32 0.0, %v4653
        %4655 = vdwg.mxu0
        %4656 = vmatpush.msra.mxu0 0.0
        %v4657 = vand.u32 %v3256, 4294901760
        %v4658 = vsub.f32 %v3256, %v4657
        %v4659 = vand.u32 %v4658, 4294901760
        %v4660 = vsub.f32 %v4658, %v4659
        %v4661 = vand.u32 %v4660, 4294901760
        %4662 = vmatpush.msra.mxu0 %v4661
        %v4663 = vand.u32 %v3255, 4294901760
        %v4664 = vsub.f32 %v3255, %v4663
        %v4665 = vand.u32 %v4664, 4294901760
        %v4666 = vsub.f32 %v4664, %v4665
        %v4667 = vand.u32 %v4666, 4294901760
        %4668 = vmatpush.msra.mxu0 %v4667
        %v4669 = vand.u32 %v3254, 4294901760
        %v4670 = vsub.f32 %v3254, %v4669
        %v4671 = vand.u32 %v4670, 4294901760
        %v4672 = vsub.f32 %v4670, %v4671
        %v4673 = vand.u32 %v4672, 4294901760
        %4674 = vmatpush.msra.mxu0 %v4673
        %v4675 = vand.u32 %v3253, 4294901760
        %v4676 = vsub.f32 %v3253, %v4675
        %v4677 = vand.u32 %v4676, 4294901760
        %v4678 = vsub.f32 %v4676, %v4677
        %v4679 = vand.u32 %v4678, 4294901760
        %4680 = vmatpush.msra.mxu0 %v4679
        %v4681 = vand.u32 %v3252, 4294901760
        %v4682 = vsub.f32 %v3252, %v4681
        %v4683 = vand.u32 %v4682, 4294901760
        %v4684 = vsub.f32 %v4682, %v4683
        %v4685 = vand.u32 %v4684, 4294901760
        %4686 = vmatpush.msra.mxu0 %v4685
        %v4687 = vand.u32 %v3251, 4294901760
        %v4688 = vsub.f32 %v3251, %v4687
        %v4689 = vand.u32 %v4688, 4294901760
        %v4690 = vsub.f32 %v4688, %v4689
        %v4691 = vand.u32 %v4690, 4294901760
        %4692 = vmatpush.msra.mxu0 %v4691
        %v4693 = vand.u32 %v3250, 4294901760
        %v4694 = vsub.f32 %v3250, %v4693
        %v4695 = vand.u32 %v4694, 4294901760
        %v4696 = vsub.f32 %v4694, %v4695
        %v4697 = vand.u32 %v4696, 4294901760
        %4698 = vmatpush.msra.mxu0 %v4697
        %v4699 = vand.u32 %v3249, 4294901760
        %v4700 = vsub.f32 %v3249, %v4699
        %v4701 = vand.u32 %v4700, 4294901760
        %v4702 = vsub.f32 %v4700, %v4701
        %v4703 = vand.u32 %v4702, 4294901760
        %4704 = vmatpush.msra.mxu0 %v4703
        %v4705 = vand.u32 %v3248, 4294901760
        %v4706 = vsub.f32 %v3248, %v4705
        %v4707 = vand.u32 %v4706, 4294901760
        %v4708 = vsub.f32 %v4706, %v4707
        %v4709 = vand.u32 %v4708, 4294901760
        %4710 = vmatpush.msra.mxu0 %v4709
        %v4711 = vand.u32 %v3247, 4294901760
        %v4712 = vsub.f32 %v3247, %v4711
        %v4713 = vand.u32 %v4712, 4294901760
        %v4714 = vsub.f32 %v4712, %v4713
        %v4715 = vand.u32 %v4714, 4294901760
        %4716 = vmatpush.msra.mxu0 %v4715
        %v4717 = vand.u32 %v3246, 4294901760
        %v4718 = vsub.f32 %v3246, %v4717
        %v4719 = vand.u32 %v4718, 4294901760
        %v4720 = vsub.f32 %v4718, %v4719
        %v4721 = vand.u32 %v4720, 4294901760
        %4722 = vmatpush.msra.mxu0 %v4721
        %v4723 = vand.u32 %v3245, 4294901760
        %v4724 = vsub.f32 %v3245, %v4723
        %v4725 = vand.u32 %v4724, 4294901760
        %v4726 = vsub.f32 %v4724, %v4725
        %v4727 = vand.u32 %v4726, 4294901760
        %4728 = vmatpush.msra.mxu0 %v4727
        %v4729 = vand.u32 %v3244, 4294901760
        %v4730 = vsub.f32 %v3244, %v4729
        %v4731 = vand.u32 %v4730, 4294901760
        %v4732 = vsub.f32 %v4730, %v4731
        %v4733 = vand.u32 %v4732, 4294901760
        %4734 = vmatpush.msra.mxu0 %v4733
        %v4735 = vand.u32 %v3243, 4294901760
        %v4736 = vsub.f32 %v3243, %v4735
        %v4737 = vand.u32 %v4736, 4294901760
        %v4738 = vsub.f32 %v4736, %v4737
        %v4739 = vand.u32 %v4738, 4294901760
        %4740 = vmatpush.msra.mxu0 %v4739
        %v4741 = vand.u32 %v3242, 4294901760
        %v4742 = vsub.f32 %v3242, %v4741
        %v4743 = vand.u32 %v4742, 4294901760
        %v4744 = vsub.f32 %v4742, %v4743
        %v4745 = vand.u32 %v4744, 4294901760
        %4746 = vmatpush.msra.mxu0 %v4745
        %v4747 = vand.u32 %v4614, 4294901760
        %4748 = vmatmul.f32.gmra.mxu0 %v4747
        %v4749 = vpop.f32.mrf.mxu0
        %v4750 = vadd.f32 %v4654, %v4749
        %4751 = vdwg.mxu0
        %4752 = vmatpush.msra.mxu0 0.0
        %v4753 = vand.u32 %v3256, 4294901760
        %v4754 = vsub.f32 %v3256, %v4753
        %4755 = vmatpush.msra.mxu0 %v4754
        %v4756 = vand.u32 %v3255, 4294901760
        %v4757 = vsub.f32 %v3255, %v4756
        %4758 = vmatpush.msra.mxu0 %v4757
        %v4759 = vand.u32 %v3254, 4294901760
        %v4760 = vsub.f32 %v3254, %v4759
        %4761 = vmatpush.msra.mxu0 %v4760
        %v4762 = vand.u32 %v3253, 4294901760
        %v4763 = vsub.f32 %v3253, %v4762
        %4764 = vmatpush.msra.mxu0 %v4763
        %v4765 = vand.u32 %v3252, 4294901760
        %v4766 = vsub.f32 %v3252, %v4765
        %4767 = vmatpush.msra.mxu0 %v4766
        %v4768 = vand.u32 %v3251, 4294901760
        %v4769 = vsub.f32 %v3251, %v4768
        %4770 = vmatpush.msra.mxu0 %v4769
        %v4771 = vand.u32 %v3250, 4294901760
        %v4772 = vsub.f32 %v3250, %v4771
        %4773 = vmatpush.msra.mxu0 %v4772
        %v4774 = vand.u32 %v3249, 4294901760
        %v4775 = vsub.f32 %v3249, %v4774
        %4776 = vmatpush.msra.mxu0 %v4775
        %v4777 = vand.u32 %v3248, 4294901760
        %v4778 = vsub.f32 %v3248, %v4777
        %4779 = vmatpush.msra.mxu0 %v4778
        %v4780 = vand.u32 %v3247, 4294901760
        %v4781 = vsub.f32 %v3247, %v4780
        %4782 = vmatpush.msra.mxu0 %v4781
        %v4783 = vand.u32 %v3246, 4294901760
        %v4784 = vsub.f32 %v3246, %v4783
        %4785 = vmatpush.msra.mxu0 %v4784
        %v4786 = vand.u32 %v3245, 4294901760
        %v4787 = vsub.f32 %v3245, %v4786
        %4788 = vmatpush.msra.mxu0 %v4787
        %v4789 = vand.u32 %v3244, 4294901760
        %v4790 = vsub.f32 %v3244, %v4789
        %4791 = vmatpush.msra.mxu0 %v4790
        %v4792 = vand.u32 %v3243, 4294901760
        %v4793 = vsub.f32 %v3243, %v4792
        %4794 = vmatpush.msra.mxu0 %v4793
        %v4795 = vand.u32 %v3242, 4294901760
        %v4796 = vsub.f32 %v3242, %v4795
        %4797 = vmatpush.msra.mxu0 %v4796
        %v4798 = vand.u32 %v4614, 4294901760
        %v4799 = vsub.f32 %v4614, %v4798
        %4800 = vmatmul.f32.gmra.mxu0 %v4799
        %v4801 = vpop.f32.mrf.mxu0
        %v4802 = vadd.f32 %v4750, %v4801
        %4803 = vdwg.mxu0
        %4804 = vmatpush.msra.mxu0 0.0
        %v4805 = vand.u32 %v3256, 4294901760
        %4806 = vmatpush.msra.mxu0 %v4805
        %v4807 = vand.u32 %v3255, 4294901760
        %4808 = vmatpush.msra.mxu0 %v4807
        %v4809 = vand.u32 %v3254, 4294901760
        %4810 = vmatpush.msra.mxu0 %v4809
        %v4811 = vand.u32 %v3253, 4294901760
        %4812 = vmatpush.msra.mxu0 %v4811
        %v4813 = vand.u32 %v3252, 4294901760
        %4814 = vmatpush.msra.mxu0 %v4813
        %v4815 = vand.u32 %v3251, 4294901760
        %4816 = vmatpush.msra.mxu0 %v4815
        %v4817 = vand.u32 %v3250, 4294901760
        %4818 = vmatpush.msra.mxu0 %v4817
        %v4819 = vand.u32 %v3249, 4294901760
        %4820 = vmatpush.msra.mxu0 %v4819
        %v4821 = vand.u32 %v3248, 4294901760
        %4822 = vmatpush.msra.mxu0 %v4821
        %v4823 = vand.u32 %v3247, 4294901760
        %4824 = vmatpush.msra.mxu0 %v4823
        %v4825 = vand.u32 %v3246, 4294901760
        %4826 = vmatpush.msra.mxu0 %v4825
        %v4827 = vand.u32 %v3245, 4294901760
        %4828 = vmatpush.msra.mxu0 %v4827
        %v4829 = vand.u32 %v3244, 4294901760
        %4830 = vmatpush.msra.mxu0 %v4829
        %v4831 = vand.u32 %v3243, 4294901760
        %4832 = vmatpush.msra.mxu0 %v4831
        %v4833 = vand.u32 %v3242, 4294901760
        %4834 = vmatpush.msra.mxu0 %v4833
        %v4835 = vand.u32 %v4614, 4294901760
        %v4836 = vsub.f32 %v4614, %v4835
        %v4837 = vand.u32 %v4836, 4294901760
        %4838 = vmatmul.f32.gmra.mxu0 %v4837
        %v4839 = vpop.f32.mrf.mxu0
        %v4840 = vadd.f32 %v4802, %v4839
        %4841 = vdwg.mxu0
        %4842 = vmatpush.msra.mxu0 0.0
        %v4843 = vand.u32 %v3256, 4294901760
        %v4844 = vsub.f32 %v3256, %v4843
        %v4845 = vand.u32 %v4844, 4294901760
        %4846 = vmatpush.msra.mxu0 %v4845
        %v4847 = vand.u32 %v3255, 4294901760
        %v4848 = vsub.f32 %v3255, %v4847
        %v4849 = vand.u32 %v4848, 4294901760
        %4850 = vmatpush.msra.mxu0 %v4849
        %v4851 = vand.u32 %v3254, 4294901760
        %v4852 = vsub.f32 %v3254, %v4851
        %v4853 = vand.u32 %v4852, 4294901760
        %4854 = vmatpush.msra.mxu0 %v4853
        %v4855 = vand.u32 %v3253, 4294901760
        %v4856 = vsub.f32 %v3253, %v4855
        %v4857 = vand.u32 %v4856, 4294901760
        %4858 = vmatpush.msra.mxu0 %v4857
        %v4859 = vand.u32 %v3252, 4294901760
        %v4860 = vsub.f32 %v3252, %v4859
        %v4861 = vand.u32 %v4860, 4294901760
        %4862 = vmatpush.msra.mxu0 %v4861
        %v4863 = vand.u32 %v3251, 4294901760
        %v4864 = vsub.f32 %v3251, %v4863
        %v4865 = vand.u32 %v4864, 4294901760
        %4866 = vmatpush.msra.mxu0 %v4865
        %v4867 = vand.u32 %v3250, 4294901760
        %v4868 = vsub.f32 %v3250, %v4867
        %v4869 = vand.u32 %v4868, 4294901760
        %4870 = vmatpush.msra.mxu0 %v4869
        %v4871 = vand.u32 %v3249, 4294901760
        %v4872 = vsub.f32 %v3249, %v4871
        %v4873 = vand.u32 %v4872, 4294901760
        %4874 = vmatpush.msra.mxu0 %v4873
        %v4875 = vand.u32 %v3248, 4294901760
        %v4876 = vsub.f32 %v3248, %v4875
        %v4877 = vand.u32 %v4876, 4294901760
        %4878 = vmatpush.msra.mxu0 %v4877
        %v4879 = vand.u32 %v3247, 4294901760
        %v4880 = vsub.f32 %v3247, %v4879
        %v4881 = vand.u32 %v4880, 4294901760
        %4882 = vmatpush.msra.mxu0 %v4881
        %v4883 = vand.u32 %v3246, 4294901760
        %v4884 = vsub.f32 %v3246, %v4883
        %v4885 = vand.u32 %v4884, 4294901760
        %4886 = vmatpush.msra.mxu0 %v4885
        %v4887 = vand.u32 %v3245, 4294901760
        %v4888 = vsub.f32 %v3245, %v4887
        %v4889 = vand.u32 %v4888, 4294901760
        %4890 = vmatpush.msra.mxu0 %v4889
        %v4891 = vand.u32 %v3244, 4294901760
        %v4892 = vsub.f32 %v3244, %v4891
        %v4893 = vand.u32 %v4892, 4294901760
        %4894 = vmatpush.msra.mxu0 %v4893
        %v4895 = vand.u32 %v3243, 4294901760
        %v4896 = vsub.f32 %v3243, %v4895
        %v4897 = vand.u32 %v4896, 4294901760
        %4898 = vmatpush.msra.mxu0 %v4897
        %v4899 = vand.u32 %v3242, 4294901760
        %v4900 = vsub.f32 %v3242, %v4899
        %v4901 = vand.u32 %v4900, 4294901760
        %4902 = vmatpush.msra.mxu0 %v4901
        %v4903 = vand.u32 %v4614, 4294901760
        %4904 = vmatmul.f32.gmra.mxu0 %v4903
        %v4905 = vpop.f32.mrf.mxu0
        %v4906 = vadd.f32 %v4840, %v4905
        %4907 = vdwg.mxu0
        %4908 = vmatpush.msra.mxu0 0.0
        %v4909 = vand.u32 %v3256, 4294901760
        %4910 = vmatpush.msra.mxu0 %v4909
        %v4911 = vand.u32 %v3255, 4294901760
        %4912 = vmatpush.msra.mxu0 %v4911
        %v4913 = vand.u32 %v3254, 4294901760
        %4914 = vmatpush.msra.mxu0 %v4913
        %v4915 = vand.u32 %v3253, 4294901760
        %4916 = vmatpush.msra.mxu0 %v4915
        %v4917 = vand.u32 %v3252, 4294901760
        %4918 = vmatpush.msra.mxu0 %v4917
        %v4919 = vand.u32 %v3251, 4294901760
        %4920 = vmatpush.msra.mxu0 %v4919
        %v4921 = vand.u32 %v3250, 4294901760
        %4922 = vmatpush.msra.mxu0 %v4921
        %v4923 = vand.u32 %v3249, 4294901760
        %4924 = vmatpush.msra.mxu0 %v4923
        %v4925 = vand.u32 %v3248, 4294901760
        %4926 = vmatpush.msra.mxu0 %v4925
        %v4927 = vand.u32 %v3247, 4294901760
        %4928 = vmatpush.msra.mxu0 %v4927
        %v4929 = vand.u32 %v3246, 4294901760
        %4930 = vmatpush.msra.mxu0 %v4929
        %v4931 = vand.u32 %v3245, 4294901760
        %4932 = vmatpush.msra.mxu0 %v4931
        %v4933 = vand.u32 %v3244, 4294901760
        %4934 = vmatpush.msra.mxu0 %v4933
        %v4935 = vand.u32 %v3243, 4294901760
        %4936 = vmatpush.msra.mxu0 %v4935
        %v4937 = vand.u32 %v3242, 4294901760
        %4938 = vmatpush.msra.mxu0 %v4937
        %v4939 = vand.u32 %v4614, 4294901760
        %4940 = vmatmul.f32.gmra.mxu0 %v4939
        %v4941 = vpop.f32.mrf.mxu0
        %v4942 = vadd.f32 %v4906, %v4941
        %4943 = vdwg.mxu0
        %v4944 = vadd.f32 %v4610, %v4942
        %v4945 = vld [vmem:[#allocation2 + $0x5] sm:$0x1]
        %v4947 = vsel %vm2543, %v4945, 0
        %4949 = vmatpush.msra.mxu0 0.0
        %v4950 = vand.u32 %v3605, 4294901760
        %4951 = vmatpush.msra.mxu0 %v4950
        %v4952 = vand.u32 %v3604, 4294901760
        %4953 = vmatpush.msra.mxu0 %v4952
        %v4954 = vand.u32 %v3603, 4294901760
        %4955 = vmatpush.msra.mxu0 %v4954
        %v4956 = vand.u32 %v3602, 4294901760
        %4957 = vmatpush.msra.mxu0 %v4956
        %v4958 = vand.u32 %v3601, 4294901760
        %4959 = vmatpush.msra.mxu0 %v4958
        %v4960 = vand.u32 %v3600, 4294901760
        %4961 = vmatpush.msra.mxu0 %v4960
        %v4962 = vand.u32 %v3599, 4294901760
        %4963 = vmatpush.msra.mxu0 %v4962
        %v4964 = vand.u32 %v3598, 4294901760
        %4965 = vmatpush.msra.mxu0 %v4964
        %v4966 = vand.u32 %v3597, 4294901760
        %4967 = vmatpush.msra.mxu0 %v4966
        %v4968 = vand.u32 %v3596, 4294901760
        %4969 = vmatpush.msra.mxu0 %v4968
        %v4970 = vand.u32 %v3595, 4294901760
        %4971 = vmatpush.msra.mxu0 %v4970
        %v4972 = vand.u32 %v3594, 4294901760
        %4973 = vmatpush.msra.mxu0 %v4972
        %v4974 = vand.u32 %v3593, 4294901760
        %4975 = vmatpush.msra.mxu0 %v4974
        %v4976 = vand.u32 %v3592, 4294901760
        %4977 = vmatpush.msra.mxu0 %v4976
        %v4978 = vand.u32 %v3591, 4294901760
        %4979 = vmatpush.msra.mxu0 %v4978
        %v4980 = vand.u32 %v4947, 4294901760
        %v4981 = vsub.f32 %v4947, %v4980
        %v4982 = vand.u32 %v4981, 4294901760
        %v4983 = vsub.f32 %v4981, %v4982
        %v4984 = vand.u32 %v4983, 4294901760
        %4985 = vmatmul.f32.gmra.mxu0 %v4984
        %v4986 = vpop.f32.mrf.mxu0
        %v4987 = vadd.f32 0.0, %v4986
        %4988 = vdwg.mxu0
        %4989 = vmatpush.msra.mxu0 0.0
        %v4990 = vand.u32 %v3605, 4294901760
        %v4991 = vsub.f32 %v3605, %v4990
        %v4992 = vand.u32 %v4991, 4294901760
        %v4993 = vsub.f32 %v4991, %v4992
        %v4994 = vand.u32 %v4993, 4294901760
        %4995 = vmatpush.msra.mxu0 %v4994
        %v4996 = vand.u32 %v3604, 4294901760
        %v4997 = vsub.f32 %v3604, %v4996
        %v4998 = vand.u32 %v4997, 4294901760
        %v4999 = vsub.f32 %v4997, %v4998
        %v5000 = vand.u32 %v4999, 4294901760
        %5001 = vmatpush.msra.mxu0 %v5000
        %v5002 = vand.u32 %v3603, 4294901760
        %v5003 = vsub.f32 %v3603, %v5002
        %v5004 = vand.u32 %v5003, 4294901760
        %v5005 = vsub.f32 %v5003, %v5004
        %v5006 = vand.u32 %v5005, 4294901760
        %5007 = vmatpush.msra.mxu0 %v5006
        %v5008 = vand.u32 %v3602, 4294901760
        %v5009 = vsub.f32 %v3602, %v5008
        %v5010 = vand.u32 %v5009, 4294901760
        %v5011 = vsub.f32 %v5009, %v5010
        %v5012 = vand.u32 %v5011, 4294901760
        %5013 = vmatpush.msra.mxu0 %v5012
        %v5014 = vand.u32 %v3601, 4294901760
        %v5015 = vsub.f32 %v3601, %v5014
        %v5016 = vand.u32 %v5015, 4294901760
        %v5017 = vsub.f32 %v5015, %v5016
        %v5018 = vand.u32 %v5017, 4294901760
        %5019 = vmatpush.msra.mxu0 %v5018
        %v5020 = vand.u32 %v3600, 4294901760
        %v5021 = vsub.f32 %v3600, %v5020
        %v5022 = vand.u32 %v5021, 4294901760
        %v5023 = vsub.f32 %v5021, %v5022
        %v5024 = vand.u32 %v5023, 4294901760
        %5025 = vmatpush.msra.mxu0 %v5024
        %v5026 = vand.u32 %v3599, 4294901760
        %v5027 = vsub.f32 %v3599, %v5026
        %v5028 = vand.u32 %v5027, 4294901760
        %v5029 = vsub.f32 %v5027, %v5028
        %v5030 = vand.u32 %v5029, 4294901760
        %5031 = vmatpush.msra.mxu0 %v5030
        %v5032 = vand.u32 %v3598, 4294901760
        %v5033 = vsub.f32 %v3598, %v5032
        %v5034 = vand.u32 %v5033, 4294901760
        %v5035 = vsub.f32 %v5033, %v5034
        %v5036 = vand.u32 %v5035, 4294901760
        %5037 = vmatpush.msra.mxu0 %v5036
        %v5038 = vand.u32 %v3597, 4294901760
        %v5039 = vsub.f32 %v3597, %v5038
        %v5040 = vand.u32 %v5039, 4294901760
        %v5041 = vsub.f32 %v5039, %v5040
        %v5042 = vand.u32 %v5041, 4294901760
        %5043 = vmatpush.msra.mxu0 %v5042
        %v5044 = vand.u32 %v3596, 4294901760
        %v5045 = vsub.f32 %v3596, %v5044
        %v5046 = vand.u32 %v5045, 4294901760
        %v5047 = vsub.f32 %v5045, %v5046
        %v5048 = vand.u32 %v5047, 4294901760
        %5049 = vmatpush.msra.mxu0 %v5048
        %v5050 = vand.u32 %v3595, 4294901760
        %v5051 = vsub.f32 %v3595, %v5050
        %v5052 = vand.u32 %v5051, 4294901760
        %v5053 = vsub.f32 %v5051, %v5052
        %v5054 = vand.u32 %v5053, 4294901760
        %5055 = vmatpush.msra.mxu0 %v5054
        %v5056 = vand.u32 %v3594, 4294901760
        %v5057 = vsub.f32 %v3594, %v5056
        %v5058 = vand.u32 %v5057, 4294901760
        %v5059 = vsub.f32 %v5057, %v5058
        %v5060 = vand.u32 %v5059, 4294901760
        %5061 = vmatpush.msra.mxu0 %v5060
        %v5062 = vand.u32 %v3593, 4294901760
        %v5063 = vsub.f32 %v3593, %v5062
        %v5064 = vand.u32 %v5063, 4294901760
        %v5065 = vsub.f32 %v5063, %v5064
        %v5066 = vand.u32 %v5065, 4294901760
        %5067 = vmatpush.msra.mxu0 %v5066
        %v5068 = vand.u32 %v3592, 4294901760
        %v5069 = vsub.f32 %v3592, %v5068
        %v5070 = vand.u32 %v5069, 4294901760
        %v5071 = vsub.f32 %v5069, %v5070
        %v5072 = vand.u32 %v5071, 4294901760
        %5073 = vmatpush.msra.mxu0 %v5072
        %v5074 = vand.u32 %v3591, 4294901760
        %v5075 = vsub.f32 %v3591, %v5074
        %v5076 = vand.u32 %v5075, 4294901760
        %v5077 = vsub.f32 %v5075, %v5076
        %v5078 = vand.u32 %v5077, 4294901760
        %5079 = vmatpush.msra.mxu0 %v5078
        %v5080 = vand.u32 %v4947, 4294901760
        %5081 = vmatmul.f32.gmra.mxu0 %v5080
        %v5082 = vpop.f32.mrf.mxu0
        %v5083 = vadd.f32 %v4987, %v5082
        %5084 = vdwg.mxu0
        %5085 = vmatpush.msra.mxu0 0.0
        %v5086 = vand.u32 %v3605, 4294901760
        %v5087 = vsub.f32 %v3605, %v5086
        %5088 = vmatpush.msra.mxu0 %v5087
        %v5089 = vand.u32 %v3604, 4294901760
        %v5090 = vsub.f32 %v3604, %v5089
        %5091 = vmatpush.msra.mxu0 %v5090
        %v5092 = vand.u32 %v3603, 4294901760
        %v5093 = vsub.f32 %v3603, %v5092
        %5094 = vmatpush.msra.mxu0 %v5093
        %v5095 = vand.u32 %v3602, 4294901760
        %v5096 = vsub.f32 %v3602, %v5095
        %5097 = vmatpush.msra.mxu0 %v5096
        %v5098 = vand.u32 %v3601, 4294901760
        %v5099 = vsub.f32 %v3601, %v5098
        %5100 = vmatpush.msra.mxu0 %v5099
        %v5101 = vand.u32 %v3600, 4294901760
        %v5102 = vsub.f32 %v3600, %v5101
        %5103 = vmatpush.msra.mxu0 %v5102
        %v5104 = vand.u32 %v3599, 4294901760
        %v5105 = vsub.f32 %v3599, %v5104
        %5106 = vmatpush.msra.mxu0 %v5105
        %v5107 = vand.u32 %v3598, 4294901760
        %v5108 = vsub.f32 %v3598, %v5107
        %5109 = vmatpush.msra.mxu0 %v5108
        %v5110 = vand.u32 %v3597, 4294901760
        %v5111 = vsub.f32 %v3597, %v5110
        %5112 = vmatpush.msra.mxu0 %v5111
        %v5113 = vand.u32 %v3596, 4294901760
        %v5114 = vsub.f32 %v3596, %v5113
        %5115 = vmatpush.msra.mxu0 %v5114
        %v5116 = vand.u32 %v3595, 4294901760
        %v5117 = vsub.f32 %v3595, %v5116
        %5118 = vmatpush.msra.mxu0 %v5117
        %v5119 = vand.u32 %v3594, 4294901760
        %v5120 = vsub.f32 %v3594, %v5119
        %5121 = vmatpush.msra.mxu0 %v5120
        %v5122 = vand.u32 %v3593, 4294901760
        %v5123 = vsub.f32 %v3593, %v5122
        %5124 = vmatpush.msra.mxu0 %v5123
        %v5125 = vand.u32 %v3592, 4294901760
        %v5126 = vsub.f32 %v3592, %v5125
        %5127 = vmatpush.msra.mxu0 %v5126
        %v5128 = vand.u32 %v3591, 4294901760
        %v5129 = vsub.f32 %v3591, %v5128
        %5130 = vmatpush.msra.mxu0 %v5129
        %v5131 = vand.u32 %v4947, 4294901760
        %v5132 = vsub.f32 %v4947, %v5131
        %5133 = vmatmul.f32.gmra.mxu0 %v5132
        %v5134 = vpop.f32.mrf.mxu0
        %v5135 = vadd.f32 %v5083, %v5134
        %5136 = vdwg.mxu0
        %5137 = vmatpush.msra.mxu0 0.0
        %v5138 = vand.u32 %v3605, 4294901760
        %5139 = vmatpush.msra.mxu0 %v5138
        %v5140 = vand.u32 %v3604, 4294901760
        %5141 = vmatpush.msra.mxu0 %v5140
        %v5142 = vand.u32 %v3603, 4294901760
        %5143 = vmatpush.msra.mxu0 %v5142
        %v5144 = vand.u32 %v3602, 4294901760
        %5145 = vmatpush.msra.mxu0 %v5144
        %v5146 = vand.u32 %v3601, 4294901760
        %5147 = vmatpush.msra.mxu0 %v5146
        %v5148 = vand.u32 %v3600, 4294901760
        %5149 = vmatpush.msra.mxu0 %v5148
        %v5150 = vand.u32 %v3599, 4294901760
        %5151 = vmatpush.msra.mxu0 %v5150
        %v5152 = vand.u32 %v3598, 4294901760
        %5153 = vmatpush.msra.mxu0 %v5152
        %v5154 = vand.u32 %v3597, 4294901760
        %5155 = vmatpush.msra.mxu0 %v5154
        %v5156 = vand.u32 %v3596, 4294901760
        %5157 = vmatpush.msra.mxu0 %v5156
        %v5158 = vand.u32 %v3595, 4294901760
        %5159 = vmatpush.msra.mxu0 %v5158
        %v5160 = vand.u32 %v3594, 4294901760
        %5161 = vmatpush.msra.mxu0 %v5160
        %v5162 = vand.u32 %v3593, 4294901760
        %5163 = vmatpush.msra.mxu0 %v5162
        %v5164 = vand.u32 %v3592, 4294901760
        %5165 = vmatpush.msra.mxu0 %v5164
        %v5166 = vand.u32 %v3591, 4294901760
        %5167 = vmatpush.msra.mxu0 %v5166
        %v5168 = vand.u32 %v4947, 4294901760
        %v5169 = vsub.f32 %v4947, %v5168
        %v5170 = vand.u32 %v5169, 4294901760
        %5171 = vmatmul.f32.gmra.mxu0 %v5170
        %v5172 = vpop.f32.mrf.mxu0
        %v5173 = vadd.f32 %v5135, %v5172
        %5174 = vdwg.mxu0
        %5175 = vmatpush.msra.mxu0 0.0
        %v5176 = vand.u32 %v3605, 4294901760
        %v5177 = vsub.f32 %v3605, %v5176
        %v5178 = vand.u32 %v5177, 4294901760
        %5179 = vmatpush.msra.mxu0 %v5178
        %v5180 = vand.u32 %v3604, 4294901760
        %v5181 = vsub.f32 %v3604, %v5180
        %v5182 = vand.u32 %v5181, 4294901760
        %5183 = vmatpush.msra.mxu0 %v5182
        %v5184 = vand.u32 %v3603, 4294901760
        %v5185 = vsub.f32 %v3603, %v5184
        %v5186 = vand.u32 %v5185, 4294901760
        %5187 = vmatpush.msra.mxu0 %v5186
        %v5188 = vand.u32 %v3602, 4294901760
        %v5189 = vsub.f32 %v3602, %v5188
        %v5190 = vand.u32 %v5189, 4294901760
        %5191 = vmatpush.msra.mxu0 %v5190
        %v5192 = vand.u32 %v3601, 4294901760
        %v5193 = vsub.f32 %v3601, %v5192
        %v5194 = vand.u32 %v5193, 4294901760
        %5195 = vmatpush.msra.mxu0 %v5194
        %v5196 = vand.u32 %v3600, 4294901760
        %v5197 = vsub.f32 %v3600, %v5196
        %v5198 = vand.u32 %v5197, 4294901760
        %5199 = vmatpush.msra.mxu0 %v5198
        %v5200 = vand.u32 %v3599, 4294901760
        %v5201 = vsub.f32 %v3599, %v5200
        %v5202 = vand.u32 %v5201, 4294901760
        %5203 = vmatpush.msra.mxu0 %v5202
        %v5204 = vand.u32 %v3598, 4294901760
        %v5205 = vsub.f32 %v3598, %v5204
        %v5206 = vand.u32 %v5205, 4294901760
        %5207 = vmatpush.msra.mxu0 %v5206
        %v5208 = vand.u32 %v3597, 4294901760
        %v5209 = vsub.f32 %v3597, %v5208
        %v5210 = vand.u32 %v5209, 4294901760
        %5211 = vmatpush.msra.mxu0 %v5210
        %v5212 = vand.u32 %v3596, 4294901760
        %v5213 = vsub.f32 %v3596, %v5212
        %v5214 = vand.u32 %v5213, 4294901760
        %5215 = vmatpush.msra.mxu0 %v5214
        %v5216 = vand.u32 %v3595, 4294901760
        %v5217 = vsub.f32 %v3595, %v5216
        %v5218 = vand.u32 %v5217, 4294901760
        %5219 = vmatpush.msra.mxu0 %v5218
        %v5220 = vand.u32 %v3594, 4294901760
        %v5221 = vsub.f32 %v3594, %v5220
        %v5222 = vand.u32 %v5221, 4294901760
        %5223 = vmatpush.msra.mxu0 %v5222
        %v5224 = vand.u32 %v3593, 4294901760
        %v5225 = vsub.f32 %v3593, %v5224
        %v5226 = vand.u32 %v5225, 4294901760
        %5227 = vmatpush.msra.mxu0 %v5226
        %v5228 = vand.u32 %v3592, 4294901760
        %v5229 = vsub.f32 %v3592, %v5228
        %v5230 = vand.u32 %v5229, 4294901760
        %5231 = vmatpush.msra.mxu0 %v5230
        %v5232 = vand.u32 %v3591, 4294901760
        %v5233 = vsub.f32 %v3591, %v5232
        %v5234 = vand.u32 %v5233, 4294901760
        %5235 = vmatpush.msra.mxu0 %v5234
        %v5236 = vand.u32 %v4947, 4294901760
        %5237 = vmatmul.f32.gmra.mxu0 %v5236
        %v5238 = vpop.f32.mrf.mxu0
        %v5239 = vadd.f32 %v5173, %v5238
        %5240 = vdwg.mxu0
        %5241 = vmatpush.msra.mxu0 0.0
        %v5242 = vand.u32 %v3605, 4294901760
        %5243 = vmatpush.msra.mxu0 %v5242
        %v5244 = vand.u32 %v3604, 4294901760
        %5245 = vmatpush.msra.mxu0 %v5244
        %v5246 = vand.u32 %v3603, 4294901760
        %5247 = vmatpush.msra.mxu0 %v5246
        %v5248 = vand.u32 %v3602, 4294901760
        %5249 = vmatpush.msra.mxu0 %v5248
        %v5250 = vand.u32 %v3601, 4294901760
        %5251 = vmatpush.msra.mxu0 %v5250
        %v5252 = vand.u32 %v3600, 4294901760
        %5253 = vmatpush.msra.mxu0 %v5252
        %v5254 = vand.u32 %v3599, 4294901760
        %5255 = vmatpush.msra.mxu0 %v5254
        %v5256 = vand.u32 %v3598, 4294901760
        %5257 = vmatpush.msra.mxu0 %v5256
        %v5258 = vand.u32 %v3597, 4294901760
        %5259 = vmatpush.msra.mxu0 %v5258
        %v5260 = vand.u32 %v3596, 4294901760
        %5261 = vmatpush.msra.mxu0 %v5260
        %v5262 = vand.u32 %v3595, 4294901760
        %5263 = vmatpush.msra.mxu0 %v5262
        %v5264 = vand.u32 %v3594, 4294901760
        %5265 = vmatpush.msra.mxu0 %v5264
        %v5266 = vand.u32 %v3593, 4294901760
        %5267 = vmatpush.msra.mxu0 %v5266
        %v5268 = vand.u32 %v3592, 4294901760
        %5269 = vmatpush.msra.mxu0 %v5268
        %v5270 = vand.u32 %v3591, 4294901760
        %5271 = vmatpush.msra.mxu0 %v5270
        %v5272 = vand.u32 %v4947, 4294901760
        %5273 = vmatmul.f32.gmra.mxu0 %v5272
        %v5274 = vpop.f32.mrf.mxu0
        %v5275 = vadd.f32 %v5239, %v5274
        %5276 = vdwg.mxu0
        %v5277 = vadd.f32 %v4944, %v5275
        %v5278 = vadd.f32 %v5277, %v3938
        %v5279 = vmax.f32 %v5278, 0.0
        %5281 = vrot.lane.b32.xlu0 %v5279, 80
        %v5282 = vpop.permute.xlu0 %5281
        %v5284 = vmax.f32 %v5279, %v5282
        %5286 = vrot.lane.b32.xlu0 %v5284, 120
        %v5287 = vpop.permute.xlu0 %5286
        %v5289 = vmax.f32 %v5284, %v5287
        %s5290 = scalar_lea.vmem %s6, 40
        %v5291 = vld [vmem:[%s5290] sm:$0xff]
        %v5292 = vld [vmem:[%s5290 + $0x8] sm:$0xff]
        %v5293 = vld [vmem:[%s5290 + $0x10] sm:$0xff]
        %v5294 = vld [vmem:[%s5290 + $0x18] sm:$0xff]
        %v5295 = vld [vmem:[%s5290 + $0x20] sm:$0xff]
        %vm5296 = vcmask 326656
        %v5298 = vsel %vm5296, %v5289, 0
        %5300 = vmatpush.msra.mxu0 0.0
        %5301 = vmatpush.msra.mxu0 0.0
        %5302 = vmatpush.msra.mxu0 0.0
        %5303 = vmatpush.msra.mxu0 0.0
        %5304 = vmatpush.msra.mxu0 0.0
        %5305 = vmatpush.msra.mxu0 0.0
        %5306 = vmatpush.msra.mxu0 0.0
        %5307 = vmatpush.msra.mxu0 0.0
        %5308 = vmatpush.msra.mxu0 0.0
        %5309 = vmatpush.msra.mxu0 0.0
        %5310 = vmatpush.msra.mxu0 0.0
        %v5311 = vand.u32 %v5295, 4294901760
        %5312 = vmatpush.msra.mxu0 %v5311
        %v5313 = vand.u32 %v5294, 4294901760
        %5314 = vmatpush.msra.mxu0 %v5313
        %v5315 = vand.u32 %v5293, 4294901760
        %5316 = vmatpush.msra.mxu0 %v5315
        %v5317 = vand.u32 %v5292, 4294901760
        %5318 = vmatpush.msra.mxu0 %v5317
        %v5319 = vand.u32 %v5291, 4294901760
        %5320 = vmatpush.msra.mxu0 %v5319
        %v5321 = vand.u32 %v5298, 4294901760
        %v5322 = vsub.f32 %v5298, %v5321
        %v5323 = vand.u32 %v5322, 4294901760
        %v5324 = vsub.f32 %v5322, %v5323
        %v5325 = vand.u32 %v5324, 4294901760
        %5326 = vmatmul.f32.gmra.mxu0 %v5325
        %v5327 = vpop.f32.mrf.mxu0
        %v5328 = vadd.f32 0.0, %v5327
        %5329 = vdwg.mxu0
        %5330 = vmatpush.msra.mxu0 0.0
        %5331 = vmatpush.msra.mxu0 0.0
        %5332 = vmatpush.msra.mxu0 0.0
        %5333 = vmatpush.msra.mxu0 0.0
        %5334 = vmatpush.msra.mxu0 0.0
        %5335 = vmatpush.msra.mxu0 0.0
        %5336 = vmatpush.msra.mxu0 0.0
        %5337 = vmatpush.msra.mxu0 0.0
        %5338 = vmatpush.msra.mxu0 0.0
        %5339 = vmatpush.msra.mxu0 0.0
        %5340 = vmatpush.msra.mxu0 0.0
        %v5341 = vand.u32 %v5295, 4294901760
        %v5342 = vsub.f32 %v5295, %v5341
        %v5343 = vand.u32 %v5342, 4294901760
        %v5344 = vsub.f32 %v5342, %v5343
        %v5345 = vand.u32 %v5344, 4294901760
        %5346 = vmatpush.msra.mxu0 %v5345
        %v5347 = vand.u32 %v5294, 4294901760
        %v5348 = vsub.f32 %v5294, %v5347
        %v5349 = vand.u32 %v5348, 4294901760
        %v5350 = vsub.f32 %v5348, %v5349
        %v5351 = vand.u32 %v5350, 4294901760
        %5352 = vmatpush.msra.mxu0 %v5351
        %v5353 = vand.u32 %v5293, 4294901760
        %v5354 = vsub.f32 %v5293, %v5353
        %v5355 = vand.u32 %v5354, 4294901760
        %v5356 = vsub.f32 %v5354, %v5355
        %v5357 = vand.u32 %v5356, 4294901760
        %5358 = vmatpush.msra.mxu0 %v5357
        %v5359 = vand.u32 %v5292, 4294901760
        %v5360 = vsub.f32 %v5292, %v5359
        %v5361 = vand.u32 %v5360, 4294901760
        %v5362 = vsub.f32 %v5360, %v5361
        %v5363 = vand.u32 %v5362, 4294901760
        %5364 = vmatpush.msra.mxu0 %v5363
        %v5365 = vand.u32 %v5291, 4294901760
        %v5366 = vsub.f32 %v5291, %v5365
        %v5367 = vand.u32 %v5366, 4294901760
        %v5368 = vsub.f32 %v5366, %v5367
        %v5369 = vand.u32 %v5368, 4294901760
        %5370 = vmatpush.msra.mxu0 %v5369
        %v5371 = vand.u32 %v5298, 4294901760
        %5372 = vmatmul.f32.gmra.mxu0 %v5371
        %v5373 = vpop.f32.mrf.mxu0
        %v5374 = vadd.f32 %v5328, %v5373
        %5375 = vdwg.mxu0
        %5376 = vmatpush.msra.mxu0 0.0
        %5377 = vmatpush.msra.mxu0 0.0
        %5378 = vmatpush.msra.mxu0 0.0
        %5379 = vmatpush.msra.mxu0 0.0
        %5380 = vmatpush.msra.mxu0 0.0
        %5381 = vmatpush.msra.mxu0 0.0
        %5382 = vmatpush.msra.mxu0 0.0
        %5383 = vmatpush.msra.mxu0 0.0
        %5384 = vmatpush.msra.mxu0 0.0
        %5385 = vmatpush.msra.mxu0 0.0
        %5386 = vmatpush.msra.mxu0 0.0
        %v5387 = vand.u32 %v5295, 4294901760
        %v5388 = vsub.f32 %v5295, %v5387
        %5389 = vmatpush.msra.mxu0 %v5388
        %v5390 = vand.u32 %v5294, 4294901760
        %v5391 = vsub.f32 %v5294, %v5390
        %5392 = vmatpush.msra.mxu0 %v5391
        %v5393 = vand.u32 %v5293, 4294901760
        %v5394 = vsub.f32 %v5293, %v5393
        %5395 = vmatpush.msra.mxu0 %v5394
        %v5396 = vand.u32 %v5292, 4294901760
        %v5397 = vsub.f32 %v5292, %v5396
        %5398 = vmatpush.msra.mxu0 %v5397
        %v5399 = vand.u32 %v5291, 4294901760
        %v5400 = vsub.f32 %v5291, %v5399
        %5401 = vmatpush.msra.mxu0 %v5400
        %v5402 = vand.u32 %v5298, 4294901760
        %v5403 = vsub.f32 %v5298, %v5402
        %5404 = vmatmul.f32.gmra.mxu0 %v5403
        %v5405 = vpop.f32.mrf.mxu0
        %v5406 = vadd.f32 %v5374, %v5405
        %5407 = vdwg.mxu0
        %5408 = vmatpush.msra.mxu0 0.0
        %5409 = vmatpush.msra.mxu0 0.0
        %5410 = vmatpush.msra.mxu0 0.0
        %5411 = vmatpush.msra.mxu0 0.0
        %5412 = vmatpush.msra.mxu0 0.0
        %5413 = vmatpush.msra.mxu0 0.0
        %5414 = vmatpush.msra.mxu0 0.0
        %5415 = vmatpush.msra.mxu0 0.0
        %5416 = vmatpush.msra.mxu0 0.0
        %5417 = vmatpush.msra.mxu0 0.0
        %5418 = vmatpush.msra.mxu0 0.0
        %v5419 = vand.u32 %v5295, 4294901760
        %5420 = vmatpush.msra.mxu0 %v5419
        %v5421 = vand.u32 %v5294, 4294901760
        %5422 = vmatpush.msra.mxu0 %v5421
        %v5423 = vand.u32 %v5293, 4294901760
        %5424 = vmatpush.msra.mxu0 %v5423
        %v5425 = vand.u32 %v5292, 4294901760
        %5426 = vmatpush.msra.mxu0 %v5425
        %v5427 = vand.u32 %v5291, 4294901760
        %5428 = vmatpush.msra.mxu0 %v5427
        %v5429 = vand.u32 %v5298, 4294901760
        %v5430 = vsub.f32 %v5298, %v5429
        %v5431 = vand.u32 %v5430, 4294901760
        %5432 = vmatmul.f32.gmra.mxu0 %v5431
        %v5433 = vpop.f32.mrf.mxu0
        %v5434 = vadd.f32 %v5406, %v5433
        %5435 = vdwg.mxu0
        %5436 = vmatpush.msra.mxu0 0.0
        %5437 = vmatpush.msra.mxu0 0.0
        %5438 = vmatpush.msra.mxu0 0.0
        %5439 = vmatpush.msra.mxu0 0.0
        %5440 = vmatpush.msra.mxu0 0.0
        %5441 = vmatpush.msra.mxu0 0.0
        %5442 = vmatpush.msra.mxu0 0.0
        %5443 = vmatpush.msra.mxu0 0.0
        %5444 = vmatpush.msra.mxu0 0.0
        %5445 = vmatpush.msra.mxu0 0.0
        %5446 = vmatpush.msra.mxu0 0.0
        %v5447 = vand.u32 %v5295, 4294901760
        %v5448 = vsub.f32 %v5295, %v5447
        %v5449 = vand.u32 %v5448, 4294901760
        %5450 = vmatpush.msra.mxu0 %v5449
        %v5451 = vand.u32 %v5294, 4294901760
        %v5452 = vsub.f32 %v5294, %v5451
        %v5453 = vand.u32 %v5452, 4294901760
        %5454 = vmatpush.msra.mxu0 %v5453
        %v5455 = vand.u32 %v5293, 4294901760
        %v5456 = vsub.f32 %v5293, %v5455
        %v5457 = vand.u32 %v5456, 4294901760
        %5458 = vmatpush.msra.mxu0 %v5457
        %v5459 = vand.u32 %v5292, 4294901760
        %v5460 = vsub.f32 %v5292, %v5459
        %v5461 = vand.u32 %v5460, 4294901760
        %5462 = vmatpush.msra.mxu0 %v5461
        %v5463 = vand.u32 %v5291, 4294901760
        %v5464 = vsub.f32 %v5291, %v5463
        %v5465 = vand.u32 %v5464, 4294901760
        %5466 = vmatpush.msra.mxu0 %v5465
        %v5467 = vand.u32 %v5298, 4294901760
        %5468 = vmatmul.f32.gmra.mxu0 %v5467
        %v5469 = vpop.f32.mrf.mxu0
        %v5470 = vadd.f32 %v5434, %v5469
        %5471 = vdwg.mxu0
        %5472 = vmatpush.msra.mxu0 0.0
        %5473 = vmatpush.msra.mxu0 0.0
        %5474 = vmatpush.msra.mxu0 0.0
        %5475 = vmatpush.msra.mxu0 0.0
        %5476 = vmatpush.msra.mxu0 0.0
        %5477 = vmatpush.msra.mxu0 0.0
        %5478 = vmatpush.msra.mxu0 0.0
        %5479 = vmatpush.msra.mxu0 0.0
        %5480 = vmatpush.msra.mxu0 0.0
        %5481 = vmatpush.msra.mxu0 0.0
        %5482 = vmatpush.msra.mxu0 0.0
        %v5483 = vand.u32 %v5295, 4294901760
        %5484 = vmatpush.msra.mxu0 %v5483
        %v5485 = vand.u32 %v5294, 4294901760
        %5486 = vmatpush.msra.mxu0 %v5485
        %v5487 = vand.u32 %v5293, 4294901760
        %5488 = vmatpush.msra.mxu0 %v5487
        %v5489 = vand.u32 %v5292, 4294901760
        %5490 = vmatpush.msra.mxu0 %v5489
        %v5491 = vand.u32 %v5291, 4294901760
        %5492 = vmatpush.msra.mxu0 %v5491
        %v5493 = vand.u32 %v5298, 4294901760
        %5494 = vmatmul.f32.gmra.mxu0 %v5493
        %v5495 = vpop.f32.mrf.mxu0
        %v5496 = vadd.f32 %v5470, %v5495
        %5497 = vdwg.mxu0
        %v5499 = vsel %vm5296, %v3950, 0
        %5501 = vmatpush.msra.mxu0 0.0
        %5502 = vmatpush.msra.mxu0 0.0
        %5503 = vmatpush.msra.mxu0 0.0
        %5504 = vmatpush.msra.mxu0 0.0
        %5505 = vmatpush.msra.mxu0 0.0
        %5506 = vmatpush.msra.mxu0 0.0
        %5507 = vmatpush.msra.mxu0 0.0
        %5508 = vmatpush.msra.mxu0 0.0
        %5509 = vmatpush.msra.mxu0 0.0
        %5510 = vmatpush.msra.mxu0 0.0
        %5511 = vmatpush.msra.mxu0 0.0
        %v5512 = vand.u32 %v3955, 4294901760
        %5513 = vmatpush.msra.mxu0 %v5512
        %v5514 = vand.u32 %v3954, 4294901760
        %5515 = vmatpush.msra.mxu0 %v5514
        %v5516 = vand.u32 %v3953, 4294901760
        %5517 = vmatpush.msra.mxu0 %v5516
        %v5518 = vand.u32 %v3952, 4294901760
        %5519 = vmatpush.msra.mxu0 %v5518
        %v5520 = vand.u32 %v3951, 4294901760
        %5521 = vmatpush.msra.mxu0 %v5520
        %v5522 = vand.u32 %v5499, 4294901760
        %v5523 = vsub.f32 %v5499, %v5522
        %v5524 = vand.u32 %v5523, 4294901760
        %v5525 = vsub.f32 %v5523, %v5524
        %v5526 = vand.u32 %v5525, 4294901760
        %5527 = vmatmul.f32.gmra.mxu0 %v5526
        %v5528 = vpop.f32.mrf.mxu0
        %v5529 = vadd.f32 %v5496, %v5528
        %5530 = vdwg.mxu0
        %5531 = vmatpush.msra.mxu0 0.0
        %5532 = vmatpush.msra.mxu0 0.0
        %5533 = vmatpush.msra.mxu0 0.0
        %5534 = vmatpush.msra.mxu0 0.0
        %5535 = vmatpush.msra.mxu0 0.0
        %5536 = vmatpush.msra.mxu0 0.0
        %5537 = vmatpush.msra.mxu0 0.0
        %5538 = vmatpush.msra.mxu0 0.0
        %5539 = vmatpush.msra.mxu0 0.0
        %5540 = vmatpush.msra.mxu0 0.0
        %5541 = vmatpush.msra.mxu0 0.0
        %v5542 = vand.u32 %v3955, 4294901760
        %v5543 = vsub.f32 %v3955, %v5542
        %v5544 = vand.u32 %v5543, 4294901760
        %v5545 = vsub.f32 %v5543, %v5544
        %v5546 = vand.u32 %v5545, 4294901760
        %5547 = vmatpush.msra.mxu0 %v5546
        %v5548 = vand.u32 %v3954, 4294901760
        %v5549 = vsub.f32 %v3954, %v5548
        %v5550 = vand.u32 %v5549, 4294901760
        %v5551 = vsub.f32 %v5549, %v5550
        %v5552 = vand.u32 %v5551, 4294901760
        %5553 = vmatpush.msra.mxu0 %v5552
        %v5554 = vand.u32 %v3953, 4294901760
        %v5555 = vsub.f32 %v3953, %v5554
        %v5556 = vand.u32 %v5555, 4294901760
        %v5557 = vsub.f32 %v5555, %v5556
        %v5558 = vand.u32 %v5557, 4294901760
        %5559 = vmatpush.msra.mxu0 %v5558
        %v5560 = vand.u32 %v3952, 4294901760
        %v5561 = vsub.f32 %v3952, %v5560
        %v5562 = vand.u32 %v5561, 4294901760
        %v5563 = vsub.f32 %v5561, %v5562
        %v5564 = vand.u32 %v5563, 4294901760
        %5565 = vmatpush.msra.mxu0 %v5564
        %v5566 = vand.u32 %v3951, 4294901760
        %v5567 = vsub.f32 %v3951, %v5566
        %v5568 = vand.u32 %v5567, 4294901760
        %v5569 = vsub.f32 %v5567, %v5568
        %v5570 = vand.u32 %v5569, 4294901760
        %5571 = vmatpush.msra.mxu0 %v5570
        %v5572 = vand.u32 %v5499, 4294901760
        %5573 = vmatmul.f32.gmra.mxu0 %v5572
        %v5574 = vpop.f32.mrf.mxu0
        %v5575 = vadd.f32 %v5529, %v5574
        %5576 = vdwg.mxu0
        %5577 = vmatpush.msra.mxu0 0.0
        %5578 = vmatpush.msra.mxu0 0.0
        %5579 = vmatpush.msra.mxu0 0.0
        %5580 = vmatpush.msra.mxu0 0.0
        %5581 = vmatpush.msra.mxu0 0.0
        %5582 = vmatpush.msra.mxu0 0.0
        %5583 = vmatpush.msra.mxu0 0.0
        %5584 = vmatpush.msra.mxu0 0.0
        %5585 = vmatpush.msra.mxu0 0.0
        %5586 = vmatpush.msra.mxu0 0.0
        %5587 = vmatpush.msra.mxu0 0.0
        %v5588 = vand.u32 %v3955, 4294901760
        %v5589 = vsub.f32 %v3955, %v5588
        %5590 = vmatpush.msra.mxu0 %v5589
        %v5591 = vand.u32 %v3954, 4294901760
        %v5592 = vsub.f32 %v3954, %v5591
        %5593 = vmatpush.msra.mxu0 %v5592
        %v5594 = vand.u32 %v3953, 4294901760
        %v5595 = vsub.f32 %v3953, %v5594
        %5596 = vmatpush.msra.mxu0 %v5595
        %v5597 = vand.u32 %v3952, 4294901760
        %v5598 = vsub.f32 %v3952, %v5597
        %5599 = vmatpush.msra.mxu0 %v5598
        %v5600 = vand.u32 %v3951, 4294901760
        %v5601 = vsub.f32 %v3951, %v5600
        %5602 = vmatpush.msra.mxu0 %v5601
        %v5603 = vand.u32 %v5499, 4294901760
        %v5604 = vsub.f32 %v5499, %v5603
        %5605 = vmatmul.f32.gmra.mxu0 %v5604
        %v5606 = vpop.f32.mrf.mxu0
        %v5607 = vadd.f32 %v5575, %v5606
        %5608 = vdwg.mxu0
        %5609 = vmatpush.msra.mxu0 0.0
        %5610 = vmatpush.msra.mxu0 0.0
        %5611 = vmatpush.msra.mxu0 0.0
        %5612 = vmatpush.msra.mxu0 0.0
        %5613 = vmatpush.msra.mxu0 0.0
        %5614 = vmatpush.msra.mxu0 0.0
        %5615 = vmatpush.msra.mxu0 0.0
        %5616 = vmatpush.msra.mxu0 0.0
        %5617 = vmatpush.msra.mxu0 0.0
        %5618 = vmatpush.msra.mxu0 0.0
        %5619 = vmatpush.msra.mxu0 0.0
        %v5620 = vand.u32 %v3955, 4294901760
        %5621 = vmatpush.msra.mxu0 %v5620
        %v5622 = vand.u32 %v3954, 4294901760
        %5623 = vmatpush.msra.mxu0 %v5622
        %v5624 = vand.u32 %v3953, 4294901760
        %5625 = vmatpush.msra.mxu0 %v5624
        %v5626 = vand.u32 %v3952, 4294901760
        %5627 = vmatpush.msra.mxu0 %v5626
        %v5628 = vand.u32 %v3951, 4294901760
        %5629 = vmatpush.msra.mxu0 %v5628
        %v5630 = vand.u32 %v5499, 4294901760
        %v5631 = vsub.f32 %v5499, %v5630
        %v5632 = vand.u32 %v5631, 4294901760
        %5633 = vmatmul.f32.gmra.mxu0 %v5632
        %v5634 = vpop.f32.mrf.mxu0
        %v5635 = vadd.f32 %v5607, %v5634
        %5636 = vdwg.mxu0
        %5637 = vmatpush.msra.mxu0 0.0
        %5638 = vmatpush.msra.mxu0 0.0
        %5639 = vmatpush.msra.mxu0 0.0
        %5640 = vmatpush.msra.mxu0 0.0
        %5641 = vmatpush.msra.mxu0 0.0
        %5642 = vmatpush.msra.mxu0 0.0
        %5643 = vmatpush.msra.mxu0 0.0
        %5644 = vmatpush.msra.mxu0 0.0
        %5645 = vmatpush.msra.mxu0 0.0
        %5646 = vmatpush.msra.mxu0 0.0
        %5647 = vmatpush.msra.mxu0 0.0
        %v5648 = vand.u32 %v3955, 4294901760
        %v5649 = vsub.f32 %v3955, %v5648
        %v5650 = vand.u32 %v5649, 4294901760
        %5651 = vmatpush.msra.mxu0 %v5650
        %v5652 = vand.u32 %v3954, 4294901760
        %v5653 = vsub.f32 %v3954, %v5652
        %v5654 = vand.u32 %v5653, 4294901760
        %5655 = vmatpush.msra.mxu0 %v5654
        %v5656 = vand.u32 %v3953, 4294901760
        %v5657 = vsub.f32 %v3953, %v5656
        %v5658 = vand.u32 %v5657, 4294901760
        %5659 = vmatpush.msra.mxu0 %v5658
        %v5660 = vand.u32 %v3952, 4294901760
        %v5661 = vsub.f32 %v3952, %v5660
        %v5662 = vand.u32 %v5661, 4294901760
        %5663 = vmatpush.msra.mxu0 %v5662
        %v5664 = vand.u32 %v3951, 4294901760
        %v5665 = vsub.f32 %v3951, %v5664
        %v5666 = vand.u32 %v5665, 4294901760
        %5667 = vmatpush.msra.mxu0 %v5666
        %v5668 = vand.u32 %v5499, 4294901760
        %5669 = vmatmul.f32.gmra.mxu0 %v5668
        %v5670 = vpop.f32.mrf.mxu0
        %v5671 = vadd.f32 %v5635, %v5670
        %5672 = vdwg.mxu0
        %5673 = vmatpush.msra.mxu0 0.0
        %5674 = vmatpush.msra.mxu0 0.0
        %5675 = vmatpush.msra.mxu0 0.0
        %5676 = vmatpush.msra.mxu0 0.0
        %5677 = vmatpush.msra.mxu0 0.0
        %5678 = vmatpush.msra.mxu0 0.0
        %5679 = vmatpush.msra.mxu0 0.0
        %5680 = vmatpush.msra.mxu0 0.0
        %5681 = vmatpush.msra.mxu0 0.0
        %5682 = vmatpush.msra.mxu0 0.0
        %5683 = vmatpush.msra.mxu0 0.0
        %v5684 = vand.u32 %v3955, 4294901760
        %5685 = vmatpush.msra.mxu0 %v5684
        %v5686 = vand.u32 %v3954, 4294901760
        %5687 = vmatpush.msra.mxu0 %v5686
        %v5688 = vand.u32 %v3953, 4294901760
        %5689 = vmatpush.msra.mxu0 %v5688
        %v5690 = vand.u32 %v3952, 4294901760
        %5691 = vmatpush.msra.mxu0 %v5690
        %v5692 = vand.u32 %v3951, 4294901760
        %5693 = vmatpush.msra.mxu0 %v5692
        %v5694 = vand.u32 %v5499, 4294901760
        %5695 = vmatmul.f32.gmra.mxu0 %v5694
        %v5696 = vpop.f32.mrf.mxu0
        %v5697 = vadd.f32 %v5671, %v5696
        %5698 = vdwg.mxu0
        %5699 = vmatpush.msra.mxu0 0.0
        %v5700 = vand.u32 %v2577, 4294901760
        %5701 = vmatpush.msra.mxu0 %v5700
        %v5702 = vand.u32 %v2576, 4294901760
        %5703 = vmatpush.msra.mxu0 %v5702
        %v5704 = vand.u32 %v2575, 4294901760
        %5705 = vmatpush.msra.mxu0 %v5704
        %v5706 = vand.u32 %v2574, 4294901760
        %5707 = vmatpush.msra.mxu0 %v5706
        %v5708 = vand.u32 %v2573, 4294901760
        %5709 = vmatpush.msra.mxu0 %v5708
        %v5710 = vand.u32 %v2572, 4294901760
        %5711 = vmatpush.msra.mxu0 %v5710
        %v5712 = vand.u32 %v2571, 4294901760
        %5713 = vmatpush.msra.mxu0 %v5712
        %v5714 = vand.u32 %v2570, 4294901760
        %5715 = vmatpush.msra.mxu0 %v5714
        %v5716 = vand.u32 %v2569, 4294901760
        %5717 = vmatpush.msra.mxu0 %v5716
        %v5718 = vand.u32 %v2568, 4294901760
        %5719 = vmatpush.msra.mxu0 %v5718
        %v5720 = vand.u32 %v2567, 4294901760
        %5721 = vmatpush.msra.mxu0 %v5720
        %v5722 = vand.u32 %v2566, 4294901760
        %5723 = vmatpush.msra.mxu0 %v5722
        %v5724 = vand.u32 %v2565, 4294901760
        %5725 = vmatpush.msra.mxu0 %v5724
        %v5726 = vand.u32 %v2564, 4294901760
        %5727 = vmatpush.msra.mxu0 %v5726
        %v5728 = vand.u32 %v2563, 4294901760
        %5729 = vmatpush.msra.mxu0 %v5728
        %v5730 = vand.u32 %v4947, 4294901760
        %v5731 = vsub.f32 %v4947, %v5730
        %v5732 = vand.u32 %v5731, 4294901760
        %v5733 = vsub.f32 %v5731, %v5732
        %v5734 = vand.u32 %v5733, 4294901760
        %5735 = vmatmul.f32.gmra.mxu0 %v5734
        %v5736 = vpop.f32.mrf.mxu0
        %v5737 = vadd.f32 0.0, %v5736
        %5738 = vdwg.mxu0
        %5739 = vmatpush.msra.mxu0 0.0
        %v5740 = vand.u32 %v2577, 4294901760
        %v5741 = vsub.f32 %v2577, %v5740
        %v5742 = vand.u32 %v5741, 4294901760
        %v5743 = vsub.f32 %v5741, %v5742
        %v5744 = vand.u32 %v5743, 4294901760
        %5745 = vmatpush.msra.mxu0 %v5744
        %v5746 = vand.u32 %v2576, 4294901760
        %v5747 = vsub.f32 %v2576, %v5746
        %v5748 = vand.u32 %v5747, 4294901760
        %v5749 = vsub.f32 %v5747, %v5748
        %v5750 = vand.u32 %v5749, 4294901760
        %5751 = vmatpush.msra.mxu0 %v5750
        %v5752 = vand.u32 %v2575, 4294901760
        %v5753 = vsub.f32 %v2575, %v5752
        %v5754 = vand.u32 %v5753, 4294901760
        %v5755 = vsub.f32 %v5753, %v5754
        %v5756 = vand.u32 %v5755, 4294901760
        %5757 = vmatpush.msra.mxu0 %v5756
        %v5758 = vand.u32 %v2574, 4294901760
        %v5759 = vsub.f32 %v2574, %v5758
        %v5760 = vand.u32 %v5759, 4294901760
        %v5761 = vsub.f32 %v5759, %v5760
        %v5762 = vand.u32 %v5761, 4294901760
        %5763 = vmatpush.msra.mxu0 %v5762
        %v5764 = vand.u32 %v2573, 4294901760
        %v5765 = vsub.f32 %v2573, %v5764
        %v5766 = vand.u32 %v5765, 4294901760
        %v5767 = vsub.f32 %v5765, %v5766
        %v5768 = vand.u32 %v5767, 4294901760
        %5769 = vmatpush.msra.mxu0 %v5768
        %v5770 = vand.u32 %v2572, 4294901760
        %v5771 = vsub.f32 %v2572, %v5770
        %v5772 = vand.u32 %v5771, 4294901760
        %v5773 = vsub.f32 %v5771, %v5772
        %v5774 = vand.u32 %v5773, 4294901760
        %5775 = vmatpush.msra.mxu0 %v5774
        %v5776 = vand.u32 %v2571, 4294901760
        %v5777 = vsub.f32 %v2571, %v5776
        %v5778 = vand.u32 %v5777, 4294901760
        %v5779 = vsub.f32 %v5777, %v5778
        %v5780 = vand.u32 %v5779, 4294901760
        %5781 = vmatpush.msra.mxu0 %v5780
        %v5782 = vand.u32 %v2570, 4294901760
        %v5783 = vsub.f32 %v2570, %v5782
        %v5784 = vand.u32 %v5783, 4294901760
        %v5785 = vsub.f32 %v5783, %v5784
        %v5786 = vand.u32 %v5785, 4294901760
        %5787 = vmatpush.msra.mxu0 %v5786
        %v5788 = vand.u32 %v2569, 4294901760
        %v5789 = vsub.f32 %v2569, %v5788
        %v5790 = vand.u32 %v5789, 4294901760
        %v5791 = vsub.f32 %v5789, %v5790
        %v5792 = vand.u32 %v5791, 4294901760
        %5793 = vmatpush.msra.mxu0 %v5792
        %v5794 = vand.u32 %v2568, 4294901760
        %v5795 = vsub.f32 %v2568, %v5794
        %v5796 = vand.u32 %v5795, 4294901760
        %v5797 = vsub.f32 %v5795, %v5796
        %v5798 = vand.u32 %v5797, 4294901760
        %5799 = vmatpush.msra.mxu0 %v5798
        %v5800 = vand.u32 %v2567, 4294901760
        %v5801 = vsub.f32 %v2567, %v5800
        %v5802 = vand.u32 %v5801, 4294901760
        %v5803 = vsub.f32 %v5801, %v5802
        %v5804 = vand.u32 %v5803, 4294901760
        %5805 = vmatpush.msra.mxu0 %v5804
        %v5806 = vand.u32 %v2566, 4294901760
        %v5807 = vsub.f32 %v2566, %v5806
        %v5808 = vand.u32 %v5807, 4294901760
        %v5809 = vsub.f32 %v5807, %v5808
        %v5810 = vand.u32 %v5809, 4294901760
        %5811 = vmatpush.msra.mxu0 %v5810
        %v5812 = vand.u32 %v2565, 4294901760
        %v5813 = vsub.f32 %v2565, %v5812
        %v5814 = vand.u32 %v5813, 4294901760
        %v5815 = vsub.f32 %v5813, %v5814
        %v5816 = vand.u32 %v5815, 4294901760
        %5817 = vmatpush.msra.mxu0 %v5816
        %v5818 = vand.u32 %v2564, 4294901760
        %v5819 = vsub.f32 %v2564, %v5818
        %v5820 = vand.u32 %v5819, 4294901760
        %v5821 = vsub.f32 %v5819, %v5820
        %v5822 = vand.u32 %v5821, 4294901760
        %5823 = vmatpush.msra.mxu0 %v5822
        %v5824 = vand.u32 %v2563, 4294901760
        %v5825 = vsub.f32 %v2563, %v5824
        %v5826 = vand.u32 %v5825, 4294901760
        %v5827 = vsub.f32 %v5825, %v5826
        %v5828 = vand.u32 %v5827, 4294901760
        %5829 = vmatpush.msra.mxu0 %v5828
        %v5830 = vand.u32 %v4947, 4294901760
        %5831 = vmatmul.f32.gmra.mxu0 %v5830
        %v5832 = vpop.f32.mrf.mxu0
        %v5833 = vadd.f32 %v5737, %v5832
        %5834 = vdwg.mxu0
        %5835 = vmatpush.msra.mxu0 0.0
        %v5836 = vand.u32 %v2577, 4294901760
        %v5837 = vsub.f32 %v2577, %v5836
        %5838 = vmatpush.msra.mxu0 %v5837
        %v5839 = vand.u32 %v2576, 4294901760
        %v5840 = vsub.f32 %v2576, %v5839
        %5841 = vmatpush.msra.mxu0 %v5840
        %v5842 = vand.u32 %v2575, 4294901760
        %v5843 = vsub.f32 %v2575, %v5842
        %5844 = vmatpush.msra.mxu0 %v5843
        %v5845 = vand.u32 %v2574, 4294901760
        %v5846 = vsub.f32 %v2574, %v5845
        %5847 = vmatpush.msra.mxu0 %v5846
        %v5848 = vand.u32 %v2573, 4294901760
        %v5849 = vsub.f32 %v2573, %v5848
        %5850 = vmatpush.msra.mxu0 %v5849
        %v5851 = vand.u32 %v2572, 4294901760
        %v5852 = vsub.f32 %v2572, %v5851
        %5853 = vmatpush.msra.mxu0 %v5852
        %v5854 = vand.u32 %v2571, 4294901760
        %v5855 = vsub.f32 %v2571, %v5854
        %5856 = vmatpush.msra.mxu0 %v5855
        %v5857 = vand.u32 %v2570, 4294901760
        %v5858 = vsub.f32 %v2570, %v5857
        %5859 = vmatpush.msra.mxu0 %v5858
        %v5860 = vand.u32 %v2569, 4294901760
        %v5861 = vsub.f32 %v2569, %v5860
        %5862 = vmatpush.msra.mxu0 %v5861
        %v5863 = vand.u32 %v2568, 4294901760
        %v5864 = vsub.f32 %v2568, %v5863
        %5865 = vmatpush.msra.mxu0 %v5864
        %v5866 = vand.u32 %v2567, 4294901760
        %v5867 = vsub.f32 %v2567, %v5866
        %5868 = vmatpush.msra.mxu0 %v5867
        %v5869 = vand.u32 %v2566, 4294901760
        %v5870 = vsub.f32 %v2566, %v5869
        %5871 = vmatpush.msra.mxu0 %v5870
        %v5872 = vand.u32 %v2565, 4294901760
        %v5873 = vsub.f32 %v2565, %v5872
        %5874 = vmatpush.msra.mxu0 %v5873
        %v5875 = vand.u32 %v2564, 4294901760
        %v5876 = vsub.f32 %v2564, %v5875
        %5877 = vmatpush.msra.mxu0 %v5876
        %v5878 = vand.u32 %v2563, 4294901760
        %v5879 = vsub.f32 %v2563, %v5878
        %5880 = vmatpush.msra.mxu0 %v5879
        %v5881 = vand.u32 %v4947, 4294901760
        %v5882 = vsub.f32 %v4947, %v5881
        %5883 = vmatmul.f32.gmra.mxu0 %v5882
        %v5884 = vpop.f32.mrf.mxu0
        %v5885 = vadd.f32 %v5833, %v5884
        %5886 = vdwg.mxu0
        %5887 = vmatpush.msra.mxu0 0.0
        %v5888 = vand.u32 %v2577, 4294901760
        %5889 = vmatpush.msra.mxu0 %v5888
        %v5890 = vand.u32 %v2576, 4294901760
        %5891 = vmatpush.msra.mxu0 %v5890
        %v5892 = vand.u32 %v2575, 4294901760
        %5893 = vmatpush.msra.mxu0 %v5892
        %v5894 = vand.u32 %v2574, 4294901760
        %5895 = vmatpush.msra.mxu0 %v5894
        %v5896 = vand.u32 %v2573, 4294901760
        %5897 = vmatpush.msra.mxu0 %v5896
        %v5898 = vand.u32 %v2572, 4294901760
        %5899 = vmatpush.msra.mxu0 %v5898
        %v5900 = vand.u32 %v2571, 4294901760
        %5901 = vmatpush.msra.mxu0 %v5900
        %v5902 = vand.u32 %v2570, 4294901760
        %5903 = vmatpush.msra.mxu0 %v5902
        %v5904 = vand.u32 %v2569, 4294901760
        %5905 = vmatpush.msra.mxu0 %v5904
        %v5906 = vand.u32 %v2568, 4294901760
        %5907 = vmatpush.msra.mxu0 %v5906
        %v5908 = vand.u32 %v2567, 4294901760
        %5909 = vmatpush.msra.mxu0 %v5908
        %v5910 = vand.u32 %v2566, 4294901760
        %5911 = vmatpush.msra.mxu0 %v5910
        %v5912 = vand.u32 %v2565, 4294901760
        %5913 = vmatpush.msra.mxu0 %v5912
        %v5914 = vand.u32 %v2564, 4294901760
        %5915 = vmatpush.msra.mxu0 %v5914
        %v5916 = vand.u32 %v2563, 4294901760
        %5917 = vmatpush.msra.mxu0 %v5916
        %v5918 = vand.u32 %v4947, 4294901760
        %v5919 = vsub.f32 %v4947, %v5918
        %v5920 = vand.u32 %v5919, 4294901760
        %5921 = vmatmul.f32.gmra.mxu0 %v5920
        %v5922 = vpop.f32.mrf.mxu0
        %v5923 = vadd.f32 %v5885, %v5922
        %5924 = vdwg.mxu0
        %5925 = vmatpush.msra.mxu0 0.0
        %v5926 = vand.u32 %v2577, 4294901760
        %v5927 = vsub.f32 %v2577, %v5926
        %v5928 = vand.u32 %v5927, 4294901760
        %5929 = vmatpush.msra.mxu0 %v5928
        %v5930 = vand.u32 %v2576, 4294901760
        %v5931 = vsub.f32 %v2576, %v5930
        %v5932 = vand.u32 %v5931, 4294901760
        %5933 = vmatpush.msra.mxu0 %v5932
        %v5934 = vand.u32 %v2575, 4294901760
        %v5935 = vsub.f32 %v2575, %v5934
        %v5936 = vand.u32 %v5935, 4294901760
        %5937 = vmatpush.msra.mxu0 %v5936
        %v5938 = vand.u32 %v2574, 4294901760
        %v5939 = vsub.f32 %v2574, %v5938
        %v5940 = vand.u32 %v5939, 4294901760
        %5941 = vmatpush.msra.mxu0 %v5940
        %v5942 = vand.u32 %v2573, 4294901760
        %v5943 = vsub.f32 %v2573, %v5942
        %v5944 = vand.u32 %v5943, 4294901760
        %5945 = vmatpush.msra.mxu0 %v5944
        %v5946 = vand.u32 %v2572, 4294901760
        %v5947 = vsub.f32 %v2572, %v5946
        %v5948 = vand.u32 %v5947, 4294901760
        %5949 = vmatpush.msra.mxu0 %v5948
        %v5950 = vand.u32 %v2571, 4294901760
        %v5951 = vsub.f32 %v2571, %v5950
        %v5952 = vand.u32 %v5951, 4294901760
        %5953 = vmatpush.msra.mxu0 %v5952
        %v5954 = vand.u32 %v2570, 4294901760
        %v5955 = vsub.f32 %v2570, %v5954
        %v5956 = vand.u32 %v5955, 4294901760
        %5957 = vmatpush.msra.mxu0 %v5956
        %v5958 = vand.u32 %v2569, 4294901760
        %v5959 = vsub.f32 %v2569, %v5958
        %v5960 = vand.u32 %v5959, 4294901760
        %5961 = vmatpush.msra.mxu0 %v5960
        %v5962 = vand.u32 %v2568, 4294901760
        %v5963 = vsub.f32 %v2568, %v5962
        %v5964 = vand.u32 %v5963, 4294901760
        %5965 = vmatpush.msra.mxu0 %v5964
        %v5966 = vand.u32 %v2567, 4294901760
        %v5967 = vsub.f32 %v2567, %v5966
        %v5968 = vand.u32 %v5967, 4294901760
        %5969 = vmatpush.msra.mxu0 %v5968
        %v5970 = vand.u32 %v2566, 4294901760
        %v5971 = vsub.f32 %v2566, %v5970
        %v5972 = vand.u32 %v5971, 4294901760
        %5973 = vmatpush.msra.mxu0 %v5972
        %v5974 = vand.u32 %v2565, 4294901760
        %v5975 = vsub.f32 %v2565, %v5974
        %v5976 = vand.u32 %v5975, 4294901760
        %5977 = vmatpush.msra.mxu0 %v5976
        %v5978 = vand.u32 %v2564, 4294901760
        %v5979 = vsub.f32 %v2564, %v5978
        %v5980 = vand.u32 %v5979, 4294901760
        %5981 = vmatpush.msra.mxu0 %v5980
        %v5982 = vand.u32 %v2563, 4294901760
        %v5983 = vsub.f32 %v2563, %v5982
        %v5984 = vand.u32 %v5983, 4294901760
        %5985 = vmatpush.msra.mxu0 %v5984
        %v5986 = vand.u32 %v4947, 4294901760
        %5987 = vmatmul.f32.gmra.mxu0 %v5986
        %v5988 = vpop.f32.mrf.mxu0
        %v5989 = vadd.f32 %v5923, %v5988
        %5990 = vdwg.mxu0
        %5991 = vmatpush.msra.mxu0 0.0
        %v5992 = vand.u32 %v2577, 4294901760
        %5993 = vmatpush.msra.mxu0 %v5992
        %v5994 = vand.u32 %v2576, 4294901760
        %5995 = vmatpush.msra.mxu0 %v5994
        %v5996 = vand.u32 %v2575, 4294901760
        %5997 = vmatpush.msra.mxu0 %v5996
        %v5998 = vand.u32 %v2574, 4294901760
        %5999 = vmatpush.msra.mxu0 %v5998
        %v6000 = vand.u32 %v2573, 4294901760
        %6001 = vmatpush.msra.mxu0 %v6000
        %v6002 = vand.u32 %v2572, 4294901760
        %6003 = vmatpush.msra.mxu0 %v6002
        %v6004 = vand.u32 %v2571, 4294901760
        %6005 = vmatpush.msra.mxu0 %v6004
        %v6006 = vand.u32 %v2570, 4294901760
        %6007 = vmatpush.msra.mxu0 %v6006
        %v6008 = vand.u32 %v2569, 4294901760
        %6009 = vmatpush.msra.mxu0 %v6008
        %v6010 = vand.u32 %v2568, 4294901760
        %6011 = vmatpush.msra.mxu0 %v6010
        %v6012 = vand.u32 %v2567, 4294901760
        %6013 = vmatpush.msra.mxu0 %v6012
        %v6014 = vand.u32 %v2566, 4294901760
        %6015 = vmatpush.msra.mxu0 %v6014
        %v6016 = vand.u32 %v2565, 4294901760
        %6017 = vmatpush.msra.mxu0 %v6016
        %v6018 = vand.u32 %v2564, 4294901760
        %6019 = vmatpush.msra.mxu0 %v6018
        %v6020 = vand.u32 %v2563, 4294901760
        %6021 = vmatpush.msra.mxu0 %v6020
        %v6022 = vand.u32 %v4947, 4294901760
        %6023 = vmatmul.f32.gmra.mxu0 %v6022
        %v6024 = vpop.f32.mrf.mxu0
        %v6025 = vadd.f32 %v5989, %v6024
        %6026 = vdwg.mxu0
        %6027 = vmatpush.msra.mxu0 0.0
        %v6028 = vand.u32 %v2560, 4294901760
        %6029 = vmatpush.msra.mxu0 %v6028
        %v6030 = vand.u32 %v2559, 4294901760
        %6031 = vmatpush.msra.mxu0 %v6030
        %v6032 = vand.u32 %v2558, 4294901760
        %6033 = vmatpush.msra.mxu0 %v6032
        %v6034 = vand.u32 %v2557, 4294901760
        %6035 = vmatpush.msra.mxu0 %v6034
        %v6036 = vand.u32 %v2556, 4294901760
        %6037 = vmatpush.msra.mxu0 %v6036
        %v6038 = vand.u32 %v2555, 4294901760
        %6039 = vmatpush.msra.mxu0 %v6038
        %v6040 = vand.u32 %v2554, 4294901760
        %6041 = vmatpush.msra.mxu0 %v6040
        %v6042 = vand.u32 %v2553, 4294901760
        %6043 = vmatpush.msra.mxu0 %v6042
        %v6044 = vand.u32 %v2552, 4294901760
        %6045 = vmatpush.msra.mxu0 %v6044
        %v6046 = vand.u32 %v2551, 4294901760
        %6047 = vmatpush.msra.mxu0 %v6046
        %v6048 = vand.u32 %v2550, 4294901760
        %6049 = vmatpush.msra.mxu0 %v6048
        %v6050 = vand.u32 %v2549, 4294901760
        %6051 = vmatpush.msra.mxu0 %v6050
        %v6052 = vand.u32 %v2548, 4294901760
        %6053 = vmatpush.msra.mxu0 %v6052
        %v6054 = vand.u32 %v2547, 4294901760
        %6055 = vmatpush.msra.mxu0 %v6054
        %v6056 = vand.u32 %v2546, 4294901760
        %6057 = vmatpush.msra.mxu0 %v6056
        %v6058 = vand.u32 %v4614, 4294901760
        %v6059 = vsub.f32 %v4614, %v6058
        %v6060 = vand.u32 %v6059, 4294901760
        %v6061 = vsub.f32 %v6059, %v6060
        %v6062 = vand.u32 %v6061, 4294901760
        %6063 = vmatmul.f32.gmra.mxu0 %v6062
        %v6064 = vpop.f32.mrf.mxu0
        %v6065 = vadd.f32 %v6025, %v6064
        %6066 = vdwg.mxu0
        %6067 = vmatpush.msra.mxu0 0.0
        %v6068 = vand.u32 %v2560, 4294901760
        %v6069 = vsub.f32 %v2560, %v6068
        %v6070 = vand.u32 %v6069, 4294901760
        %v6071 = vsub.f32 %v6069, %v6070
        %v6072 = vand.u32 %v6071, 4294901760
        %6073 = vmatpush.msra.mxu0 %v6072
        %v6074 = vand.u32 %v2559, 4294901760
        %v6075 = vsub.f32 %v2559, %v6074
        %v6076 = vand.u32 %v6075, 4294901760
        %v6077 = vsub.f32 %v6075, %v6076
        %v6078 = vand.u32 %v6077, 4294901760
        %6079 = vmatpush.msra.mxu0 %v6078
        %v6080 = vand.u32 %v2558, 4294901760
        %v6081 = vsub.f32 %v2558, %v6080
        %v6082 = vand.u32 %v6081, 4294901760
        %v6083 = vsub.f32 %v6081, %v6082
        %v6084 = vand.u32 %v6083, 4294901760
        %6085 = vmatpush.msra.mxu0 %v6084
        %v6086 = vand.u32 %v2557, 4294901760
        %v6087 = vsub.f32 %v2557, %v6086
        %v6088 = vand.u32 %v6087, 4294901760
        %v6089 = vsub.f32 %v6087, %v6088
        %v6090 = vand.u32 %v6089, 4294901760
        %6091 = vmatpush.msra.mxu0 %v6090
        %v6092 = vand.u32 %v2556, 4294901760
        %v6093 = vsub.f32 %v2556, %v6092
        %v6094 = vand.u32 %v6093, 4294901760
        %v6095 = vsub.f32 %v6093, %v6094
        %v6096 = vand.u32 %v6095, 4294901760
        %6097 = vmatpush.msra.mxu0 %v6096
        %v6098 = vand.u32 %v2555, 4294901760
        %v6099 = vsub.f32 %v2555, %v6098
        %v6100 = vand.u32 %v6099, 4294901760
        %v6101 = vsub.f32 %v6099, %v6100
        %v6102 = vand.u32 %v6101, 4294901760
        %6103 = vmatpush.msra.mxu0 %v6102
        %v6104 = vand.u32 %v2554, 4294901760
        %v6105 = vsub.f32 %v2554, %v6104
        %v6106 = vand.u32 %v6105, 4294901760
        %v6107 = vsub.f32 %v6105, %v6106
        %v6108 = vand.u32 %v6107, 4294901760
        %6109 = vmatpush.msra.mxu0 %v6108
        %v6110 = vand.u32 %v2553, 4294901760
        %v6111 = vsub.f32 %v2553, %v6110
        %v6112 = vand.u32 %v6111, 4294901760
        %v6113 = vsub.f32 %v6111, %v6112
        %v6114 = vand.u32 %v6113, 4294901760
        %6115 = vmatpush.msra.mxu0 %v6114
        %v6116 = vand.u32 %v2552, 4294901760
        %v6117 = vsub.f32 %v2552, %v6116
        %v6118 = vand.u32 %v6117, 4294901760
        %v6119 = vsub.f32 %v6117, %v6118
        %v6120 = vand.u32 %v6119, 4294901760
        %6121 = vmatpush.msra.mxu0 %v6120
        %v6122 = vand.u32 %v2551, 4294901760
        %v6123 = vsub.f32 %v2551, %v6122
        %v6124 = vand.u32 %v6123, 4294901760
        %v6125 = vsub.f32 %v6123, %v6124
        %v6126 = vand.u32 %v6125, 4294901760
        %6127 = vmatpush.msra.mxu0 %v6126
        %v6128 = vand.u32 %v2550, 4294901760
        %v6129 = vsub.f32 %v2550, %v6128
        %v6130 = vand.u32 %v6129, 4294901760
        %v6131 = vsub.f32 %v6129, %v6130
        %v6132 = vand.u32 %v6131, 4294901760
        %6133 = vmatpush.msra.mxu0 %v6132
        %v6134 = vand.u32 %v2549, 4294901760
        %v6135 = vsub.f32 %v2549, %v6134
        %v6136 = vand.u32 %v6135, 4294901760
        %v6137 = vsub.f32 %v6135, %v6136
        %v6138 = vand.u32 %v6137, 4294901760
        %6139 = vmatpush.msra.mxu0 %v6138
        %v6140 = vand.u32 %v2548, 4294901760
        %v6141 = vsub.f32 %v2548, %v6140
        %v6142 = vand.u32 %v6141, 4294901760
        %v6143 = vsub.f32 %v6141, %v6142
        %v6144 = vand.u32 %v6143, 4294901760
        %6145 = vmatpush.msra.mxu0 %v6144
        %v6146 = vand.u32 %v2547, 4294901760
        %v6147 = vsub.f32 %v2547, %v6146
        %v6148 = vand.u32 %v6147, 4294901760
        %v6149 = vsub.f32 %v6147, %v6148
        %v6150 = vand.u32 %v6149, 4294901760
        %6151 = vmatpush.msra.mxu0 %v6150
        %v6152 = vand.u32 %v2546, 4294901760
        %v6153 = vsub.f32 %v2546, %v6152
        %v6154 = vand.u32 %v6153, 4294901760
        %v6155 = vsub.f32 %v6153, %v6154
        %v6156 = vand.u32 %v6155, 4294901760
        %6157 = vmatpush.msra.mxu0 %v6156
        %v6158 = vand.u32 %v4614, 4294901760
        %6159 = vmatmul.f32.gmra.mxu0 %v6158
        %v6160 = vpop.f32.mrf.mxu0
        %v6161 = vadd.f32 %v6065, %v6160
        %6162 = vdwg.mxu0
        %6163 = vmatpush.msra.mxu0 0.0
        %v6164 = vand.u32 %v2560, 4294901760
        %v6165 = vsub.f32 %v2560, %v6164
        %6166 = vmatpush.msra.mxu0 %v6165
        %v6167 = vand.u32 %v2559, 4294901760
        %v6168 = vsub.f32 %v2559, %v6167
        %6169 = vmatpush.msra.mxu0 %v6168
        %v6170 = vand.u32 %v2558, 4294901760
        %v6171 = vsub.f32 %v2558, %v6170
        %6172 = vmatpush.msra.mxu0 %v6171
        %v6173 = vand.u32 %v2557, 4294901760
        %v6174 = vsub.f32 %v2557, %v6173
        %6175 = vmatpush.msra.mxu0 %v6174
        %v6176 = vand.u32 %v2556, 4294901760
        %v6177 = vsub.f32 %v2556, %v6176
        %6178 = vmatpush.msra.mxu0 %v6177
        %v6179 = vand.u32 %v2555, 4294901760
        %v6180 = vsub.f32 %v2555, %v6179
        %6181 = vmatpush.msra.mxu0 %v6180
        %v6182 = vand.u32 %v2554, 4294901760
        %v6183 = vsub.f32 %v2554, %v6182
        %6184 = vmatpush.msra.mxu0 %v6183
        %v6185 = vand.u32 %v2553, 4294901760
        %v6186 = vsub.f32 %v2553, %v6185
        %6187 = vmatpush.msra.mxu0 %v6186
        %v6188 = vand.u32 %v2552, 4294901760
        %v6189 = vsub.f32 %v2552, %v6188
        %6190 = vmatpush.msra.mxu0 %v6189
        %v6191 = vand.u32 %v2551, 4294901760
        %v6192 = vsub.f32 %v2551, %v6191
        %6193 = vmatpush.msra.mxu0 %v6192
        %v6194 = vand.u32 %v2550, 4294901760
        %v6195 = vsub.f32 %v2550, %v6194
        %6196 = vmatpush.msra.mxu0 %v6195
        %v6197 = vand.u32 %v2549, 4294901760
        %v6198 = vsub.f32 %v2549, %v6197
        %6199 = vmatpush.msra.mxu0 %v6198
        %v6200 = vand.u32 %v2548, 4294901760
        %v6201 = vsub.f32 %v2548, %v6200
        %6202 = vmatpush.msra.mxu0 %v6201
        %v6203 = vand.u32 %v2547, 4294901760
        %v6204 = vsub.f32 %v2547, %v6203
        %6205 = vmatpush.msra.mxu0 %v6204
        %v6206 = vand.u32 %v2546, 4294901760
        %v6207 = vsub.f32 %v2546, %v6206
        %6208 = vmatpush.msra.mxu0 %v6207
        %v6209 = vand.u32 %v4614, 4294901760
        %v6210 = vsub.f32 %v4614, %v6209
        %6211 = vmatmul.f32.gmra.mxu0 %v6210
        %v6212 = vpop.f32.mrf.mxu0
        %v6213 = vadd.f32 %v6161, %v6212
        %6214 = vdwg.mxu0
        %6215 = vmatpush.msra.mxu0 0.0
        %v6216 = vand.u32 %v2560, 4294901760
        %6217 = vmatpush.msra.mxu0 %v6216
        %v6218 = vand.u32 %v2559, 4294901760
        %6219 = vmatpush.msra.mxu0 %v6218
        %v6220 = vand.u32 %v2558, 4294901760
        %6221 = vmatpush.msra.mxu0 %v6220
        %v6222 = vand.u32 %v2557, 4294901760
        %6223 = vmatpush.msra.mxu0 %v6222
        %v6224 = vand.u32 %v2556, 4294901760
        %6225 = vmatpush.msra.mxu0 %v6224
        %v6226 = vand.u32 %v2555, 4294901760
        %6227 = vmatpush.msra.mxu0 %v6226
        %v6228 = vand.u32 %v2554, 4294901760
        %6229 = vmatpush.msra.mxu0 %v6228
        %v6230 = vand.u32 %v2553, 4294901760
        %6231 = vmatpush.msra.mxu0 %v6230
        %v6232 = vand.u32 %v2552, 4294901760
        %6233 = vmatpush.msra.mxu0 %v6232
        %v6234 = vand.u32 %v2551, 4294901760
        %6235 = vmatpush.msra.mxu0 %v6234
        %v6236 = vand.u32 %v2550, 4294901760
        %6237 = vmatpush.msra.mxu0 %v6236
        %v6238 = vand.u32 %v2549, 4294901760
        %6239 = vmatpush.msra.mxu0 %v6238
        %v6240 = vand.u32 %v2548, 4294901760
        %6241 = vmatpush.msra.mxu0 %v6240
        %v6242 = vand.u32 %v2547, 4294901760
        %6243 = vmatpush.msra.mxu0 %v6242
        %v6244 = vand.u32 %v2546, 4294901760
        %6245 = vmatpush.msra.mxu0 %v6244
        %v6246 = vand.u32 %v4614, 4294901760
        %v6247 = vsub.f32 %v4614, %v6246
        %v6248 = vand.u32 %v6247, 4294901760
        %6249 = vmatmul.f32.gmra.mxu0 %v6248
        %v6250 = vpop.f32.mrf.mxu0
        %v6251 = vadd.f32 %v6213, %v6250
        %6252 = vdwg.mxu0
        %6253 = vmatpush.msra.mxu0 0.0
        %v6254 = vand.u32 %v2560, 4294901760
        %v6255 = vsub.f32 %v2560, %v6254
        %v6256 = vand.u32 %v6255, 4294901760
        %6257 = vmatpush.msra.mxu0 %v6256
        %v6258 = vand.u32 %v2559, 4294901760
        %v6259 = vsub.f32 %v2559, %v6258
        %v6260 = vand.u32 %v6259, 4294901760
        %6261 = vmatpush.msra.mxu0 %v6260
        %v6262 = vand.u32 %v2558, 4294901760
        %v6263 = vsub.f32 %v2558, %v6262
        %v6264 = vand.u32 %v6263, 4294901760
        %6265 = vmatpush.msra.mxu0 %v6264
        %v6266 = vand.u32 %v2557, 4294901760
        %v6267 = vsub.f32 %v2557, %v6266
        %v6268 = vand.u32 %v6267, 4294901760
        %6269 = vmatpush.msra.mxu0 %v6268
        %v6270 = vand.u32 %v2556, 4294901760
        %v6271 = vsub.f32 %v2556, %v6270
        %v6272 = vand.u32 %v6271, 4294901760
        %6273 = vmatpush.msra.mxu0 %v6272
        %v6274 = vand.u32 %v2555, 4294901760
        %v6275 = vsub.f32 %v2555, %v6274
        %v6276 = vand.u32 %v6275, 4294901760
        %6277 = vmatpush.msra.mxu0 %v6276
        %v6278 = vand.u32 %v2554, 4294901760
        %v6279 = vsub.f32 %v2554, %v6278
        %v6280 = vand.u32 %v6279, 4294901760
        %6281 = vmatpush.msra.mxu0 %v6280
        %v6282 = vand.u32 %v2553, 4294901760
        %v6283 = vsub.f32 %v2553, %v6282
        %v6284 = vand.u32 %v6283, 4294901760
        %6285 = vmatpush.msra.mxu0 %v6284
        %v6286 = vand.u32 %v2552, 4294901760
        %v6287 = vsub.f32 %v2552, %v6286
        %v6288 = vand.u32 %v6287, 4294901760
        %6289 = vmatpush.msra.mxu0 %v6288
        %v6290 = vand.u32 %v2551, 4294901760
        %v6291 = vsub.f32 %v2551, %v6290
        %v6292 = vand.u32 %v6291, 4294901760
        %6293 = vmatpush.msra.mxu0 %v6292
        %v6294 = vand.u32 %v2550, 4294901760
        %v6295 = vsub.f32 %v2550, %v6294
        %v6296 = vand.u32 %v6295, 4294901760
        %6297 = vmatpush.msra.mxu0 %v6296
        %v6298 = vand.u32 %v2549, 4294901760
        %v6299 = vsub.f32 %v2549, %v6298
        %v6300 = vand.u32 %v6299, 4294901760
        %6301 = vmatpush.msra.mxu0 %v6300
        %v6302 = vand.u32 %v2548, 4294901760
        %v6303 = vsub.f32 %v2548, %v6302
        %v6304 = vand.u32 %v6303, 4294901760
        %6305 = vmatpush.msra.mxu0 %v6304
        %v6306 = vand.u32 %v2547, 4294901760
        %v6307 = vsub.f32 %v2547, %v6306
        %v6308 = vand.u32 %v6307, 4294901760
        %6309 = vmatpush.msra.mxu0 %v6308
        %v6310 = vand.u32 %v2546, 4294901760
        %v6311 = vsub.f32 %v2546, %v6310
        %v6312 = vand.u32 %v6311, 4294901760
        %6313 = vmatpush.msra.mxu0 %v6312
        %v6314 = vand.u32 %v4614, 4294901760
        %6315 = vmatmul.f32.gmra.mxu0 %v6314
        %v6316 = vpop.f32.mrf.mxu0
        %v6317 = vadd.f32 %v6251, %v6316
        %6318 = vdwg.mxu0
        %6319 = vmatpush.msra.mxu0 0.0
        %v6320 = vand.u32 %v2560, 4294901760
        %6321 = vmatpush.msra.mxu0 %v6320
        %v6322 = vand.u32 %v2559, 4294901760
        %6323 = vmatpush.msra.mxu0 %v6322
        %v6324 = vand.u32 %v2558, 4294901760
        %6325 = vmatpush.msra.mxu0 %v6324
        %v6326 = vand.u32 %v2557, 4294901760
        %6327 = vmatpush.msra.mxu0 %v6326
        %v6328 = vand.u32 %v2556, 4294901760
        %6329 = vmatpush.msra.mxu0 %v6328
        %v6330 = vand.u32 %v2555, 4294901760
        %6331 = vmatpush.msra.mxu0 %v6330
        %v6332 = vand.u32 %v2554, 4294901760
        %6333 = vmatpush.msra.mxu0 %v6332
        %v6334 = vand.u32 %v2553, 4294901760
        %6335 = vmatpush.msra.mxu0 %v6334
        %v6336 = vand.u32 %v2552, 4294901760
        %6337 = vmatpush.msra.mxu0 %v6336
        %v6338 = vand.u32 %v2551, 4294901760
        %6339 = vmatpush.msra.mxu0 %v6338
        %v6340 = vand.u32 %v2550, 4294901760
        %6341 = vmatpush.msra.mxu0 %v6340
        %v6342 = vand.u32 %v2549, 4294901760
        %6343 = vmatpush.msra.mxu0 %v6342
        %v6344 = vand.u32 %v2548, 4294901760
        %6345 = vmatpush.msra.mxu0 %v6344
        %v6346 = vand.u32 %v2547, 4294901760
        %6347 = vmatpush.msra.mxu0 %v6346
        %v6348 = vand.u32 %v2546, 4294901760
        %6349 = vmatpush.msra.mxu0 %v6348
        %v6350 = vand.u32 %v4614, 4294901760
        %6351 = vmatmul.f32.gmra.mxu0 %v6350
        %v6352 = vpop.f32.mrf.mxu0
        %v6353 = vadd.f32 %v6317, %v6352
        %6354 = vdwg.mxu0
        %v6355 = vld [vmem:[#allocation2 + $0x6] sm:$0x1]
        %v6357 = vsel %vm2543, %v6355, 0
        %6359 = vmatpush.msra.mxu0 0.0
        %v6360 = vand.u32 %v3256, 4294901760
        %6361 = vmatpush.msra.mxu0 %v6360
        %v6362 = vand.u32 %v3255, 4294901760
        %6363 = vmatpush.msra.mxu0 %v6362
        %v6364 = vand.u32 %v3254, 4294901760
        %6365 = vmatpush.msra.mxu0 %v6364
        %v6366 = vand.u32 %v3253, 4294901760
        %6367 = vmatpush.msra.mxu0 %v6366
        %v6368 = vand.u32 %v3252, 4294901760
        %6369 = vmatpush.msra.mxu0 %v6368
        %v6370 = vand.u32 %v3251, 4294901760
        %6371 = vmatpush.msra.mxu0 %v6370
        %v6372 = vand.u32 %v3250, 4294901760
        %6373 = vmatpush.msra.mxu0 %v6372
        %v6374 = vand.u32 %v3249, 4294901760
        %6375 = vmatpush.msra.mxu0 %v6374
        %v6376 = vand.u32 %v3248, 4294901760
        %6377 = vmatpush.msra.mxu0 %v6376
        %v6378 = vand.u32 %v3247, 4294901760
        %6379 = vmatpush.msra.mxu0 %v6378
        %v6380 = vand.u32 %v3246, 4294901760
        %6381 = vmatpush.msra.mxu0 %v6380
        %v6382 = vand.u32 %v3245, 4294901760
        %6383 = vmatpush.msra.mxu0 %v6382
        %v6384 = vand.u32 %v3244, 4294901760
        %6385 = vmatpush.msra.mxu0 %v6384
        %v6386 = vand.u32 %v3243, 4294901760
        %6387 = vmatpush.msra.mxu0 %v6386
        %v6388 = vand.u32 %v3242, 4294901760
        %6389 = vmatpush.msra.mxu0 %v6388
        %v6390 = vand.u32 %v6357, 4294901760
        %v6391 = vsub.f32 %v6357, %v6390
        %v6392 = vand.u32 %v6391, 4294901760
        %v6393 = vsub.f32 %v6391, %v6392
        %v6394 = vand.u32 %v6393, 4294901760
        %6395 = vmatmul.f32.gmra.mxu0 %v6394
        %v6396 = vpop.f32.mrf.mxu0
        %v6397 = vadd.f32 0.0, %v6396
        %6398 = vdwg.mxu0
        %6399 = vmatpush.msra.mxu0 0.0
        %v6400 = vand.u32 %v3256, 4294901760
        %v6401 = vsub.f32 %v3256, %v6400
        %v6402 = vand.u32 %v6401, 4294901760
        %v6403 = vsub.f32 %v6401, %v6402
        %v6404 = vand.u32 %v6403, 4294901760
        %6405 = vmatpush.msra.mxu0 %v6404
        %v6406 = vand.u32 %v3255, 4294901760
        %v6407 = vsub.f32 %v3255, %v6406
        %v6408 = vand.u32 %v6407, 4294901760
        %v6409 = vsub.f32 %v6407, %v6408
        %v6410 = vand.u32 %v6409, 4294901760
        %6411 = vmatpush.msra.mxu0 %v6410
        %v6412 = vand.u32 %v3254, 4294901760
        %v6413 = vsub.f32 %v3254, %v6412
        %v6414 = vand.u32 %v6413, 4294901760
        %v6415 = vsub.f32 %v6413, %v6414
        %v6416 = vand.u32 %v6415, 4294901760
        %6417 = vmatpush.msra.mxu0 %v6416
        %v6418 = vand.u32 %v3253, 4294901760
        %v6419 = vsub.f32 %v3253, %v6418
        %v6420 = vand.u32 %v6419, 4294901760
        %v6421 = vsub.f32 %v6419, %v6420
        %v6422 = vand.u32 %v6421, 4294901760
        %6423 = vmatpush.msra.mxu0 %v6422
        %v6424 = vand.u32 %v3252, 4294901760
        %v6425 = vsub.f32 %v3252, %v6424
        %v6426 = vand.u32 %v6425, 4294901760
        %v6427 = vsub.f32 %v6425, %v6426
        %v6428 = vand.u32 %v6427, 4294901760
        %6429 = vmatpush.msra.mxu0 %v6428
        %v6430 = vand.u32 %v3251, 4294901760
        %v6431 = vsub.f32 %v3251, %v6430
        %v6432 = vand.u32 %v6431, 4294901760
        %v6433 = vsub.f32 %v6431, %v6432
        %v6434 = vand.u32 %v6433, 4294901760
        %6435 = vmatpush.msra.mxu0 %v6434
        %v6436 = vand.u32 %v3250, 4294901760
        %v6437 = vsub.f32 %v3250, %v6436
        %v6438 = vand.u32 %v6437, 4294901760
        %v6439 = vsub.f32 %v6437, %v6438
        %v6440 = vand.u32 %v6439, 4294901760
        %6441 = vmatpush.msra.mxu0 %v6440
        %v6442 = vand.u32 %v3249, 4294901760
        %v6443 = vsub.f32 %v3249, %v6442
        %v6444 = vand.u32 %v6443, 4294901760
        %v6445 = vsub.f32 %v6443, %v6444
        %v6446 = vand.u32 %v6445, 4294901760
        %6447 = vmatpush.msra.mxu0 %v6446
        %v6448 = vand.u32 %v3248, 4294901760
        %v6449 = vsub.f32 %v3248, %v6448
        %v6450 = vand.u32 %v6449, 4294901760
        %v6451 = vsub.f32 %v6449, %v6450
        %v6452 = vand.u32 %v6451, 4294901760
        %6453 = vmatpush.msra.mxu0 %v6452
        %v6454 = vand.u32 %v3247, 4294901760
        %v6455 = vsub.f32 %v3247, %v6454
        %v6456 = vand.u32 %v6455, 4294901760
        %v6457 = vsub.f32 %v6455, %v6456
        %v6458 = vand.u32 %v6457, 4294901760
        %6459 = vmatpush.msra.mxu0 %v6458
        %v6460 = vand.u32 %v3246, 4294901760
        %v6461 = vsub.f32 %v3246, %v6460
        %v6462 = vand.u32 %v6461, 4294901760
        %v6463 = vsub.f32 %v6461, %v6462
        %v6464 = vand.u32 %v6463, 4294901760
        %6465 = vmatpush.msra.mxu0 %v6464
        %v6466 = vand.u32 %v3245, 4294901760
        %v6467 = vsub.f32 %v3245, %v6466
        %v6468 = vand.u32 %v6467, 4294901760
        %v6469 = vsub.f32 %v6467, %v6468
        %v6470 = vand.u32 %v6469, 4294901760
        %6471 = vmatpush.msra.mxu0 %v6470
        %v6472 = vand.u32 %v3244, 4294901760
        %v6473 = vsub.f32 %v3244, %v6472
        %v6474 = vand.u32 %v6473, 4294901760
        %v6475 = vsub.f32 %v6473, %v6474
        %v6476 = vand.u32 %v6475, 4294901760
        %6477 = vmatpush.msra.mxu0 %v6476
        %v6478 = vand.u32 %v3243, 4294901760
        %v6479 = vsub.f32 %v3243, %v6478
        %v6480 = vand.u32 %v6479, 4294901760
        %v6481 = vsub.f32 %v6479, %v6480
        %v6482 = vand.u32 %v6481, 4294901760
        %6483 = vmatpush.msra.mxu0 %v6482
        %v6484 = vand.u32 %v3242, 4294901760
        %v6485 = vsub.f32 %v3242, %v6484
        %v6486 = vand.u32 %v6485, 4294901760
        %v6487 = vsub.f32 %v6485, %v6486
        %v6488 = vand.u32 %v6487, 4294901760
        %6489 = vmatpush.msra.mxu0 %v6488
        %v6490 = vand.u32 %v6357, 4294901760
        %6491 = vmatmul.f32.gmra.mxu0 %v6490
        %v6492 = vpop.f32.mrf.mxu0
        %v6493 = vadd.f32 %v6397, %v6492
        %6494 = vdwg.mxu0
        %6495 = vmatpush.msra.mxu0 0.0
        %v6496 = vand.u32 %v3256, 4294901760
        %v6497 = vsub.f32 %v3256, %v6496
        %6498 = vmatpush.msra.mxu0 %v6497
        %v6499 = vand.u32 %v3255, 4294901760
        %v6500 = vsub.f32 %v3255, %v6499
        %6501 = vmatpush.msra.mxu0 %v6500
        %v6502 = vand.u32 %v3254, 4294901760
        %v6503 = vsub.f32 %v3254, %v6502
        %6504 = vmatpush.msra.mxu0 %v6503
        %v6505 = vand.u32 %v3253, 4294901760
        %v6506 = vsub.f32 %v3253, %v6505
        %6507 = vmatpush.msra.mxu0 %v6506
        %v6508 = vand.u32 %v3252, 4294901760
        %v6509 = vsub.f32 %v3252, %v6508
        %6510 = vmatpush.msra.mxu0 %v6509
        %v6511 = vand.u32 %v3251, 4294901760
        %v6512 = vsub.f32 %v3251, %v6511
        %6513 = vmatpush.msra.mxu0 %v6512
        %v6514 = vand.u32 %v3250, 4294901760
        %v6515 = vsub.f32 %v3250, %v6514
        %6516 = vmatpush.msra.mxu0 %v6515
        %v6517 = vand.u32 %v3249, 4294901760
        %v6518 = vsub.f32 %v3249, %v6517
        %6519 = vmatpush.msra.mxu0 %v6518
        %v6520 = vand.u32 %v3248, 4294901760
        %v6521 = vsub.f32 %v3248, %v6520
        %6522 = vmatpush.msra.mxu0 %v6521
        %v6523 = vand.u32 %v3247, 4294901760
        %v6524 = vsub.f32 %v3247, %v6523
        %6525 = vmatpush.msra.mxu0 %v6524
        %v6526 = vand.u32 %v3246, 4294901760
        %v6527 = vsub.f32 %v3246, %v6526
        %6528 = vmatpush.msra.mxu0 %v6527
        %v6529 = vand.u32 %v3245, 4294901760
        %v6530 = vsub.f32 %v3245, %v6529
        %6531 = vmatpush.msra.mxu0 %v6530
        %v6532 = vand.u32 %v3244, 4294901760
        %v6533 = vsub.f32 %v3244, %v6532
        %6534 = vmatpush.msra.mxu0 %v6533
        %v6535 = vand.u32 %v3243, 4294901760
        %v6536 = vsub.f32 %v3243, %v6535
        %6537 = vmatpush.msra.mxu0 %v6536
        %v6538 = vand.u32 %v3242, 4294901760
        %v6539 = vsub.f32 %v3242, %v6538
        %6540 = vmatpush.msra.mxu0 %v6539
        %v6541 = vand.u32 %v6357, 4294901760
        %v6542 = vsub.f32 %v6357, %v6541
        %6543 = vmatmul.f32.gmra.mxu0 %v6542
        %v6544 = vpop.f32.mrf.mxu0
        %v6545 = vadd.f32 %v6493, %v6544
        %6546 = vdwg.mxu0
        %6547 = vmatpush.msra.mxu0 0.0
        %v6548 = vand.u32 %v3256, 4294901760
        %6549 = vmatpush.msra.mxu0 %v6548
        %v6550 = vand.u32 %v3255, 4294901760
        %6551 = vmatpush.msra.mxu0 %v6550
        %v6552 = vand.u32 %v3254, 4294901760
        %6553 = vmatpush.msra.mxu0 %v6552
        %v6554 = vand.u32 %v3253, 4294901760
        %6555 = vmatpush.msra.mxu0 %v6554
        %v6556 = vand.u32 %v3252, 4294901760
        %6557 = vmatpush.msra.mxu0 %v6556
        %v6558 = vand.u32 %v3251, 4294901760
        %6559 = vmatpush.msra.mxu0 %v6558
        %v6560 = vand.u32 %v3250, 4294901760
        %6561 = vmatpush.msra.mxu0 %v6560
        %v6562 = vand.u32 %v3249, 4294901760
        %6563 = vmatpush.msra.mxu0 %v6562
        %v6564 = vand.u32 %v3248, 4294901760
        %6565 = vmatpush.msra.mxu0 %v6564
        %v6566 = vand.u32 %v3247, 4294901760
        %6567 = vmatpush.msra.mxu0 %v6566
        %v6568 = vand.u32 %v3246, 4294901760
        %6569 = vmatpush.msra.mxu0 %v6568
        %v6570 = vand.u32 %v3245, 4294901760
        %6571 = vmatpush.msra.mxu0 %v6570
        %v6572 = vand.u32 %v3244, 4294901760
        %6573 = vmatpush.msra.mxu0 %v6572
        %v6574 = vand.u32 %v3243, 4294901760
        %6575 = vmatpush.msra.mxu0 %v6574
        %v6576 = vand.u32 %v3242, 4294901760
        %6577 = vmatpush.msra.mxu0 %v6576
        %v6578 = vand.u32 %v6357, 4294901760
        %v6579 = vsub.f32 %v6357, %v6578
        %v6580 = vand.u32 %v6579, 4294901760
        %6581 = vmatmul.f32.gmra.mxu0 %v6580
        %v6582 = vpop.f32.mrf.mxu0
        %v6583 = vadd.f32 %v6545, %v6582
        %6584 = vdwg.mxu0
        %6585 = vmatpush.msra.mxu0 0.0
        %v6586 = vand.u32 %v3256, 4294901760
        %v6587 = vsub.f32 %v3256, %v6586
        %v6588 = vand.u32 %v6587, 4294901760
        %6589 = vmatpush.msra.mxu0 %v6588
        %v6590 = vand.u32 %v3255, 4294901760
        %v6591 = vsub.f32 %v3255, %v6590
        %v6592 = vand.u32 %v6591, 4294901760
        %6593 = vmatpush.msra.mxu0 %v6592
        %v6594 = vand.u32 %v3254, 4294901760
        %v6595 = vsub.f32 %v3254, %v6594
        %v6596 = vand.u32 %v6595, 4294901760
        %6597 = vmatpush.msra.mxu0 %v6596
        %v6598 = vand.u32 %v3253, 4294901760
        %v6599 = vsub.f32 %v3253, %v6598
        %v6600 = vand.u32 %v6599, 4294901760
        %6601 = vmatpush.msra.mxu0 %v6600
        %v6602 = vand.u32 %v3252, 4294901760
        %v6603 = vsub.f32 %v3252, %v6602
        %v6604 = vand.u32 %v6603, 4294901760
        %6605 = vmatpush.msra.mxu0 %v6604
        %v6606 = vand.u32 %v3251, 4294901760
        %v6607 = vsub.f32 %v3251, %v6606
        %v6608 = vand.u32 %v6607, 4294901760
        %6609 = vmatpush.msra.mxu0 %v6608
        %v6610 = vand.u32 %v3250, 4294901760
        %v6611 = vsub.f32 %v3250, %v6610
        %v6612 = vand.u32 %v6611, 4294901760
        %6613 = vmatpush.msra.mxu0 %v6612
        %v6614 = vand.u32 %v3249, 4294901760
        %v6615 = vsub.f32 %v3249, %v6614
        %v6616 = vand.u32 %v6615, 4294901760
        %6617 = vmatpush.msra.mxu0 %v6616
        %v6618 = vand.u32 %v3248, 4294901760
        %v6619 = vsub.f32 %v3248, %v6618
        %v6620 = vand.u32 %v6619, 4294901760
        %6621 = vmatpush.msra.mxu0 %v6620
        %v6622 = vand.u32 %v3247, 4294901760
        %v6623 = vsub.f32 %v3247, %v6622
        %v6624 = vand.u32 %v6623, 4294901760
        %6625 = vmatpush.msra.mxu0 %v6624
        %v6626 = vand.u32 %v3246, 4294901760
        %v6627 = vsub.f32 %v3246, %v6626
        %v6628 = vand.u32 %v6627, 4294901760
        %6629 = vmatpush.msra.mxu0 %v6628
        %v6630 = vand.u32 %v3245, 4294901760
        %v6631 = vsub.f32 %v3245, %v6630
        %v6632 = vand.u32 %v6631, 4294901760
        %6633 = vmatpush.msra.mxu0 %v6632
        %v6634 = vand.u32 %v3244, 4294901760
        %v6635 = vsub.f32 %v3244, %v6634
        %v6636 = vand.u32 %v6635, 4294901760
        %6637 = vmatpush.msra.mxu0 %v6636
        %v6638 = vand.u32 %v3243, 4294901760
        %v6639 = vsub.f32 %v3243, %v6638
        %v6640 = vand.u32 %v6639, 4294901760
        %6641 = vmatpush.msra.mxu0 %v6640
        %v6642 = vand.u32 %v3242, 4294901760
        %v6643 = vsub.f32 %v3242, %v6642
        %v6644 = vand.u32 %v6643, 4294901760
        %6645 = vmatpush.msra.mxu0 %v6644
        %v6646 = vand.u32 %v6357, 4294901760
        %6647 = vmatmul.f32.gmra.mxu0 %v6646
        %v6648 = vpop.f32.mrf.mxu0
        %v6649 = vadd.f32 %v6583, %v6648
        %6650 = vdwg.mxu0
        %6651 = vmatpush.msra.mxu0 0.0
        %v6652 = vand.u32 %v3256, 4294901760
        %6653 = vmatpush.msra.mxu0 %v6652
        %v6654 = vand.u32 %v3255, 4294901760
        %6655 = vmatpush.msra.mxu0 %v6654
        %v6656 = vand.u32 %v3254, 4294901760
        %6657 = vmatpush.msra.mxu0 %v6656
        %v6658 = vand.u32 %v3253, 4294901760
        %6659 = vmatpush.msra.mxu0 %v6658
        %v6660 = vand.u32 %v3252, 4294901760
        %6661 = vmatpush.msra.mxu0 %v6660
        %v6662 = vand.u32 %v3251, 4294901760
        %6663 = vmatpush.msra.mxu0 %v6662
        %v6664 = vand.u32 %v3250, 4294901760
        %6665 = vmatpush.msra.mxu0 %v6664
        %v6666 = vand.u32 %v3249, 4294901760
        %6667 = vmatpush.msra.mxu0 %v6666
        %v6668 = vand.u32 %v3248, 4294901760
        %6669 = vmatpush.msra.mxu0 %v6668
        %v6670 = vand.u32 %v3247, 4294901760
        %6671 = vmatpush.msra.mxu0 %v6670
        %v6672 = vand.u32 %v3246, 4294901760
        %6673 = vmatpush.msra.mxu0 %v6672
        %v6674 = vand.u32 %v3245, 4294901760
        %6675 = vmatpush.msra.mxu0 %v6674
        %v6676 = vand.u32 %v3244, 4294901760
        %6677 = vmatpush.msra.mxu0 %v6676
        %v6678 = vand.u32 %v3243, 4294901760
        %6679 = vmatpush.msra.mxu0 %v6678
        %v6680 = vand.u32 %v3242, 4294901760
        %6681 = vmatpush.msra.mxu0 %v6680
        %v6682 = vand.u32 %v6357, 4294901760
        %6683 = vmatmul.f32.gmra.mxu0 %v6682
        %v6684 = vpop.f32.mrf.mxu0
        %v6685 = vadd.f32 %v6649, %v6684
        %6686 = vdwg.mxu0
        %v6687 = vadd.f32 %v6353, %v6685
        %v6688 = vld [vmem:[#allocation2 + $0x7] sm:$0x1]
        %v6690 = vsel %vm2543, %v6688, 0
        %6692 = vmatpush.msra.mxu0 0.0
        %v6693 = vand.u32 %v3605, 4294901760
        %6694 = vmatpush.msra.mxu0 %v6693
        %v6695 = vand.u32 %v3604, 4294901760
        %6696 = vmatpush.msra.mxu0 %v6695
        %v6697 = vand.u32 %v3603, 4294901760
        %6698 = vmatpush.msra.mxu0 %v6697
        %v6699 = vand.u32 %v3602, 4294901760
        %6700 = vmatpush.msra.mxu0 %v6699
        %v6701 = vand.u32 %v3601, 4294901760
        %6702 = vmatpush.msra.mxu0 %v6701
        %v6703 = vand.u32 %v3600, 4294901760
        %6704 = vmatpush.msra.mxu0 %v6703
        %v6705 = vand.u32 %v3599, 4294901760
        %6706 = vmatpush.msra.mxu0 %v6705
        %v6707 = vand.u32 %v3598, 4294901760
        %6708 = vmatpush.msra.mxu0 %v6707
        %v6709 = vand.u32 %v3597, 4294901760
        %6710 = vmatpush.msra.mxu0 %v6709
        %v6711 = vand.u32 %v3596, 4294901760
        %6712 = vmatpush.msra.mxu0 %v6711
        %v6713 = vand.u32 %v3595, 4294901760
        %6714 = vmatpush.msra.mxu0 %v6713
        %v6715 = vand.u32 %v3594, 4294901760
        %6716 = vmatpush.msra.mxu0 %v6715
        %v6717 = vand.u32 %v3593, 4294901760
        %6718 = vmatpush.msra.mxu0 %v6717
        %v6719 = vand.u32 %v3592, 4294901760
        %6720 = vmatpush.msra.mxu0 %v6719
        %v6721 = vand.u32 %v3591, 4294901760
        %6722 = vmatpush.msra.mxu0 %v6721
        %v6723 = vand.u32 %v6690, 4294901760
        %v6724 = vsub.f32 %v6690, %v6723
        %v6725 = vand.u32 %v6724, 4294901760
        %v6726 = vsub.f32 %v6724, %v6725
        %v6727 = vand.u32 %v6726, 4294901760
        %6728 = vmatmul.f32.gmra.mxu0 %v6727
        %v6729 = vpop.f32.mrf.mxu0
        %v6730 = vadd.f32 0.0, %v6729
        %6731 = vdwg.mxu0
        %6732 = vmatpush.msra.mxu0 0.0
        %v6733 = vand.u32 %v3605, 4294901760
        %v6734 = vsub.f32 %v3605, %v6733
        %v6735 = vand.u32 %v6734, 4294901760
        %v6736 = vsub.f32 %v6734, %v6735
        %v6737 = vand.u32 %v6736, 4294901760
        %6738 = vmatpush.msra.mxu0 %v6737
        %v6739 = vand.u32 %v3604, 4294901760
        %v6740 = vsub.f32 %v3604, %v6739
        %v6741 = vand.u32 %v6740, 4294901760
        %v6742 = vsub.f32 %v6740, %v6741
        %v6743 = vand.u32 %v6742, 4294901760
        %6744 = vmatpush.msra.mxu0 %v6743
        %v6745 = vand.u32 %v3603, 4294901760
        %v6746 = vsub.f32 %v3603, %v6745
        %v6747 = vand.u32 %v6746, 4294901760
        %v6748 = vsub.f32 %v6746, %v6747
        %v6749 = vand.u32 %v6748, 4294901760
        %6750 = vmatpush.msra.mxu0 %v6749
        %v6751 = vand.u32 %v3602, 4294901760
        %v6752 = vsub.f32 %v3602, %v6751
        %v6753 = vand.u32 %v6752, 4294901760
        %v6754 = vsub.f32 %v6752, %v6753
        %v6755 = vand.u32 %v6754, 4294901760
        %6756 = vmatpush.msra.mxu0 %v6755
        %v6757 = vand.u32 %v3601, 4294901760
        %v6758 = vsub.f32 %v3601, %v6757
        %v6759 = vand.u32 %v6758, 4294901760
        %v6760 = vsub.f32 %v6758, %v6759
        %v6761 = vand.u32 %v6760, 4294901760
        %6762 = vmatpush.msra.mxu0 %v6761
        %v6763 = vand.u32 %v3600, 4294901760
        %v6764 = vsub.f32 %v3600, %v6763
        %v6765 = vand.u32 %v6764, 4294901760
        %v6766 = vsub.f32 %v6764, %v6765
        %v6767 = vand.u32 %v6766, 4294901760
        %6768 = vmatpush.msra.mxu0 %v6767
        %v6769 = vand.u32 %v3599, 4294901760
        %v6770 = vsub.f32 %v3599, %v6769
        %v6771 = vand.u32 %v6770, 4294901760
        %v6772 = vsub.f32 %v6770, %v6771
        %v6773 = vand.u32 %v6772, 4294901760
        %6774 = vmatpush.msra.mxu0 %v6773
        %v6775 = vand.u32 %v3598, 4294901760
        %v6776 = vsub.f32 %v3598, %v6775
        %v6777 = vand.u32 %v6776, 4294901760
        %v6778 = vsub.f32 %v6776, %v6777
        %v6779 = vand.u32 %v6778, 4294901760
        %6780 = vmatpush.msra.mxu0 %v6779
        %v6781 = vand.u32 %v3597, 4294901760
        %v6782 = vsub.f32 %v3597, %v6781
        %v6783 = vand.u32 %v6782, 4294901760
        %v6784 = vsub.f32 %v6782, %v6783
        %v6785 = vand.u32 %v6784, 4294901760
        %6786 = vmatpush.msra.mxu0 %v6785
        %v6787 = vand.u32 %v3596, 4294901760
        %v6788 = vsub.f32 %v3596, %v6787
        %v6789 = vand.u32 %v6788, 4294901760
        %v6790 = vsub.f32 %v6788, %v6789
        %v6791 = vand.u32 %v6790, 4294901760
        %6792 = vmatpush.msra.mxu0 %v6791
        %v6793 = vand.u32 %v3595, 4294901760
        %v6794 = vsub.f32 %v3595, %v6793
        %v6795 = vand.u32 %v6794, 4294901760
        %v6796 = vsub.f32 %v6794, %v6795
        %v6797 = vand.u32 %v6796, 4294901760
        %6798 = vmatpush.msra.mxu0 %v6797
        %v6799 = vand.u32 %v3594, 4294901760
        %v6800 = vsub.f32 %v3594, %v6799
        %v6801 = vand.u32 %v6800, 4294901760
        %v6802 = vsub.f32 %v6800, %v6801
        %v6803 = vand.u32 %v6802, 4294901760
        %6804 = vmatpush.msra.mxu0 %v6803
        %v6805 = vand.u32 %v3593, 4294901760
        %v6806 = vsub.f32 %v3593, %v6805
        %v6807 = vand.u32 %v6806, 4294901760
        %v6808 = vsub.f32 %v6806, %v6807
        %v6809 = vand.u32 %v6808, 4294901760
        %6810 = vmatpush.msra.mxu0 %v6809
        %v6811 = vand.u32 %v3592, 4294901760
        %v6812 = vsub.f32 %v3592, %v6811
        %v6813 = vand.u32 %v6812, 4294901760
        %v6814 = vsub.f32 %v6812, %v6813
        %v6815 = vand.u32 %v6814, 4294901760
        %6816 = vmatpush.msra.mxu0 %v6815
        %v6817 = vand.u32 %v3591, 4294901760
        %v6818 = vsub.f32 %v3591, %v6817
        %v6819 = vand.u32 %v6818, 4294901760
        %v6820 = vsub.f32 %v6818, %v6819
        %v6821 = vand.u32 %v6820, 4294901760
        %6822 = vmatpush.msra.mxu0 %v6821
        %v6823 = vand.u32 %v6690, 4294901760
        %6824 = vmatmul.f32.gmra.mxu0 %v6823
        %v6825 = vpop.f32.mrf.mxu0
        %v6826 = vadd.f32 %v6730, %v6825
        %6827 = vdwg.mxu0
        %6828 = vmatpush.msra.mxu0 0.0
        %v6829 = vand.u32 %v3605, 4294901760
        %v6830 = vsub.f32 %v3605, %v6829
        %6831 = vmatpush.msra.mxu0 %v6830
        %v6832 = vand.u32 %v3604, 4294901760
        %v6833 = vsub.f32 %v3604, %v6832
        %6834 = vmatpush.msra.mxu0 %v6833
        %v6835 = vand.u32 %v3603, 4294901760
        %v6836 = vsub.f32 %v3603, %v6835
        %6837 = vmatpush.msra.mxu0 %v6836
        %v6838 = vand.u32 %v3602, 4294901760
        %v6839 = vsub.f32 %v3602, %v6838
        %6840 = vmatpush.msra.mxu0 %v6839
        %v6841 = vand.u32 %v3601, 4294901760
        %v6842 = vsub.f32 %v3601, %v6841
        %6843 = vmatpush.msra.mxu0 %v6842
        %v6844 = vand.u32 %v3600, 4294901760
        %v6845 = vsub.f32 %v3600, %v6844
        %6846 = vmatpush.msra.mxu0 %v6845
        %v6847 = vand.u32 %v3599, 4294901760
        %v6848 = vsub.f32 %v3599, %v6847
        %6849 = vmatpush.msra.mxu0 %v6848
        %v6850 = vand.u32 %v3598, 4294901760
        %v6851 = vsub.f32 %v3598, %v6850
        %6852 = vmatpush.msra.mxu0 %v6851
        %v6853 = vand.u32 %v3597, 4294901760
        %v6854 = vsub.f32 %v3597, %v6853
        %6855 = vmatpush.msra.mxu0 %v6854
        %v6856 = vand.u32 %v3596, 4294901760
        %v6857 = vsub.f32 %v3596, %v6856
        %6858 = vmatpush.msra.mxu0 %v6857
        %v6859 = vand.u32 %v3595, 4294901760
        %v6860 = vsub.f32 %v3595, %v6859
        %6861 = vmatpush.msra.mxu0 %v6860
        %v6862 = vand.u32 %v3594, 4294901760
        %v6863 = vsub.f32 %v3594, %v6862
        %6864 = vmatpush.msra.mxu0 %v6863
        %v6865 = vand.u32 %v3593, 4294901760
        %v6866 = vsub.f32 %v3593, %v6865
        %6867 = vmatpush.msra.mxu0 %v6866
        %v6868 = vand.u32 %v3592, 4294901760
        %v6869 = vsub.f32 %v3592, %v6868
        %6870 = vmatpush.msra.mxu0 %v6869
        %v6871 = vand.u32 %v3591, 4294901760
        %v6872 = vsub.f32 %v3591, %v6871
        %6873 = vmatpush.msra.mxu0 %v6872
        %v6874 = vand.u32 %v6690, 4294901760
        %v6875 = vsub.f32 %v6690, %v6874
        %6876 = vmatmul.f32.gmra.mxu0 %v6875
        %v6877 = vpop.f32.mrf.mxu0
        %v6878 = vadd.f32 %v6826, %v6877
        %6879 = vdwg.mxu0
        %6880 = vmatpush.msra.mxu0 0.0
        %v6881 = vand.u32 %v3605, 4294901760
        %6882 = vmatpush.msra.mxu0 %v6881
        %v6883 = vand.u32 %v3604, 4294901760
        %6884 = vmatpush.msra.mxu0 %v6883
        %v6885 = vand.u32 %v3603, 4294901760
        %6886 = vmatpush.msra.mxu0 %v6885
        %v6887 = vand.u32 %v3602, 4294901760
        %6888 = vmatpush.msra.mxu0 %v6887
        %v6889 = vand.u32 %v3601, 4294901760
        %6890 = vmatpush.msra.mxu0 %v6889
        %v6891 = vand.u32 %v3600, 4294901760
        %6892 = vmatpush.msra.mxu0 %v6891
        %v6893 = vand.u32 %v3599, 4294901760
        %6894 = vmatpush.msra.mxu0 %v6893
        %v6895 = vand.u32 %v3598, 4294901760
        %6896 = vmatpush.msra.mxu0 %v6895
        %v6897 = vand.u32 %v3597, 4294901760
        %6898 = vmatpush.msra.mxu0 %v6897
        %v6899 = vand.u32 %v3596, 4294901760
        %6900 = vmatpush.msra.mxu0 %v6899
        %v6901 = vand.u32 %v3595, 4294901760
        %6902 = vmatpush.msra.mxu0 %v6901
        %v6903 = vand.u32 %v3594, 4294901760
        %6904 = vmatpush.msra.mxu0 %v6903
        %v6905 = vand.u32 %v3593, 4294901760
        %6906 = vmatpush.msra.mxu0 %v6905
        %v6907 = vand.u32 %v3592, 4294901760
        %6908 = vmatpush.msra.mxu0 %v6907
        %v6909 = vand.u32 %v3591, 4294901760
        %6910 = vmatpush.msra.mxu0 %v6909
        %v6911 = vand.u32 %v6690, 4294901760
        %v6912 = vsub.f32 %v6690, %v6911
        %v6913 = vand.u32 %v6912, 4294901760
        %6914 = vmatmul.f32.gmra.mxu0 %v6913
        %v6915 = vpop.f32.mrf.mxu0
        %v6916 = vadd.f32 %v6878, %v6915
        %6917 = vdwg.mxu0
        %6918 = vmatpush.msra.mxu0 0.0
        %v6919 = vand.u32 %v3605, 4294901760
        %v6920 = vsub.f32 %v3605, %v6919
        %v6921 = vand.u32 %v6920, 4294901760
        %6922 = vmatpush.msra.mxu0 %v6921
        %v6923 = vand.u32 %v3604, 4294901760
        %v6924 = vsub.f32 %v3604, %v6923
        %v6925 = vand.u32 %v6924, 4294901760
        %6926 = vmatpush.msra.mxu0 %v6925
        %v6927 = vand.u32 %v3603, 4294901760
        %v6928 = vsub.f32 %v3603, %v6927
        %v6929 = vand.u32 %v6928, 4294901760
        %6930 = vmatpush.msra.mxu0 %v6929
        %v6931 = vand.u32 %v3602, 4294901760
        %v6932 = vsub.f32 %v3602, %v6931
        %v6933 = vand.u32 %v6932, 4294901760
        %6934 = vmatpush.msra.mxu0 %v6933
        %v6935 = vand.u32 %v3601, 4294901760
        %v6936 = vsub.f32 %v3601, %v6935
        %v6937 = vand.u32 %v6936, 4294901760
        %6938 = vmatpush.msra.mxu0 %v6937
        %v6939 = vand.u32 %v3600, 4294901760
        %v6940 = vsub.f32 %v3600, %v6939
        %v6941 = vand.u32 %v6940, 4294901760
        %6942 = vmatpush.msra.mxu0 %v6941
        %v6943 = vand.u32 %v3599, 4294901760
        %v6944 = vsub.f32 %v3599, %v6943
        %v6945 = vand.u32 %v6944, 4294901760
        %6946 = vmatpush.msra.mxu0 %v6945
        %v6947 = vand.u32 %v3598, 4294901760
        %v6948 = vsub.f32 %v3598, %v6947
        %v6949 = vand.u32 %v6948, 4294901760
        %6950 = vmatpush.msra.mxu0 %v6949
        %v6951 = vand.u32 %v3597, 4294901760
        %v6952 = vsub.f32 %v3597, %v6951
        %v6953 = vand.u32 %v6952, 4294901760
        %6954 = vmatpush.msra.mxu0 %v6953
        %v6955 = vand.u32 %v3596, 4294901760
        %v6956 = vsub.f32 %v3596, %v6955
        %v6957 = vand.u32 %v6956, 4294901760
        %6958 = vmatpush.msra.mxu0 %v6957
        %v6959 = vand.u32 %v3595, 4294901760
        %v6960 = vsub.f32 %v3595, %v6959
        %v6961 = vand.u32 %v6960, 4294901760
        %6962 = vmatpush.msra.mxu0 %v6961
        %v6963 = vand.u32 %v3594, 4294901760
        %v6964 = vsub.f32 %v3594, %v6963
        %v6965 = vand.u32 %v6964, 4294901760
        %6966 = vmatpush.msra.mxu0 %v6965
        %v6967 = vand.u32 %v3593, 4294901760
        %v6968 = vsub.f32 %v3593, %v6967
        %v6969 = vand.u32 %v6968, 4294901760
        %6970 = vmatpush.msra.mxu0 %v6969
        %v6971 = vand.u32 %v3592, 4294901760
        %v6972 = vsub.f32 %v3592, %v6971
        %v6973 = vand.u32 %v6972, 4294901760
        %6974 = vmatpush.msra.mxu0 %v6973
        %v6975 = vand.u32 %v3591, 4294901760
        %v6976 = vsub.f32 %v3591, %v6975
        %v6977 = vand.u32 %v6976, 4294901760
        %6978 = vmatpush.msra.mxu0 %v6977
        %v6979 = vand.u32 %v6690, 4294901760
        %6980 = vmatmul.f32.gmra.mxu0 %v6979
        %v6981 = vpop.f32.mrf.mxu0
        %v6982 = vadd.f32 %v6916, %v6981
        %6983 = vdwg.mxu0
        %6984 = vmatpush.msra.mxu0 0.0
        %v6985 = vand.u32 %v3605, 4294901760
        %6986 = vmatpush.msra.mxu0 %v6985
        %v6987 = vand.u32 %v3604, 4294901760
        %6988 = vmatpush.msra.mxu0 %v6987
        %v6989 = vand.u32 %v3603, 4294901760
        %6990 = vmatpush.msra.mxu0 %v6989
        %v6991 = vand.u32 %v3602, 4294901760
        %6992 = vmatpush.msra.mxu0 %v6991
        %v6993 = vand.u32 %v3601, 4294901760
        %6994 = vmatpush.msra.mxu0 %v6993
        %v6995 = vand.u32 %v3600, 4294901760
        %6996 = vmatpush.msra.mxu0 %v6995
        %v6997 = vand.u32 %v3599, 4294901760
        %6998 = vmatpush.msra.mxu0 %v6997
        %v6999 = vand.u32 %v3598, 4294901760
        %7000 = vmatpush.msra.mxu0 %v6999
        %v7001 = vand.u32 %v3597, 4294901760
        %7002 = vmatpush.msra.mxu0 %v7001
        %v7003 = vand.u32 %v3596, 4294901760
        %7004 = vmatpush.msra.mxu0 %v7003
        %v7005 = vand.u32 %v3595, 4294901760
        %7006 = vmatpush.msra.mxu0 %v7005
        %v7007 = vand.u32 %v3594, 4294901760
        %7008 = vmatpush.msra.mxu0 %v7007
        %v7009 = vand.u32 %v3593, 4294901760
        %7010 = vmatpush.msra.mxu0 %v7009
        %v7011 = vand.u32 %v3592, 4294901760
        %7012 = vmatpush.msra.mxu0 %v7011
        %v7013 = vand.u32 %v3591, 4294901760
        %7014 = vmatpush.msra.mxu0 %v7013
        %v7015 = vand.u32 %v6690, 4294901760
        %7016 = vmatmul.f32.gmra.mxu0 %v7015
        %v7017 = vpop.f32.mrf.mxu0
        %v7018 = vadd.f32 %v6982, %v7017
        %7019 = vdwg.mxu0
        %v7020 = vadd.f32 %v6687, %v7018
        %v7021 = vadd.f32 %v7020, %v3938
        %v7022 = vmax.f32 %v7021, 0.0
        %7024 = vrot.lane.b32.xlu0 %v7022, 80
        %v7025 = vpop.permute.xlu0 %7024
        %v7027 = vmax.f32 %v7022, %v7025
        %7029 = vrot.lane.b32.xlu0 %v7027, 120
        %v7030 = vpop.permute.xlu0 %7029
        %v7032 = vmax.f32 %v7027, %v7030
        %s7033 = scalar_lea.vmem %s6, 80
        %v7034 = vld [vmem:[%s7033] sm:$0xff]
        %v7035 = vld [vmem:[%s7033 + $0x8] sm:$0xff]
        %v7036 = vld [vmem:[%s7033 + $0x10] sm:$0xff]
        %v7037 = vld [vmem:[%s7033 + $0x18] sm:$0xff]
        %v7038 = vld [vmem:[%s7033 + $0x20] sm:$0xff]
        %v7040 = vsel %vm5296, %v7032, 0
        %7042 = vmatpush.msra.mxu0 0.0
        %7043 = vmatpush.msra.mxu0 0.0
        %7044 = vmatpush.msra.mxu0 0.0
        %7045 = vmatpush.msra.mxu0 0.0
        %7046 = vmatpush.msra.mxu0 0.0
        %7047 = vmatpush.msra.mxu0 0.0
        %7048 = vmatpush.msra.mxu0 0.0
        %7049 = vmatpush.msra.mxu0 0.0
        %7050 = vmatpush.msra.mxu0 0.0
        %7051 = vmatpush.msra.mxu0 0.0
        %7052 = vmatpush.msra.mxu0 0.0
        %v7053 = vand.u32 %v7038, 4294901760
        %7054 = vmatpush.msra.mxu0 %v7053
        %v7055 = vand.u32 %v7037, 4294901760
        %7056 = vmatpush.msra.mxu0 %v7055
        %v7057 = vand.u32 %v7036, 4294901760
        %7058 = vmatpush.msra.mxu0 %v7057
        %v7059 = vand.u32 %v7035, 4294901760
        %7060 = vmatpush.msra.mxu0 %v7059
        %v7061 = vand.u32 %v7034, 4294901760
        %7062 = vmatpush.msra.mxu0 %v7061
        %v7063 = vand.u32 %v7040, 4294901760
        %v7064 = vsub.f32 %v7040, %v7063
        %v7065 = vand.u32 %v7064, 4294901760
        %v7066 = vsub.f32 %v7064, %v7065
        %v7067 = vand.u32 %v7066, 4294901760
        %7068 = vmatmul.f32.gmra.mxu0 %v7067
        %v7069 = vpop.f32.mrf.mxu0
        %v7070 = vadd.f32 0.0, %v7069
        %7071 = vdwg.mxu0
        %7072 = vmatpush.msra.mxu0 0.0
        %7073 = vmatpush.msra.mxu0 0.0
        %7074 = vmatpush.msra.mxu0 0.0
        %7075 = vmatpush.msra.mxu0 0.0
        %7076 = vmatpush.msra.mxu0 0.0
        %7077 = vmatpush.msra.mxu0 0.0
        %7078 = vmatpush.msra.mxu0 0.0
        %7079 = vmatpush.msra.mxu0 0.0
        %7080 = vmatpush.msra.mxu0 0.0
        %7081 = vmatpush.msra.mxu0 0.0
        %7082 = vmatpush.msra.mxu0 0.0
        %v7083 = vand.u32 %v7038, 4294901760
        %v7084 = vsub.f32 %v7038, %v7083
        %v7085 = vand.u32 %v7084, 4294901760
        %v7086 = vsub.f32 %v7084, %v7085
        %v7087 = vand.u32 %v7086, 4294901760
        %7088 = vmatpush.msra.mxu0 %v7087
        %v7089 = vand.u32 %v7037, 4294901760
        %v7090 = vsub.f32 %v7037, %v7089
        %v7091 = vand.u32 %v7090, 4294901760
        %v7092 = vsub.f32 %v7090, %v7091
        %v7093 = vand.u32 %v7092, 4294901760
        %7094 = vmatpush.msra.mxu0 %v7093
        %v7095 = vand.u32 %v7036, 4294901760
        %v7096 = vsub.f32 %v7036, %v7095
        %v7097 = vand.u32 %v7096, 4294901760
        %v7098 = vsub.f32 %v7096, %v7097
        %v7099 = vand.u32 %v7098, 4294901760
        %7100 = vmatpush.msra.mxu0 %v7099
        %v7101 = vand.u32 %v7035, 4294901760
        %v7102 = vsub.f32 %v7035, %v7101
        %v7103 = vand.u32 %v7102, 4294901760
        %v7104 = vsub.f32 %v7102, %v7103
        %v7105 = vand.u32 %v7104, 4294901760
        %7106 = vmatpush.msra.mxu0 %v7105
        %v7107 = vand.u32 %v7034, 4294901760
        %v7108 = vsub.f32 %v7034, %v7107
        %v7109 = vand.u32 %v7108, 4294901760
        %v7110 = vsub.f32 %v7108, %v7109
        %v7111 = vand.u32 %v7110, 4294901760
        %7112 = vmatpush.msra.mxu0 %v7111
        %v7113 = vand.u32 %v7040, 4294901760
        %7114 = vmatmul.f32.gmra.mxu0 %v7113
        %v7115 = vpop.f32.mrf.mxu0
        %v7116 = vadd.f32 %v7070, %v7115
        %7117 = vdwg.mxu0
        %7118 = vmatpush.msra.mxu0 0.0
        %7119 = vmatpush.msra.mxu0 0.0
        %7120 = vmatpush.msra.mxu0 0.0
        %7121 = vmatpush.msra.mxu0 0.0
        %7122 = vmatpush.msra.mxu0 0.0
        %7123 = vmatpush.msra.mxu0 0.0
        %7124 = vmatpush.msra.mxu0 0.0
        %7125 = vmatpush.msra.mxu0 0.0
        %7126 = vmatpush.msra.mxu0 0.0
        %7127 = vmatpush.msra.mxu0 0.0
        %7128 = vmatpush.msra.mxu0 0.0
        %v7129 = vand.u32 %v7038, 4294901760
        %v7130 = vsub.f32 %v7038, %v7129
        %7131 = vmatpush.msra.mxu0 %v7130
        %v7132 = vand.u32 %v7037, 4294901760
        %v7133 = vsub.f32 %v7037, %v7132
        %7134 = vmatpush.msra.mxu0 %v7133
        %v7135 = vand.u32 %v7036, 4294901760
        %v7136 = vsub.f32 %v7036, %v7135
        %7137 = vmatpush.msra.mxu0 %v7136
        %v7138 = vand.u32 %v7035, 4294901760
        %v7139 = vsub.f32 %v7035, %v7138
        %7140 = vmatpush.msra.mxu0 %v7139
        %v7141 = vand.u32 %v7034, 4294901760
        %v7142 = vsub.f32 %v7034, %v7141
        %7143 = vmatpush.msra.mxu0 %v7142
        %v7144 = vand.u32 %v7040, 4294901760
        %v7145 = vsub.f32 %v7040, %v7144
        %7146 = vmatmul.f32.gmra.mxu0 %v7145
        %v7147 = vpop.f32.mrf.mxu0
        %v7148 = vadd.f32 %v7116, %v7147
        %7149 = vdwg.mxu0
        %7150 = vmatpush.msra.mxu0 0.0
        %7151 = vmatpush.msra.mxu0 0.0
        %7152 = vmatpush.msra.mxu0 0.0
        %7153 = vmatpush.msra.mxu0 0.0
        %7154 = vmatpush.msra.mxu0 0.0
        %7155 = vmatpush.msra.mxu0 0.0
        %7156 = vmatpush.msra.mxu0 0.0
        %7157 = vmatpush.msra.mxu0 0.0
        %7158 = vmatpush.msra.mxu0 0.0
        %7159 = vmatpush.msra.mxu0 0.0
        %7160 = vmatpush.msra.mxu0 0.0
        %v7161 = vand.u32 %v7038, 4294901760
        %7162 = vmatpush.msra.mxu0 %v7161
        %v7163 = vand.u32 %v7037, 4294901760
        %7164 = vmatpush.msra.mxu0 %v7163
        %v7165 = vand.u32 %v7036, 4294901760
        %7166 = vmatpush.msra.mxu0 %v7165
        %v7167 = vand.u32 %v7035, 4294901760
        %7168 = vmatpush.msra.mxu0 %v7167
        %v7169 = vand.u32 %v7034, 4294901760
        %7170 = vmatpush.msra.mxu0 %v7169
        %v7171 = vand.u32 %v7040, 4294901760
        %v7172 = vsub.f32 %v7040, %v7171
        %v7173 = vand.u32 %v7172, 4294901760
        %7174 = vmatmul.f32.gmra.mxu0 %v7173
        %v7175 = vpop.f32.mrf.mxu0
        %v7176 = vadd.f32 %v7148, %v7175
        %7177 = vdwg.mxu0
        %7178 = vmatpush.msra.mxu0 0.0
        %7179 = vmatpush.msra.mxu0 0.0
        %7180 = vmatpush.msra.mxu0 0.0
        %7181 = vmatpush.msra.mxu0 0.0
        %7182 = vmatpush.msra.mxu0 0.0
        %7183 = vmatpush.msra.mxu0 0.0
        %7184 = vmatpush.msra.mxu0 0.0
        %7185 = vmatpush.msra.mxu0 0.0
        %7186 = vmatpush.msra.mxu0 0.0
        %7187 = vmatpush.msra.mxu0 0.0
        %7188 = vmatpush.msra.mxu0 0.0
        %v7189 = vand.u32 %v7038, 4294901760
        %v7190 = vsub.f32 %v7038, %v7189
        %v7191 = vand.u32 %v7190, 4294901760
        %7192 = vmatpush.msra.mxu0 %v7191
        %v7193 = vand.u32 %v7037, 4294901760
        %v7194 = vsub.f32 %v7037, %v7193
        %v7195 = vand.u32 %v7194, 4294901760
        %7196 = vmatpush.msra.mxu0 %v7195
        %v7197 = vand.u32 %v7036, 4294901760
        %v7198 = vsub.f32 %v7036, %v7197
        %v7199 = vand.u32 %v7198, 4294901760
        %7200 = vmatpush.msra.mxu0 %v7199
        %v7201 = vand.u32 %v7035, 4294901760
        %v7202 = vsub.f32 %v7035, %v7201
        %v7203 = vand.u32 %v7202, 4294901760
        %7204 = vmatpush.msra.mxu0 %v7203
        %v7205 = vand.u32 %v7034, 4294901760
        %v7206 = vsub.f32 %v7034, %v7205
        %v7207 = vand.u32 %v7206, 4294901760
        %7208 = vmatpush.msra.mxu0 %v7207
        %v7209 = vand.u32 %v7040, 4294901760
        %7210 = vmatmul.f32.gmra.mxu0 %v7209
        %v7211 = vpop.f32.mrf.mxu0
        %v7212 = vadd.f32 %v7176, %v7211
        %7213 = vdwg.mxu0
        %7214 = vmatpush.msra.mxu0 0.0
        %7215 = vmatpush.msra.mxu0 0.0
        %7216 = vmatpush.msra.mxu0 0.0
        %7217 = vmatpush.msra.mxu0 0.0
        %7218 = vmatpush.msra.mxu0 0.0
        %7219 = vmatpush.msra.mxu0 0.0
        %7220 = vmatpush.msra.mxu0 0.0
        %7221 = vmatpush.msra.mxu0 0.0
        %7222 = vmatpush.msra.mxu0 0.0
        %7223 = vmatpush.msra.mxu0 0.0
        %7224 = vmatpush.msra.mxu0 0.0
        %v7225 = vand.u32 %v7038, 4294901760
        %7226 = vmatpush.msra.mxu0 %v7225
        %v7227 = vand.u32 %v7037, 4294901760
        %7228 = vmatpush.msra.mxu0 %v7227
        %v7229 = vand.u32 %v7036, 4294901760
        %7230 = vmatpush.msra.mxu0 %v7229
        %v7231 = vand.u32 %v7035, 4294901760
        %7232 = vmatpush.msra.mxu0 %v7231
        %v7233 = vand.u32 %v7034, 4294901760
        %7234 = vmatpush.msra.mxu0 %v7233
        %v7235 = vand.u32 %v7040, 4294901760
        %7236 = vmatmul.f32.gmra.mxu0 %v7235
        %v7237 = vpop.f32.mrf.mxu0
        %v7238 = vadd.f32 %v7212, %v7237
        %7239 = vdwg.mxu0
        %v7240 = vadd.f32 %v5697, %v7238
        %v7241 = vld [vmem:[%s7] sm:$0x1]
        %v7242 = vadd.f32 %v7240, %v7241
        %v7243 = vmax.f32 %v7242, 0.0
        %v7244 = vld [vmem:[%s8] sm:$0xff]
        %v7245 = vld [vmem:[%s8 + $0x8] sm:$0xff]
        %v7246 = vld [vmem:[%s8 + $0x10] sm:$0xff]
        %v7247 = vld [vmem:[%s8 + $0x18] sm:$0xff]
        %v7248 = vld [vmem:[%s9] sm:$0x1]
        %vm7249 = vcmask 261120
        %v7251 = vsel %vm7249, %v7243, 0
        %7253 = vmatpush.msra.mxu0 0.0
        %7254 = vmatpush.msra.mxu0 0.0
        %7255 = vmatpush.msra.mxu0 0.0
        %7256 = vmatpush.msra.mxu0 0.0
        %7257 = vmatpush.msra.mxu0 0.0
        %7258 = vmatpush.msra.mxu0 0.0
        %7259 = vmatpush.msra.mxu0 0.0
        %7260 = vmatpush.msra.mxu0 0.0
        %7261 = vmatpush.msra.mxu0 0.0
        %7262 = vmatpush.msra.mxu0 0.0
        %7263 = vmatpush.msra.mxu0 0.0
        %7264 = vmatpush.msra.mxu0 0.0
        %v7265 = vand.u32 %v7247, 4294901760
        %7266 = vmatpush.msra.mxu0 %v7265
        %v7267 = vand.u32 %v7246, 4294901760
        %7268 = vmatpush.msra.mxu0 %v7267
        %v7269 = vand.u32 %v7245, 4294901760
        %7270 = vmatpush.msra.mxu0 %v7269
        %v7271 = vand.u32 %v7244, 4294901760
        %7272 = vmatpush.msra.mxu0 %v7271
        %v7273 = vand.u32 %v7251, 4294901760
        %v7274 = vsub.f32 %v7251, %v7273
        %v7275 = vand.u32 %v7274, 4294901760
        %v7276 = vsub.f32 %v7274, %v7275
        %v7277 = vand.u32 %v7276, 4294901760
        %7278 = vmatmul.f32.gmra.mxu0 %v7277
        %v7279 = vpop.f32.mrf.mxu0
        %v7280 = vadd.f32 %v7248, %v7279
        %7281 = vdwg.mxu0
        %7282 = vmatpush.msra.mxu0 0.0
        %7283 = vmatpush.msra.mxu0 0.0
        %7284 = vmatpush.msra.mxu0 0.0
        %7285 = vmatpush.msra.mxu0 0.0
        %7286 = vmatpush.msra.mxu0 0.0
        %7287 = vmatpush.msra.mxu0 0.0
        %7288 = vmatpush.msra.mxu0 0.0
        %7289 = vmatpush.msra.mxu0 0.0
        %7290 = vmatpush.msra.mxu0 0.0
        %7291 = vmatpush.msra.mxu0 0.0
        %7292 = vmatpush.msra.mxu0 0.0
        %7293 = vmatpush.msra.mxu0 0.0
        %v7294 = vand.u32 %v7247, 4294901760
        %v7295 = vsub.f32 %v7247, %v7294
        %v7296 = vand.u32 %v7295, 4294901760
        %v7297 = vsub.f32 %v7295, %v7296
        %v7298 = vand.u32 %v7297, 4294901760
        %7299 = vmatpush.msra.mxu0 %v7298
        %v7300 = vand.u32 %v7246, 4294901760
        %v7301 = vsub.f32 %v7246, %v7300
        %v7302 = vand.u32 %v7301, 4294901760
        %v7303 = vsub.f32 %v7301, %v7302
        %v7304 = vand.u32 %v7303, 4294901760
        %7305 = vmatpush.msra.mxu0 %v7304
        %v7306 = vand.u32 %v7245, 4294901760
        %v7307 = vsub.f32 %v7245, %v7306
        %v7308 = vand.u32 %v7307, 4294901760
        %v7309 = vsub.f32 %v7307, %v7308
        %v7310 = vand.u32 %v7309, 4294901760
        %7311 = vmatpush.msra.mxu0 %v7310
        %v7312 = vand.u32 %v7244, 4294901760
        %v7313 = vsub.f32 %v7244, %v7312
        %v7314 = vand.u32 %v7313, 4294901760
        %v7315 = vsub.f32 %v7313, %v7314
        %v7316 = vand.u32 %v7315, 4294901760
        %7317 = vmatpush.msra.mxu0 %v7316
        %v7318 = vand.u32 %v7251, 4294901760
        %7319 = vmatmul.f32.gmra.mxu0 %v7318
        %v7320 = vpop.f32.mrf.mxu0
        %v7321 = vadd.f32 %v7280, %v7320
        %7322 = vdwg.mxu0
        %7323 = vmatpush.msra.mxu0 0.0
        %7324 = vmatpush.msra.mxu0 0.0
        %7325 = vmatpush.msra.mxu0 0.0
        %7326 = vmatpush.msra.mxu0 0.0
        %7327 = vmatpush.msra.mxu0 0.0
        %7328 = vmatpush.msra.mxu0 0.0
        %7329 = vmatpush.msra.mxu0 0.0
        %7330 = vmatpush.msra.mxu0 0.0
        %7331 = vmatpush.msra.mxu0 0.0
        %7332 = vmatpush.msra.mxu0 0.0
        %7333 = vmatpush.msra.mxu0 0.0
        %7334 = vmatpush.msra.mxu0 0.0
        %v7335 = vand.u32 %v7247, 4294901760
        %v7336 = vsub.f32 %v7247, %v7335
        %7337 = vmatpush.msra.mxu0 %v7336
        %v7338 = vand.u32 %v7246, 4294901760
        %v7339 = vsub.f32 %v7246, %v7338
        %7340 = vmatpush.msra.mxu0 %v7339
        %v7341 = vand.u32 %v7245, 4294901760
        %v7342 = vsub.f32 %v7245, %v7341
        %7343 = vmatpush.msra.mxu0 %v7342
        %v7344 = vand.u32 %v7244, 4294901760
        %v7345 = vsub.f32 %v7244, %v7344
        %7346 = vmatpush.msra.mxu0 %v7345
        %v7347 = vand.u32 %v7251, 4294901760
        %v7348 = vsub.f32 %v7251, %v7347
        %7349 = vmatmul.f32.gmra.mxu0 %v7348
        %v7350 = vpop.f32.mrf.mxu0
        %v7351 = vadd.f32 %v7321, %v7350
        %7352 = vdwg.mxu0
        %7353 = vmatpush.msra.mxu0 0.0
        %7354 = vmatpush.msra.mxu0 0.0
        %7355 = vmatpush.msra.mxu0 0.0
        %7356 = vmatpush.msra.mxu0 0.0
        %7357 = vmatpush.msra.mxu0 0.0
        %7358 = vmatpush.msra.mxu0 0.0
        %7359 = vmatpush.msra.mxu0 0.0
        %7360 = vmatpush.msra.mxu0 0.0
        %7361 = vmatpush.msra.mxu0 0.0
        %7362 = vmatpush.msra.mxu0 0.0
        %7363 = vmatpush.msra.mxu0 0.0
        %7364 = vmatpush.msra.mxu0 0.0
        %v7365 = vand.u32 %v7247, 4294901760
        %7366 = vmatpush.msra.mxu0 %v7365
        %v7367 = vand.u32 %v7246, 4294901760
        %7368 = vmatpush.msra.mxu0 %v7367
        %v7369 = vand.u32 %v7245, 4294901760
        %7370 = vmatpush.msra.mxu0 %v7369
        %v7371 = vand.u32 %v7244, 4294901760
        %7372 = vmatpush.msra.mxu0 %v7371
        %v7373 = vand.u32 %v7251, 4294901760
        %v7374 = vsub.f32 %v7251, %v7373
        %v7375 = vand.u32 %v7374, 4294901760
        %7376 = vmatmul.f32.gmra.mxu0 %v7375
        %v7377 = vpop.f32.mrf.mxu0
        %v7378 = vadd.f32 %v7351, %v7377
        %7379 = vdwg.mxu0
        %7380 = vmatpush.msra.mxu0 0.0
        %7381 = vmatpush.msra.mxu0 0.0
        %7382 = vmatpush.msra.mxu0 0.0
        %7383 = vmatpush.msra.mxu0 0.0
        %7384 = vmatpush.msra.mxu0 0.0
        %7385 = vmatpush.msra.mxu0 0.0
        %7386 = vmatpush.msra.mxu0 0.0
        %7387 = vmatpush.msra.mxu0 0.0
        %7388 = vmatpush.msra.mxu0 0.0
        %7389 = vmatpush.msra.mxu0 0.0
        %7390 = vmatpush.msra.mxu0 0.0
        %7391 = vmatpush.msra.mxu0 0.0
        %v7392 = vand.u32 %v7247, 4294901760
        %v7393 = vsub.f32 %v7247, %v7392
        %v7394 = vand.u32 %v7393, 4294901760
        %7395 = vmatpush.msra.mxu0 %v7394
        %v7396 = vand.u32 %v7246, 4294901760
        %v7397 = vsub.f32 %v7246, %v7396
        %v7398 = vand.u32 %v7397, 4294901760
        %7399 = vmatpush.msra.mxu0 %v7398
        %v7400 = vand.u32 %v7245, 4294901760
        %v7401 = vsub.f32 %v7245, %v7400
        %v7402 = vand.u32 %v7401, 4294901760
        %7403 = vmatpush.msra.mxu0 %v7402
        %v7404 = vand.u32 %v7244, 4294901760
        %v7405 = vsub.f32 %v7244, %v7404
        %v7406 = vand.u32 %v7405, 4294901760
        %7407 = vmatpush.msra.mxu0 %v7406
        %v7408 = vand.u32 %v7251, 4294901760
        %7409 = vmatmul.f32.gmra.mxu0 %v7408
        %v7410 = vpop.f32.mrf.mxu0
        %v7411 = vadd.f32 %v7378, %v7410
        %7412 = vdwg.mxu0
        %7413 = vmatpush.msra.mxu0 0.0
        %7414 = vmatpush.msra.mxu0 0.0
        %7415 = vmatpush.msra.mxu0 0.0
        %7416 = vmatpush.msra.mxu0 0.0
        %7417 = vmatpush.msra.mxu0 0.0
        %7418 = vmatpush.msra.mxu0 0.0
        %7419 = vmatpush.msra.mxu0 0.0
        %7420 = vmatpush.msra.mxu0 0.0
        %7421 = vmatpush.msra.mxu0 0.0
        %7422 = vmatpush.msra.mxu0 0.0
        %7423 = vmatpush.msra.mxu0 0.0
        %7424 = vmatpush.msra.mxu0 0.0
        %v7425 = vand.u32 %v7247, 4294901760
        %7426 = vmatpush.msra.mxu0 %v7425
        %v7427 = vand.u32 %v7246, 4294901760
        %7428 = vmatpush.msra.mxu0 %v7427
        %v7429 = vand.u32 %v7245, 4294901760
        %7430 = vmatpush.msra.mxu0 %v7429
        %v7431 = vand.u32 %v7244, 4294901760
        %7432 = vmatpush.msra.mxu0 %v7431
        %v7433 = vand.u32 %v7251, 4294901760
        %7434 = vmatmul.f32.gmra.mxu0 %v7433
        %v7435 = vpop.f32.mrf.mxu0
        %v7436 = vadd.f32 %v7411, %v7435
        %7437 = vdwg.mxu0
        %v7438 = vmax.f32 %v7436, 0.0
        %v7439 = vld [vmem:[%s10] sm:$0xff]
        %v7440 = vld [vmem:[%s10 + $0x8] sm:$0xff]
        %v7441 = vld [vmem:[%s11] sm:$0x1]
        %vm7442 = vcmask 130048
        %v7444 = vsel %vm7442, %v7438, 0
        %7446 = vmatpush.msra.mxu0 0.0
        %7447 = vmatpush.msra.mxu0 0.0
        %7448 = vmatpush.msra.mxu0 0.0
        %7449 = vmatpush.msra.mxu0 0.0
        %7450 = vmatpush.msra.mxu0 0.0
        %7451 = vmatpush.msra.mxu0 0.0
        %7452 = vmatpush.msra.mxu0 0.0
        %7453 = vmatpush.msra.mxu0 0.0
        %7454 = vmatpush.msra.mxu0 0.0
        %7455 = vmatpush.msra.mxu0 0.0
        %7456 = vmatpush.msra.mxu0 0.0
        %7457 = vmatpush.msra.mxu0 0.0
        %7458 = vmatpush.msra.mxu0 0.0
        %7459 = vmatpush.msra.mxu0 0.0
        %v7460 = vand.u32 %v7440, 4294901760
        %7461 = vmatpush.msra.mxu0 %v7460
        %v7462 = vand.u32 %v7439, 4294901760
        %7463 = vmatpush.msra.mxu0 %v7462
        %v7464 = vand.u32 %v7444, 4294901760
        %v7465 = vsub.f32 %v7444, %v7464
        %v7466 = vand.u32 %v7465, 4294901760
        %v7467 = vsub.f32 %v7465, %v7466
        %v7468 = vand.u32 %v7467, 4294901760
        %7469 = vmatmul.f32.gmra.mxu0 %v7468
        %v7470 = vpop.f32.mrf.mxu0
        %v7471 = vadd.f32 %v7441, %v7470
        %7472 = vdwg.mxu0
        %7473 = vmatpush.msra.mxu0 0.0
        %7474 = vmatpush.msra.mxu0 0.0
        %7475 = vmatpush.msra.mxu0 0.0
        %7476 = vmatpush.msra.mxu0 0.0
        %7477 = vmatpush.msra.mxu0 0.0
        %7478 = vmatpush.msra.mxu0 0.0
        %7479 = vmatpush.msra.mxu0 0.0
        %7480 = vmatpush.msra.mxu0 0.0
        %7481 = vmatpush.msra.mxu0 0.0
        %7482 = vmatpush.msra.mxu0 0.0
        %7483 = vmatpush.msra.mxu0 0.0
        %7484 = vmatpush.msra.mxu0 0.0
        %7485 = vmatpush.msra.mxu0 0.0
        %7486 = vmatpush.msra.mxu0 0.0
        %v7487 = vand.u32 %v7440, 4294901760
        %v7488 = vsub.f32 %v7440, %v7487
        %v7489 = vand.u32 %v7488, 4294901760
        %v7490 = vsub.f32 %v7488, %v7489
        %v7491 = vand.u32 %v7490, 4294901760
        %7492 = vmatpush.msra.mxu0 %v7491
        %v7493 = vand.u32 %v7439, 4294901760
        %v7494 = vsub.f32 %v7439, %v7493
        %v7495 = vand.u32 %v7494, 4294901760
        %v7496 = vsub.f32 %v7494, %v7495
        %v7497 = vand.u32 %v7496, 4294901760
        %7498 = vmatpush.msra.mxu0 %v7497
        %v7499 = vand.u32 %v7444, 4294901760
        %7500 = vmatmul.f32.gmra.mxu0 %v7499
        %v7501 = vpop.f32.mrf.mxu0
        %v7502 = vadd.f32 %v7471, %v7501
        %7503 = vdwg.mxu0
        %7504 = vmatpush.msra.mxu0 0.0
        %7505 = vmatpush.msra.mxu0 0.0
        %7506 = vmatpush.msra.mxu0 0.0
        %7507 = vmatpush.msra.mxu0 0.0
        %7508 = vmatpush.msra.mxu0 0.0
        %7509 = vmatpush.msra.mxu0 0.0
        %7510 = vmatpush.msra.mxu0 0.0
        %7511 = vmatpush.msra.mxu0 0.0
        %7512 = vmatpush.msra.mxu0 0.0
        %7513 = vmatpush.msra.mxu0 0.0
        %7514 = vmatpush.msra.mxu0 0.0
        %7515 = vmatpush.msra.mxu0 0.0
        %7516 = vmatpush.msra.mxu0 0.0
        %7517 = vmatpush.msra.mxu0 0.0
        %v7518 = vand.u32 %v7440, 4294901760
        %v7519 = vsub.f32 %v7440, %v7518
        %7520 = vmatpush.msra.mxu0 %v7519
        %v7521 = vand.u32 %v7439, 4294901760
        %v7522 = vsub.f32 %v7439, %v7521
        %7523 = vmatpush.msra.mxu0 %v7522
        %v7524 = vand.u32 %v7444, 4294901760
        %v7525 = vsub.f32 %v7444, %v7524
        %7526 = vmatmul.f32.gmra.mxu0 %v7525
        %v7527 = vpop.f32.mrf.mxu0
        %v7528 = vadd.f32 %v7502, %v7527
        %7529 = vdwg.mxu0
        %7530 = vmatpush.msra.mxu0 0.0
        %7531 = vmatpush.msra.mxu0 0.0
        %7532 = vmatpush.msra.mxu0 0.0
        %7533 = vmatpush.msra.mxu0 0.0
        %7534 = vmatpush.msra.mxu0 0.0
        %7535 = vmatpush.msra.mxu0 0.0
        %7536 = vmatpush.msra.mxu0 0.0
        %7537 = vmatpush.msra.mxu0 0.0
        %7538 = vmatpush.msra.mxu0 0.0
        %7539 = vmatpush.msra.mxu0 0.0
        %7540 = vmatpush.msra.mxu0 0.0
        %7541 = vmatpush.msra.mxu0 0.0
        %7542 = vmatpush.msra.mxu0 0.0
        %7543 = vmatpush.msra.mxu0 0.0
        %v7544 = vand.u32 %v7440, 4294901760
        %7545 = vmatpush.msra.mxu0 %v7544
        %v7546 = vand.u32 %v7439, 4294901760
        %7547 = vmatpush.msra.mxu0 %v7546
        %v7548 = vand.u32 %v7444, 4294901760
        %v7549 = vsub.f32 %v7444, %v7548
        %v7550 = vand.u32 %v7549, 4294901760
        %7551 = vmatmul.f32.gmra.mxu0 %v7550
        %v7552 = vpop.f32.mrf.mxu0
        %v7553 = vadd.f32 %v7528, %v7552
        %7554 = vdwg.mxu0
        %7555 = vmatpush.msra.mxu0 0.0
        %7556 = vmatpush.msra.mxu0 0.0
        %7557 = vmatpush.msra.mxu0 0.0
        %7558 = vmatpush.msra.mxu0 0.0
        %7559 = vmatpush.msra.mxu0 0.0
        %7560 = vmatpush.msra.mxu0 0.0
        %7561 = vmatpush.msra.mxu0 0.0
        %7562 = vmatpush.msra.mxu0 0.0
        %7563 = vmatpush.msra.mxu0 0.0
        %7564 = vmatpush.msra.mxu0 0.0
        %7565 = vmatpush.msra.mxu0 0.0
        %7566 = vmatpush.msra.mxu0 0.0
        %7567 = vmatpush.msra.mxu0 0.0
        %7568 = vmatpush.msra.mxu0 0.0
        %v7569 = vand.u32 %v7440, 4294901760
        %v7570 = vsub.f32 %v7440, %v7569
        %v7571 = vand.u32 %v7570, 4294901760
        %7572 = vmatpush.msra.mxu0 %v7571
        %v7573 = vand.u32 %v7439, 4294901760
        %v7574 = vsub.f32 %v7439, %v7573
        %v7575 = vand.u32 %v7574, 4294901760
        %7576 = vmatpush.msra.mxu0 %v7575
        %v7577 = vand.u32 %v7444, 4294901760
        %7578 = vmatmul.f32.gmra.mxu0 %v7577
        %v7579 = vpop.f32.mrf.mxu0
        %v7580 = vadd.f32 %v7553, %v7579
        %7581 = vdwg.mxu0
        %7582 = vmatpush.msra.mxu0 0.0
        %7583 = vmatpush.msra.mxu0 0.0
        %7584 = vmatpush.msra.mxu0 0.0
        %7585 = vmatpush.msra.mxu0 0.0
        %7586 = vmatpush.msra.mxu0 0.0
        %7587 = vmatpush.msra.mxu0 0.0
        %7588 = vmatpush.msra.mxu0 0.0
        %7589 = vmatpush.msra.mxu0 0.0
        %7590 = vmatpush.msra.mxu0 0.0
        %7591 = vmatpush.msra.mxu0 0.0
        %7592 = vmatpush.msra.mxu0 0.0
        %7593 = vmatpush.msra.mxu0 0.0
        %7594 = vmatpush.msra.mxu0 0.0
        %7595 = vmatpush.msra.mxu0 0.0
        %v7596 = vand.u32 %v7440, 4294901760
        %7597 = vmatpush.msra.mxu0 %v7596
        %v7598 = vand.u32 %v7439, 4294901760
        %7599 = vmatpush.msra.mxu0 %v7598
        %v7600 = vand.u32 %v7444, 4294901760
        %7601 = vmatmul.f32.gmra.mxu0 %v7600
        %v7602 = vpop.f32.mrf.mxu0
        %v7603 = vadd.f32 %v7580, %v7602
        %7604 = vdwg.mxu0
        %7605 = vst [vmem:[%s420] sm:$0x1] %v7603
        %s7606 = sand.u32 %s296, 1
        %s7607 = scalar_lea.sflag [#allocation4], %s7606
        %s7608 = sand.u32 %s296, 1
        %s7609 = scalar_lea.vmem [#allocation3], %s7608
        // Predicated region
        $region69: #{tpu_custom_call.1} parent=67 // pred_check
          %p7610 = pneg %p306
        $region70: #{tpu_custom_call.1} parent=67 // pred_check_branch
          %7612 = sbr.rel (%p7610) target = $region72
        $region71: #{tpu_custom_call.1} parent=67 // pred_region
          %7614 = vsyncadd %s7607, 0
          %s7615 = scalar_lea.hbm %s12, %s26
          %s7617 = sshll.u32 %s7609, 4
          %s7618 = int_to_ptr.vmem [resolvable:$true] %s7617
          %s7619 = sshll.u32 %s7615, 4
          %s7620 = int_to_ptr.hbm [resolvable:$true] %s7619
          %7622 = dma.vmem_to_hbm [thread:$0]  %s7618, 16, %s7620, %s7607
        $region72: #{tpu_custom_call.1} parent=67 // pred_fallthru
          _
      $region68: #{tpu_custom_call.1} parent=5 // pred_fallthru
        _
      %p7623 = scmp.le.s32.totalorder 2, %s21
      // Predicated region
      $region73: #{tpu_custom_call.1} parent=5 // pred_check
        %p7624 = pneg %p7623
      $region74: #{tpu_custom_call.1} parent=5 // pred_check_branch
        %7626 = sbr.rel (%p7624) target = $region76
      $region75: #{tpu_custom_call.1} parent=5 // pred_region
        %s7627 = ssub.s32 %s21, 2
        // Predicated region
        $region77: #{tpu_custom_call.1} parent=75 // pred_check
          %p7628 = pneg %p312
        $region78: #{tpu_custom_call.1} parent=75 // pred_check_branch
          %7630 = sbr.rel (%p7628) target = $region80
        $region79: #{tpu_custom_call.1} parent=75 // pred_region
          %s7631 = sand.u32 %s297, 1
          %s7632 = scalar_lea.sflag [#allocation4], %s7631
          %s7633 = sand.u32 %s297, 1
          %s7634 = scalar_lea.vmem [#allocation3], %s7633
          %7636 = dma.done %s7632, 16
        $region80: #{tpu_custom_call.1} parent=75 // pred_fallthru
          _
      $region76: #{tpu_custom_call.1} parent=5 // pred_fallthru
        _
    $region6: #{tpu_custom_call.1} parent=1 // loop_footer
      %s25 = sadd.s32 1, %s21
    $region7: #{tpu_custom_call.1} parent=1 // loop_footer_branch
      %20 = sbr.rel target = $region3
    $region8: #{tpu_custom_call.1} parent=1 // loop_exit
      _
    %7637 = vsyncpa [#allocation4], 1
    %s7638 = scalar_lea.sflag [#allocation4], 1
    %7639 = vsyncpa %s7638, 1

</llo_original>
